<compile_context>
chip_gen: v6e
topology: v6e:2x2x1
jax: 0.10.0
libtpu: 0.0.40
codegen_flags: <defaults>
</compile_context>

<pallas_src>
import functools

import jax
import jax.numpy as jnp
from jax.experimental import pallas as pl
from jax.experimental.pallas import tpu as pltpu

LN_EPS = 1e-5  # nn.LayerNorm default eps


# ----------------------------- in-kernel math helpers ----------------------------- #

def _erf(x):
    # Abramowitz & Stegun 7.1.26 rational approximation (max abs err ~1.5e-7),
    # used so the exact (erf-based) torch GELU lowers cleanly on Mosaic.
    a1, a2, a3, a4, a5 = 0.254829592, -0.284496736, 1.421413741, -1.453152027, 1.061405429
    p = 0.3275911
    s = jnp.where(x >= 0, 1.0, -1.0)
    ax = jnp.abs(x)
    t = 1.0 / (1.0 + p * ax)
    poly = ((((a5 * t + a4) * t + a3) * t + a2) * t + a1) * t
    return s * (1.0 - poly * jnp.exp(-ax * ax))


def _gelu(x):
    # torch nn.GELU(approximate='none')
    return x * 0.5 * (1.0 + _erf(x * 0.7071067811865476))


def _layernorm(x, g, b, eps=LN_EPS):
    mu = jnp.mean(x, axis=-1, keepdims=True)
    xc = x - mu
    var = jnp.mean(xc * xc, axis=-1, keepdims=True)
    return xc * jax.lax.rsqrt(var + eps) * g + b


# ------------------------------------ kernel --------------------------------------- #

def _fused_kernel(feat_ref, pos_ref, w_embed_ref, b_embed_ref, cls_ref, poscls_ref,
                  ln1g_ref, ln1b_ref, wqkv_ref, wproj_ref, bproj_ref,
                  ln2g_ref, ln2b_ref, wfc1_ref, bfc1_ref, wfc2_ref, bfc2_ref,
                  normg_ref, normb_ref, out_ref, tok_ref,
                  *, num_heads, head_dim, depth):
    """Entire PointTransformer forward for one batch element per grid step."""
    H, hd = num_heads, head_dim
    scale = hd ** -0.5
    bf16 = jnp.bfloat16

    # --- prep: voxel_embed linear + [cls] token + pos-embed sum, assembled in VMEM ---
    emb = jnp.dot(feat_ref[0].astype(bf16), w_embed_ref[...],
                  preferred_element_type=jnp.float32) + b_embed_ref[...]     # (N, D) f32
    tok_ref[0:1, :] = cls_ref[...] + poscls_ref[...]      # cls token + class pos embed
    tok_ref[1:, :] = emb + pos_ref[0]                     # point tokens + voxel pos embed
    x = tok_ref[...]                                      # (T, D) f32 residual stream

    for d in range(depth):                                # static unroll over blocks
        # ---------------- attention ----------------
        xn = _layernorm(x, ln1g_ref[d], ln1b_ref[d]).astype(bf16)            # (T, D)
        xn_b = jnp.broadcast_to(xn[None], (3 * H,) + xn.shape)               # (3H, T, D)
        qkv = jnp.einsum('gtd,gdk->gtk', xn_b, wqkv_ref[d],
                         preferred_element_type=jnp.float32)                 # (3H, T, hd)
        q, k, v = qkv[:H], qkv[H:2 * H], qkv[2 * H:]
        s = jnp.einsum('htk,hsk->hts', q.astype(bf16), k.astype(bf16),
                       preferred_element_type=jnp.float32) * scale           # (H, T, T)
        s = s - jnp.max(s, axis=-1, keepdims=True)
        p = jnp.exp(s)
        p = p * pl.reciprocal(jnp.sum(p, axis=-1, keepdims=True), approx=True)
        o = jnp.einsum('hts,hsk->htk', p.astype(bf16), v.astype(bf16),
                       preferred_element_type=jnp.float32)                   # (H, T, hd)
        proj = jnp.einsum('htk,hko->hto', o.astype(bf16), wproj_ref[d],
                          preferred_element_type=jnp.float32)                # (H, T, D)
        x = x + jnp.sum(proj, axis=0) + bproj_ref[d]

        # ------------------- MLP --------------------
        xn2 = _layernorm(x, ln2g_ref[d], ln2b_ref[d]).astype(bf16)
        h1 = _gelu(jnp.dot(xn2, wfc1_ref[d], preferred_element_type=jnp.float32)
                   + bfc1_ref[d])
        h2 = jnp.dot(h1.astype(bf16), wfc2_ref[d],
                     preferred_element_type=jnp.float32) + bfc2_ref[d]
        x = x + h2

    out_ref[0] = _layernorm(x, normg_ref[...], normb_ref[...]).astype(out_ref.dtype)


# ---------------------------------- wrappers --------------------------------------- #

def _pack_params(params, num_heads):
    """Stack per-block weights along depth, pre-permute qkv/proj into head-batched
    layouts, and cast all matmul weights to bf16 (biases / LN params stay f32)."""
    D = params['w_embed'].shape[1]
    H = num_heads
    hd = D // H
    blocks = params['blocks']
    bf16 = jnp.bfloat16

    def stack(key):
        return jnp.stack([bp[key] for bp in blocks])

    # w_qkv (D, 3D): out-column = qkv_idx*D + h*hd + j  ->  (3H, D, hd)
    wqkv = jnp.stack([
        bp['w_qkv'].reshape(D, 3, H, hd).transpose(1, 2, 0, 3).reshape(3 * H, D, hd)
        for bp in blocks]).astype(bf16)                                 # (depth, 3H, D, hd)
    # w_proj (D, D): in-row = h*hd + j  ->  (H, hd, D)
    wproj = jnp.stack([bp['w_proj'].reshape(H, hd, D)
                       for bp in blocks]).astype(bf16)                  # (depth, H, hd, D)
    return dict(
        w_embed=params['w_embed'].astype(bf16),
        b_embed=params['b_embed'],
        cls=params['cls_token'],
        ln1g=stack('ln1_g'), ln1b=stack('ln1_b'),
        wqkv=wqkv, wproj=wproj, bproj=stack('b_proj'),
        ln2g=stack('ln2_g'), ln2b=stack('ln2_b'),
        wfc1=stack('w_fc1').astype(bf16), bfc1=stack('b_fc1'),
        wfc2=stack('w_fc2').astype(bf16), bfc2=stack('b_fc2'),
        normg=params['norm_g'], normb=params['norm_b'],
    )


def point_transformer_forward(xyz, feat, params, *, voxel_resolution, num_heads):
    """Equivalent of PointTransformer.forward(xyz, feat, cls_token=None)."""
    B, N, Cin = feat.shape
    D = params['w_embed'].shape[1]
    hd = D // num_heads
    depth = len(params['blocks'])
    T = N + 1
    R = voxel_resolution

    # interpolate_pos_encoding: F.grid_sample(mode='nearest', align_corners=True) on the
    # (R,R,R) learned pos-embed volume == per-axis nearest-index gather.
    # TODO(synk): data-dependent row gather kept in plain JAX (tiny); could be fused into
    # the kernel via scalar-prefetched indices + in-kernel jnp.take if profiling warrants.
    idx = jnp.clip(jnp.round((xyz + 1.0) * 0.5 * (R - 1)), 0, R - 1).astype(jnp.int32)
    flat = idx[..., 2] * (R * R) + idx[..., 1] * R + idx[..., 0]                # (B, N)
    pos_pts = jnp.take(params['pos_embed'][1:], flat.reshape(-1), axis=0).reshape(B, N, D)
    pos_cls = params['pos_embed'][0:1]                                          # (1, D)

    pk = _pack_params(params, num_heads)

    def full(a):
        nd = a.ndim
        return pl.BlockSpec(a.shape, lambda b, _nd=nd: (0,) * _nd)

    inputs = [feat, pos_pts, pk['w_embed'], pk['b_embed'], pk['cls'], pos_cls,
              pk['ln1g'], pk['ln1b'], pk['wqkv'], pk['wproj'], pk['bproj'],
              pk['ln2g'], pk['ln2b'], pk['wfc1'], pk['bfc1'], pk['wfc2'], pk['bfc2'],
              pk['normg'], pk['normb']]
    in_specs = ([pl.BlockSpec((1, N, Cin), lambda b: (b, 0, 0)),
                 pl.BlockSpec((1, N, D), lambda b: (b, 0, 0))] +
                [full(a) for a in inputs[2:]])

    kern = functools.partial(_fused_kernel, num_heads=num_heads, head_dim=hd, depth=depth)
    return pl.pallas_call(
        kern,
        out_shape=jax.ShapeDtypeStruct((B, T, D), jnp.float32),
        grid_spec=pltpu.PrefetchScalarGridSpec(
            num_scalar_prefetch=0,
            grid=(B,),
            in_specs=in_specs,
            out_specs=pl.BlockSpec((1, T, D), lambda b: (b, 0, 0)),
            scratch_shapes=[pltpu.VMEM((T, D), jnp.float32)],
        ),
        compiler_params=pltpu.CompilerParams(dimension_semantics=("parallel",)),
    )(*inputs)


# --------------------------- parameters (deterministic) ---------------------------- #

def init_params(key, in_chans, embed_dim, depth, num_heads, mlp_ratio, voxel_resolution):
    D = embed_dim
    Hm = int(D * mlp_ratio)
    max_n_voxels = voxel_resolution ** 3
    keys = jax.random.split(key, 4 + depth)

    def tn(k, shape, std=0.02):  # trunc_normal_(std=0.02) stand-in
        return (std * jax.random.normal(k, shape)).astype(jnp.float32)

    params = {
        'w_embed': tn(keys[0], (in_chans, D)),
        'b_embed': jnp.zeros((1, D), jnp.float32),
        'cls_token': tn(keys[1], (1, D)),
        'pos_embed': tn(keys[2], (max_n_voxels + 1, D)),
        'norm_g': jnp.ones((1, D), jnp.float32),
        'norm_b': jnp.zeros((1, D), jnp.float32),
        'blocks': [],
    }
    for i in range(depth):
        bk = jax.random.split(keys[4 + i], 4)
        params['blocks'].append({
            'ln1_g': jnp.ones((1, D), jnp.float32),
            'ln1_b': jnp.zeros((1, D), jnp.float32),
            'w_qkv': tn(bk[0], (D, 3 * D)),          # qkv_bias=False
            'w_proj': tn(bk[1], (D, D)),
            'b_proj': jnp.zeros((1, D), jnp.float32),
            'ln2_g': jnp.ones((1, D), jnp.float32),
            'ln2_b': jnp.zeros((1, D), jnp.float32),
            'w_fc1': tn(bk[2], (D, Hm)),
            'b_fc1': jnp.zeros((1, Hm), jnp.float32),
            'w_fc2': tn(bk[3], (Hm, D)),
            'b_fc2': jnp.zeros((1, D), jnp.float32),
        })
    return params


# ------------------------------ pure-JAX reference (f32) --------------------------- #

def reference_forward(xyz, feat, params, *, voxel_resolution, num_heads):
    B, N, _ = feat.shape
    D = params['w_embed'].shape[1]
    hd = D // num_heads
    R = voxel_resolution
    idx = jnp.clip(jnp.round((xyz + 1.0) * 0.5 * (R - 1)), 0, R - 1).astype(jnp.int32)
    flat = idx[..., 2] * (R * R) + idx[..., 1] * R + idx[..., 0]
    pos_pts = jnp.take(params['pos_embed'][1:], flat.reshape(-1), axis=0).reshape(B, N, D)
    pos = jnp.concatenate(
        [jnp.broadcast_to(params['pos_embed'][0:1][None], (B, 1, D)), pos_pts], axis=1)
    emb = feat @ params['w_embed'] + params['b_embed'][0]
    cls = jnp.broadcast_to(params['cls_token'][None], (B, 1, D))
    x = jnp.concatenate([cls, emb], axis=1) + pos
    T = x.shape[1]
    for bp in params['blocks']:
        xn = _layernorm(x, bp['ln1_g'][0], bp['ln1_b'][0])
        qkv = (xn @ bp['w_qkv']).reshape(B, T, 3, num_heads, hd).transpose(2, 0, 3, 1, 4)
        q, k, v = qkv[0], qkv[1], qkv[2]
        attn = jax.nn.softmax((q @ jnp.swapaxes(k, -1, -2)) * (hd ** -0.5), axis=-1)
        o = (attn @ v).transpose(0, 2, 1, 3).reshape(B, T, D)
        x = x + o @ bp['w_proj'] + bp['b_proj'][0]
        xn2 = _layernorm(x, bp['ln2_g'][0], bp['ln2_b'][0])
        h = _gelu(xn2 @ bp['w_fc1'] + bp['b_fc1'][0])
        x = x + h @ bp['w_fc2'] + bp['b_fc2'][0]
    return _layernorm(x, params['norm_g'][0], params['norm_b'][0])


# ------------------------------------- main ----------------------------------------- #

if __name__ == "__main__":
    key = jax.random.PRNGKey(0)
    B, N = 2, 16
    in_chans, embed_dim, depth, num_heads = 24, 48, 2, 6
    mlp_ratio = 4.0
    voxel_resolution = 8

    k1, k2, k3 = jax.random.split(key, 3)
    params = init_params(k1, in_chans, embed_dim, depth, num_heads, mlp_ratio, voxel_resolution)
    xyz = jax.random.uniform(k2, (B, N, 3), minval=-1.0, maxval=1.0, dtype=jnp.float32)
    feat = jax.random.normal(k3, (B, N, in_chans), dtype=jnp.float32)

    out = point_transformer_forward(xyz, feat, params,
                                    voxel_resolution=voxel_resolution, num_heads=num_heads)
    out = jax.block_until_ready(out)
    assert out.shape == (B, N + 1, embed_dim)

    ref = reference_forward(xyz, feat, params,
                            voxel_resolution=voxel_resolution, num_heads=num_heads)
    # Tolerance accounts for bf16 matmul operands (f32 accumulation) and the EUP
    # approx reciprocal in the softmax; the f32 reference matches torch semantics.
    if not jnp.allclose(out, ref, atol=2e-2, rtol=2e-2):
        raise AssertionError(
            f"mismatch vs reference, max abs diff {float(jnp.max(jnp.abs(out - ref)))}")
    print("KERNEL_OK")
</pallas_src>

<mosaic_0001>
module attributes {stable_mosaic.version = 11 : i64} {
  func.func @_fused_kernel(%arg0: i32, %arg1: memref<1x16x24xf32, #tpu.memory_space<vmem>>, %arg2: memref<1x16x48xf32, #tpu.memory_space<vmem>>, %arg3: memref<24x48xbf16, #tpu.memory_space<vmem>>, %arg4: memref<1x48xf32, #tpu.memory_space<vmem>>, %arg5: memref<1x48xf32, #tpu.memory_space<vmem>>, %arg6: memref<1x48xf32, #tpu.memory_space<vmem>>, %arg7: memref<2x1x48xf32, #tpu.memory_space<vmem>>, %arg8: memref<2x1x48xf32, #tpu.memory_space<vmem>>, %arg9: memref<2x18x48x8xbf16, #tpu.memory_space<vmem>>, %arg10: memref<2x6x8x48xbf16, #tpu.memory_space<vmem>>, %arg11: memref<2x1x48xf32, #tpu.memory_space<vmem>>, %arg12: memref<2x1x48xf32, #tpu.memory_space<vmem>>, %arg13: memref<2x1x48xf32, #tpu.memory_space<vmem>>, %arg14: memref<2x48x192xbf16, #tpu.memory_space<vmem>>, %arg15: memref<2x1x192xf32, #tpu.memory_space<vmem>>, %arg16: memref<2x192x48xbf16, #tpu.memory_space<vmem>>, %arg17: memref<2x1x48xf32, #tpu.memory_space<vmem>>, %arg18: memref<1x48xf32, #tpu.memory_space<vmem>>, %arg19: memref<1x48xf32, #tpu.memory_space<vmem>>, %arg20: memref<1x17x48xf32, #tpu.memory_space<vmem>>, %arg21: memref<17x48xf32, #tpu.memory_space<vmem>>) attributes {dimension_semantics = [#tpu.dimension_semantics<parallel>], iteration_bounds = array<i64: 2>, scalar_prefetch = 0 : i64, scratch_operands = 1 : i64, tpu.core_type = #tpu.core_type<tc>, window_params = [{transform_indices = @transform_0, window_bounds = array<i64: 1, 16, 24>}, {transform_indices = @transform_1, window_bounds = array<i64: 1, 16, 48>}, {pipeline_mode = #tpu.pipeline_mode<synchronous>, transform_indices = @transform_2, window_bounds = array<i64: 24, 48>}, {pipeline_mode = #tpu.pipeline_mode<synchronous>, transform_indices = @transform_3, window_bounds = array<i64: 1, 48>}, {pipeline_mode = #tpu.pipeline_mode<synchronous>, transform_indices = @transform_4, window_bounds = array<i64: 1, 48>}, {pipeline_mode = #tpu.pipeline_mode<synchronous>, transform_indices = @transform_5, window_bounds = array<i64: 1, 48>}, {pipeline_mode = #tpu.pipeline_mode<synchronous>, transform_indices = @transform_6, window_bounds = array<i64: 2, 1, 48>}, {pipeline_mode = #tpu.pipeline_mode<synchronous>, transform_indices = @transform_7, window_bounds = array<i64: 2, 1, 48>}, {pipeline_mode = #tpu.pipeline_mode<synchronous>, transform_indices = @transform_8, window_bounds = array<i64: 2, 18, 48, 8>}, {pipeline_mode = #tpu.pipeline_mode<synchronous>, transform_indices = @transform_9, window_bounds = array<i64: 2, 6, 8, 48>}, {pipeline_mode = #tpu.pipeline_mode<synchronous>, transform_indices = @transform_10, window_bounds = array<i64: 2, 1, 48>}, {pipeline_mode = #tpu.pipeline_mode<synchronous>, transform_indices = @transform_11, window_bounds = array<i64: 2, 1, 48>}, {pipeline_mode = #tpu.pipeline_mode<synchronous>, transform_indices = @transform_12, window_bounds = array<i64: 2, 1, 48>}, {pipeline_mode = #tpu.pipeline_mode<synchronous>, transform_indices = @transform_13, window_bounds = array<i64: 2, 48, 192>}, {pipeline_mode = #tpu.pipeline_mode<synchronous>, transform_indices = @transform_14, window_bounds = array<i64: 2, 1, 192>}, {pipeline_mode = #tpu.pipeline_mode<synchronous>, transform_indices = @transform_15, window_bounds = array<i64: 2, 192, 48>}, {pipeline_mode = #tpu.pipeline_mode<synchronous>, transform_indices = @transform_16, window_bounds = array<i64: 2, 1, 48>}, {pipeline_mode = #tpu.pipeline_mode<synchronous>, transform_indices = @transform_17, window_bounds = array<i64: 1, 48>}, {pipeline_mode = #tpu.pipeline_mode<synchronous>, transform_indices = @transform_18, window_bounds = array<i64: 1, 48>}, {transform_indices = @transform_19, window_bounds = array<i64: 1, 17, 48>}]} {
    %c0 = arith.constant 0 : index
    %c0_0 = arith.constant 0 : index
    %c0_1 = arith.constant 0 : index
    %0 = vector.load %arg1[%c0, %c0_0, %c0_1] : memref<1x16x24xf32, #tpu.memory_space<vmem>>, vector<1x16x24xf32>
    %1 = vector.shape_cast %0 : vector<1x16x24xf32> to vector<16x24xf32>
    %2 = arith.truncf %1 : vector<16x24xf32> to vector<16x24xbf16>
    %c0_2 = arith.constant 0 : index
    %c0_3 = arith.constant 0 : index
    %3 = vector.load %arg3[%c0_2, %c0_3] : memref<24x48xbf16, #tpu.memory_space<vmem>>, vector<24x48xbf16>
    %cst = arith.constant dense<0.000000e+00> : vector<16x48xf32>
    %4 = tpu.matmul %2, %3, %cst {dimension_numbers = #tpu.dot_dimension_numbers<[1], [0], [0], [1], [0, 0, 1, 1], [], []>} : vector<16x24xbf16>, vector<24x48xbf16>, vector<16x48xf32> -> vector<16x48xf32>
    %c0_4 = arith.constant 0 : index
    %c0_5 = arith.constant 0 : index
    %5 = vector.load %arg4[%c0_4, %c0_5] : memref<1x48xf32, #tpu.memory_space<vmem>>, vector<1x48xf32>
    %6 = vector.broadcast %5 : vector<1x48xf32> to vector<16x48xf32>
    %7 = arith.addf %4, %6 : vector<16x48xf32>
    %c0_6 = arith.constant 0 : index
    %c0_7 = arith.constant 0 : index
    %8 = vector.load %arg5[%c0_6, %c0_7] : memref<1x48xf32, #tpu.memory_space<vmem>>, vector<1x48xf32>
    %c0_8 = arith.constant 0 : index
    %c0_9 = arith.constant 0 : index
    %9 = vector.load %arg6[%c0_8, %c0_9] : memref<1x48xf32, #tpu.memory_space<vmem>>, vector<1x48xf32>
    %10 = arith.addf %8, %9 : vector<1x48xf32>
    %c0_10 = arith.constant 0 : index
    %c0_11 = arith.constant 0 : index
    %11 = vector.load %arg21[%c0_10, %c0_11] : memref<17x48xf32, #tpu.memory_space<vmem>>, vector<1x48xf32>
    tpu.vector_store %arg21[%c0_10, %c0_11], %10 {strides = array<i32>} : memref<17x48xf32, #tpu.memory_space<vmem>>, vector<1x48xf32>,
    %c0_12 = arith.constant 0 : index
    %c0_13 = arith.constant 0 : index
    %c0_14 = arith.constant 0 : index
    %12 = vector.load %arg2[%c0_12, %c0_13, %c0_14] : memref<1x16x48xf32, #tpu.memory_space<vmem>>, vector<1x16x48xf32>
    %13 = vector.shape_cast %12 : vector<1x16x48xf32> to vector<16x48xf32>
    %14 = arith.addf %7, %13 : vector<16x48xf32>
    %c1 = arith.constant 1 : index
    %c0_15 = arith.constant 0 : index
    %15 = vector.load %arg21[%c1, %c0_15] : memref<17x48xf32, #tpu.memory_space<vmem>>, vector<16x48xf32>
    tpu.vector_store %arg21[%c1, %c0_15], %14 {strides = array<i32>} : memref<17x48xf32, #tpu.memory_space<vmem>>, vector<16x48xf32>,
    %c0_16 = arith.constant 0 : index
    %c0_17 = arith.constant 0 : index
    %16 = vector.load %arg21[%c0_16, %c0_17] : memref<17x48xf32, #tpu.memory_space<vmem>>, vector<17x48xf32>
    %c0_18 = arith.constant 0 : index
    %c0_19 = arith.constant 0 : index
    %c0_20 = arith.constant 0 : index
    %17 = vector.load %arg7[%c0_18, %c0_19, %c0_20] : memref<2x1x48xf32, #tpu.memory_space<vmem>>, vector<1x1x48xf32>
    %18 = vector.shape_cast %17 : vector<1x1x48xf32> to vector<1x48xf32>
    %c0_21 = arith.constant 0 : index
    %c0_22 = arith.constant 0 : index
    %c0_23 = arith.constant 0 : index
    %19 = vector.load %arg8[%c0_21, %c0_22, %c0_23] : memref<2x1x48xf32, #tpu.memory_space<vmem>>, vector<1x1x48xf32>
    %20 = vector.shape_cast %19 : vector<1x1x48xf32> to vector<1x48xf32>
    %cst_24 = arith.constant dense<0.000000e+00> : vector<17xf32>
    %21 = vector.multi_reduction <add>, %16, %cst_24 [1] : vector<17x48xf32> to vector<17xf32>
    %22 = vector.shape_cast %21 : vector<17xf32> to vector<17x1xf32>
    %cst_25 = arith.constant 4.800000e+01 : f32
    %23 = vector.broadcast %cst_25 : f32 to vector<17x1xf32>
    %24 = arith.divf %22, %23 : vector<17x1xf32>
    %25 = vector.broadcast %24 : vector<17x1xf32> to vector<17x48xf32>
    %26 = arith.subf %16, %25 : vector<17x48xf32>
    %27 = arith.mulf %26, %26 : vector<17x48xf32>
    %cst_26 = arith.constant dense<0.000000e+00> : vector<17xf32>
    %28 = vector.multi_reduction <add>, %27, %cst_26 [1] : vector<17x48xf32> to vector<17xf32>
    %29 = vector.shape_cast %28 : vector<17xf32> to vector<17x1xf32>
    %cst_27 = arith.constant 4.800000e+01 : f32
    %30 = vector.broadcast %cst_27 : f32 to vector<17x1xf32>
    %31 = arith.divf %29, %30 : vector<17x1xf32>
    %cst_28 = arith.constant 9.99999974E-6 : f32
    %32 = vector.broadcast %cst_28 : f32 to vector<17x1xf32>
    %33 = arith.addf %31, %32 : vector<17x1xf32>
    %34 = math.rsqrt %33 : vector<17x1xf32>
    %35 = vector.broadcast %34 : vector<17x1xf32> to vector<17x48xf32>
    %36 = arith.mulf %26, %35 : vector<17x48xf32>
    %37 = vector.broadcast %18 : vector<1x48xf32> to vector<17x48xf32>
    %38 = arith.mulf %36, %37 : vector<17x48xf32>
    %39 = vector.broadcast %20 : vector<1x48xf32> to vector<17x48xf32>
    %40 = arith.addf %38, %39 : vector<17x48xf32>
    %41 = arith.truncf %40 : vector<17x48xf32> to vector<17x48xbf16>
    %42 = vector.shape_cast %41 : vector<17x48xbf16> to vector<1x17x48xbf16>
    %43 = vector.shape_cast %42 : vector<1x17x48xbf16> to vector<1x17x48xbf16>
    %44 = vector.broadcast %43 : vector<1x17x48xbf16> to vector<18x17x48xbf16>
    %c0_29 = arith.constant 0 : index
    %c0_30 = arith.constant 0 : index
    %c0_31 = arith.constant 0 : index
    %c0_32 = arith.constant 0 : index
    %45 = vector.load %arg9[%c0_29, %c0_30, %c0_31, %c0_32] : memref<2x18x48x8xbf16, #tpu.memory_space<vmem>>, vector<1x18x48x8xbf16>
    %46 = vector.shape_cast %45 : vector<1x18x48x8xbf16> to vector<18x48x8xbf16>
    "tpu.trace_start"() <{level = 10 : i32, message = "gtd,gdk->gtk"}> : () -> ()
    %cst_33 = arith.constant dense<0.000000e+00> : vector<18x17x8xf32>
    %47 = tpu.matmul %44, %46, %cst_33 {dimension_numbers = #tpu.dot_dimension_numbers<[2], [1], [1], [2], [0, 0, 0, 1, 1, 2], [0], [0]>} : vector<18x17x48xbf16>, vector<18x48x8xbf16>, vector<18x17x8xf32> -> vector<18x17x8xf32>
    "tpu.trace_stop"() : () -> ()
    %48 = vector.extract_strided_slice %47 {offsets = [0, 0, 0], sizes = [6, 17, 8], strides = [1, 1, 1]} : vector<18x17x8xf32> to vector<6x17x8xf32>
    %49 = vector.extract_strided_slice %47 {offsets = [6, 0, 0], sizes = [6, 17, 8], strides = [1, 1, 1]} : vector<18x17x8xf32> to vector<6x17x8xf32>
    %50 = vector.extract_strided_slice %47 {offsets = [12, 0, 0], sizes = [6, 17, 8], strides = [1, 1, 1]} : vector<18x17x8xf32> to vector<6x17x8xf32>
    %51 = arith.truncf %48 : vector<6x17x8xf32> to vector<6x17x8xbf16>
    %52 = arith.truncf %49 : vector<6x17x8xf32> to vector<6x17x8xbf16>
    "tpu.trace_start"() <{level = 10 : i32, message = "htk,hsk->hts"}> : () -> ()
    %cst_34 = arith.constant dense<0.000000e+00> : vector<6x17x17xf32>
    %53 = tpu.matmul %51, %52, %cst_34 {dimension_numbers = #tpu.dot_dimension_numbers<[2], [2], [1], [1], [0, 0, 0, 1, 1, 1], [0], [0]>} : vector<6x17x8xbf16>, vector<6x17x8xbf16>, vector<6x17x17xf32> -> vector<6x17x17xf32>
    "tpu.trace_stop"() : () -> ()
    %cst_35 = arith.constant 0.353553385 : f32
    %54 = vector.broadcast %cst_35 : f32 to vector<6x17x17xf32>
    %55 = arith.mulf %53, %54 : vector<6x17x17xf32>
    %cst_36 = arith.constant dense<0xFF800000> : vector<6x17xf32>
    %56 = vector.multi_reduction <maximumf>, %55, %cst_36 [2] : vector<6x17x17xf32> to vector<6x17xf32>
    %57 = vector.shape_cast %56 : vector<6x17xf32> to vector<6x17x1xf32>
    %58 = vector.broadcast %57 : vector<6x17x1xf32> to vector<6x17x17xf32>
    %59 = arith.subf %55, %58 : vector<6x17x17xf32>
    %60 = math.exp %59 : vector<6x17x17xf32>
    %cst_37 = arith.constant dense<0.000000e+00> : vector<6x17xf32>
    %61 = vector.multi_reduction <add>, %60, %cst_37 [2] : vector<6x17x17xf32> to vector<6x17xf32>
    %62 = vector.shape_cast %61 : vector<6x17xf32> to vector<6x17x1xf32>
    %63 = tpu.reciprocal %62 {approx = true} : vector<6x17x1xf32> -> vector<6x17x1xf32>
    %64 = vector.broadcast %63 : vector<6x17x1xf32> to vector<6x17x17xf32>
    %65 = arith.mulf %60, %64 : vector<6x17x17xf32>
    %66 = arith.truncf %65 : vector<6x17x17xf32> to vector<6x17x17xbf16>
    %67 = arith.truncf %50 : vector<6x17x8xf32> to vector<6x17x8xbf16>
    "tpu.trace_start"() <{level = 10 : i32, message = "hts,hsk->htk"}> : () -> ()
    %cst_38 = arith.constant dense<0.000000e+00> : vector<6x17x8xf32>
    %68 = tpu.matmul %66, %67, %cst_38 {dimension_numbers = #tpu.dot_dimension_numbers<[2], [1], [1], [2], [0, 0, 0, 1, 1, 2], [0], [0]>} : vector<6x17x17xbf16>, vector<6x17x8xbf16>, vector<6x17x8xf32> -> vector<6x17x8xf32>
    "tpu.trace_stop"() : () -> ()
    %69 = arith.truncf %68 : vector<6x17x8xf32> to vector<6x17x8xbf16>
    %c0_39 = arith.constant 0 : index
    %c0_40 = arith.constant 0 : index
    %c0_41 = arith.constant 0 : index
    %c0_42 = arith.constant 0 : index
    %70 = vector.load %arg10[%c0_39, %c0_40, %c0_41, %c0_42] : memref<2x6x8x48xbf16, #tpu.memory_space<vmem>>, vector<1x6x8x48xbf16>
    %71 = vector.shape_cast %70 : vector<1x6x8x48xbf16> to vector<6x8x48xbf16>
    "tpu.trace_start"() <{level = 10 : i32, message = "htk,hko->hto"}> : () -> ()
    %cst_43 = arith.constant dense<0.000000e+00> : vector<6x17x48xf32>
    %72 = tpu.matmul %69, %71, %cst_43 {dimension_numbers = #tpu.dot_dimension_numbers<[2], [1], [1], [2], [0, 0, 0, 1, 1, 2], [0], [0]>} : vector<6x17x8xbf16>, vector<6x8x48xbf16>, vector<6x17x48xf32> -> vector<6x17x48xf32>
    "tpu.trace_stop"() : () -> ()
    %cst_44 = arith.constant dense<0.000000e+00> : vector<17x48xf32>
    %73 = vector.multi_reduction <add>, %72, %cst_44 [0] : vector<6x17x48xf32> to vector<17x48xf32>
    %74 = arith.addf %16, %73 : vector<17x48xf32>
    %c0_45 = arith.constant 0 : index
    %c0_46 = arith.constant 0 : index
    %c0_47 = arith.constant 0 : index
    %75 = vector.load %arg11[%c0_45, %c0_46, %c0_47] : memref<2x1x48xf32, #tpu.memory_space<vmem>>, vector<1x1x48xf32>
    %76 = vector.shape_cast %75 : vector<1x1x48xf32> to vector<1x48xf32>
    %77 = vector.broadcast %76 : vector<1x48xf32> to vector<17x48xf32>
    %78 = arith.addf %74, %77 : vector<17x48xf32>
    %c0_48 = arith.constant 0 : index
    %c0_49 = arith.constant 0 : index
    %c0_50 = arith.constant 0 : index
    %79 = vector.load %arg12[%c0_48, %c0_49, %c0_50] : memref<2x1x48xf32, #tpu.memory_space<vmem>>, vector<1x1x48xf32>
    %80 = vector.shape_cast %79 : vector<1x1x48xf32> to vector<1x48xf32>
    %c0_51 = arith.constant 0 : index
    %c0_52 = arith.constant 0 : index
    %c0_53 = arith.constant 0 : index
    %81 = vector.load %arg13[%c0_51, %c0_52, %c0_53] : memref<2x1x48xf32, #tpu.memory_space<vmem>>, vector<1x1x48xf32>
    %82 = vector.shape_cast %81 : vector<1x1x48xf32> to vector<1x48xf32>
    %cst_54 = arith.constant dense<0.000000e+00> : vector<17xf32>
    %83 = vector.multi_reduction <add>, %78, %cst_54 [1] : vector<17x48xf32> to vector<17xf32>
    %84 = vector.shape_cast %83 : vector<17xf32> to vector<17x1xf32>
    %cst_55 = arith.constant 4.800000e+01 : f32
    %85 = vector.broadcast %cst_55 : f32 to vector<17x1xf32>
    %86 = arith.divf %84, %85 : vector<17x1xf32>
    %87 = vector.broadcast %86 : vector<17x1xf32> to vector<17x48xf32>
    %88 = arith.subf %78, %87 : vector<17x48xf32>
    %89 = arith.mulf %88, %88 : vector<17x48xf32>
    %cst_56 = arith.constant dense<0.000000e+00> : vector<17xf32>
    %90 = vector.multi_reduction <add>, %89, %cst_56 [1] : vector<17x48xf32> to vector<17xf32>
    %91 = vector.shape_cast %90 : vector<17xf32> to vector<17x1xf32>
    %cst_57 = arith.constant 4.800000e+01 : f32
    %92 = vector.broadcast %cst_57 : f32 to vector<17x1xf32>
    %93 = arith.divf %91, %92 : vector<17x1xf32>
    %cst_58 = arith.constant 9.99999974E-6 : f32
    %94 = vector.broadcast %cst_58 : f32 to vector<17x1xf32>
    %95 = arith.addf %93, %94 : vector<17x1xf32>
    %96 = math.rsqrt %95 : vector<17x1xf32>
    %97 = vector.broadcast %96 : vector<17x1xf32> to vector<17x48xf32>
    %98 = arith.mulf %88, %97 : vector<17x48xf32>
    %99 = vector.broadcast %80 : vector<1x48xf32> to vector<17x48xf32>
    %100 = arith.mulf %98, %99 : vector<17x48xf32>
    %101 = vector.broadcast %82 : vector<1x48xf32> to vector<17x48xf32>
    %102 = arith.addf %100, %101 : vector<17x48xf32>
    %103 = arith.truncf %102 : vector<17x48xf32> to vector<17x48xbf16>
    %c0_59 = arith.constant 0 : index
    %c0_60 = arith.constant 0 : index
    %c0_61 = arith.constant 0 : index
    %104 = vector.load %arg14[%c0_59, %c0_60, %c0_61] : memref<2x48x192xbf16, #tpu.memory_space<vmem>>, vector<1x48x192xbf16>
    %105 = vector.shape_cast %104 : vector<1x48x192xbf16> to vector<48x192xbf16>
    %cst_62 = arith.constant dense<0.000000e+00> : vector<17x192xf32>
    %106 = tpu.matmul %103, %105, %cst_62 {dimension_numbers = #tpu.dot_dimension_numbers<[1], [0], [0], [1], [0, 0, 1, 1], [], []>} : vector<17x48xbf16>, vector<48x192xbf16>, vector<17x192xf32> -> vector<17x192xf32>
    %c0_63 = arith.constant 0 : index
    %c0_64 = arith.constant 0 : index
    %c0_65 = arith.constant 0 : index
    %107 = vector.load %arg15[%c0_63, %c0_64, %c0_65] : memref<2x1x192xf32, #tpu.memory_space<vmem>>, vector<1x1x192xf32>
    %108 = vector.shape_cast %107 : vector<1x1x192xf32> to vector<1x192xf32>
    %109 = vector.broadcast %108 : vector<1x192xf32> to vector<17x192xf32>
    %110 = arith.addf %106, %109 : vector<17x192xf32>
    %cst_66 = arith.constant 5.000000e-01 : f32
    %111 = vector.broadcast %cst_66 : f32 to vector<17x192xf32>
    %112 = arith.mulf %110, %111 : vector<17x192xf32>
    %cst_67 = arith.constant 0.707106769 : f32
    %113 = vector.broadcast %cst_67 : f32 to vector<17x192xf32>
    %114 = arith.mulf %110, %113 : vector<17x192xf32>
    %cst_68 = arith.constant 0.000000e+00 : f32
    %115 = vector.broadcast %cst_68 : f32 to vector<17x192xf32>
    %116 = arith.cmpf oge, %114, %115 : vector<17x192xf32>
    %cst_69 = arith.constant 1.000000e+00 : f32
    %cst_70 = arith.constant -1.000000e+00 : f32
    %117 = vector.broadcast %cst_69 : f32 to vector<17x192xf32>
    %118 = vector.broadcast %cst_70 : f32 to vector<17x192xf32>
    %119 = arith.select %116, %117, %118 : vector<17x192xi1>, vector<17x192xf32>
    %120 = math.absf %114 : vector<17x192xf32>
    %cst_71 = arith.constant 0.327591091 : f32
    %121 = vector.broadcast %cst_71 : f32 to vector<17x192xf32>
    %122 = arith.mulf %121, %120 : vector<17x192xf32>
    %cst_72 = arith.constant 1.000000e+00 : f32
    %123 = vector.broadcast %cst_72 : f32 to vector<17x192xf32>
    %124 = arith.addf %123, %122 : vector<17x192xf32>
    %cst_73 = arith.constant 1.000000e+00 : f32
    %125 = vector.broadcast %cst_73 : f32 to vector<17x192xf32>
    %126 = arith.divf %125, %124 : vector<17x192xf32>
    %cst_74 = arith.constant 1.06140542 : f32
    %127 = vector.broadcast %cst_74 : f32 to vector<17x192xf32>
    %128 = arith.mulf %127, %126 : vector<17x192xf32>
    %cst_75 = arith.constant -1.45315206 : f32
    %129 = vector.broadcast %cst_75 : f32 to vector<17x192xf32>
    %130 = arith.addf %128, %129 : vector<17x192xf32>
    %131 = arith.mulf %130, %126 : vector<17x192xf32>
    %cst_76 = arith.constant 1.42141378 : f32
    %132 = vector.broadcast %cst_76 : f32 to vector<17x192xf32>
    %133 = arith.addf %131, %132 : vector<17x192xf32>
    %134 = arith.mulf %133, %126 : vector<17x192xf32>
    %cst_77 = arith.constant -0.284496725 : f32
    %135 = vector.broadcast %cst_77 : f32 to vector<17x192xf32>
    %136 = arith.addf %134, %135 : vector<17x192xf32>
    %137 = arith.mulf %136, %126 : vector<17x192xf32>
    %cst_78 = arith.constant 0.254829586 : f32
    %138 = vector.broadcast %cst_78 : f32 to vector<17x192xf32>
    %139 = arith.addf %137, %138 : vector<17x192xf32>
    %140 = arith.mulf %139, %126 : vector<17x192xf32>
    %cst_79 = arith.constant 0.000000e+00 : f32
    %141 = vector.broadcast %cst_79 : f32 to vector<17x192xf32>
    %142 = arith.subf %141, %120 : vector<17x192xf32>
    %143 = arith.mulf %142, %120 : vector<17x192xf32>
    %144 = math.exp %143 : vector<17x192xf32>
    %145 = arith.mulf %140, %144 : vector<17x192xf32>
    %cst_80 = arith.constant 1.000000e+00 : f32
    %146 = vector.broadcast %cst_80 : f32 to vector<17x192xf32>
    %147 = arith.subf %146, %145 : vector<17x192xf32>
    %148 = arith.mulf %119, %147 : vector<17x192xf32>
    %cst_81 = arith.constant 1.000000e+00 : f32
    %149 = vector.broadcast %cst_81 : f32 to vector<17x192xf32>
    %150 = arith.addf %149, %148 : vector<17x192xf32>
    %151 = arith.mulf %112, %150 : vector<17x192xf32>
    %152 = arith.truncf %151 : vector<17x192xf32> to vector<17x192xbf16>
    %c0_82 = arith.constant 0 : index
    %c0_83 = arith.constant 0 : index
    %c0_84 = arith.constant 0 : index
    %153 = vector.load %arg16[%c0_82, %c0_83, %c0_84] : memref<2x192x48xbf16, #tpu.memory_space<vmem>>, vector<1x192x48xbf16>
    %154 = vector.shape_cast %153 : vector<1x192x48xbf16> to vector<192x48xbf16>
    %cst_85 = arith.constant dense<0.000000e+00> : vector<17x48xf32>
    %155 = tpu.matmul %152, %154, %cst_85 {dimension_numbers = #tpu.dot_dimension_numbers<[1], [0], [0], [1], [0, 0, 1, 1], [], []>} : vector<17x192xbf16>, vector<192x48xbf16>, vector<17x48xf32> -> vector<17x48xf32>
    %c0_86 = arith.constant 0 : index
    %c0_87 = arith.constant 0 : index
    %c0_88 = arith.constant 0 : index
    %156 = vector.load %arg17[%c0_86, %c0_87, %c0_88] : memref<2x1x48xf32, #tpu.memory_space<vmem>>, vector<1x1x48xf32>
    %157 = vector.shape_cast %156 : vector<1x1x48xf32> to vector<1x48xf32>
    %158 = vector.broadcast %157 : vector<1x48xf32> to vector<17x48xf32>
    %159 = arith.addf %155, %158 : vector<17x48xf32>
    %160 = arith.addf %78, %159 : vector<17x48xf32>
    %c1_89 = arith.constant 1 : index
    %c0_90 = arith.constant 0 : index
    %c0_91 = arith.constant 0 : index
    %161 = vector.load %arg7[%c1_89, %c0_90, %c0_91] : memref<2x1x48xf32, #tpu.memory_space<vmem>>, vector<1x1x48xf32>
    %162 = vector.shape_cast %161 : vector<1x1x48xf32> to vector<1x48xf32>
    %c1_92 = arith.constant 1 : index
    %c0_93 = arith.constant 0 : index
    %c0_94 = arith.constant 0 : index
    %163 = vector.load %arg8[%c1_92, %c0_93, %c0_94] : memref<2x1x48xf32, #tpu.memory_space<vmem>>, vector<1x1x48xf32>
    %164 = vector.shape_cast %163 : vector<1x1x48xf32> to vector<1x48xf32>
    %cst_95 = arith.constant dense<0.000000e+00> : vector<17xf32>
    %165 = vector.multi_reduction <add>, %160, %cst_95 [1] : vector<17x48xf32> to vector<17xf32>
    %166 = vector.shape_cast %165 : vector<17xf32> to vector<17x1xf32>
    %cst_96 = arith.constant 4.800000e+01 : f32
    %167 = vector.broadcast %cst_96 : f32 to vector<17x1xf32>
    %168 = arith.divf %166, %167 : vector<17x1xf32>
    %169 = vector.broadcast %168 : vector<17x1xf32> to vector<17x48xf32>
    %170 = arith.subf %160, %169 : vector<17x48xf32>
    %171 = arith.mulf %170, %170 : vector<17x48xf32>
    %cst_97 = arith.constant dense<0.000000e+00> : vector<17xf32>
    %172 = vector.multi_reduction <add>, %171, %cst_97 [1] : vector<17x48xf32> to vector<17xf32>
    %173 = vector.shape_cast %172 : vector<17xf32> to vector<17x1xf32>
    %cst_98 = arith.constant 4.800000e+01 : f32
    %174 = vector.broadcast %cst_98 : f32 to vector<17x1xf32>
    %175 = arith.divf %173, %174 : vector<17x1xf32>
    %cst_99 = arith.constant 9.99999974E-6 : f32
    %176 = vector.broadcast %cst_99 : f32 to vector<17x1xf32>
    %177 = arith.addf %175, %176 : vector<17x1xf32>
    %178 = math.rsqrt %177 : vector<17x1xf32>
    %179 = vector.broadcast %178 : vector<17x1xf32> to vector<17x48xf32>
    %180 = arith.mulf %170, %179 : vector<17x48xf32>
    %181 = vector.broadcast %162 : vector<1x48xf32> to vector<17x48xf32>
    %182 = arith.mulf %180, %181 : vector<17x48xf32>
    %183 = vector.broadcast %164 : vector<1x48xf32> to vector<17x48xf32>
    %184 = arith.addf %182, %183 : vector<17x48xf32>
    %185 = arith.truncf %184 : vector<17x48xf32> to vector<17x48xbf16>
    %186 = vector.shape_cast %185 : vector<17x48xbf16> to vector<1x17x48xbf16>
    %187 = vector.shape_cast %186 : vector<1x17x48xbf16> to vector<1x17x48xbf16>
    %188 = vector.broadcast %187 : vector<1x17x48xbf16> to vector<18x17x48xbf16>
    %c1_100 = arith.constant 1 : index
    %c0_101 = arith.constant 0 : index
    %c0_102 = arith.constant 0 : index
    %c0_103 = arith.constant 0 : index
    %189 = vector.load %arg9[%c1_100, %c0_101, %c0_102, %c0_103] : memref<2x18x48x8xbf16, #tpu.memory_space<vmem>>, vector<1x18x48x8xbf16>
    %190 = vector.shape_cast %189 : vector<1x18x48x8xbf16> to vector<18x48x8xbf16>
    "tpu.trace_start"() <{level = 10 : i32, message = "gtd,gdk->gtk"}> : () -> ()
    %cst_104 = arith.constant dense<0.000000e+00> : vector<18x17x8xf32>
    %191 = tpu.matmul %188, %190, %cst_104 {dimension_numbers = #tpu.dot_dimension_numbers<[2], [1], [1], [2], [0, 0, 0, 1, 1, 2], [0], [0]>} : vector<18x17x48xbf16>, vector<18x48x8xbf16>, vector<18x17x8xf32> -> vector<18x17x8xf32>
    "tpu.trace_stop"() : () -> ()
    %192 = vector.extract_strided_slice %191 {offsets = [0, 0, 0], sizes = [6, 17, 8], strides = [1, 1, 1]} : vector<18x17x8xf32> to vector<6x17x8xf32>
    %193 = vector.extract_strided_slice %191 {offsets = [6, 0, 0], sizes = [6, 17, 8], strides = [1, 1, 1]} : vector<18x17x8xf32> to vector<6x17x8xf32>
    %194 = vector.extract_strided_slice %191 {offsets = [12, 0, 0], sizes = [6, 17, 8], strides = [1, 1, 1]} : vector<18x17x8xf32> to vector<6x17x8xf32>
    %195 = arith.truncf %192 : vector<6x17x8xf32> to vector<6x17x8xbf16>
    %196 = arith.truncf %193 : vector<6x17x8xf32> to vector<6x17x8xbf16>
    "tpu.trace_start"() <{level = 10 : i32, message = "htk,hsk->hts"}> : () -> ()
    %cst_105 = arith.constant dense<0.000000e+00> : vector<6x17x17xf32>
    %197 = tpu.matmul %195, %196, %cst_105 {dimension_numbers = #tpu.dot_dimension_numbers<[2], [2], [1], [1], [0, 0, 0, 1, 1, 1], [0], [0]>} : vector<6x17x8xbf16>, vector<6x17x8xbf16>, vector<6x17x17xf32> -> vector<6x17x17xf32>
    "tpu.trace_stop"() : () -> ()
    %cst_106 = arith.constant 0.353553385 : f32
    %198 = vector.broadcast %cst_106 : f32 to vector<6x17x17xf32>
    %199 = arith.mulf %197, %198 : vector<6x17x17xf32>
    %cst_107 = arith.constant dense<0xFF800000> : vector<6x17xf32>
    %200 = vector.multi_reduction <maximumf>, %199, %cst_107 [2] : vector<6x17x17xf32> to vector<6x17xf32>
    %201 = vector.shape_cast %200 : vector<6x17xf32> to vector<6x17x1xf32>
    %202 = vector.broadcast %201 : vector<6x17x1xf32> to vector<6x17x17xf32>
    %203 = arith.subf %199, %202 : vector<6x17x17xf32>
    %204 = math.exp %203 : vector<6x17x17xf32>
    %cst_108 = arith.constant dense<0.000000e+00> : vector<6x17xf32>
    %205 = vector.multi_reduction <add>, %204, %cst_108 [2] : vector<6x17x17xf32> to vector<6x17xf32>
    %206 = vector.shape_cast %205 : vector<6x17xf32> to vector<6x17x1xf32>
    %207 = tpu.reciprocal %206 {approx = true} : vector<6x17x1xf32> -> vector<6x17x1xf32>
    %208 = vector.broadcast %207 : vector<6x17x1xf32> to vector<6x17x17xf32>
    %209 = arith.mulf %204, %208 : vector<6x17x17xf32>
    %210 = arith.truncf %209 : vector<6x17x17xf32> to vector<6x17x17xbf16>
    %211 = arith.truncf %194 : vector<6x17x8xf32> to vector<6x17x8xbf16>
    "tpu.trace_start"() <{level = 10 : i32, message = "hts,hsk->htk"}> : () -> ()
    %cst_109 = arith.constant dense<0.000000e+00> : vector<6x17x8xf32>
    %212 = tpu.matmul %210, %211, %cst_109 {dimension_numbers = #tpu.dot_dimension_numbers<[2], [1], [1], [2], [0, 0, 0, 1, 1, 2], [0], [0]>} : vector<6x17x17xbf16>, vector<6x17x8xbf16>, vector<6x17x8xf32> -> vector<6x17x8xf32>
    "tpu.trace_stop"() : () -> ()
    %213 = arith.truncf %212 : vector<6x17x8xf32> to vector<6x17x8xbf16>
    %c1_110 = arith.constant 1 : index
    %c0_111 = arith.constant 0 : index
    %c0_112 = arith.constant 0 : index
    %c0_113 = arith.constant 0 : index
    %214 = vector.load %arg10[%c1_110, %c0_111, %c0_112, %c0_113] : memref<2x6x8x48xbf16, #tpu.memory_space<vmem>>, vector<1x6x8x48xbf16>
    %215 = vector.shape_cast %214 : vector<1x6x8x48xbf16> to vector<6x8x48xbf16>
    "tpu.trace_start"() <{level = 10 : i32, message = "htk,hko->hto"}> : () -> ()
    %cst_114 = arith.constant dense<0.000000e+00> : vector<6x17x48xf32>
    %216 = tpu.matmul %213, %215, %cst_114 {dimension_numbers = #tpu.dot_dimension_numbers<[2], [1], [1], [2], [0, 0, 0, 1, 1, 2], [0], [0]>} : vector<6x17x8xbf16>, vector<6x8x48xbf16>, vector<6x17x48xf32> -> vector<6x17x48xf32>
    "tpu.trace_stop"() : () -> ()
    %cst_115 = arith.constant dense<0.000000e+00> : vector<17x48xf32>
    %217 = vector.multi_reduction <add>, %216, %cst_115 [0] : vector<6x17x48xf32> to vector<17x48xf32>
    %218 = arith.addf %160, %217 : vector<17x48xf32>
    %c1_116 = arith.constant 1 : index
    %c0_117 = arith.constant 0 : index
    %c0_118 = arith.constant 0 : index
    %219 = vector.load %arg11[%c1_116, %c0_117, %c0_118] : memref<2x1x48xf32, #tpu.memory_space<vmem>>, vector<1x1x48xf32>
    %220 = vector.shape_cast %219 : vector<1x1x48xf32> to vector<1x48xf32>
    %221 = vector.broadcast %220 : vector<1x48xf32> to vector<17x48xf32>
    %222 = arith.addf %218, %221 : vector<17x48xf32>
    %c1_119 = arith.constant 1 : index
    %c0_120 = arith.constant 0 : index
    %c0_121 = arith.constant 0 : index
    %223 = vector.load %arg12[%c1_119, %c0_120, %c0_121] : memref<2x1x48xf32, #tpu.memory_space<vmem>>, vector<1x1x48xf32>
    %224 = vector.shape_cast %223 : vector<1x1x48xf32> to vector<1x48xf32>
    %c1_122 = arith.constant 1 : index
    %c0_123 = arith.constant 0 : index
    %c0_124 = arith.constant 0 : index
    %225 = vector.load %arg13[%c1_122, %c0_123, %c0_124] : memref<2x1x48xf32, #tpu.memory_space<vmem>>, vector<1x1x48xf32>
    %226 = vector.shape_cast %225 : vector<1x1x48xf32> to vector<1x48xf32>
    %cst_125 = arith.constant dense<0.000000e+00> : vector<17xf32>
    %227 = vector.multi_reduction <add>, %222, %cst_125 [1] : vector<17x48xf32> to vector<17xf32>
    %228 = vector.shape_cast %227 : vector<17xf32> to vector<17x1xf32>
    %cst_126 = arith.constant 4.800000e+01 : f32
    %229 = vector.broadcast %cst_126 : f32 to vector<17x1xf32>
    %230 = arith.divf %228, %229 : vector<17x1xf32>
    %231 = vector.broadcast %230 : vector<17x1xf32> to vector<17x48xf32>
    %232 = arith.subf %222, %231 : vector<17x48xf32>
    %233 = arith.mulf %232, %232 : vector<17x48xf32>
    %cst_127 = arith.constant dense<0.000000e+00> : vector<17xf32>
    %234 = vector.multi_reduction <add>, %233, %cst_127 [1] : vector<17x48xf32> to vector<17xf32>
    %235 = vector.shape_cast %234 : vector<17xf32> to vector<17x1xf32>
    %cst_128 = arith.constant 4.800000e+01 : f32
    %236 = vector.broadcast %cst_128 : f32 to vector<17x1xf32>
    %237 = arith.divf %235, %236 : vector<17x1xf32>
    %cst_129 = arith.constant 9.99999974E-6 : f32
    %238 = vector.broadcast %cst_129 : f32 to vector<17x1xf32>
    %239 = arith.addf %237, %238 : vector<17x1xf32>
    %240 = math.rsqrt %239 : vector<17x1xf32>
    %241 = vector.broadcast %240 : vector<17x1xf32> to vector<17x48xf32>
    %242 = arith.mulf %232, %241 : vector<17x48xf32>
    %243 = vector.broadcast %224 : vector<1x48xf32> to vector<17x48xf32>
    %244 = arith.mulf %242, %243 : vector<17x48xf32>
    %245 = vector.broadcast %226 : vector<1x48xf32> to vector<17x48xf32>
    %246 = arith.addf %244, %245 : vector<17x48xf32>
    %247 = arith.truncf %246 : vector<17x48xf32> to vector<17x48xbf16>
    %c1_130 = arith.constant 1 : index
    %c0_131 = arith.constant 0 : index
    %c0_132 = arith.constant 0 : index
    %248 = vector.load %arg14[%c1_130, %c0_131, %c0_132] : memref<2x48x192xbf16, #tpu.memory_space<vmem>>, vector<1x48x192xbf16>
    %249 = vector.shape_cast %248 : vector<1x48x192xbf16> to vector<48x192xbf16>
    %cst_133 = arith.constant dense<0.000000e+00> : vector<17x192xf32>
    %250 = tpu.matmul %247, %249, %cst_133 {dimension_numbers = #tpu.dot_dimension_numbers<[1], [0], [0], [1], [0, 0, 1, 1], [], []>} : vector<17x48xbf16>, vector<48x192xbf16>, vector<17x192xf32> -> vector<17x192xf32>
    %c1_134 = arith.constant 1 : index
    %c0_135 = arith.constant 0 : index
    %c0_136 = arith.constant 0 : index
    %251 = vector.load %arg15[%c1_134, %c0_135, %c0_136] : memref<2x1x192xf32, #tpu.memory_space<vmem>>, vector<1x1x192xf32>
    %252 = vector.shape_cast %251 : vector<1x1x192xf32> to vector<1x192xf32>
    %253 = vector.broadcast %252 : vector<1x192xf32> to vector<17x192xf32>
    %254 = arith.addf %250, %253 : vector<17x192xf32>
    %cst_137 = arith.constant 5.000000e-01 : f32
    %255 = vector.broadcast %cst_137 : f32 to vector<17x192xf32>
    %256 = arith.mulf %254, %255 : vector<17x192xf32>
    %cst_138 = arith.constant 0.707106769 : f32
    %257 = vector.broadcast %cst_138 : f32 to vector<17x192xf32>
    %258 = arith.mulf %254, %257 : vector<17x192xf32>
    %cst_139 = arith.constant 0.000000e+00 : f32
    %259 = vector.broadcast %cst_139 : f32 to vector<17x192xf32>
    %260 = arith.cmpf oge, %258, %259 : vector<17x192xf32>
    %cst_140 = arith.constant 1.000000e+00 : f32
    %cst_141 = arith.constant -1.000000e+00 : f32
    %261 = vector.broadcast %cst_140 : f32 to vector<17x192xf32>
    %262 = vector.broadcast %cst_141 : f32 to vector<17x192xf32>
    %263 = arith.select %260, %261, %262 : vector<17x192xi1>, vector<17x192xf32>
    %264 = math.absf %258 : vector<17x192xf32>
    %cst_142 = arith.constant 0.327591091 : f32
    %265 = vector.broadcast %cst_142 : f32 to vector<17x192xf32>
    %266 = arith.mulf %265, %264 : vector<17x192xf32>
    %cst_143 = arith.constant 1.000000e+00 : f32
    %267 = vector.broadcast %cst_143 : f32 to vector<17x192xf32>
    %268 = arith.addf %267, %266 : vector<17x192xf32>
    %cst_144 = arith.constant 1.000000e+00 : f32
    %269 = vector.broadcast %cst_144 : f32 to vector<17x192xf32>
    %270 = arith.divf %269, %268 : vector<17x192xf32>
    %cst_145 = arith.constant 1.06140542 : f32
    %271 = vector.broadcast %cst_145 : f32 to vector<17x192xf32>
    %272 = arith.mulf %271, %270 : vector<17x192xf32>
    %cst_146 = arith.constant -1.45315206 : f32
    %273 = vector.broadcast %cst_146 : f32 to vector<17x192xf32>
    %274 = arith.addf %272, %273 : vector<17x192xf32>
    %275 = arith.mulf %274, %270 : vector<17x192xf32>
    %cst_147 = arith.constant 1.42141378 : f32
    %276 = vector.broadcast %cst_147 : f32 to vector<17x192xf32>
    %277 = arith.addf %275, %276 : vector<17x192xf32>
    %278 = arith.mulf %277, %270 : vector<17x192xf32>
    %cst_148 = arith.constant -0.284496725 : f32
    %279 = vector.broadcast %cst_148 : f32 to vector<17x192xf32>
    %280 = arith.addf %278, %279 : vector<17x192xf32>
    %281 = arith.mulf %280, %270 : vector<17x192xf32>
    %cst_149 = arith.constant 0.254829586 : f32
    %282 = vector.broadcast %cst_149 : f32 to vector<17x192xf32>
    %283 = arith.addf %281, %282 : vector<17x192xf32>
    %284 = arith.mulf %283, %270 : vector<17x192xf32>
    %cst_150 = arith.constant 0.000000e+00 : f32
    %285 = vector.broadcast %cst_150 : f32 to vector<17x192xf32>
    %286 = arith.subf %285, %264 : vector<17x192xf32>
    %287 = arith.mulf %286, %264 : vector<17x192xf32>
    %288 = math.exp %287 : vector<17x192xf32>
    %289 = arith.mulf %284, %288 : vector<17x192xf32>
    %cst_151 = arith.constant 1.000000e+00 : f32
    %290 = vector.broadcast %cst_151 : f32 to vector<17x192xf32>
    %291 = arith.subf %290, %289 : vector<17x192xf32>
    %292 = arith.mulf %263, %291 : vector<17x192xf32>
    %cst_152 = arith.constant 1.000000e+00 : f32
    %293 = vector.broadcast %cst_152 : f32 to vector<17x192xf32>
    %294 = arith.addf %293, %292 : vector<17x192xf32>
    %295 = arith.mulf %256, %294 : vector<17x192xf32>
    %296 = arith.truncf %295 : vector<17x192xf32> to vector<17x192xbf16>
    %c1_153 = arith.constant 1 : index
    %c0_154 = arith.constant 0 : index
    %c0_155 = arith.constant 0 : index
    %297 = vector.load %arg16[%c1_153, %c0_154, %c0_155] : memref<2x192x48xbf16, #tpu.memory_space<vmem>>, vector<1x192x48xbf16>
    %298 = vector.shape_cast %297 : vector<1x192x48xbf16> to vector<192x48xbf16>
    %cst_156 = arith.constant dense<0.000000e+00> : vector<17x48xf32>
    %299 = tpu.matmul %296, %298, %cst_156 {dimension_numbers = #tpu.dot_dimension_numbers<[1], [0], [0], [1], [0, 0, 1, 1], [], []>} : vector<17x192xbf16>, vector<192x48xbf16>, vector<17x48xf32> -> vector<17x48xf32>
    %c1_157 = arith.constant 1 : index
    %c0_158 = arith.constant 0 : index
    %c0_159 = arith.constant 0 : index
    %300 = vector.load %arg17[%c1_157, %c0_158, %c0_159] : memref<2x1x48xf32, #tpu.memory_space<vmem>>, vector<1x1x48xf32>
    %301 = vector.shape_cast %300 : vector<1x1x48xf32> to vector<1x48xf32>
    %302 = vector.broadcast %301 : vector<1x48xf32> to vector<17x48xf32>
    %303 = arith.addf %299, %302 : vector<17x48xf32>
    %304 = arith.addf %222, %303 : vector<17x48xf32>
    %c0_160 = arith.constant 0 : index
    %c0_161 = arith.constant 0 : index
    %305 = vector.load %arg18[%c0_160, %c0_161] : memref<1x48xf32, #tpu.memory_space<vmem>>, vector<1x48xf32>
    %c0_162 = arith.constant 0 : index
    %c0_163 = arith.constant 0 : index
    %306 = vector.load %arg19[%c0_162, %c0_163] : memref<1x48xf32, #tpu.memory_space<vmem>>, vector<1x48xf32>
    %cst_164 = arith.constant dense<0.000000e+00> : vector<17xf32>
    %307 = vector.multi_reduction <add>, %304, %cst_164 [1] : vector<17x48xf32> to vector<17xf32>
    %308 = vector.shape_cast %307 : vector<17xf32> to vector<17x1xf32>
    %cst_165 = arith.constant 4.800000e+01 : f32
    %309 = vector.broadcast %cst_165 : f32 to vector<17x1xf32>
    %310 = arith.divf %308, %309 : vector<17x1xf32>
    %311 = vector.broadcast %310 : vector<17x1xf32> to vector<17x48xf32>
    %312 = arith.subf %304, %311 : vector<17x48xf32>
    %313 = arith.mulf %312, %312 : vector<17x48xf32>
    %cst_166 = arith.constant dense<0.000000e+00> : vector<17xf32>
    %314 = vector.multi_reduction <add>, %313, %cst_166 [1] : vector<17x48xf32> to vector<17xf32>
    %315 = vector.shape_cast %314 : vector<17xf32> to vector<17x1xf32>
    %cst_167 = arith.constant 4.800000e+01 : f32
    %316 = vector.broadcast %cst_167 : f32 to vector<17x1xf32>
    %317 = arith.divf %315, %316 : vector<17x1xf32>
    %cst_168 = arith.constant 9.99999974E-6 : f32
    %318 = vector.broadcast %cst_168 : f32 to vector<17x1xf32>
    %319 = arith.addf %317, %318 : vector<17x1xf32>
    %320 = math.rsqrt %319 : vector<17x1xf32>
    %321 = vector.broadcast %320 : vector<17x1xf32> to vector<17x48xf32>
    %322 = arith.mulf %312, %321 : vector<17x48xf32>
    %323 = vector.broadcast %305 : vector<1x48xf32> to vector<17x48xf32>
    %324 = arith.mulf %322, %323 : vector<17x48xf32>
    %325 = vector.broadcast %306 : vector<1x48xf32> to vector<17x48xf32>
    %326 = arith.addf %324, %325 : vector<17x48xf32>
    %c0_169 = arith.constant 0 : index
    %c0_170 = arith.constant 0 : index
    %c0_171 = arith.constant 0 : index
    %327 = vector.load %arg20[%c0_169, %c0_170, %c0_171] : memref<1x17x48xf32, #tpu.memory_space<vmem>>, vector<1x17x48xf32>
    %328 = vector.shape_cast %327 : vector<1x17x48xf32> to vector<17x48xf32>
    %329 = vector.shape_cast %326 : vector<17x48xf32> to vector<1x17x48xf32>
    tpu.vector_store %arg20[%c0_169, %c0_170, %c0_171], %329 {strides = array<i32>} : memref<1x17x48xf32, #tpu.memory_space<vmem>>, vector<1x17x48xf32>,
    return
  }
  func.func @transform_0(%arg0: i32) -> (i32, i32, i32) {
    %c0_i32 = arith.constant 0 : i32
    %c0_i32_0 = arith.constant 0 : i32
    %c0_i32_1 = arith.constant 0 : i32
    return %arg0, %c0_i32, %c0_i32_0 : i32, i32, i32
  }
  func.func @transform_1(%arg0: i32) -> (i32, i32, i32) {
    %c0_i32 = arith.constant 0 : i32
    %c0_i32_0 = arith.constant 0 : i32
    %c0_i32_1 = arith.constant 0 : i32
    return %arg0, %c0_i32, %c0_i32_0 : i32, i32, i32
  }
  func.func @transform_2(%arg0: i32) -> (i32, i32) {
    %c0_i32 = arith.constant 0 : i32
    %c0_i32_0 = arith.constant 0 : i32
    %c0_i32_1 = arith.constant 0 : i32
    return %c0_i32, %c0_i32_0 : i32, i32
  }
  func.func @transform_3(%arg0: i32) -> (i32, i32) {
    %c0_i32 = arith.constant 0 : i32
    %c0_i32_0 = arith.constant 0 : i32
    %c0_i32_1 = arith.constant 0 : i32
    return %c0_i32, %c0_i32_0 : i32, i32
  }
  func.func @transform_4(%arg0: i32) -> (i32, i32) {
    %c0_i32 = arith.constant 0 : i32
    %c0_i32_0 = arith.constant 0 : i32
    %c0_i32_1 = arith.constant 0 : i32
    return %c0_i32, %c0_i32_0 : i32, i32
  }
  func.func @transform_5(%arg0: i32) -> (i32, i32) {
    %c0_i32 = arith.constant 0 : i32
    %c0_i32_0 = arith.constant 0 : i32
    %c0_i32_1 = arith.constant 0 : i32
    return %c0_i32, %c0_i32_0 : i32, i32
  }
  func.func @transform_6(%arg0: i32) -> (i32, i32, i32) {
    %c0_i32 = arith.constant 0 : i32
    %c0_i32_0 = arith.constant 0 : i32
    %c0_i32_1 = arith.constant 0 : i32
    %c0_i32_2 = arith.constant 0 : i32
    return %c0_i32, %c0_i32_0, %c0_i32_1 : i32, i32, i32
  }
  func.func @transform_7(%arg0: i32) -> (i32, i32, i32) {
    %c0_i32 = arith.constant 0 : i32
    %c0_i32_0 = arith.constant 0 : i32
    %c0_i32_1 = arith.constant 0 : i32
    %c0_i32_2 = arith.constant 0 : i32
    return %c0_i32, %c0_i32_0, %c0_i32_1 : i32, i32, i32
  }
  func.func @transform_8(%arg0: i32) -> (i32, i32, i32, i32) {
    %c0_i32 = arith.constant 0 : i32
    %c0_i32_0 = arith.constant 0 : i32
    %c0_i32_1 = arith.constant 0 : i32
    %c0_i32_2 = arith.constant 0 : i32
    %c0_i32_3 = arith.constant 0 : i32
    return %c0_i32, %c0_i32_0, %c0_i32_1, %c0_i32_2 : i32, i32, i32, i32
  }
  func.func @transform_9(%arg0: i32) -> (i32, i32, i32, i32) {
    %c0_i32 = arith.constant 0 : i32
    %c0_i32_0 = arith.constant 0 : i32
    %c0_i32_1 = arith.constant 0 : i32
    %c0_i32_2 = arith.constant 0 : i32
    %c0_i32_3 = arith.constant 0 : i32
    return %c0_i32, %c0_i32_0, %c0_i32_1, %c0_i32_2 : i32, i32, i32, i32
  }
  func.func @transform_10(%arg0: i32) -> (i32, i32, i32) {
    %c0_i32 = arith.constant 0 : i32
    %c0_i32_0 = arith.constant 0 : i32
    %c0_i32_1 = arith.constant 0 : i32
    %c0_i32_2 = arith.constant 0 : i32
    return %c0_i32, %c0_i32_0, %c0_i32_1 : i32, i32, i32
  }
  func.func @transform_11(%arg0: i32) -> (i32, i32, i32) {
    %c0_i32 = arith.constant 0 : i32
    %c0_i32_0 = arith.constant 0 : i32
    %c0_i32_1 = arith.constant 0 : i32
    %c0_i32_2 = arith.constant 0 : i32
    return %c0_i32, %c0_i32_0, %c0_i32_1 : i32, i32, i32
  }
  func.func @transform_12(%arg0: i32) -> (i32, i32, i32) {
    %c0_i32 = arith.constant 0 : i32
    %c0_i32_0 = arith.constant 0 : i32
    %c0_i32_1 = arith.constant 0 : i32
    %c0_i32_2 = arith.constant 0 : i32
    return %c0_i32, %c0_i32_0, %c0_i32_1 : i32, i32, i32
  }
  func.func @transform_13(%arg0: i32) -> (i32, i32, i32) {
    %c0_i32 = arith.constant 0 : i32
    %c0_i32_0 = arith.constant 0 : i32
    %c0_i32_1 = arith.constant 0 : i32
    %c0_i32_2 = arith.constant 0 : i32
    return %c0_i32, %c0_i32_0, %c0_i32_1 : i32, i32, i32
  }
  func.func @transform_14(%arg0: i32) -> (i32, i32, i32) {
    %c0_i32 = arith.constant 0 : i32
    %c0_i32_0 = arith.constant 0 : i32
    %c0_i32_1 = arith.constant 0 : i32
    %c0_i32_2 = arith.constant 0 : i32
    return %c0_i32, %c0_i32_0, %c0_i32_1 : i32, i32, i32
  }
  func.func @transform_15(%arg0: i32) -> (i32, i32, i32) {
    %c0_i32 = arith.constant 0 : i32
    %c0_i32_0 = arith.constant 0 : i32
    %c0_i32_1 = arith.constant 0 : i32
    %c0_i32_2 = arith.constant 0 : i32
    return %c0_i32, %c0_i32_0, %c0_i32_1 : i32, i32, i32
  }
  func.func @transform_16(%arg0: i32) -> (i32, i32, i32) {
    %c0_i32 = arith.constant 0 : i32
    %c0_i32_0 = arith.constant 0 : i32
    %c0_i32_1 = arith.constant 0 : i32
    %c0_i32_2 = arith.constant 0 : i32
    return %c0_i32, %c0_i32_0, %c0_i32_1 : i32, i32, i32
  }
  func.func @transform_17(%arg0: i32) -> (i32, i32) {
    %c0_i32 = arith.constant 0 : i32
    %c0_i32_0 = arith.constant 0 : i32
    %c0_i32_1 = arith.constant 0 : i32
    return %c0_i32, %c0_i32_0 : i32, i32
  }
  func.func @transform_18(%arg0: i32) -> (i32, i32) {
    %c0_i32 = arith.constant 0 : i32
    %c0_i32_0 = arith.constant 0 : i32
    %c0_i32_1 = arith.constant 0 : i32
    return %c0_i32, %c0_i32_0 : i32, i32
  }
  func.func @transform_19(%arg0: i32) -> (i32, i32, i32) {
    %c0_i32 = arith.constant 0 : i32
    %c0_i32_0 = arith.constant 0 : i32
    %c0_i32_1 = arith.constant 0 : i32
    return %arg0, %c0_i32, %c0_i32_0 : i32, i32, i32
  }
}

</mosaic_0001>

<llo_original>
// kernel: tpu_custom_call.1
$region0: #{tpu_custom_call.1}
  #allocation0 [shape = 'u32[]', space=smem, size = 0x4, offset = 0x4, fixed_abs, tag = 'smem constant byte address 0x4 - core index']
  #allocation1 [shape = 'u32[144,128]{1,0:T(1,128)}', space=vmem, size = 0x12000, scoped, tag = 'internal scratch']
  #allocation2 [shape = 'f32[17,48]{1,0:T(8,128)}', space=vmem, size = 0x3000, scoped, tag = 'scratch operand']
  %s0 = inlined_call_operand.vmem [shape: f32[2,16,24], index: 0, kind: input, shape index: {}]
  %s1 = inlined_call_operand.vmem [shape: f32[2,16,48], index: 1, kind: input, shape index: {}]
  %s2 = inlined_call_operand.vmem [shape: bf16[24,48], index: 2, kind: input, shape index: {}]
  %s3 = inlined_call_operand.vmem [shape: f32[1,48], index: 3, kind: input, shape index: {}]
  %s4 = inlined_call_operand.vmem [shape: f32[1,48], index: 4, kind: input, shape index: {}]
  %s5 = inlined_call_operand.vmem [shape: f32[1,48], index: 5, kind: input, shape index: {}]
  %s6 = inlined_call_operand.vmem [shape: f32[2,1,48], index: 6, kind: input, shape index: {}]
  %s7 = inlined_call_operand.vmem [shape: f32[2,1,48], index: 7, kind: input, shape index: {}]
  %s8 = inlined_call_operand.vmem [shape: bf16[2,18,48,8], index: 8, kind: input, shape index: {}]
  %s9 = inlined_call_operand.vmem [shape: bf16[2,6,8,48], index: 9, kind: input, shape index: {}]
  %s10 = inlined_call_operand.vmem [shape: f32[2,1,48], index: 10, kind: input, shape index: {}]
  %s11 = inlined_call_operand.vmem [shape: f32[2,1,48], index: 11, kind: input, shape index: {}]
  %s12 = inlined_call_operand.vmem [shape: f32[2,1,48], index: 12, kind: input, shape index: {}]
  %s13 = inlined_call_operand.vmem [shape: bf16[2,48,192], index: 13, kind: input, shape index: {}]
  %s14 = inlined_call_operand.vmem [shape: f32[2,1,192], index: 14, kind: input, shape index: {}]
  %s15 = inlined_call_operand.vmem [shape: bf16[2,192,48], index: 15, kind: input, shape index: {}]
  %s16 = inlined_call_operand.vmem [shape: f32[2,1,48], index: 16, kind: input, shape index: {}]
  %s17 = inlined_call_operand.vmem [shape: f32[1,48], index: 17, kind: input, shape index: {}]
  %s18 = inlined_call_operand.vmem [shape: f32[1,48], index: 18, kind: input, shape index: {}]
  %s19 = inlined_call_operand.vmem [shape: f32[2,17,48], index: 19, kind: output, shape index: {}]
  %s20 = sld [smem:[#allocation0]]
  $region109: #{tpu_custom_call.1} parent=0
    _
  %s22 = ssub.s32 1, %s20
  %s23 = scalar_select 0, %s22, %s20
  loop: start=0, step=1, limit=4
  $region2: #{tpu_custom_call.1} parent=0 // loop_pre_header
    _
  $region3: #{tpu_custom_call.1} parent=0 // loop_header
    %s25 = sphi 0, %s29
    %p26 = scmp.ge.s32.totalorder %s25, 4
    %s35 = sphi 0, %s37
    %s38 = sphi 0, %s35
    %s39 = sphi 0, %s38
    %s55 = sphi 0, %s39
    %s61 = sphi 0, %s63
    %s64 = sphi 0, %s61
    %s65 = sphi 0, %s64
    %s81 = sphi 0, %s65
    %s85 = sphi 0, %s85
    %s87 = sphi 0, %s85
    %s88 = sphi 0, %s87
    %s102 = sphi 0, %s88
    %s106 = sphi 0, %s106
    %s108 = sphi 0, %s106
    %s109 = sphi 0, %s108
    %s123 = sphi 0, %s109
    %s127 = sphi 0, %s127
    %s129 = sphi 0, %s127
    %s130 = sphi 0, %s129
    %s144 = sphi 0, %s130
    %s148 = sphi 0, %s148
    %s150 = sphi 0, %s148
    %s151 = sphi 0, %s150
    %s165 = sphi 0, %s151
    %s169 = sphi 0, %s169
    %s171 = sphi 0, %s169
    %s172 = sphi 0, %s171
    %s186 = sphi 0, %s172
    %s190 = sphi 0, %s190
    %s192 = sphi 0, %s190
    %s193 = sphi 0, %s192
    %s207 = sphi 0, %s193
    %s211 = sphi 0, %s211
    %s213 = sphi 0, %s211
    %s214 = sphi 0, %s213
    %s228 = sphi 0, %s214
    %s232 = sphi 0, %s232
    %s234 = sphi 0, %s232
    %s235 = sphi 0, %s234
    %s249 = sphi 0, %s235
    %s253 = sphi 0, %s253
    %s255 = sphi 0, %s253
    %s256 = sphi 0, %s255
    %s270 = sphi 0, %s256
    %s274 = sphi 0, %s274
    %s276 = sphi 0, %s274
    %s277 = sphi 0, %s276
    %s291 = sphi 0, %s277
    %s295 = sphi 0, %s295
    %s297 = sphi 0, %s295
    %s298 = sphi 0, %s297
    %s312 = sphi 0, %s298
    %s316 = sphi 0, %s316
    %s318 = sphi 0, %s316
    %s319 = sphi 0, %s318
    %s333 = sphi 0, %s319
    %s337 = sphi 0, %s337
    %s339 = sphi 0, %s337
    %s340 = sphi 0, %s339
    %s354 = sphi 0, %s340
    %s358 = sphi 0, %s358
    %s360 = sphi 0, %s358
    %s361 = sphi 0, %s360
    %s375 = sphi 0, %s361
    %s379 = sphi 0, %s379
    %s381 = sphi 0, %s379
    %s382 = sphi 0, %s381
    %s396 = sphi 0, %s382
    %s400 = sphi 0, %s400
    %s402 = sphi 0, %s400
    %s403 = sphi 0, %s402
    %s417 = sphi 0, %s403
    %s421 = sphi 0, %s421
    %s423 = sphi 0, %s421
    %s424 = sphi 0, %s423
    %s438 = sphi 0, %s424
    %s444 = sphi 0, %s446
    %s447 = sphi 0, %s444
    %s448 = sphi 0, %s447
    %s464 = sphi 0, %s448
  $region4: #{tpu_custom_call.1} parent=0 // loop_header_branch
    %28 = sbr.rel (%p26) target = $region8
  $region5: #{tpu_custom_call.1} parent=0 // loop_body
    %s30 = ssub.s32 %s25, 1
    %s31 = ssub.s32 %s25, 2
    %s32 = sadd.s32 %s25, 1
    %s33 = ssub.s32 %s25, %s32
    %p34 = scmp.eq.s32.totalorder %s33, 0
    %s36 = sadd.s32 %s35, 1
    %s37 = scalar_select %p34, %s35, %s36
    %p40 = pneg %p34
    %p41 = scmp.eq.s32.totalorder %s25, 1
    %p42 = por %p40, %p41
    %p43 = scmp.ne.s32.totalorder %s35, %s38
    %p44 = scmp.eq.s32.totalorder %s25, 0
    %p45 = por %p43, %p44
    %p46 = scmp.ne.s32.totalorder %s35, %s38
    %p47 = scmp.eq.s32.totalorder %s30, 1
    %p48 = por %p46, %p47
    %p49 = scmp.ne.s32.totalorder %s38, %s39
    %p50 = scmp.eq.s32.totalorder %s30, 0
    %p51 = por %p49, %p50
    %p52 = scmp.ne.s32.totalorder %s38, %s39
    %p53 = scmp.eq.s32.totalorder %s31, 1
    %p54 = por %p52, %p53
    %p56 = scmp.ne.s32.totalorder %s39, %s55
    %p57 = scmp.eq.s32.totalorder %s31, 0
    %p58 = por %p56, %p57
    %s59 = ssub.s32 %s25, %s32
    %p60 = scmp.eq.s32.totalorder %s59, 0
    %s62 = sadd.s32 %s61, 1
    %s63 = scalar_select %p60, %s61, %s62
    %p66 = pneg %p60
    %p67 = scmp.eq.s32.totalorder %s25, 1
    %p68 = por %p66, %p67
    %p69 = scmp.ne.s32.totalorder %s61, %s64
    %p70 = scmp.eq.s32.totalorder %s25, 0
    %p71 = por %p69, %p70
    %p72 = scmp.ne.s32.totalorder %s61, %s64
    %p73 = scmp.eq.s32.totalorder %s30, 1
    %p74 = por %p72, %p73
    %p75 = scmp.ne.s32.totalorder %s64, %s65
    %p76 = scmp.eq.s32.totalorder %s30, 0
    %p77 = por %p75, %p76
    %p78 = scmp.ne.s32.totalorder %s64, %s65
    %p79 = scmp.eq.s32.totalorder %s31, 1
    %p80 = por %p78, %p79
    %p82 = scmp.ne.s32.totalorder %s65, %s81
    %p83 = scmp.eq.s32.totalorder %s31, 0
    %p84 = por %p82, %p83
    %s86 = sadd.s32 %s85, 1
    %p89 = scmp.eq.s32.totalorder %s25, 1
    %p90 = scmp.ne.s32.totalorder %s85, %s87
    %p91 = scmp.eq.s32.totalorder %s25, 0
    %p92 = por %p90, %p91
    %p93 = scmp.ne.s32.totalorder %s85, %s87
    %p94 = scmp.eq.s32.totalorder %s30, 1
    %p95 = por %p93, %p94
    %p96 = scmp.ne.s32.totalorder %s87, %s88
    %p97 = scmp.eq.s32.totalorder %s30, 0
    %p98 = por %p96, %p97
    %p99 = scmp.ne.s32.totalorder %s87, %s88
    %p100 = scmp.eq.s32.totalorder %s31, 1
    %p101 = por %p99, %p100
    %p103 = scmp.ne.s32.totalorder %s88, %s102
    %p104 = scmp.eq.s32.totalorder %s31, 0
    %p105 = por %p103, %p104
    %s107 = sadd.s32 %s106, 1
    %p110 = scmp.eq.s32.totalorder %s25, 1
    %p111 = scmp.ne.s32.totalorder %s106, %s108
    %p112 = scmp.eq.s32.totalorder %s25, 0
    %p113 = por %p111, %p112
    %p114 = scmp.ne.s32.totalorder %s106, %s108
    %p115 = scmp.eq.s32.totalorder %s30, 1
    %p116 = por %p114, %p115
    %p117 = scmp.ne.s32.totalorder %s108, %s109
    %p118 = scmp.eq.s32.totalorder %s30, 0
    %p119 = por %p117, %p118
    %p120 = scmp.ne.s32.totalorder %s108, %s109
    %p121 = scmp.eq.s32.totalorder %s31, 1
    %p122 = por %p120, %p121
    %p124 = scmp.ne.s32.totalorder %s109, %s123
    %p125 = scmp.eq.s32.totalorder %s31, 0
    %p126 = por %p124, %p125
    %s128 = sadd.s32 %s127, 1
    %p131 = scmp.eq.s32.totalorder %s25, 1
    %p132 = scmp.ne.s32.totalorder %s127, %s129
    %p133 = scmp.eq.s32.totalorder %s25, 0
    %p134 = por %p132, %p133
    %p135 = scmp.ne.s32.totalorder %s127, %s129
    %p136 = scmp.eq.s32.totalorder %s30, 1
    %p137 = por %p135, %p136
    %p138 = scmp.ne.s32.totalorder %s129, %s130
    %p139 = scmp.eq.s32.totalorder %s30, 0
    %p140 = por %p138, %p139
    %p141 = scmp.ne.s32.totalorder %s129, %s130
    %p142 = scmp.eq.s32.totalorder %s31, 1
    %p143 = por %p141, %p142
    %p145 = scmp.ne.s32.totalorder %s130, %s144
    %p146 = scmp.eq.s32.totalorder %s31, 0
    %p147 = por %p145, %p146
    %s149 = sadd.s32 %s148, 1
    %p152 = scmp.eq.s32.totalorder %s25, 1
    %p153 = scmp.ne.s32.totalorder %s148, %s150
    %p154 = scmp.eq.s32.totalorder %s25, 0
    %p155 = por %p153, %p154
    %p156 = scmp.ne.s32.totalorder %s148, %s150
    %p157 = scmp.eq.s32.totalorder %s30, 1
    %p158 = por %p156, %p157
    %p159 = scmp.ne.s32.totalorder %s150, %s151
    %p160 = scmp.eq.s32.totalorder %s30, 0
    %p161 = por %p159, %p160
    %p162 = scmp.ne.s32.totalorder %s150, %s151
    %p163 = scmp.eq.s32.totalorder %s31, 1
    %p164 = por %p162, %p163
    %p166 = scmp.ne.s32.totalorder %s151, %s165
    %p167 = scmp.eq.s32.totalorder %s31, 0
    %p168 = por %p166, %p167
    %s170 = sadd.s32 %s169, 1
    %p173 = scmp.eq.s32.totalorder %s25, 1
    %p174 = scmp.ne.s32.totalorder %s169, %s171
    %p175 = scmp.eq.s32.totalorder %s25, 0
    %p176 = por %p174, %p175
    %p177 = scmp.ne.s32.totalorder %s169, %s171
    %p178 = scmp.eq.s32.totalorder %s30, 1
    %p179 = por %p177, %p178
    %p180 = scmp.ne.s32.totalorder %s171, %s172
    %p181 = scmp.eq.s32.totalorder %s30, 0
    %p182 = por %p180, %p181
    %p183 = scmp.ne.s32.totalorder %s171, %s172
    %p184 = scmp.eq.s32.totalorder %s31, 1
    %p185 = por %p183, %p184
    %p187 = scmp.ne.s32.totalorder %s172, %s186
    %p188 = scmp.eq.s32.totalorder %s31, 0
    %p189 = por %p187, %p188
    %s191 = sadd.s32 %s190, 1
    %p194 = scmp.eq.s32.totalorder %s25, 1
    %p195 = scmp.ne.s32.totalorder %s190, %s192
    %p196 = scmp.eq.s32.totalorder %s25, 0
    %p197 = por %p195, %p196
    %p198 = scmp.ne.s32.totalorder %s190, %s192
    %p199 = scmp.eq.s32.totalorder %s30, 1
    %p200 = por %p198, %p199
    %p201 = scmp.ne.s32.totalorder %s192, %s193
    %p202 = scmp.eq.s32.totalorder %s30, 0
    %p203 = por %p201, %p202
    %p204 = scmp.ne.s32.totalorder %s192, %s193
    %p205 = scmp.eq.s32.totalorder %s31, 1
    %p206 = por %p204, %p205
    %p208 = scmp.ne.s32.totalorder %s193, %s207
    %p209 = scmp.eq.s32.totalorder %s31, 0
    %p210 = por %p208, %p209
    %s212 = sadd.s32 %s211, 1
    %p215 = scmp.eq.s32.totalorder %s25, 1
    %p216 = scmp.ne.s32.totalorder %s211, %s213
    %p217 = scmp.eq.s32.totalorder %s25, 0
    %p218 = por %p216, %p217
    %p219 = scmp.ne.s32.totalorder %s211, %s213
    %p220 = scmp.eq.s32.totalorder %s30, 1
    %p221 = por %p219, %p220
    %p222 = scmp.ne.s32.totalorder %s213, %s214
    %p223 = scmp.eq.s32.totalorder %s30, 0
    %p224 = por %p222, %p223
    %p225 = scmp.ne.s32.totalorder %s213, %s214
    %p226 = scmp.eq.s32.totalorder %s31, 1
    %p227 = por %p225, %p226
    %p229 = scmp.ne.s32.totalorder %s214, %s228
    %p230 = scmp.eq.s32.totalorder %s31, 0
    %p231 = por %p229, %p230
    %s233 = sadd.s32 %s232, 1
    %p236 = scmp.eq.s32.totalorder %s25, 1
    %p237 = scmp.ne.s32.totalorder %s232, %s234
    %p238 = scmp.eq.s32.totalorder %s25, 0
    %p239 = por %p237, %p238
    %p240 = scmp.ne.s32.totalorder %s232, %s234
    %p241 = scmp.eq.s32.totalorder %s30, 1
    %p242 = por %p240, %p241
    %p243 = scmp.ne.s32.totalorder %s234, %s235
    %p244 = scmp.eq.s32.totalorder %s30, 0
    %p245 = por %p243, %p244
    %p246 = scmp.ne.s32.totalorder %s234, %s235
    %p247 = scmp.eq.s32.totalorder %s31, 1
    %p248 = por %p246, %p247
    %p250 = scmp.ne.s32.totalorder %s235, %s249
    %p251 = scmp.eq.s32.totalorder %s31, 0
    %p252 = por %p250, %p251
    %s254 = sadd.s32 %s253, 1
    %p257 = scmp.eq.s32.totalorder %s25, 1
    %p258 = scmp.ne.s32.totalorder %s253, %s255
    %p259 = scmp.eq.s32.totalorder %s25, 0
    %p260 = por %p258, %p259
    %p261 = scmp.ne.s32.totalorder %s253, %s255
    %p262 = scmp.eq.s32.totalorder %s30, 1
    %p263 = por %p261, %p262
    %p264 = scmp.ne.s32.totalorder %s255, %s256
    %p265 = scmp.eq.s32.totalorder %s30, 0
    %p266 = por %p264, %p265
    %p267 = scmp.ne.s32.totalorder %s255, %s256
    %p268 = scmp.eq.s32.totalorder %s31, 1
    %p269 = por %p267, %p268
    %p271 = scmp.ne.s32.totalorder %s256, %s270
    %p272 = scmp.eq.s32.totalorder %s31, 0
    %p273 = por %p271, %p272
    %s275 = sadd.s32 %s274, 1
    %p278 = scmp.eq.s32.totalorder %s25, 1
    %p279 = scmp.ne.s32.totalorder %s274, %s276
    %p280 = scmp.eq.s32.totalorder %s25, 0
    %p281 = por %p279, %p280
    %p282 = scmp.ne.s32.totalorder %s274, %s276
    %p283 = scmp.eq.s32.totalorder %s30, 1
    %p284 = por %p282, %p283
    %p285 = scmp.ne.s32.totalorder %s276, %s277
    %p286 = scmp.eq.s32.totalorder %s30, 0
    %p287 = por %p285, %p286
    %p288 = scmp.ne.s32.totalorder %s276, %s277
    %p289 = scmp.eq.s32.totalorder %s31, 1
    %p290 = por %p288, %p289
    %p292 = scmp.ne.s32.totalorder %s277, %s291
    %p293 = scmp.eq.s32.totalorder %s31, 0
    %p294 = por %p292, %p293
    %s296 = sadd.s32 %s295, 1
    %p299 = scmp.eq.s32.totalorder %s25, 1
    %p300 = scmp.ne.s32.totalorder %s295, %s297
    %p301 = scmp.eq.s32.totalorder %s25, 0
    %p302 = por %p300, %p301
    %p303 = scmp.ne.s32.totalorder %s295, %s297
    %p304 = scmp.eq.s32.totalorder %s30, 1
    %p305 = por %p303, %p304
    %p306 = scmp.ne.s32.totalorder %s297, %s298
    %p307 = scmp.eq.s32.totalorder %s30, 0
    %p308 = por %p306, %p307
    %p309 = scmp.ne.s32.totalorder %s297, %s298
    %p310 = scmp.eq.s32.totalorder %s31, 1
    %p311 = por %p309, %p310
    %p313 = scmp.ne.s32.totalorder %s298, %s312
    %p314 = scmp.eq.s32.totalorder %s31, 0
    %p315 = por %p313, %p314
    %s317 = sadd.s32 %s316, 1
    %p320 = scmp.eq.s32.totalorder %s25, 1
    %p321 = scmp.ne.s32.totalorder %s316, %s318
    %p322 = scmp.eq.s32.totalorder %s25, 0
    %p323 = por %p321, %p322
    %p324 = scmp.ne.s32.totalorder %s316, %s318
    %p325 = scmp.eq.s32.totalorder %s30, 1
    %p326 = por %p324, %p325
    %p327 = scmp.ne.s32.totalorder %s318, %s319
    %p328 = scmp.eq.s32.totalorder %s30, 0
    %p329 = por %p327, %p328
    %p330 = scmp.ne.s32.totalorder %s318, %s319
    %p331 = scmp.eq.s32.totalorder %s31, 1
    %p332 = por %p330, %p331
    %p334 = scmp.ne.s32.totalorder %s319, %s333
    %p335 = scmp.eq.s32.totalorder %s31, 0
    %p336 = por %p334, %p335
    %s338 = sadd.s32 %s337, 1
    %p341 = scmp.eq.s32.totalorder %s25, 1
    %p342 = scmp.ne.s32.totalorder %s337, %s339
    %p343 = scmp.eq.s32.totalorder %s25, 0
    %p344 = por %p342, %p343
    %p345 = scmp.ne.s32.totalorder %s337, %s339
    %p346 = scmp.eq.s32.totalorder %s30, 1
    %p347 = por %p345, %p346
    %p348 = scmp.ne.s32.totalorder %s339, %s340
    %p349 = scmp.eq.s32.totalorder %s30, 0
    %p350 = por %p348, %p349
    %p351 = scmp.ne.s32.totalorder %s339, %s340
    %p352 = scmp.eq.s32.totalorder %s31, 1
    %p353 = por %p351, %p352
    %p355 = scmp.ne.s32.totalorder %s340, %s354
    %p356 = scmp.eq.s32.totalorder %s31, 0
    %p357 = por %p355, %p356
    %s359 = sadd.s32 %s358, 1
    %p362 = scmp.eq.s32.totalorder %s25, 1
    %p363 = scmp.ne.s32.totalorder %s358, %s360
    %p364 = scmp.eq.s32.totalorder %s25, 0
    %p365 = por %p363, %p364
    %p366 = scmp.ne.s32.totalorder %s358, %s360
    %p367 = scmp.eq.s32.totalorder %s30, 1
    %p368 = por %p366, %p367
    %p369 = scmp.ne.s32.totalorder %s360, %s361
    %p370 = scmp.eq.s32.totalorder %s30, 0
    %p371 = por %p369, %p370
    %p372 = scmp.ne.s32.totalorder %s360, %s361
    %p373 = scmp.eq.s32.totalorder %s31, 1
    %p374 = por %p372, %p373
    %p376 = scmp.ne.s32.totalorder %s361, %s375
    %p377 = scmp.eq.s32.totalorder %s31, 0
    %p378 = por %p376, %p377
    %s380 = sadd.s32 %s379, 1
    %p383 = scmp.eq.s32.totalorder %s25, 1
    %p384 = scmp.ne.s32.totalorder %s379, %s381
    %p385 = scmp.eq.s32.totalorder %s25, 0
    %p386 = por %p384, %p385
    %p387 = scmp.ne.s32.totalorder %s379, %s381
    %p388 = scmp.eq.s32.totalorder %s30, 1
    %p389 = por %p387, %p388
    %p390 = scmp.ne.s32.totalorder %s381, %s382
    %p391 = scmp.eq.s32.totalorder %s30, 0
    %p392 = por %p390, %p391
    %p393 = scmp.ne.s32.totalorder %s381, %s382
    %p394 = scmp.eq.s32.totalorder %s31, 1
    %p395 = por %p393, %p394
    %p397 = scmp.ne.s32.totalorder %s382, %s396
    %p398 = scmp.eq.s32.totalorder %s31, 0
    %p399 = por %p397, %p398
    %s401 = sadd.s32 %s400, 1
    %p404 = scmp.eq.s32.totalorder %s25, 1
    %p405 = scmp.ne.s32.totalorder %s400, %s402
    %p406 = scmp.eq.s32.totalorder %s25, 0
    %p407 = por %p405, %p406
    %p408 = scmp.ne.s32.totalorder %s400, %s402
    %p409 = scmp.eq.s32.totalorder %s30, 1
    %p410 = por %p408, %p409
    %p411 = scmp.ne.s32.totalorder %s402, %s403
    %p412 = scmp.eq.s32.totalorder %s30, 0
    %p413 = por %p411, %p412
    %p414 = scmp.ne.s32.totalorder %s402, %s403
    %p415 = scmp.eq.s32.totalorder %s31, 1
    %p416 = por %p414, %p415
    %p418 = scmp.ne.s32.totalorder %s403, %s417
    %p419 = scmp.eq.s32.totalorder %s31, 0
    %p420 = por %p418, %p419
    %s422 = sadd.s32 %s421, 1
    %p425 = scmp.eq.s32.totalorder %s25, 1
    %p426 = scmp.ne.s32.totalorder %s421, %s423
    %p427 = scmp.eq.s32.totalorder %s25, 0
    %p428 = por %p426, %p427
    %p429 = scmp.ne.s32.totalorder %s421, %s423
    %p430 = scmp.eq.s32.totalorder %s30, 1
    %p431 = por %p429, %p430
    %p432 = scmp.ne.s32.totalorder %s423, %s424
    %p433 = scmp.eq.s32.totalorder %s30, 0
    %p434 = por %p432, %p433
    %p435 = scmp.ne.s32.totalorder %s423, %s424
    %p436 = scmp.eq.s32.totalorder %s31, 1
    %p437 = por %p435, %p436
    %p439 = scmp.ne.s32.totalorder %s424, %s438
    %p440 = scmp.eq.s32.totalorder %s31, 0
    %p441 = por %p439, %p440
    %s442 = ssub.s32 %s25, %s32
    %p443 = scmp.eq.s32.totalorder %s442, 0
    %s445 = sadd.s32 %s444, 1
    %s446 = scalar_select %p443, %s444, %s445
    %p449 = pneg %p443
    %p450 = scmp.eq.s32.totalorder %s25, 1
    %p451 = por %p449, %p450
    %p452 = scmp.ne.s32.totalorder %s444, %s447
    %p453 = scmp.eq.s32.totalorder %s25, 0
    %p454 = por %p452, %p453
    %p455 = scmp.ne.s32.totalorder %s444, %s447
    %p456 = scmp.eq.s32.totalorder %s30, 1
    %p457 = por %p455, %p456
    %p458 = scmp.ne.s32.totalorder %s447, %s448
    %p459 = scmp.eq.s32.totalorder %s30, 0
    %p460 = por %p458, %p459
    %p461 = scmp.ne.s32.totalorder %s447, %s448
    %p462 = scmp.eq.s32.totalorder %s31, 1
    %p463 = por %p461, %p462
    %p465 = scmp.ne.s32.totalorder %s448, %s464
    %p466 = scmp.eq.s32.totalorder %s31, 0
    %p467 = por %p465, %p466
    %p468 = scmp.le.s32.totalorder 1, %s25
    %p469 = scmp.lt.s32.totalorder %s25, 3
    %p470 = pnand %p468, %p469
    %p471 = pneg %p470
    // Predicated region
    $region9: #{tpu_custom_call.1} parent=5 // pred_check
      _
    $region10: #{tpu_custom_call.1} parent=5 // pred_check_branch
      %473 = sbr.rel (%p470) target = $region12
    $region11: #{tpu_custom_call.1} parent=5 // pred_region
      %s474 = ssub.s32 %s25, 1
      // Predicated region
      $region13: #{tpu_custom_call.1} parent=11 // pred_check
        %p475 = pneg %p98
      $region14: #{tpu_custom_call.1} parent=11 // pred_check_branch
        %477 = sbr.rel (%p475) target = $region16
      $region15: #{tpu_custom_call.1} parent=11 // pred_region
        _
      $region16: #{tpu_custom_call.1} parent=11 // pred_fallthru
        _
      // Predicated region
      $region17: #{tpu_custom_call.1} parent=11 // pred_check
        %p478 = pneg %p119
      $region18: #{tpu_custom_call.1} parent=11 // pred_check_branch
        %480 = sbr.rel (%p478) target = $region20
      $region19: #{tpu_custom_call.1} parent=11 // pred_region
        _
      $region20: #{tpu_custom_call.1} parent=11 // pred_fallthru
        _
      // Predicated region
      $region21: #{tpu_custom_call.1} parent=11 // pred_check
        %p481 = pneg %p140
      $region22: #{tpu_custom_call.1} parent=11 // pred_check_branch
        %483 = sbr.rel (%p481) target = $region24
      $region23: #{tpu_custom_call.1} parent=11 // pred_region
        _
      $region24: #{tpu_custom_call.1} parent=11 // pred_fallthru
        _
      // Predicated region
      $region25: #{tpu_custom_call.1} parent=11 // pred_check
        %p484 = pneg %p161
      $region26: #{tpu_custom_call.1} parent=11 // pred_check_branch
        %486 = sbr.rel (%p484) target = $region28
      $region27: #{tpu_custom_call.1} parent=11 // pred_region
        _
      $region28: #{tpu_custom_call.1} parent=11 // pred_fallthru
        _
      // Predicated region
      $region29: #{tpu_custom_call.1} parent=11 // pred_check
        %p487 = pneg %p182
      $region30: #{tpu_custom_call.1} parent=11 // pred_check_branch
        %489 = sbr.rel (%p487) target = $region32
      $region31: #{tpu_custom_call.1} parent=11 // pred_region
        _
      $region32: #{tpu_custom_call.1} parent=11 // pred_fallthru
        _
      // Predicated region
      $region33: #{tpu_custom_call.1} parent=11 // pred_check
        %p490 = pneg %p203
      $region34: #{tpu_custom_call.1} parent=11 // pred_check_branch
        %492 = sbr.rel (%p490) target = $region36
      $region35: #{tpu_custom_call.1} parent=11 // pred_region
        _
      $region36: #{tpu_custom_call.1} parent=11 // pred_fallthru
        _
      // Predicated region
      $region37: #{tpu_custom_call.1} parent=11 // pred_check
        %p493 = pneg %p224
      $region38: #{tpu_custom_call.1} parent=11 // pred_check_branch
        %495 = sbr.rel (%p493) target = $region40
      $region39: #{tpu_custom_call.1} parent=11 // pred_region
        _
      $region40: #{tpu_custom_call.1} parent=11 // pred_fallthru
        _
      // Predicated region
      $region41: #{tpu_custom_call.1} parent=11 // pred_check
        %p496 = pneg %p245
      $region42: #{tpu_custom_call.1} parent=11 // pred_check_branch
        %498 = sbr.rel (%p496) target = $region44
      $region43: #{tpu_custom_call.1} parent=11 // pred_region
        _
      $region44: #{tpu_custom_call.1} parent=11 // pred_fallthru
        _
      // Predicated region
      $region45: #{tpu_custom_call.1} parent=11 // pred_check
        %p499 = pneg %p266
      $region46: #{tpu_custom_call.1} parent=11 // pred_check_branch
        %501 = sbr.rel (%p499) target = $region48
      $region47: #{tpu_custom_call.1} parent=11 // pred_region
        _
      $region48: #{tpu_custom_call.1} parent=11 // pred_fallthru
        _
      // Predicated region
      $region49: #{tpu_custom_call.1} parent=11 // pred_check
        %p502 = pneg %p287
      $region50: #{tpu_custom_call.1} parent=11 // pred_check_branch
        %504 = sbr.rel (%p502) target = $region52
      $region51: #{tpu_custom_call.1} parent=11 // pred_region
        _
      $region52: #{tpu_custom_call.1} parent=11 // pred_fallthru
        _
      // Predicated region
      $region53: #{tpu_custom_call.1} parent=11 // pred_check
        %p505 = pneg %p308
      $region54: #{tpu_custom_call.1} parent=11 // pred_check_branch
        %507 = sbr.rel (%p505) target = $region56
      $region55: #{tpu_custom_call.1} parent=11 // pred_region
        _
      $region56: #{tpu_custom_call.1} parent=11 // pred_fallthru
        _
      // Predicated region
      $region57: #{tpu_custom_call.1} parent=11 // pred_check
        %p508 = pneg %p329
      $region58: #{tpu_custom_call.1} parent=11 // pred_check_branch
        %510 = sbr.rel (%p508) target = $region60
      $region59: #{tpu_custom_call.1} parent=11 // pred_region
        _
      $region60: #{tpu_custom_call.1} parent=11 // pred_fallthru
        _
      // Predicated region
      $region61: #{tpu_custom_call.1} parent=11 // pred_check
        %p511 = pneg %p350
      $region62: #{tpu_custom_call.1} parent=11 // pred_check_branch
        %513 = sbr.rel (%p511) target = $region64
      $region63: #{tpu_custom_call.1} parent=11 // pred_region
        _
      $region64: #{tpu_custom_call.1} parent=11 // pred_fallthru
        _
      // Predicated region
      $region65: #{tpu_custom_call.1} parent=11 // pred_check
        %p514 = pneg %p371
      $region66: #{tpu_custom_call.1} parent=11 // pred_check_branch
        %516 = sbr.rel (%p514) target = $region68
      $region67: #{tpu_custom_call.1} parent=11 // pred_region
        _
      $region68: #{tpu_custom_call.1} parent=11 // pred_fallthru
        _
      // Predicated region
      $region69: #{tpu_custom_call.1} parent=11 // pred_check
        %p517 = pneg %p392
      $region70: #{tpu_custom_call.1} parent=11 // pred_check_branch
        %519 = sbr.rel (%p517) target = $region72
      $region71: #{tpu_custom_call.1} parent=11 // pred_region
        _
      $region72: #{tpu_custom_call.1} parent=11 // pred_fallthru
        _
      // Predicated region
      $region73: #{tpu_custom_call.1} parent=11 // pred_check
        %p520 = pneg %p413
      $region74: #{tpu_custom_call.1} parent=11 // pred_check_branch
        %522 = sbr.rel (%p520) target = $region76
      $region75: #{tpu_custom_call.1} parent=11 // pred_region
        _
      $region76: #{tpu_custom_call.1} parent=11 // pred_fallthru
        _
      // Predicated region
      $region77: #{tpu_custom_call.1} parent=11 // pred_check
        %p523 = pneg %p434
      $region78: #{tpu_custom_call.1} parent=11 // pred_check_branch
        %525 = sbr.rel (%p523) target = $region80
      $region79: #{tpu_custom_call.1} parent=11 // pred_region
        _
      $region80: #{tpu_custom_call.1} parent=11 // pred_fallthru
        _
    $region12: #{tpu_custom_call.1} parent=5 // pred_fallthru
      _
    %p526 = scmp.lt.s32.totalorder %s25, 2
    // Predicated region
    $region81: #{tpu_custom_call.1} parent=5 // pred_check
      %p527 = pneg %p526
    $region82: #{tpu_custom_call.1} parent=5 // pred_check_branch
      %529 = sbr.rel (%p527) target = $region84
    $region83: #{tpu_custom_call.1} parent=5 // pred_region
      // Predicated region
      $region85: #{tpu_custom_call.1} parent=83 // pred_check
        %p530 = pneg %p45
      $region86: #{tpu_custom_call.1} parent=83 // pred_check_branch
        %532 = sbr.rel (%p530) target = $region88
      $region87: #{tpu_custom_call.1} parent=83 // pred_region
        %p533 = scmp.lt.s32.totalorder %s25, 1
        %s534 = scalar_select %p533, %s25, 1
        %s535 = smul.addr %s534, 2
        %s536 = smul.addr %s535, 8
        %s537 = scalar_lea.vmem %s0, %s536
      $region88: #{tpu_custom_call.1} parent=83 // pred_fallthru
        _
      // Predicated region
      $region89: #{tpu_custom_call.1} parent=83 // pred_check
        %p538 = pneg %p71
      $region90: #{tpu_custom_call.1} parent=83 // pred_check_branch
        %540 = sbr.rel (%p538) target = $region92
      $region91: #{tpu_custom_call.1} parent=83 // pred_region
        %p541 = scmp.lt.s32.totalorder %s25, 1
        %s542 = scalar_select %p541, %s25, 1
        %s543 = smul.addr %s542, 2
        %s544 = smul.addr %s543, 8
        %s545 = scalar_lea.vmem %s1, %s544
      $region92: #{tpu_custom_call.1} parent=83 // pred_fallthru
        _
    $region84: #{tpu_custom_call.1} parent=5 // pred_fallthru
      _
    %p546 = scmp.le.s32.totalorder 1, %s25
    %p547 = scmp.lt.s32.totalorder %s25, 3
    %p548 = pnand %p546, %p547
    %p549 = pneg %p548
    // Predicated region
    $region93: #{tpu_custom_call.1} parent=5 // pred_check
      _
    $region94: #{tpu_custom_call.1} parent=5 // pred_check_branch
      %551 = sbr.rel (%p548) target = $region96
    $region95: #{tpu_custom_call.1} parent=5 // pred_region
      %s552 = ssub.s32 %s25, 1
      %p553 = scmp.lt.s32.totalorder %s30, 1
      %s554 = scalar_select %p553, %s30, 1
      %s555 = smul.addr %s554, 2
      %s556 = smul.addr %s555, 8
      %s557 = scalar_lea.vmem %s0, %s556
      %p558 = pneg %p51
      %p559 = pneg %p48
      %p560 = scmp.lt.s32.totalorder %s30, 1
      %s561 = scalar_select %p560, %s30, 1
      %s562 = smul.addr %s561, 2
      %s563 = smul.addr %s562, 8
      %s564 = scalar_lea.vmem %s1, %s563
      %p565 = pneg %p77
      %p566 = pneg %p74
      %p567 = pneg %p98
      %p568 = pneg %p95
      %p569 = pneg %p119
      %p570 = pneg %p116
      %p571 = pneg %p140
      %p572 = pneg %p137
      %p573 = pneg %p161
      %p574 = pneg %p158
      %p575 = pneg %p182
      %p576 = pneg %p179
      %p577 = pneg %p203
      %p578 = pneg %p200
      %p579 = pneg %p224
      %p580 = pneg %p221
      %p581 = pneg %p245
      %p582 = pneg %p242
      %p583 = pneg %p266
      %p584 = pneg %p263
      %p585 = pneg %p287
      %p586 = pneg %p284
      %p587 = pneg %p308
      %p588 = pneg %p305
      %p589 = pneg %p329
      %p590 = pneg %p326
      %p591 = pneg %p350
      %p592 = pneg %p347
      %p593 = pneg %p371
      %p594 = pneg %p368
      %p595 = pneg %p392
      %p596 = pneg %p389
      %p597 = pneg %p413
      %p598 = pneg %p410
      %p599 = pneg %p434
      %p600 = pneg %p431
      %p601 = pneg %p460
      %p602 = pneg %p457
      %p603 = scmp.lt.s32.totalorder %s30, 1
      %s604 = scalar_select %p603, %s30, 1
      %s605 = smul.addr %s604, 3
      %s606 = smul.addr %s605, 8
      %s607 = scalar_lea.vmem %s19, %s606
      %p608 = scmp.lt.s32.totalorder %s30, 1
      %s609 = scalar_select %p608, %s30, 1
      %s610 = smul.addr %s609, 2
      %s611 = smul.addr %s610, 8
      %s612 = scalar_lea.vmem %s0, %s611
      %p613 = scmp.lt.s32.totalorder %s30, 1
      %s614 = scalar_select %p613, %s30, 1
      %s615 = smul.addr %s614, 2
      %s616 = smul.addr %s615, 8
      %s617 = scalar_lea.vmem %s1, %s616
      %p618 = scmp.lt.s32.totalorder %s30, 1
      %s619 = scalar_select %p618, %s30, 1
      %s620 = smul.addr %s619, 3
      %s621 = smul.addr %s620, 8
      %s622 = scalar_lea.vmem %s19, %s621
      %v624 = vld [vmem:[%s612] sm:$0xff]
      %v625 = vld [vmem:[%s612 + $0x8] sm:$0xff]
      %v626 = vpack.c.bf16 %v625, %v624
      %v627 = vld [vmem:[%s2] sm:$0xf]
      %v628 = vld [vmem:[%s2 + $0x4] sm:$0xf]
      %v629 = vld [vmem:[%s2 + $0x8] sm:$0xf]
      %v630 = vld [vmem:[%s3] sm:$0x1]
      %v632 = vlaneseq
      %v633 = vshrl.u32 %v632, 7
      %v634 = vsub.s32 0, %v633
      %v635 = vrot.slane %v630, %v634
      %v640 = vunpack.c.l.b16 %v627
      %v641 = vunpack.c.l.b16 %v628
      %v642 = vunpack.c.l.b16 %v629
      %v643 = vpack.c.b16 %v641, %v640
      %v644 = vpack.c.b16 %v642, %v642
      %vm646 = vcmask 195584
      %v648 = vsel %vm646, %v626, 0
      %vm650 = vcmask 1043456
      %v652 = vsel %vm650, %v644, 0
      %654 = vmatprep.subr.bf16.mxu0 0
      %655 = vmatpush1.bf16.msra.mxu0 0
      %656 = vmatprep.subr.bf16.mxu0 0
      %657 = vmatpush1.bf16.msra.mxu0 0
      %658 = vmatprep.subr.bf16.mxu0 0
      %659 = vmatpush1.bf16.msra.mxu0 0
      %660 = vmatprep.subr.bf16.mxu0 0
      %661 = vmatpush1.bf16.msra.mxu0 0
      %662 = vmatprep.subr.bf16.mxu0 0
      %663 = vmatpush1.bf16.msra.mxu0 0
      %664 = vmatprep.subr.bf16.mxu0 0
      %665 = vmatpush1.bf16.msra.mxu0 0
      %666 = vmatprep.subr.bf16.mxu0 0
      %667 = vmatpush1.bf16.msra.mxu0 %v652
      %668 = vmatprep.subr.bf16.mxu0 0
      %669 = vmatpush1.bf16.msra.mxu0 %v643
      %670 = vmatprep.subr.bf16.mxu0 0
      %671 = vmatpush2.bf16.msra.mxu0 0
      %672 = vmatprep.subr.bf16.mxu0 0
      %673 = vmatpush2.bf16.msra.mxu0 0
      %674 = vmatprep.subr.bf16.mxu0 0
      %675 = vmatpush2.bf16.msra.mxu0 0
      %676 = vmatprep.subr.bf16.mxu0 0
      %677 = vmatpush2.bf16.msra.mxu0 0
      %678 = vmatprep.subr.bf16.mxu0 0
      %679 = vmatpush2.bf16.msra.mxu0 0
      %680 = vmatprep.subr.bf16.mxu0 0
      %681 = vmatpush2.bf16.msra.mxu0 0
      %682 = vmatprep.subr.bf16.mxu0 0
      %683 = vmatpush2.bf16.msra.mxu0 0
      %684 = vmatprep.subr.bf16.mxu0 0
      %685 = vmatpush2.bf16.msra.mxu0 0
      %686 = vmatprep.mubr.bf16.mxu0 0
      %687 = vmatmul.mubr.bf16.gmra.mxu0 %v648
      %v688 = vpop.f32.mrf.mxu0
      %v689 = vadd.f32 %v635, %v688
      %v690 = vpop.f32.mrf.mxu0
      %v691 = vpop.f32.mrf.mxu0
      %v692 = vadd.f32 %v635, %v691
      %v693 = vpop.f32.mrf.mxu0
      %694 = vdwg.mxu0
      %v695 = vld [vmem:[%s4] sm:$0x1]
      %v696 = vld [vmem:[%s5] sm:$0x1]
      %v697 = vadd.f32 %v695, %v696
      %vm698 = vcmask 385024
      %699 = vst.msk [vmem:[#allocation2] sm:$0x1] %vm698, %v697
      %v700 = vld [vmem:[%s617] sm:$0xff]
      %v701 = vld [vmem:[%s617 + $0x8] sm:$0xff]
      %v702 = vadd.f32 %v689, %v700
      %v703 = vadd.f32 %v692, %v701
      %vm704 = vcmask 392192
      %705 = vst.msk [vmem:[#allocation2 + $0x1] sm:$0xff] %vm704, %v702
      %706 = vst.msk [vmem:[#allocation2 + $0x9] sm:$0xff] %vm704, %v703
      %v707 = vld [vmem:[#allocation2] sm:$0xff]
      %v708 = vld [vmem:[#allocation2 + $0x8] sm:$0xff]
      %v709 = vld [vmem:[#allocation2 + $0x10] sm:$0x1]
      %v710 = vld [vmem:[%s6] sm:$0x1]
      %v711 = vld [vmem:[%s7] sm:$0x1]
      %v712 = vsel %vm704, %v707, 0.0
      %713 = vadd.xlane.f32.xlu0 %v712
      %v714 = vpop.xlane.xlu0 %713
      %v715 = vsel %vm704, %v708, 0.0
      %716 = vadd.xlane.f32.xlu0 %v715
      %v717 = vpop.xlane.xlu0 %716
      %v718 = vsel %vm698, %v709, 0.0
      %719 = vadd.xlane.f32.xlu0 %v718
      %v720 = vpop.xlane.xlu0 %719
      %v721 = vrcp.pop 48.0
      %v722 = vmul.f32 %v714, %v721
      %v723 = vmul.f32 %v717, %v721
      %v724 = vmul.f32 %v720, %v721
      %v725 = vsub.f32 %v707, %v722
      %v726 = vsub.f32 %v708, %v723
      %v727 = vsub.f32 %v709, %v724
      %v728 = vmul.f32 %v725, %v725
      %v729 = vmul.f32 %v726, %v726
      %v730 = vmul.f32 %v727, %v727
      %v731 = vsel %vm704, %v728, 0.0
      %732 = vadd.xlane.f32.xlu0 %v731
      %v733 = vpop.xlane.xlu0 %732
      %v734 = vsel %vm704, %v729, 0.0
      %735 = vadd.xlane.f32.xlu0 %v734
      %v736 = vpop.xlane.xlu0 %735
      %v737 = vsel %vm698, %v730, 0.0
      %738 = vadd.xlane.f32.xlu0 %v737
      %v739 = vpop.xlane.xlu0 %738
      %v740 = vmul.f32 %v733, %v721
      %v741 = vmul.f32 %v736, %v721
      %v742 = vmul.f32 %v739, %v721
      %v743 = vadd.f32 %v740, 1e-05
      %v744 = vadd.f32 %v741, 1e-05
      %v745 = vadd.f32 %v742, 1e-05
      %v746 = vrsqrt.pop %v743
      %v747 = vrsqrt.pop %v744
      %v748 = vrsqrt.pop %v745
      %v749 = vmul.f32 %v725, %v746
      %v750 = vmul.f32 %v726, %v747
      %v751 = vmul.f32 %v727, %v748
      %v753 = vlaneseq
      %v754 = vshrl.u32 %v753, 7
      %v755 = vsub.s32 0, %v754
      %v756 = vrot.slane %v710, %v755
      %v758 = vmul.f32 %v749, %v756
      %v759 = vmul.f32 %v750, %v756
      %v760 = vmul.f32 %v751, %v756
      %v762 = vlaneseq
      %v763 = vshrl.u32 %v762, 7
      %v764 = vsub.s32 0, %v763
      %v765 = vrot.slane %v711, %v764
      %v767 = vadd.f32 %v758, %v765
      %v768 = vadd.f32 %v759, %v765
      %v769 = vadd.f32 %v760, %v765
      %v770 = vpack.c.bf16 %v768, %v767
      %v771 = vpack.c.bf16 %v769, %v769
      %v772 = vld [vmem:[%s8] sm:$0xf]
      %v773 = vld [vmem:[%s8 + $0x4] sm:$0xf]
      %v774 = vld [vmem:[%s8 + $0x8] sm:$0xf]
      %v775 = vld [vmem:[%s8 + $0xc] sm:$0xf]
      %v776 = vld [vmem:[%s8 + $0x10] sm:$0xf]
      %v777 = vld [vmem:[%s8 + $0x14] sm:$0xf]
      %v778 = vld [vmem:[%s8 + $0x18] sm:$0xf]
      %v779 = vld [vmem:[%s8 + $0x1c] sm:$0xf]
      %v780 = vld [vmem:[%s8 + $0x20] sm:$0xf]
      %v781 = vld [vmem:[%s8 + $0x24] sm:$0xf]
      %v782 = vld [vmem:[%s8 + $0x28] sm:$0xf]
      %v783 = vld [vmem:[%s8 + $0x2c] sm:$0xf]
      %v784 = vld [vmem:[%s8 + $0x30] sm:$0xf]
      %v785 = vld [vmem:[%s8 + $0x34] sm:$0xf]
      %v786 = vld [vmem:[%s8 + $0x38] sm:$0xf]
      %v787 = vld [vmem:[%s8 + $0x3c] sm:$0xf]
      %v788 = vld [vmem:[%s8 + $0x40] sm:$0xf]
      %v789 = vld [vmem:[%s8 + $0x44] sm:$0xf]
      %v790 = vld [vmem:[%s8 + $0x48] sm:$0xf]
      %v791 = vld [vmem:[%s8 + $0x4c] sm:$0xf]
      %v792 = vld [vmem:[%s8 + $0x50] sm:$0xf]
      %v793 = vld [vmem:[%s8 + $0x54] sm:$0xf]
      %v794 = vld [vmem:[%s8 + $0x58] sm:$0xf]
      %v795 = vld [vmem:[%s8 + $0x5c] sm:$0xf]
      %v796 = vld [vmem:[%s8 + $0x60] sm:$0xf]
      %v797 = vld [vmem:[%s8 + $0x64] sm:$0xf]
      %v798 = vld [vmem:[%s8 + $0x68] sm:$0xf]
      %v799 = vld [vmem:[%s8 + $0x6c] sm:$0xf]
      %v800 = vld [vmem:[%s8 + $0x70] sm:$0xf]
      %v801 = vld [vmem:[%s8 + $0x74] sm:$0xf]
      %v802 = vld [vmem:[%s8 + $0x78] sm:$0xf]
      %v803 = vld [vmem:[%s8 + $0x7c] sm:$0xf]
      %v804 = vld [vmem:[%s8 + $0x80] sm:$0xf]
      %v805 = vld [vmem:[%s8 + $0x84] sm:$0xf]
      %v806 = vld [vmem:[%s8 + $0x88] sm:$0xf]
      %v807 = vld [vmem:[%s8 + $0x8c] sm:$0xf]
      %v808 = vld [vmem:[%s8 + $0x90] sm:$0xf]
      %v809 = vld [vmem:[%s8 + $0x94] sm:$0xf]
      %v810 = vld [vmem:[%s8 + $0x98] sm:$0xf]
      %v811 = vld [vmem:[%s8 + $0x9c] sm:$0xf]
      %v812 = vld [vmem:[%s8 + $0xa0] sm:$0xf]
      %v813 = vld [vmem:[%s8 + $0xa4] sm:$0xf]
      %v814 = vld [vmem:[%s8 + $0xa8] sm:$0xf]
      %v815 = vld [vmem:[%s8 + $0xac] sm:$0xf]
      %v816 = vld [vmem:[%s8 + $0xb0] sm:$0xf]
      %v817 = vld [vmem:[%s8 + $0xb4] sm:$0xf]
      %v818 = vld [vmem:[%s8 + $0xb8] sm:$0xf]
      %v819 = vld [vmem:[%s8 + $0xbc] sm:$0xf]
      %v820 = vld [vmem:[%s8 + $0xc0] sm:$0xf]
      %v821 = vld [vmem:[%s8 + $0xc4] sm:$0xf]
      %v822 = vld [vmem:[%s8 + $0xc8] sm:$0xf]
      %v823 = vld [vmem:[%s8 + $0xcc] sm:$0xf]
      %v824 = vld [vmem:[%s8 + $0xd0] sm:$0xf]
      %v825 = vld [vmem:[%s8 + $0xd4] sm:$0xf]
      %v826 = vld [vmem:[%s8 + $0xd8] sm:$0xf]
      %v827 = vld [vmem:[%s8 + $0xdc] sm:$0xf]
      %v828 = vld [vmem:[%s8 + $0xe0] sm:$0xf]
      %v829 = vld [vmem:[%s8 + $0xe4] sm:$0xf]
      %v830 = vld [vmem:[%s8 + $0xe8] sm:$0xf]
      %v831 = vld [vmem:[%s8 + $0xec] sm:$0xf]
      %v832 = vld [vmem:[%s8 + $0xf0] sm:$0xf]
      %v833 = vld [vmem:[%s8 + $0xf4] sm:$0xf]
      %v834 = vld [vmem:[%s8 + $0xf8] sm:$0xf]
      %v835 = vld [vmem:[%s8 + $0xfc] sm:$0xf]
      %v836 = vld [vmem:[%s8 + $0x100] sm:$0xf]
      %v837 = vld [vmem:[%s8 + $0x104] sm:$0xf]
      %v838 = vld [vmem:[%s8 + $0x108] sm:$0xf]
      %v839 = vld [vmem:[%s8 + $0x10c] sm:$0xf]
      %v840 = vld [vmem:[%s8 + $0x110] sm:$0xf]
      %v841 = vld [vmem:[%s8 + $0x114] sm:$0xf]
      %v842 = vld [vmem:[%s8 + $0x118] sm:$0xf]
      %v843 = vld [vmem:[%s8 + $0x11c] sm:$0xf]
      %v844 = vld [vmem:[%s8 + $0x120] sm:$0xf]
      %v845 = vld [vmem:[%s8 + $0x124] sm:$0xf]
      %v846 = vld [vmem:[%s8 + $0x128] sm:$0xf]
      %v847 = vld [vmem:[%s8 + $0x12c] sm:$0xf]
      %v848 = vld [vmem:[%s8 + $0x130] sm:$0xf]
      %v849 = vld [vmem:[%s8 + $0x134] sm:$0xf]
      %v850 = vld [vmem:[%s8 + $0x138] sm:$0xf]
      %v851 = vld [vmem:[%s8 + $0x13c] sm:$0xf]
      %v852 = vld [vmem:[%s8 + $0x140] sm:$0xf]
      %v853 = vld [vmem:[%s8 + $0x144] sm:$0xf]
      %v854 = vld [vmem:[%s8 + $0x148] sm:$0xf]
      %v855 = vld [vmem:[%s8 + $0x14c] sm:$0xf]
      %v856 = vld [vmem:[%s8 + $0x150] sm:$0xf]
      %v857 = vld [vmem:[%s8 + $0x154] sm:$0xf]
      %v858 = vld [vmem:[%s8 + $0x158] sm:$0xf]
      %v859 = vld [vmem:[%s8 + $0x15c] sm:$0xf]
      %v860 = vld [vmem:[%s8 + $0x160] sm:$0xf]
      %v861 = vld [vmem:[%s8 + $0x164] sm:$0xf]
      %v862 = vld [vmem:[%s8 + $0x168] sm:$0xf]
      %v863 = vld [vmem:[%s8 + $0x16c] sm:$0xf]
      %v864 = vld [vmem:[%s8 + $0x170] sm:$0xf]
      %v865 = vld [vmem:[%s8 + $0x174] sm:$0xf]
      %v866 = vld [vmem:[%s8 + $0x178] sm:$0xf]
      %v867 = vld [vmem:[%s8 + $0x17c] sm:$0xf]
      %v868 = vld [vmem:[%s8 + $0x180] sm:$0xf]
      %v869 = vld [vmem:[%s8 + $0x184] sm:$0xf]
      %v870 = vld [vmem:[%s8 + $0x188] sm:$0xf]
      %v871 = vld [vmem:[%s8 + $0x18c] sm:$0xf]
      %v872 = vld [vmem:[%s8 + $0x190] sm:$0xf]
      %v873 = vld [vmem:[%s8 + $0x194] sm:$0xf]
      %v874 = vld [vmem:[%s8 + $0x198] sm:$0xf]
      %v875 = vld [vmem:[%s8 + $0x19c] sm:$0xf]
      %v876 = vld [vmem:[%s8 + $0x1a0] sm:$0xf]
      %v877 = vld [vmem:[%s8 + $0x1a4] sm:$0xf]
      %v878 = vld [vmem:[%s8 + $0x1a8] sm:$0xf]
      %v879 = vld [vmem:[%s8 + $0x1ac] sm:$0xf]
      %v886 = vunpack.c.l.b16 %v772
      %v887 = vunpack.c.l.b16 %v773
      %v888 = vunpack.c.l.b16 %v774
      %v889 = vunpack.c.l.b16 %v775
      %v890 = vunpack.c.l.b16 %v776
      %v891 = vunpack.c.l.b16 %v777
      %v892 = vpack.c.b16 %v887, %v886
      %v893 = vpack.c.b16 %v889, %v888
      %v894 = vpack.c.b16 %v891, %v890
      %v899 = vsel %vm704, %v770, 0
      %v902 = vsel %vm704, %v771, 0
      %904 = vmatprep.subr.bf16.mxu0 0
      %905 = vmatpush1.bf16.msra.mxu0 0
      %906 = vmatprep.subr.bf16.mxu0 0
      %907 = vmatpush1.bf16.msra.mxu0 0
      %908 = vmatprep.subr.bf16.mxu0 0
      %909 = vmatpush1.bf16.msra.mxu0 0
      %910 = vmatprep.subr.bf16.mxu0 0
      %911 = vmatpush1.bf16.msra.mxu0 0
      %912 = vmatprep.subr.bf16.mxu0 0
      %913 = vmatpush1.bf16.msra.mxu0 0
      %914 = vmatprep.subr.bf16.mxu0 0
      %915 = vmatpush1.bf16.msra.mxu0 %v894
      %916 = vmatprep.subr.bf16.mxu0 0
      %917 = vmatpush1.bf16.msra.mxu0 %v893
      %918 = vmatprep.subr.bf16.mxu0 0
      %919 = vmatpush1.bf16.msra.mxu0 %v892
      %920 = vmatprep.subr.bf16.mxu0 0
      %921 = vmatpush2.bf16.msra.mxu0 0
      %922 = vmatprep.subr.bf16.mxu0 0
      %923 = vmatpush2.bf16.msra.mxu0 0
      %924 = vmatprep.subr.bf16.mxu0 0
      %925 = vmatpush2.bf16.msra.mxu0 0
      %926 = vmatprep.subr.bf16.mxu0 0
      %927 = vmatpush2.bf16.msra.mxu0 0
      %928 = vmatprep.subr.bf16.mxu0 0
      %929 = vmatpush2.bf16.msra.mxu0 0
      %930 = vmatprep.subr.bf16.mxu0 0
      %931 = vmatpush2.bf16.msra.mxu0 0
      %932 = vmatprep.subr.bf16.mxu0 0
      %933 = vmatpush2.bf16.msra.mxu0 0
      %934 = vmatprep.subr.bf16.mxu0 0
      %935 = vmatpush2.bf16.msra.mxu0 0
      %936 = vmatprep.mubr.bf16.mxu0 0
      %937 = vmatmul.mubr.bf16.gmra.mxu0 %v899
      %v938 = vpop.f32.mrf.mxu0
      %v939 = vadd.f32 0.0, %v938
      %v940 = vpop.f32.mrf.mxu0
      %v941 = vpop.f32.mrf.mxu0
      %v942 = vadd.f32 0.0, %v941
      %v943 = vpop.f32.mrf.mxu0
      %944 = vmatprep.mubr.bf16.mxu0 0
      %945 = vmatmul.mubr.bf16.gmra.mxu0 %v902
      %v946 = vpop.f32.mrf.mxu0
      %v947 = vadd.f32 0.0, %v946
      %v948 = vpop.f32.mrf.mxu0
      %v949 = vpop.f32.mrf.mxu0
      %v950 = vpop.f32.mrf.mxu0
      %951 = vdwg.mxu0
      %v958 = vunpack.c.l.b16 %v778
      %v959 = vunpack.c.l.b16 %v779
      %v960 = vunpack.c.l.b16 %v780
      %v961 = vunpack.c.l.b16 %v781
      %v962 = vunpack.c.l.b16 %v782
      %v963 = vunpack.c.l.b16 %v783
      %v964 = vpack.c.b16 %v959, %v958
      %v965 = vpack.c.b16 %v961, %v960
      %v966 = vpack.c.b16 %v963, %v962
      %970 = vmatprep.subr.bf16.mxu0 0
      %971 = vmatpush1.bf16.msra.mxu0 0
      %972 = vmatprep.subr.bf16.mxu0 0
      %973 = vmatpush1.bf16.msra.mxu0 0
      %974 = vmatprep.subr.bf16.mxu0 0
      %975 = vmatpush1.bf16.msra.mxu0 0
      %976 = vmatprep.subr.bf16.mxu0 0
      %977 = vmatpush1.bf16.msra.mxu0 0
      %978 = vmatprep.subr.bf16.mxu0 0
      %979 = vmatpush1.bf16.msra.mxu0 0
      %980 = vmatprep.subr.bf16.mxu0 0
      %981 = vmatpush1.bf16.msra.mxu0 %v966
      %982 = vmatprep.subr.bf16.mxu0 0
      %983 = vmatpush1.bf16.msra.mxu0 %v965
      %984 = vmatprep.subr.bf16.mxu0 0
      %985 = vmatpush1.bf16.msra.mxu0 %v964
      %986 = vmatprep.subr.bf16.mxu0 0
      %987 = vmatpush2.bf16.msra.mxu0 0
      %988 = vmatprep.subr.bf16.mxu0 0
      %989 = vmatpush2.bf16.msra.mxu0 0
      %990 = vmatprep.subr.bf16.mxu0 0
      %991 = vmatpush2.bf16.msra.mxu0 0
      %992 = vmatprep.subr.bf16.mxu0 0
      %993 = vmatpush2.bf16.msra.mxu0 0
      %994 = vmatprep.subr.bf16.mxu0 0
      %995 = vmatpush2.bf16.msra.mxu0 0
      %996 = vmatprep.subr.bf16.mxu0 0
      %997 = vmatpush2.bf16.msra.mxu0 0
      %998 = vmatprep.subr.bf16.mxu0 0
      %999 = vmatpush2.bf16.msra.mxu0 0
      %1000 = vmatprep.subr.bf16.mxu0 0
      %1001 = vmatpush2.bf16.msra.mxu0 0
      %1002 = vmatprep.mubr.bf16.mxu0 0
      %1003 = vmatmul.mubr.bf16.gmra.mxu0 %v899
      %v1004 = vpop.f32.mrf.mxu0
      %v1005 = vadd.f32 0.0, %v1004
      %v1006 = vpop.f32.mrf.mxu0
      %v1007 = vpop.f32.mrf.mxu0
      %v1008 = vadd.f32 0.0, %v1007
      %v1009 = vpop.f32.mrf.mxu0
      %1010 = vmatprep.mubr.bf16.mxu0 0
      %1011 = vmatmul.mubr.bf16.gmra.mxu0 %v902
      %v1012 = vpop.f32.mrf.mxu0
      %v1013 = vadd.f32 0.0, %v1012
      %v1014 = vpop.f32.mrf.mxu0
      %v1015 = vpop.f32.mrf.mxu0
      %v1016 = vpop.f32.mrf.mxu0
      %1017 = vdwg.mxu0
      %v1024 = vunpack.c.l.b16 %v784
      %v1025 = vunpack.c.l.b16 %v785
      %v1026 = vunpack.c.l.b16 %v786
      %v1027 = vunpack.c.l.b16 %v787
      %v1028 = vunpack.c.l.b16 %v788
      %v1029 = vunpack.c.l.b16 %v789
      %v1030 = vpack.c.b16 %v1025, %v1024
      %v1031 = vpack.c.b16 %v1027, %v1026
      %v1032 = vpack.c.b16 %v1029, %v1028
      %1036 = vmatprep.subr.bf16.mxu0 0
      %1037 = vmatpush1.bf16.msra.mxu0 0
      %1038 = vmatprep.subr.bf16.mxu0 0
      %1039 = vmatpush1.bf16.msra.mxu0 0
      %1040 = vmatprep.subr.bf16.mxu0 0
      %1041 = vmatpush1.bf16.msra.mxu0 0
      %1042 = vmatprep.subr.bf16.mxu0 0
      %1043 = vmatpush1.bf16.msra.mxu0 0
      %1044 = vmatprep.subr.bf16.mxu0 0
      %1045 = vmatpush1.bf16.msra.mxu0 0
      %1046 = vmatprep.subr.bf16.mxu0 0
      %1047 = vmatpush1.bf16.msra.mxu0 %v1032
      %1048 = vmatprep.subr.bf16.mxu0 0
      %1049 = vmatpush1.bf16.msra.mxu0 %v1031
      %1050 = vmatprep.subr.bf16.mxu0 0
      %1051 = vmatpush1.bf16.msra.mxu0 %v1030
      %1052 = vmatprep.subr.bf16.mxu0 0
      %1053 = vmatpush2.bf16.msra.mxu0 0
      %1054 = vmatprep.subr.bf16.mxu0 0
      %1055 = vmatpush2.bf16.msra.mxu0 0
      %1056 = vmatprep.subr.bf16.mxu0 0
      %1057 = vmatpush2.bf16.msra.mxu0 0
      %1058 = vmatprep.subr.bf16.mxu0 0
      %1059 = vmatpush2.bf16.msra.mxu0 0
      %1060 = vmatprep.subr.bf16.mxu0 0
      %1061 = vmatpush2.bf16.msra.mxu0 0
      %1062 = vmatprep.subr.bf16.mxu0 0
      %1063 = vmatpush2.bf16.msra.mxu0 0
      %1064 = vmatprep.subr.bf16.mxu0 0
      %1065 = vmatpush2.bf16.msra.mxu0 0
      %1066 = vmatprep.subr.bf16.mxu0 0
      %1067 = vmatpush2.bf16.msra.mxu0 0
      %1068 = vmatprep.mubr.bf16.mxu0 0
      %1069 = vmatmul.mubr.bf16.gmra.mxu0 %v899
      %v1070 = vpop.f32.mrf.mxu0
      %v1071 = vadd.f32 0.0, %v1070
      %v1072 = vpop.f32.mrf.mxu0
      %v1073 = vpop.f32.mrf.mxu0
      %v1074 = vadd.f32 0.0, %v1073
      %v1075 = vpop.f32.mrf.mxu0
      %1076 = vmatprep.mubr.bf16.mxu0 0
      %1077 = vmatmul.mubr.bf16.gmra.mxu0 %v902
      %v1078 = vpop.f32.mrf.mxu0
      %v1079 = vadd.f32 0.0, %v1078
      %v1080 = vpop.f32.mrf.mxu0
      %v1081 = vpop.f32.mrf.mxu0
      %v1082 = vpop.f32.mrf.mxu0
      %1083 = vdwg.mxu0
      %v1090 = vunpack.c.l.b16 %v790
      %v1091 = vunpack.c.l.b16 %v791
      %v1092 = vunpack.c.l.b16 %v792
      %v1093 = vunpack.c.l.b16 %v793
      %v1094 = vunpack.c.l.b16 %v794
      %v1095 = vunpack.c.l.b16 %v795
      %v1096 = vpack.c.b16 %v1091, %v1090
      %v1097 = vpack.c.b16 %v1093, %v1092
      %v1098 = vpack.c.b16 %v1095, %v1094
      %1102 = vmatprep.subr.bf16.mxu0 0
      %1103 = vmatpush1.bf16.msra.mxu0 0
      %1104 = vmatprep.subr.bf16.mxu0 0
      %1105 = vmatpush1.bf16.msra.mxu0 0
      %1106 = vmatprep.subr.bf16.mxu0 0
      %1107 = vmatpush1.bf16.msra.mxu0 0
      %1108 = vmatprep.subr.bf16.mxu0 0
      %1109 = vmatpush1.bf16.msra.mxu0 0
      %1110 = vmatprep.subr.bf16.mxu0 0
      %1111 = vmatpush1.bf16.msra.mxu0 0
      %1112 = vmatprep.subr.bf16.mxu0 0
      %1113 = vmatpush1.bf16.msra.mxu0 %v1098
      %1114 = vmatprep.subr.bf16.mxu0 0
      %1115 = vmatpush1.bf16.msra.mxu0 %v1097
      %1116 = vmatprep.subr.bf16.mxu0 0
      %1117 = vmatpush1.bf16.msra.mxu0 %v1096
      %1118 = vmatprep.subr.bf16.mxu0 0
      %1119 = vmatpush2.bf16.msra.mxu0 0
      %1120 = vmatprep.subr.bf16.mxu0 0
      %1121 = vmatpush2.bf16.msra.mxu0 0
      %1122 = vmatprep.subr.bf16.mxu0 0
      %1123 = vmatpush2.bf16.msra.mxu0 0
      %1124 = vmatprep.subr.bf16.mxu0 0
      %1125 = vmatpush2.bf16.msra.mxu0 0
      %1126 = vmatprep.subr.bf16.mxu0 0
      %1127 = vmatpush2.bf16.msra.mxu0 0
      %1128 = vmatprep.subr.bf16.mxu0 0
      %1129 = vmatpush2.bf16.msra.mxu0 0
      %1130 = vmatprep.subr.bf16.mxu0 0
      %1131 = vmatpush2.bf16.msra.mxu0 0
      %1132 = vmatprep.subr.bf16.mxu0 0
      %1133 = vmatpush2.bf16.msra.mxu0 0
      %1134 = vmatprep.mubr.bf16.mxu0 0
      %1135 = vmatmul.mubr.bf16.gmra.mxu0 %v899
      %v1136 = vpop.f32.mrf.mxu0
      %v1137 = vadd.f32 0.0, %v1136
      %v1138 = vpop.f32.mrf.mxu0
      %v1139 = vpop.f32.mrf.mxu0
      %v1140 = vadd.f32 0.0, %v1139
      %v1141 = vpop.f32.mrf.mxu0
      %1142 = vmatprep.mubr.bf16.mxu0 0
      %1143 = vmatmul.mubr.bf16.gmra.mxu0 %v902
      %v1144 = vpop.f32.mrf.mxu0
      %v1145 = vadd.f32 0.0, %v1144
      %v1146 = vpop.f32.mrf.mxu0
      %v1147 = vpop.f32.mrf.mxu0
      %v1148 = vpop.f32.mrf.mxu0
      %1149 = vdwg.mxu0
      %v1156 = vunpack.c.l.b16 %v796
      %v1157 = vunpack.c.l.b16 %v797
      %v1158 = vunpack.c.l.b16 %v798
      %v1159 = vunpack.c.l.b16 %v799
      %v1160 = vunpack.c.l.b16 %v800
      %v1161 = vunpack.c.l.b16 %v801
      %v1162 = vpack.c.b16 %v1157, %v1156
      %v1163 = vpack.c.b16 %v1159, %v1158
      %v1164 = vpack.c.b16 %v1161, %v1160
      %1168 = vmatprep.subr.bf16.mxu0 0
      %1169 = vmatpush1.bf16.msra.mxu0 0
      %1170 = vmatprep.subr.bf16.mxu0 0
      %1171 = vmatpush1.bf16.msra.mxu0 0
      %1172 = vmatprep.subr.bf16.mxu0 0
      %1173 = vmatpush1.bf16.msra.mxu0 0
      %1174 = vmatprep.subr.bf16.mxu0 0
      %1175 = vmatpush1.bf16.msra.mxu0 0
      %1176 = vmatprep.subr.bf16.mxu0 0
      %1177 = vmatpush1.bf16.msra.mxu0 0
      %1178 = vmatprep.subr.bf16.mxu0 0
      %1179 = vmatpush1.bf16.msra.mxu0 %v1164
      %1180 = vmatprep.subr.bf16.mxu0 0
      %1181 = vmatpush1.bf16.msra.mxu0 %v1163
      %1182 = vmatprep.subr.bf16.mxu0 0
      %1183 = vmatpush1.bf16.msra.mxu0 %v1162
      %1184 = vmatprep.subr.bf16.mxu0 0
      %1185 = vmatpush2.bf16.msra.mxu0 0
      %1186 = vmatprep.subr.bf16.mxu0 0
      %1187 = vmatpush2.bf16.msra.mxu0 0
      %1188 = vmatprep.subr.bf16.mxu0 0
      %1189 = vmatpush2.bf16.msra.mxu0 0
      %1190 = vmatprep.subr.bf16.mxu0 0
      %1191 = vmatpush2.bf16.msra.mxu0 0
      %1192 = vmatprep.subr.bf16.mxu0 0
      %1193 = vmatpush2.bf16.msra.mxu0 0
      %1194 = vmatprep.subr.bf16.mxu0 0
      %1195 = vmatpush2.bf16.msra.mxu0 0
      %1196 = vmatprep.subr.bf16.mxu0 0
      %1197 = vmatpush2.bf16.msra.mxu0 0
      %1198 = vmatprep.subr.bf16.mxu0 0
      %1199 = vmatpush2.bf16.msra.mxu0 0
      %1200 = vmatprep.mubr.bf16.mxu0 0
      %1201 = vmatmul.mubr.bf16.gmra.mxu0 %v899
      %v1202 = vpop.f32.mrf.mxu0
      %v1203 = vadd.f32 0.0, %v1202
      %v1204 = vpop.f32.mrf.mxu0
      %v1205 = vpop.f32.mrf.mxu0
      %v1206 = vadd.f32 0.0, %v1205
      %v1207 = vpop.f32.mrf.mxu0
      %1208 = vmatprep.mubr.bf16.mxu0 0
      %1209 = vmatmul.mubr.bf16.gmra.mxu0 %v902
      %v1210 = vpop.f32.mrf.mxu0
      %v1211 = vadd.f32 0.0, %v1210
      %v1212 = vpop.f32.mrf.mxu0
      %v1213 = vpop.f32.mrf.mxu0
      %v1214 = vpop.f32.mrf.mxu0
      %1215 = vdwg.mxu0
      %v1222 = vunpack.c.l.b16 %v802
      %v1223 = vunpack.c.l.b16 %v803
      %v1224 = vunpack.c.l.b16 %v804
      %v1225 = vunpack.c.l.b16 %v805
      %v1226 = vunpack.c.l.b16 %v806
      %v1227 = vunpack.c.l.b16 %v807
      %v1228 = vpack.c.b16 %v1223, %v1222
      %v1229 = vpack.c.b16 %v1225, %v1224
      %v1230 = vpack.c.b16 %v1227, %v1226
      %1234 = vmatprep.subr.bf16.mxu0 0
      %1235 = vmatpush1.bf16.msra.mxu0 0
      %1236 = vmatprep.subr.bf16.mxu0 0
      %1237 = vmatpush1.bf16.msra.mxu0 0
      %1238 = vmatprep.subr.bf16.mxu0 0
      %1239 = vmatpush1.bf16.msra.mxu0 0
      %1240 = vmatprep.subr.bf16.mxu0 0
      %1241 = vmatpush1.bf16.msra.mxu0 0
      %1242 = vmatprep.subr.bf16.mxu0 0
      %1243 = vmatpush1.bf16.msra.mxu0 0
      %1244 = vmatprep.subr.bf16.mxu0 0
      %1245 = vmatpush1.bf16.msra.mxu0 %v1230
      %1246 = vmatprep.subr.bf16.mxu0 0
      %1247 = vmatpush1.bf16.msra.mxu0 %v1229
      %1248 = vmatprep.subr.bf16.mxu0 0
      %1249 = vmatpush1.bf16.msra.mxu0 %v1228
      %1250 = vmatprep.subr.bf16.mxu0 0
      %1251 = vmatpush2.bf16.msra.mxu0 0
      %1252 = vmatprep.subr.bf16.mxu0 0
      %1253 = vmatpush2.bf16.msra.mxu0 0
      %1254 = vmatprep.subr.bf16.mxu0 0
      %1255 = vmatpush2.bf16.msra.mxu0 0
      %1256 = vmatprep.subr.bf16.mxu0 0
      %1257 = vmatpush2.bf16.msra.mxu0 0
      %1258 = vmatprep.subr.bf16.mxu0 0
      %1259 = vmatpush2.bf16.msra.mxu0 0
      %1260 = vmatprep.subr.bf16.mxu0 0
      %1261 = vmatpush2.bf16.msra.mxu0 0
      %1262 = vmatprep.subr.bf16.mxu0 0
      %1263 = vmatpush2.bf16.msra.mxu0 0
      %1264 = vmatprep.subr.bf16.mxu0 0
      %1265 = vmatpush2.bf16.msra.mxu0 0
      %1266 = vmatprep.mubr.bf16.mxu0 0
      %1267 = vmatmul.mubr.bf16.gmra.mxu0 %v899
      %v1268 = vpop.f32.mrf.mxu0
      %v1269 = vadd.f32 0.0, %v1268
      %v1270 = vpop.f32.mrf.mxu0
      %v1271 = vpop.f32.mrf.mxu0
      %v1272 = vadd.f32 0.0, %v1271
      %v1273 = vpop.f32.mrf.mxu0
      %1274 = vmatprep.mubr.bf16.mxu0 0
      %1275 = vmatmul.mubr.bf16.gmra.mxu0 %v902
      %v1276 = vpop.f32.mrf.mxu0
      %v1277 = vadd.f32 0.0, %v1276
      %v1278 = vpop.f32.mrf.mxu0
      %v1279 = vpop.f32.mrf.mxu0
      %v1280 = vpop.f32.mrf.mxu0
      %1281 = vdwg.mxu0
      %v1288 = vunpack.c.l.b16 %v808
      %v1289 = vunpack.c.l.b16 %v809
      %v1290 = vunpack.c.l.b16 %v810
      %v1291 = vunpack.c.l.b16 %v811
      %v1292 = vunpack.c.l.b16 %v812
      %v1293 = vunpack.c.l.b16 %v813
      %v1294 = vpack.c.b16 %v1289, %v1288
      %v1295 = vpack.c.b16 %v1291, %v1290
      %v1296 = vpack.c.b16 %v1293, %v1292
      %1300 = vmatprep.subr.bf16.mxu0 0
      %1301 = vmatpush1.bf16.msra.mxu0 0
      %1302 = vmatprep.subr.bf16.mxu0 0
      %1303 = vmatpush1.bf16.msra.mxu0 0
      %1304 = vmatprep.subr.bf16.mxu0 0
      %1305 = vmatpush1.bf16.msra.mxu0 0
      %1306 = vmatprep.subr.bf16.mxu0 0
      %1307 = vmatpush1.bf16.msra.mxu0 0
      %1308 = vmatprep.subr.bf16.mxu0 0
      %1309 = vmatpush1.bf16.msra.mxu0 0
      %1310 = vmatprep.subr.bf16.mxu0 0
      %1311 = vmatpush1.bf16.msra.mxu0 %v1296
      %1312 = vmatprep.subr.bf16.mxu0 0
      %1313 = vmatpush1.bf16.msra.mxu0 %v1295
      %1314 = vmatprep.subr.bf16.mxu0 0
      %1315 = vmatpush1.bf16.msra.mxu0 %v1294
      %1316 = vmatprep.subr.bf16.mxu0 0
      %1317 = vmatpush2.bf16.msra.mxu0 0
      %1318 = vmatprep.subr.bf16.mxu0 0
      %1319 = vmatpush2.bf16.msra.mxu0 0
      %1320 = vmatprep.subr.bf16.mxu0 0
      %1321 = vmatpush2.bf16.msra.mxu0 0
      %1322 = vmatprep.subr.bf16.mxu0 0
      %1323 = vmatpush2.bf16.msra.mxu0 0
      %1324 = vmatprep.subr.bf16.mxu0 0
      %1325 = vmatpush2.bf16.msra.mxu0 0
      %1326 = vmatprep.subr.bf16.mxu0 0
      %1327 = vmatpush2.bf16.msra.mxu0 0
      %1328 = vmatprep.subr.bf16.mxu0 0
      %1329 = vmatpush2.bf16.msra.mxu0 0
      %1330 = vmatprep.subr.bf16.mxu0 0
      %1331 = vmatpush2.bf16.msra.mxu0 0
      %1332 = vmatprep.mubr.bf16.mxu0 0
      %1333 = vmatmul.mubr.bf16.gmra.mxu0 %v899
      %v1334 = vpop.f32.mrf.mxu0
      %v1335 = vadd.f32 0.0, %v1334
      %v1336 = vpop.f32.mrf.mxu0
      %v1337 = vpop.f32.mrf.mxu0
      %v1338 = vadd.f32 0.0, %v1337
      %v1339 = vpop.f32.mrf.mxu0
      %1340 = vmatprep.mubr.bf16.mxu0 0
      %1341 = vmatmul.mubr.bf16.gmra.mxu0 %v902
      %v1342 = vpop.f32.mrf.mxu0
      %v1343 = vadd.f32 0.0, %v1342
      %v1344 = vpop.f32.mrf.mxu0
      %v1345 = vpop.f32.mrf.mxu0
      %v1346 = vpop.f32.mrf.mxu0
      %1347 = vdwg.mxu0
      %v1354 = vunpack.c.l.b16 %v814
      %v1355 = vunpack.c.l.b16 %v815
      %v1356 = vunpack.c.l.b16 %v816
      %v1357 = vunpack.c.l.b16 %v817
      %v1358 = vunpack.c.l.b16 %v818
      %v1359 = vunpack.c.l.b16 %v819
      %v1360 = vpack.c.b16 %v1355, %v1354
      %v1361 = vpack.c.b16 %v1357, %v1356
      %v1362 = vpack.c.b16 %v1359, %v1358
      %1366 = vmatprep.subr.bf16.mxu0 0
      %1367 = vmatpush1.bf16.msra.mxu0 0
      %1368 = vmatprep.subr.bf16.mxu0 0
      %1369 = vmatpush1.bf16.msra.mxu0 0
      %1370 = vmatprep.subr.bf16.mxu0 0
      %1371 = vmatpush1.bf16.msra.mxu0 0
      %1372 = vmatprep.subr.bf16.mxu0 0
      %1373 = vmatpush1.bf16.msra.mxu0 0
      %1374 = vmatprep.subr.bf16.mxu0 0
      %1375 = vmatpush1.bf16.msra.mxu0 0
      %1376 = vmatprep.subr.bf16.mxu0 0
      %1377 = vmatpush1.bf16.msra.mxu0 %v1362
      %1378 = vmatprep.subr.bf16.mxu0 0
      %1379 = vmatpush1.bf16.msra.mxu0 %v1361
      %1380 = vmatprep.subr.bf16.mxu0 0
      %1381 = vmatpush1.bf16.msra.mxu0 %v1360
      %1382 = vmatprep.subr.bf16.mxu0 0
      %1383 = vmatpush2.bf16.msra.mxu0 0
      %1384 = vmatprep.subr.bf16.mxu0 0
      %1385 = vmatpush2.bf16.msra.mxu0 0
      %1386 = vmatprep.subr.bf16.mxu0 0
      %1387 = vmatpush2.bf16.msra.mxu0 0
      %1388 = vmatprep.subr.bf16.mxu0 0
      %1389 = vmatpush2.bf16.msra.mxu0 0
      %1390 = vmatprep.subr.bf16.mxu0 0
      %1391 = vmatpush2.bf16.msra.mxu0 0
      %1392 = vmatprep.subr.bf16.mxu0 0
      %1393 = vmatpush2.bf16.msra.mxu0 0
      %1394 = vmatprep.subr.bf16.mxu0 0
      %1395 = vmatpush2.bf16.msra.mxu0 0
      %1396 = vmatprep.subr.bf16.mxu0 0
      %1397 = vmatpush2.bf16.msra.mxu0 0
      %1398 = vmatprep.mubr.bf16.mxu0 0
      %1399 = vmatmul.mubr.bf16.gmra.mxu0 %v899
      %v1400 = vpop.f32.mrf.mxu0
      %v1401 = vadd.f32 0.0, %v1400
      %v1402 = vpop.f32.mrf.mxu0
      %v1403 = vpop.f32.mrf.mxu0
      %v1404 = vadd.f32 0.0, %v1403
      %v1405 = vpop.f32.mrf.mxu0
      %1406 = vmatprep.mubr.bf16.mxu0 0
      %1407 = vmatmul.mubr.bf16.gmra.mxu0 %v902
      %v1408 = vpop.f32.mrf.mxu0
      %v1409 = vadd.f32 0.0, %v1408
      %v1410 = vpop.f32.mrf.mxu0
      %v1411 = vpop.f32.mrf.mxu0
      %v1412 = vpop.f32.mrf.mxu0
      %1413 = vdwg.mxu0
      %v1420 = vunpack.c.l.b16 %v820
      %v1421 = vunpack.c.l.b16 %v821
      %v1422 = vunpack.c.l.b16 %v822
      %v1423 = vunpack.c.l.b16 %v823
      %v1424 = vunpack.c.l.b16 %v824
      %v1425 = vunpack.c.l.b16 %v825
      %v1426 = vpack.c.b16 %v1421, %v1420
      %v1427 = vpack.c.b16 %v1423, %v1422
      %v1428 = vpack.c.b16 %v1425, %v1424
      %1432 = vmatprep.subr.bf16.mxu0 0
      %1433 = vmatpush1.bf16.msra.mxu0 0
      %1434 = vmatprep.subr.bf16.mxu0 0
      %1435 = vmatpush1.bf16.msra.mxu0 0
      %1436 = vmatprep.subr.bf16.mxu0 0
      %1437 = vmatpush1.bf16.msra.mxu0 0
      %1438 = vmatprep.subr.bf16.mxu0 0
      %1439 = vmatpush1.bf16.msra.mxu0 0
      %1440 = vmatprep.subr.bf16.mxu0 0
      %1441 = vmatpush1.bf16.msra.mxu0 0
      %1442 = vmatprep.subr.bf16.mxu0 0
      %1443 = vmatpush1.bf16.msra.mxu0 %v1428
      %1444 = vmatprep.subr.bf16.mxu0 0
      %1445 = vmatpush1.bf16.msra.mxu0 %v1427
      %1446 = vmatprep.subr.bf16.mxu0 0
      %1447 = vmatpush1.bf16.msra.mxu0 %v1426
      %1448 = vmatprep.subr.bf16.mxu0 0
      %1449 = vmatpush2.bf16.msra.mxu0 0
      %1450 = vmatprep.subr.bf16.mxu0 0
      %1451 = vmatpush2.bf16.msra.mxu0 0
      %1452 = vmatprep.subr.bf16.mxu0 0
      %1453 = vmatpush2.bf16.msra.mxu0 0
      %1454 = vmatprep.subr.bf16.mxu0 0
      %1455 = vmatpush2.bf16.msra.mxu0 0
      %1456 = vmatprep.subr.bf16.mxu0 0
      %1457 = vmatpush2.bf16.msra.mxu0 0
      %1458 = vmatprep.subr.bf16.mxu0 0
      %1459 = vmatpush2.bf16.msra.mxu0 0
      %1460 = vmatprep.subr.bf16.mxu0 0
      %1461 = vmatpush2.bf16.msra.mxu0 0
      %1462 = vmatprep.subr.bf16.mxu0 0
      %1463 = vmatpush2.bf16.msra.mxu0 0
      %1464 = vmatprep.mubr.bf16.mxu0 0
      %1465 = vmatmul.mubr.bf16.gmra.mxu0 %v899
      %v1466 = vpop.f32.mrf.mxu0
      %v1467 = vadd.f32 0.0, %v1466
      %v1468 = vpop.f32.mrf.mxu0
      %v1469 = vpop.f32.mrf.mxu0
      %v1470 = vadd.f32 0.0, %v1469
      %v1471 = vpop.f32.mrf.mxu0
      %1472 = vmatprep.mubr.bf16.mxu0 0
      %1473 = vmatmul.mubr.bf16.gmra.mxu0 %v902
      %v1474 = vpop.f32.mrf.mxu0
      %v1475 = vadd.f32 0.0, %v1474
      %v1476 = vpop.f32.mrf.mxu0
      %v1477 = vpop.f32.mrf.mxu0
      %v1478 = vpop.f32.mrf.mxu0
      %1479 = vdwg.mxu0
      %v1486 = vunpack.c.l.b16 %v826
      %v1487 = vunpack.c.l.b16 %v827
      %v1488 = vunpack.c.l.b16 %v828
      %v1489 = vunpack.c.l.b16 %v829
      %v1490 = vunpack.c.l.b16 %v830
      %v1491 = vunpack.c.l.b16 %v831
      %v1492 = vpack.c.b16 %v1487, %v1486
      %v1493 = vpack.c.b16 %v1489, %v1488
      %v1494 = vpack.c.b16 %v1491, %v1490
      %1498 = vmatprep.subr.bf16.mxu0 0
      %1499 = vmatpush1.bf16.msra.mxu0 0
      %1500 = vmatprep.subr.bf16.mxu0 0
      %1501 = vmatpush1.bf16.msra.mxu0 0
      %1502 = vmatprep.subr.bf16.mxu0 0
      %1503 = vmatpush1.bf16.msra.mxu0 0
      %1504 = vmatprep.subr.bf16.mxu0 0
      %1505 = vmatpush1.bf16.msra.mxu0 0
      %1506 = vmatprep.subr.bf16.mxu0 0
      %1507 = vmatpush1.bf16.msra.mxu0 0
      %1508 = vmatprep.subr.bf16.mxu0 0
      %1509 = vmatpush1.bf16.msra.mxu0 %v1494
      %1510 = vmatprep.subr.bf16.mxu0 0
      %1511 = vmatpush1.bf16.msra.mxu0 %v1493
      %1512 = vmatprep.subr.bf16.mxu0 0
      %1513 = vmatpush1.bf16.msra.mxu0 %v1492
      %1514 = vmatprep.subr.bf16.mxu0 0
      %1515 = vmatpush2.bf16.msra.mxu0 0
      %1516 = vmatprep.subr.bf16.mxu0 0
      %1517 = vmatpush2.bf16.msra.mxu0 0
      %1518 = vmatprep.subr.bf16.mxu0 0
      %1519 = vmatpush2.bf16.msra.mxu0 0
      %1520 = vmatprep.subr.bf16.mxu0 0
      %1521 = vmatpush2.bf16.msra.mxu0 0
      %1522 = vmatprep.subr.bf16.mxu0 0
      %1523 = vmatpush2.bf16.msra.mxu0 0
      %1524 = vmatprep.subr.bf16.mxu0 0
      %1525 = vmatpush2.bf16.msra.mxu0 0
      %1526 = vmatprep.subr.bf16.mxu0 0
      %1527 = vmatpush2.bf16.msra.mxu0 0
      %1528 = vmatprep.subr.bf16.mxu0 0
      %1529 = vmatpush2.bf16.msra.mxu0 0
      %1530 = vmatprep.mubr.bf16.mxu0 0
      %1531 = vmatmul.mubr.bf16.gmra.mxu0 %v899
      %v1532 = vpop.f32.mrf.mxu0
      %v1533 = vadd.f32 0.0, %v1532
      %v1534 = vpop.f32.mrf.mxu0
      %v1535 = vpop.f32.mrf.mxu0
      %v1536 = vadd.f32 0.0, %v1535
      %v1537 = vpop.f32.mrf.mxu0
      %1538 = vmatprep.mubr.bf16.mxu0 0
      %1539 = vmatmul.mubr.bf16.gmra.mxu0 %v902
      %v1540 = vpop.f32.mrf.mxu0
      %v1541 = vadd.f32 0.0, %v1540
      %v1542 = vpop.f32.mrf.mxu0
      %v1543 = vpop.f32.mrf.mxu0
      %v1544 = vpop.f32.mrf.mxu0
      %1545 = vdwg.mxu0
      %v1552 = vunpack.c.l.b16 %v832
      %v1553 = vunpack.c.l.b16 %v833
      %v1554 = vunpack.c.l.b16 %v834
      %v1555 = vunpack.c.l.b16 %v835
      %v1556 = vunpack.c.l.b16 %v836
      %v1557 = vunpack.c.l.b16 %v837
      %v1558 = vpack.c.b16 %v1553, %v1552
      %v1559 = vpack.c.b16 %v1555, %v1554
      %v1560 = vpack.c.b16 %v1557, %v1556
      %1564 = vmatprep.subr.bf16.mxu0 0
      %1565 = vmatpush1.bf16.msra.mxu0 0
      %1566 = vmatprep.subr.bf16.mxu0 0
      %1567 = vmatpush1.bf16.msra.mxu0 0
      %1568 = vmatprep.subr.bf16.mxu0 0
      %1569 = vmatpush1.bf16.msra.mxu0 0
      %1570 = vmatprep.subr.bf16.mxu0 0
      %1571 = vmatpush1.bf16.msra.mxu0 0
      %1572 = vmatprep.subr.bf16.mxu0 0
      %1573 = vmatpush1.bf16.msra.mxu0 0
      %1574 = vmatprep.subr.bf16.mxu0 0
      %1575 = vmatpush1.bf16.msra.mxu0 %v1560
      %1576 = vmatprep.subr.bf16.mxu0 0
      %1577 = vmatpush1.bf16.msra.mxu0 %v1559
      %1578 = vmatprep.subr.bf16.mxu0 0
      %1579 = vmatpush1.bf16.msra.mxu0 %v1558
      %1580 = vmatprep.subr.bf16.mxu0 0
      %1581 = vmatpush2.bf16.msra.mxu0 0
      %1582 = vmatprep.subr.bf16.mxu0 0
      %1583 = vmatpush2.bf16.msra.mxu0 0
      %1584 = vmatprep.subr.bf16.mxu0 0
      %1585 = vmatpush2.bf16.msra.mxu0 0
      %1586 = vmatprep.subr.bf16.mxu0 0
      %1587 = vmatpush2.bf16.msra.mxu0 0
      %1588 = vmatprep.subr.bf16.mxu0 0
      %1589 = vmatpush2.bf16.msra.mxu0 0
      %1590 = vmatprep.subr.bf16.mxu0 0
      %1591 = vmatpush2.bf16.msra.mxu0 0
      %1592 = vmatprep.subr.bf16.mxu0 0
      %1593 = vmatpush2.bf16.msra.mxu0 0
      %1594 = vmatprep.subr.bf16.mxu0 0
      %1595 = vmatpush2.bf16.msra.mxu0 0
      %1596 = vmatprep.mubr.bf16.mxu0 0
      %1597 = vmatmul.mubr.bf16.gmra.mxu0 %v899
      %v1598 = vpop.f32.mrf.mxu0
      %v1599 = vadd.f32 0.0, %v1598
      %v1600 = vpop.f32.mrf.mxu0
      %v1601 = vpop.f32.mrf.mxu0
      %v1602 = vadd.f32 0.0, %v1601
      %v1603 = vpop.f32.mrf.mxu0
      %1604 = vmatprep.mubr.bf16.mxu0 0
      %1605 = vmatmul.mubr.bf16.gmra.mxu0 %v902
      %v1606 = vpop.f32.mrf.mxu0
      %v1607 = vadd.f32 0.0, %v1606
      %v1608 = vpop.f32.mrf.mxu0
      %v1609 = vpop.f32.mrf.mxu0
      %v1610 = vpop.f32.mrf.mxu0
      %1611 = vdwg.mxu0
      %v1618 = vunpack.c.l.b16 %v838
      %v1619 = vunpack.c.l.b16 %v839
      %v1620 = vunpack.c.l.b16 %v840
      %v1621 = vunpack.c.l.b16 %v841
      %v1622 = vunpack.c.l.b16 %v842
      %v1623 = vunpack.c.l.b16 %v843
      %v1624 = vpack.c.b16 %v1619, %v1618
      %v1625 = vpack.c.b16 %v1621, %v1620
      %v1626 = vpack.c.b16 %v1623, %v1622
      %1630 = vmatprep.subr.bf16.mxu0 0
      %1631 = vmatpush1.bf16.msra.mxu0 0
      %1632 = vmatprep.subr.bf16.mxu0 0
      %1633 = vmatpush1.bf16.msra.mxu0 0
      %1634 = vmatprep.subr.bf16.mxu0 0
      %1635 = vmatpush1.bf16.msra.mxu0 0
      %1636 = vmatprep.subr.bf16.mxu0 0
      %1637 = vmatpush1.bf16.msra.mxu0 0
      %1638 = vmatprep.subr.bf16.mxu0 0
      %1639 = vmatpush1.bf16.msra.mxu0 0
      %1640 = vmatprep.subr.bf16.mxu0 0
      %1641 = vmatpush1.bf16.msra.mxu0 %v1626
      %1642 = vmatprep.subr.bf16.mxu0 0
      %1643 = vmatpush1.bf16.msra.mxu0 %v1625
      %1644 = vmatprep.subr.bf16.mxu0 0
      %1645 = vmatpush1.bf16.msra.mxu0 %v1624
      %1646 = vmatprep.subr.bf16.mxu0 0
      %1647 = vmatpush2.bf16.msra.mxu0 0
      %1648 = vmatprep.subr.bf16.mxu0 0
      %1649 = vmatpush2.bf16.msra.mxu0 0
      %1650 = vmatprep.subr.bf16.mxu0 0
      %1651 = vmatpush2.bf16.msra.mxu0 0
      %1652 = vmatprep.subr.bf16.mxu0 0
      %1653 = vmatpush2.bf16.msra.mxu0 0
      %1654 = vmatprep.subr.bf16.mxu0 0
      %1655 = vmatpush2.bf16.msra.mxu0 0
      %1656 = vmatprep.subr.bf16.mxu0 0
      %1657 = vmatpush2.bf16.msra.mxu0 0
      %1658 = vmatprep.subr.bf16.mxu0 0
      %1659 = vmatpush2.bf16.msra.mxu0 0
      %1660 = vmatprep.subr.bf16.mxu0 0
      %1661 = vmatpush2.bf16.msra.mxu0 0
      %1662 = vmatprep.mubr.bf16.mxu0 0
      %1663 = vmatmul.mubr.bf16.gmra.mxu0 %v899
      %v1664 = vpop.f32.mrf.mxu0
      %v1665 = vadd.f32 0.0, %v1664
      %v1666 = vpop.f32.mrf.mxu0
      %v1667 = vpop.f32.mrf.mxu0
      %v1668 = vadd.f32 0.0, %v1667
      %v1669 = vpop.f32.mrf.mxu0
      %1670 = vmatprep.mubr.bf16.mxu0 0
      %1671 = vmatmul.mubr.bf16.gmra.mxu0 %v902
      %v1672 = vpop.f32.mrf.mxu0
      %v1673 = vadd.f32 0.0, %v1672
      %v1674 = vpop.f32.mrf.mxu0
      %v1675 = vpop.f32.mrf.mxu0
      %v1676 = vpop.f32.mrf.mxu0
      %1677 = vdwg.mxu0
      %v1684 = vunpack.c.l.b16 %v844
      %v1685 = vunpack.c.l.b16 %v845
      %v1686 = vunpack.c.l.b16 %v846
      %v1687 = vunpack.c.l.b16 %v847
      %v1688 = vunpack.c.l.b16 %v848
      %v1689 = vunpack.c.l.b16 %v849
      %v1690 = vpack.c.b16 %v1685, %v1684
      %v1691 = vpack.c.b16 %v1687, %v1686
      %v1692 = vpack.c.b16 %v1689, %v1688
      %1696 = vmatprep.subr.bf16.mxu0 0
      %1697 = vmatpush1.bf16.msra.mxu0 0
      %1698 = vmatprep.subr.bf16.mxu0 0
      %1699 = vmatpush1.bf16.msra.mxu0 0
      %1700 = vmatprep.subr.bf16.mxu0 0
      %1701 = vmatpush1.bf16.msra.mxu0 0
      %1702 = vmatprep.subr.bf16.mxu0 0
      %1703 = vmatpush1.bf16.msra.mxu0 0
      %1704 = vmatprep.subr.bf16.mxu0 0
      %1705 = vmatpush1.bf16.msra.mxu0 0
      %1706 = vmatprep.subr.bf16.mxu0 0
      %1707 = vmatpush1.bf16.msra.mxu0 %v1692
      %1708 = vmatprep.subr.bf16.mxu0 0
      %1709 = vmatpush1.bf16.msra.mxu0 %v1691
      %1710 = vmatprep.subr.bf16.mxu0 0
      %1711 = vmatpush1.bf16.msra.mxu0 %v1690
      %1712 = vmatprep.subr.bf16.mxu0 0
      %1713 = vmatpush2.bf16.msra.mxu0 0
      %1714 = vmatprep.subr.bf16.mxu0 0
      %1715 = vmatpush2.bf16.msra.mxu0 0
      %1716 = vmatprep.subr.bf16.mxu0 0
      %1717 = vmatpush2.bf16.msra.mxu0 0
      %1718 = vmatprep.subr.bf16.mxu0 0
      %1719 = vmatpush2.bf16.msra.mxu0 0
      %1720 = vmatprep.subr.bf16.mxu0 0
      %1721 = vmatpush2.bf16.msra.mxu0 0
      %1722 = vmatprep.subr.bf16.mxu0 0
      %1723 = vmatpush2.bf16.msra.mxu0 0
      %1724 = vmatprep.subr.bf16.mxu0 0
      %1725 = vmatpush2.bf16.msra.mxu0 0
      %1726 = vmatprep.subr.bf16.mxu0 0
      %1727 = vmatpush2.bf16.msra.mxu0 0
      %1728 = vmatprep.mubr.bf16.mxu0 0
      %1729 = vmatmul.mubr.bf16.gmra.mxu0 %v899
      %v1730 = vpop.f32.mrf.mxu0
      %v1731 = vadd.f32 0.0, %v1730
      %v1732 = vpop.f32.mrf.mxu0
      %v1733 = vpop.f32.mrf.mxu0
      %v1734 = vadd.f32 0.0, %v1733
      %v1735 = vpop.f32.mrf.mxu0
      %1736 = vmatprep.mubr.bf16.mxu0 0
      %1737 = vmatmul.mubr.bf16.gmra.mxu0 %v902
      %v1738 = vpop.f32.mrf.mxu0
      %v1739 = vadd.f32 0.0, %v1738
      %v1740 = vpop.f32.mrf.mxu0
      %v1741 = vpop.f32.mrf.mxu0
      %v1742 = vpop.f32.mrf.mxu0
      %1743 = vdwg.mxu0
      %v1750 = vunpack.c.l.b16 %v850
      %v1751 = vunpack.c.l.b16 %v851
      %v1752 = vunpack.c.l.b16 %v852
      %v1753 = vunpack.c.l.b16 %v853
      %v1754 = vunpack.c.l.b16 %v854
      %v1755 = vunpack.c.l.b16 %v855
      %v1756 = vpack.c.b16 %v1751, %v1750
      %v1757 = vpack.c.b16 %v1753, %v1752
      %v1758 = vpack.c.b16 %v1755, %v1754
      %1762 = vmatprep.subr.bf16.mxu0 0
      %1763 = vmatpush1.bf16.msra.mxu0 0
      %1764 = vmatprep.subr.bf16.mxu0 0
      %1765 = vmatpush1.bf16.msra.mxu0 0
      %1766 = vmatprep.subr.bf16.mxu0 0
      %1767 = vmatpush1.bf16.msra.mxu0 0
      %1768 = vmatprep.subr.bf16.mxu0 0
      %1769 = vmatpush1.bf16.msra.mxu0 0
      %1770 = vmatprep.subr.bf16.mxu0 0
      %1771 = vmatpush1.bf16.msra.mxu0 0
      %1772 = vmatprep.subr.bf16.mxu0 0
      %1773 = vmatpush1.bf16.msra.mxu0 %v1758
      %1774 = vmatprep.subr.bf16.mxu0 0
      %1775 = vmatpush1.bf16.msra.mxu0 %v1757
      %1776 = vmatprep.subr.bf16.mxu0 0
      %1777 = vmatpush1.bf16.msra.mxu0 %v1756
      %1778 = vmatprep.subr.bf16.mxu0 0
      %1779 = vmatpush2.bf16.msra.mxu0 0
      %1780 = vmatprep.subr.bf16.mxu0 0
      %1781 = vmatpush2.bf16.msra.mxu0 0
      %1782 = vmatprep.subr.bf16.mxu0 0
      %1783 = vmatpush2.bf16.msra.mxu0 0
      %1784 = vmatprep.subr.bf16.mxu0 0
      %1785 = vmatpush2.bf16.msra.mxu0 0
      %1786 = vmatprep.subr.bf16.mxu0 0
      %1787 = vmatpush2.bf16.msra.mxu0 0
      %1788 = vmatprep.subr.bf16.mxu0 0
      %1789 = vmatpush2.bf16.msra.mxu0 0
      %1790 = vmatprep.subr.bf16.mxu0 0
      %1791 = vmatpush2.bf16.msra.mxu0 0
      %1792 = vmatprep.subr.bf16.mxu0 0
      %1793 = vmatpush2.bf16.msra.mxu0 0
      %1794 = vmatprep.mubr.bf16.mxu0 0
      %1795 = vmatmul.mubr.bf16.gmra.mxu0 %v899
      %v1796 = vpop.f32.mrf.mxu0
      %v1797 = vadd.f32 0.0, %v1796
      %v1798 = vpop.f32.mrf.mxu0
      %v1799 = vpop.f32.mrf.mxu0
      %v1800 = vadd.f32 0.0, %v1799
      %v1801 = vpop.f32.mrf.mxu0
      %1802 = vmatprep.mubr.bf16.mxu0 0
      %1803 = vmatmul.mubr.bf16.gmra.mxu0 %v902
      %v1804 = vpop.f32.mrf.mxu0
      %v1805 = vadd.f32 0.0, %v1804
      %v1806 = vpop.f32.mrf.mxu0
      %v1807 = vpop.f32.mrf.mxu0
      %v1808 = vpop.f32.mrf.mxu0
      %1809 = vdwg.mxu0
      %v1816 = vunpack.c.l.b16 %v856
      %v1817 = vunpack.c.l.b16 %v857
      %v1818 = vunpack.c.l.b16 %v858
      %v1819 = vunpack.c.l.b16 %v859
      %v1820 = vunpack.c.l.b16 %v860
      %v1821 = vunpack.c.l.b16 %v861
      %v1822 = vpack.c.b16 %v1817, %v1816
      %v1823 = vpack.c.b16 %v1819, %v1818
      %v1824 = vpack.c.b16 %v1821, %v1820
      %1828 = vmatprep.subr.bf16.mxu0 0
      %1829 = vmatpush1.bf16.msra.mxu0 0
      %1830 = vmatprep.subr.bf16.mxu0 0
      %1831 = vmatpush1.bf16.msra.mxu0 0
      %1832 = vmatprep.subr.bf16.mxu0 0
      %1833 = vmatpush1.bf16.msra.mxu0 0
      %1834 = vmatprep.subr.bf16.mxu0 0
      %1835 = vmatpush1.bf16.msra.mxu0 0
      %1836 = vmatprep.subr.bf16.mxu0 0
      %1837 = vmatpush1.bf16.msra.mxu0 0
      %1838 = vmatprep.subr.bf16.mxu0 0
      %1839 = vmatpush1.bf16.msra.mxu0 %v1824
      %1840 = vmatprep.subr.bf16.mxu0 0
      %1841 = vmatpush1.bf16.msra.mxu0 %v1823
      %1842 = vmatprep.subr.bf16.mxu0 0
      %1843 = vmatpush1.bf16.msra.mxu0 %v1822
      %1844 = vmatprep.subr.bf16.mxu0 0
      %1845 = vmatpush2.bf16.msra.mxu0 0
      %1846 = vmatprep.subr.bf16.mxu0 0
      %1847 = vmatpush2.bf16.msra.mxu0 0
      %1848 = vmatprep.subr.bf16.mxu0 0
      %1849 = vmatpush2.bf16.msra.mxu0 0
      %1850 = vmatprep.subr.bf16.mxu0 0
      %1851 = vmatpush2.bf16.msra.mxu0 0
      %1852 = vmatprep.subr.bf16.mxu0 0
      %1853 = vmatpush2.bf16.msra.mxu0 0
      %1854 = vmatprep.subr.bf16.mxu0 0
      %1855 = vmatpush2.bf16.msra.mxu0 0
      %1856 = vmatprep.subr.bf16.mxu0 0
      %1857 = vmatpush2.bf16.msra.mxu0 0
      %1858 = vmatprep.subr.bf16.mxu0 0
      %1859 = vmatpush2.bf16.msra.mxu0 0
      %1860 = vmatprep.mubr.bf16.mxu0 0
      %1861 = vmatmul.mubr.bf16.gmra.mxu0 %v899
      %v1862 = vpop.f32.mrf.mxu0
      %v1863 = vadd.f32 0.0, %v1862
      %v1864 = vpop.f32.mrf.mxu0
      %v1865 = vpop.f32.mrf.mxu0
      %v1866 = vadd.f32 0.0, %v1865
      %v1867 = vpop.f32.mrf.mxu0
      %1868 = vmatprep.mubr.bf16.mxu0 0
      %1869 = vmatmul.mubr.bf16.gmra.mxu0 %v902
      %v1870 = vpop.f32.mrf.mxu0
      %v1871 = vadd.f32 0.0, %v1870
      %v1872 = vpop.f32.mrf.mxu0
      %v1873 = vpop.f32.mrf.mxu0
      %v1874 = vpop.f32.mrf.mxu0
      %1875 = vdwg.mxu0
      %v1882 = vunpack.c.l.b16 %v862
      %v1883 = vunpack.c.l.b16 %v863
      %v1884 = vunpack.c.l.b16 %v864
      %v1885 = vunpack.c.l.b16 %v865
      %v1886 = vunpack.c.l.b16 %v866
      %v1887 = vunpack.c.l.b16 %v867
      %v1888 = vpack.c.b16 %v1883, %v1882
      %v1889 = vpack.c.b16 %v1885, %v1884
      %v1890 = vpack.c.b16 %v1887, %v1886
      %1894 = vmatprep.subr.bf16.mxu0 0
      %1895 = vmatpush1.bf16.msra.mxu0 0
      %1896 = vmatprep.subr.bf16.mxu0 0
      %1897 = vmatpush1.bf16.msra.mxu0 0
      %1898 = vmatprep.subr.bf16.mxu0 0
      %1899 = vmatpush1.bf16.msra.mxu0 0
      %1900 = vmatprep.subr.bf16.mxu0 0
      %1901 = vmatpush1.bf16.msra.mxu0 0
      %1902 = vmatprep.subr.bf16.mxu0 0
      %1903 = vmatpush1.bf16.msra.mxu0 0
      %1904 = vmatprep.subr.bf16.mxu0 0
      %1905 = vmatpush1.bf16.msra.mxu0 %v1890
      %1906 = vmatprep.subr.bf16.mxu0 0
      %1907 = vmatpush1.bf16.msra.mxu0 %v1889
      %1908 = vmatprep.subr.bf16.mxu0 0
      %1909 = vmatpush1.bf16.msra.mxu0 %v1888
      %1910 = vmatprep.subr.bf16.mxu0 0
      %1911 = vmatpush2.bf16.msra.mxu0 0
      %1912 = vmatprep.subr.bf16.mxu0 0
      %1913 = vmatpush2.bf16.msra.mxu0 0
      %1914 = vmatprep.subr.bf16.mxu0 0
      %1915 = vmatpush2.bf16.msra.mxu0 0
      %1916 = vmatprep.subr.bf16.mxu0 0
      %1917 = vmatpush2.bf16.msra.mxu0 0
      %1918 = vmatprep.subr.bf16.mxu0 0
      %1919 = vmatpush2.bf16.msra.mxu0 0
      %1920 = vmatprep.subr.bf16.mxu0 0
      %1921 = vmatpush2.bf16.msra.mxu0 0
      %1922 = vmatprep.subr.bf16.mxu0 0
      %1923 = vmatpush2.bf16.msra.mxu0 0
      %1924 = vmatprep.subr.bf16.mxu0 0
      %1925 = vmatpush2.bf16.msra.mxu0 0
      %1926 = vmatprep.mubr.bf16.mxu0 0
      %1927 = vmatmul.mubr.bf16.gmra.mxu0 %v899
      %v1928 = vpop.f32.mrf.mxu0
      %v1929 = vadd.f32 0.0, %v1928
      %v1930 = vpop.f32.mrf.mxu0
      %v1931 = vpop.f32.mrf.mxu0
      %v1932 = vadd.f32 0.0, %v1931
      %v1933 = vpop.f32.mrf.mxu0
      %1934 = vmatprep.mubr.bf16.mxu0 0
      %1935 = vmatmul.mubr.bf16.gmra.mxu0 %v902
      %v1936 = vpop.f32.mrf.mxu0
      %v1937 = vadd.f32 0.0, %v1936
      %v1938 = vpop.f32.mrf.mxu0
      %v1939 = vpop.f32.mrf.mxu0
      %v1940 = vpop.f32.mrf.mxu0
      %1941 = vdwg.mxu0
      %v1948 = vunpack.c.l.b16 %v868
      %v1949 = vunpack.c.l.b16 %v869
      %v1950 = vunpack.c.l.b16 %v870
      %v1951 = vunpack.c.l.b16 %v871
      %v1952 = vunpack.c.l.b16 %v872
      %v1953 = vunpack.c.l.b16 %v873
      %v1954 = vpack.c.b16 %v1949, %v1948
      %v1955 = vpack.c.b16 %v1951, %v1950
      %v1956 = vpack.c.b16 %v1953, %v1952
      %1960 = vmatprep.subr.bf16.mxu0 0
      %1961 = vmatpush1.bf16.msra.mxu0 0
      %1962 = vmatprep.subr.bf16.mxu0 0
      %1963 = vmatpush1.bf16.msra.mxu0 0
      %1964 = vmatprep.subr.bf16.mxu0 0
      %1965 = vmatpush1.bf16.msra.mxu0 0
      %1966 = vmatprep.subr.bf16.mxu0 0
      %1967 = vmatpush1.bf16.msra.mxu0 0
      %1968 = vmatprep.subr.bf16.mxu0 0
      %1969 = vmatpush1.bf16.msra.mxu0 0
      %1970 = vmatprep.subr.bf16.mxu0 0
      %1971 = vmatpush1.bf16.msra.mxu0 %v1956
      %1972 = vmatprep.subr.bf16.mxu0 0
      %1973 = vmatpush1.bf16.msra.mxu0 %v1955
      %1974 = vmatprep.subr.bf16.mxu0 0
      %1975 = vmatpush1.bf16.msra.mxu0 %v1954
      %1976 = vmatprep.subr.bf16.mxu0 0
      %1977 = vmatpush2.bf16.msra.mxu0 0
      %1978 = vmatprep.subr.bf16.mxu0 0
      %1979 = vmatpush2.bf16.msra.mxu0 0
      %1980 = vmatprep.subr.bf16.mxu0 0
      %1981 = vmatpush2.bf16.msra.mxu0 0
      %1982 = vmatprep.subr.bf16.mxu0 0
      %1983 = vmatpush2.bf16.msra.mxu0 0
      %1984 = vmatprep.subr.bf16.mxu0 0
      %1985 = vmatpush2.bf16.msra.mxu0 0
      %1986 = vmatprep.subr.bf16.mxu0 0
      %1987 = vmatpush2.bf16.msra.mxu0 0
      %1988 = vmatprep.subr.bf16.mxu0 0
      %1989 = vmatpush2.bf16.msra.mxu0 0
      %1990 = vmatprep.subr.bf16.mxu0 0
      %1991 = vmatpush2.bf16.msra.mxu0 0
      %1992 = vmatprep.mubr.bf16.mxu0 0
      %1993 = vmatmul.mubr.bf16.gmra.mxu0 %v899
      %v1994 = vpop.f32.mrf.mxu0
      %v1995 = vadd.f32 0.0, %v1994
      %v1996 = vpop.f32.mrf.mxu0
      %v1997 = vpop.f32.mrf.mxu0
      %v1998 = vadd.f32 0.0, %v1997
      %v1999 = vpop.f32.mrf.mxu0
      %2000 = vmatprep.mubr.bf16.mxu0 0
      %2001 = vmatmul.mubr.bf16.gmra.mxu0 %v902
      %v2002 = vpop.f32.mrf.mxu0
      %v2003 = vadd.f32 0.0, %v2002
      %v2004 = vpop.f32.mrf.mxu0
      %v2005 = vpop.f32.mrf.mxu0
      %v2006 = vpop.f32.mrf.mxu0
      %2007 = vdwg.mxu0
      %v2014 = vunpack.c.l.b16 %v874
      %v2015 = vunpack.c.l.b16 %v875
      %v2016 = vunpack.c.l.b16 %v876
      %v2017 = vunpack.c.l.b16 %v877
      %v2018 = vunpack.c.l.b16 %v878
      %v2019 = vunpack.c.l.b16 %v879
      %v2020 = vpack.c.b16 %v2015, %v2014
      %v2021 = vpack.c.b16 %v2017, %v2016
      %v2022 = vpack.c.b16 %v2019, %v2018
      %2026 = vmatprep.subr.bf16.mxu0 0
      %2027 = vmatpush1.bf16.msra.mxu0 0
      %2028 = vmatprep.subr.bf16.mxu0 0
      %2029 = vmatpush1.bf16.msra.mxu0 0
      %2030 = vmatprep.subr.bf16.mxu0 0
      %2031 = vmatpush1.bf16.msra.mxu0 0
      %2032 = vmatprep.subr.bf16.mxu0 0
      %2033 = vmatpush1.bf16.msra.mxu0 0
      %2034 = vmatprep.subr.bf16.mxu0 0
      %2035 = vmatpush1.bf16.msra.mxu0 0
      %2036 = vmatprep.subr.bf16.mxu0 0
      %2037 = vmatpush1.bf16.msra.mxu0 %v2022
      %2038 = vmatprep.subr.bf16.mxu0 0
      %2039 = vmatpush1.bf16.msra.mxu0 %v2021
      %2040 = vmatprep.subr.bf16.mxu0 0
      %2041 = vmatpush1.bf16.msra.mxu0 %v2020
      %2042 = vmatprep.subr.bf16.mxu0 0
      %2043 = vmatpush2.bf16.msra.mxu0 0
      %2044 = vmatprep.subr.bf16.mxu0 0
      %2045 = vmatpush2.bf16.msra.mxu0 0
      %2046 = vmatprep.subr.bf16.mxu0 0
      %2047 = vmatpush2.bf16.msra.mxu0 0
      %2048 = vmatprep.subr.bf16.mxu0 0
      %2049 = vmatpush2.bf16.msra.mxu0 0
      %2050 = vmatprep.subr.bf16.mxu0 0
      %2051 = vmatpush2.bf16.msra.mxu0 0
      %2052 = vmatprep.subr.bf16.mxu0 0
      %2053 = vmatpush2.bf16.msra.mxu0 0
      %2054 = vmatprep.subr.bf16.mxu0 0
      %2055 = vmatpush2.bf16.msra.mxu0 0
      %2056 = vmatprep.subr.bf16.mxu0 0
      %2057 = vmatpush2.bf16.msra.mxu0 0
      %2058 = vmatprep.mubr.bf16.mxu0 0
      %2059 = vmatmul.mubr.bf16.gmra.mxu0 %v899
      %v2060 = vpop.f32.mrf.mxu0
      %v2061 = vadd.f32 0.0, %v2060
      %v2062 = vpop.f32.mrf.mxu0
      %v2063 = vpop.f32.mrf.mxu0
      %v2064 = vadd.f32 0.0, %v2063
      %v2065 = vpop.f32.mrf.mxu0
      %2066 = vmatprep.mubr.bf16.mxu0 0
      %2067 = vmatmul.mubr.bf16.gmra.mxu0 %v902
      %v2068 = vpop.f32.mrf.mxu0
      %v2069 = vadd.f32 0.0, %v2068
      %v2070 = vpop.f32.mrf.mxu0
      %v2071 = vpop.f32.mrf.mxu0
      %v2072 = vpop.f32.mrf.mxu0
      %2073 = vdwg.mxu0
      %v2074 = vpack.c.bf16 %v942, %v939
      %v2075 = vpack.c.bf16 %v947, %v947
      %v2076 = vpack.c.bf16 %v1008, %v1005
      %v2077 = vpack.c.bf16 %v1013, %v1013
      %v2078 = vpack.c.bf16 %v1074, %v1071
      %v2079 = vpack.c.bf16 %v1079, %v1079
      %v2080 = vpack.c.bf16 %v1140, %v1137
      %v2081 = vpack.c.bf16 %v1145, %v1145
      %v2082 = vpack.c.bf16 %v1206, %v1203
      %v2083 = vpack.c.bf16 %v1211, %v1211
      %v2084 = vpack.c.bf16 %v1272, %v1269
      %v2085 = vpack.c.bf16 %v1277, %v1277
      %v2086 = vpack.c.bf16 %v1338, %v1335
      %v2087 = vpack.c.bf16 %v1343, %v1343
      %v2088 = vpack.c.bf16 %v1404, %v1401
      %v2089 = vpack.c.bf16 %v1409, %v1409
      %v2090 = vpack.c.bf16 %v1470, %v1467
      %v2091 = vpack.c.bf16 %v1475, %v1475
      %v2092 = vpack.c.bf16 %v1536, %v1533
      %v2093 = vpack.c.bf16 %v1541, %v1541
      %v2094 = vpack.c.bf16 %v1602, %v1599
      %v2095 = vpack.c.bf16 %v1607, %v1607
      %v2096 = vpack.c.bf16 %v1668, %v1665
      %v2097 = vpack.c.bf16 %v1673, %v1673
      %vm2098 = vcmask 64512
      %v2100 = vsel %vm2098, %v2074, 0
      %v2103 = vsel %vm2098, %v2075, 0
      %v2106 = vsel %vm2098, %v2086, 0
      %v2109 = vsel %vm2098, %v2087, 0
      %2111 = vmatprep.subr.bf16.mxu0 0
      %2112 = vmatpush1.bf16.xpose.msra.mxu0 0
      %2113 = vmatprep.subr.bf16.mxu0 0
      %2114 = vmatpush1.bf16.xpose.msra.mxu0 0
      %2115 = vmatprep.subr.bf16.mxu0 0
      %2116 = vmatpush1.bf16.xpose.msra.mxu0 0
      %2117 = vmatprep.subr.bf16.mxu0 0
      %2118 = vmatpush1.bf16.xpose.msra.mxu0 0
      %2119 = vmatprep.subr.bf16.mxu0 0
      %2120 = vmatpush1.bf16.xpose.msra.mxu0 0
      %2121 = vmatprep.subr.bf16.mxu0 0
      %2122 = vmatpush1.bf16.xpose.msra.mxu0 0
      %2123 = vmatprep.subr.bf16.mxu0 0
      %2124 = vmatpush1.bf16.xpose.msra.mxu0 %v2109
      %2125 = vmatprep.subr.bf16.mxu0 0
      %2126 = vmatpush1.bf16.xpose.msra.mxu0 %v2106
      %2127 = vmatprep.subr.bf16.mxu0 0
      %2128 = vmatpush2.bf16.xpose.msra.mxu0 0
      %2129 = vmatprep.subr.bf16.mxu0 0
      %2130 = vmatpush2.bf16.xpose.msra.mxu0 0
      %2131 = vmatprep.subr.bf16.mxu0 0
      %2132 = vmatpush2.bf16.xpose.msra.mxu0 0
      %2133 = vmatprep.subr.bf16.mxu0 0
      %2134 = vmatpush2.bf16.xpose.msra.mxu0 0
      %2135 = vmatprep.subr.bf16.mxu0 0
      %2136 = vmatpush2.bf16.xpose.msra.mxu0 0
      %2137 = vmatprep.subr.bf16.mxu0 0
      %2138 = vmatpush2.bf16.xpose.msra.mxu0 0
      %2139 = vmatprep.subr.bf16.mxu0 0
      %2140 = vmatpush2.bf16.xpose.msra.mxu0 0
      %2141 = vmatprep.subr.bf16.mxu0 0
      %2142 = vmatpush2.bf16.xpose.msra.mxu0 0
      %2143 = vmatprep.mubr.bf16.mxu0 0
      %2144 = vmatmul.mubr.bf16.gmra.mxu0 %v2100
      %v2145 = vpop.f32.mrf.mxu0
      %v2146 = vadd.f32 0.0, %v2145
      %v2147 = vpop.f32.mrf.mxu0
      %v2148 = vpop.f32.mrf.mxu0
      %v2149 = vadd.f32 0.0, %v2148
      %v2150 = vpop.f32.mrf.mxu0
      %2151 = vmatprep.mubr.bf16.mxu0 0
      %2152 = vmatmul.mubr.bf16.gmra.mxu0 %v2103
      %v2153 = vpop.f32.mrf.mxu0
      %v2154 = vadd.f32 0.0, %v2153
      %v2155 = vpop.f32.mrf.mxu0
      %v2156 = vpop.f32.mrf.mxu0
      %v2157 = vpop.f32.mrf.mxu0
      %2158 = vdwg.mxu0
      %v2160 = vsel %vm2098, %v2076, 0
      %v2163 = vsel %vm2098, %v2077, 0
      %v2166 = vsel %vm2098, %v2088, 0
      %v2169 = vsel %vm2098, %v2089, 0
      %2171 = vmatprep.subr.bf16.mxu0 0
      %2172 = vmatpush1.bf16.xpose.msra.mxu0 0
      %2173 = vmatprep.subr.bf16.mxu0 0
      %2174 = vmatpush1.bf16.xpose.msra.mxu0 0
      %2175 = vmatprep.subr.bf16.mxu0 0
      %2176 = vmatpush1.bf16.xpose.msra.mxu0 0
      %2177 = vmatprep.subr.bf16.mxu0 0
      %2178 = vmatpush1.bf16.xpose.msra.mxu0 0
      %2179 = vmatprep.subr.bf16.mxu0 0
      %2180 = vmatpush1.bf16.xpose.msra.mxu0 0
      %2181 = vmatprep.subr.bf16.mxu0 0
      %2182 = vmatpush1.bf16.xpose.msra.mxu0 0
      %2183 = vmatprep.subr.bf16.mxu0 0
      %2184 = vmatpush1.bf16.xpose.msra.mxu0 %v2169
      %2185 = vmatprep.subr.bf16.mxu0 0
      %2186 = vmatpush1.bf16.xpose.msra.mxu0 %v2166
      %2187 = vmatprep.subr.bf16.mxu0 0
      %2188 = vmatpush2.bf16.xpose.msra.mxu0 0
      %2189 = vmatprep.subr.bf16.mxu0 0
      %2190 = vmatpush2.bf16.xpose.msra.mxu0 0
      %2191 = vmatprep.subr.bf16.mxu0 0
      %2192 = vmatpush2.bf16.xpose.msra.mxu0 0
      %2193 = vmatprep.subr.bf16.mxu0 0
      %2194 = vmatpush2.bf16.xpose.msra.mxu0 0
      %2195 = vmatprep.subr.bf16.mxu0 0
      %2196 = vmatpush2.bf16.xpose.msra.mxu0 0
      %2197 = vmatprep.subr.bf16.mxu0 0
      %2198 = vmatpush2.bf16.xpose.msra.mxu0 0
      %2199 = vmatprep.subr.bf16.mxu0 0
      %2200 = vmatpush2.bf16.xpose.msra.mxu0 0
      %2201 = vmatprep.subr.bf16.mxu0 0
      %2202 = vmatpush2.bf16.xpose.msra.mxu0 0
      %2203 = vmatprep.mubr.bf16.mxu0 0
      %2204 = vmatmul.mubr.bf16.gmra.mxu0 %v2160
      %v2205 = vpop.f32.mrf.mxu0
      %v2206 = vadd.f32 0.0, %v2205
      %v2207 = vpop.f32.mrf.mxu0
      %v2208 = vpop.f32.mrf.mxu0
      %v2209 = vadd.f32 0.0, %v2208
      %v2210 = vpop.f32.mrf.mxu0
      %2211 = vmatprep.mubr.bf16.mxu0 0
      %2212 = vmatmul.mubr.bf16.gmra.mxu0 %v2163
      %v2213 = vpop.f32.mrf.mxu0
      %v2214 = vadd.f32 0.0, %v2213
      %v2215 = vpop.f32.mrf.mxu0
      %v2216 = vpop.f32.mrf.mxu0
      %v2217 = vpop.f32.mrf.mxu0
      %2218 = vdwg.mxu0
      %v2220 = vsel %vm2098, %v2078, 0
      %v2223 = vsel %vm2098, %v2079, 0
      %v2226 = vsel %vm2098, %v2090, 0
      %v2229 = vsel %vm2098, %v2091, 0
      %2231 = vmatprep.subr.bf16.mxu0 0
      %2232 = vmatpush1.bf16.xpose.msra.mxu0 0
      %2233 = vmatprep.subr.bf16.mxu0 0
      %2234 = vmatpush1.bf16.xpose.msra.mxu0 0
      %2235 = vmatprep.subr.bf16.mxu0 0
      %2236 = vmatpush1.bf16.xpose.msra.mxu0 0
      %2237 = vmatprep.subr.bf16.mxu0 0
      %2238 = vmatpush1.bf16.xpose.msra.mxu0 0
      %2239 = vmatprep.subr.bf16.mxu0 0
      %2240 = vmatpush1.bf16.xpose.msra.mxu0 0
      %2241 = vmatprep.subr.bf16.mxu0 0
      %2242 = vmatpush1.bf16.xpose.msra.mxu0 0
      %2243 = vmatprep.subr.bf16.mxu0 0
      %2244 = vmatpush1.bf16.xpose.msra.mxu0 %v2229
      %2245 = vmatprep.subr.bf16.mxu0 0
      %2246 = vmatpush1.bf16.xpose.msra.mxu0 %v2226
      %2247 = vmatprep.subr.bf16.mxu0 0
      %2248 = vmatpush2.bf16.xpose.msra.mxu0 0
      %2249 = vmatprep.subr.bf16.mxu0 0
      %2250 = vmatpush2.bf16.xpose.msra.mxu0 0
      %2251 = vmatprep.subr.bf16.mxu0 0
      %2252 = vmatpush2.bf16.xpose.msra.mxu0 0
      %2253 = vmatprep.subr.bf16.mxu0 0
      %2254 = vmatpush2.bf16.xpose.msra.mxu0 0
      %2255 = vmatprep.subr.bf16.mxu0 0
      %2256 = vmatpush2.bf16.xpose.msra.mxu0 0
      %2257 = vmatprep.subr.bf16.mxu0 0
      %2258 = vmatpush2.bf16.xpose.msra.mxu0 0
      %2259 = vmatprep.subr.bf16.mxu0 0
      %2260 = vmatpush2.bf16.xpose.msra.mxu0 0
      %2261 = vmatprep.subr.bf16.mxu0 0
      %2262 = vmatpush2.bf16.xpose.msra.mxu0 0
      %2263 = vmatprep.mubr.bf16.mxu0 0
      %2264 = vmatmul.mubr.bf16.gmra.mxu0 %v2220
      %v2265 = vpop.f32.mrf.mxu0
      %v2266 = vadd.f32 0.0, %v2265
      %v2267 = vpop.f32.mrf.mxu0
      %v2268 = vpop.f32.mrf.mxu0
      %v2269 = vadd.f32 0.0, %v2268
      %v2270 = vpop.f32.mrf.mxu0
      %2271 = vmatprep.mubr.bf16.mxu0 0
      %2272 = vmatmul.mubr.bf16.gmra.mxu0 %v2223
      %v2273 = vpop.f32.mrf.mxu0
      %v2274 = vadd.f32 0.0, %v2273
      %v2275 = vpop.f32.mrf.mxu0
      %v2276 = vpop.f32.mrf.mxu0
      %v2277 = vpop.f32.mrf.mxu0
      %2278 = vdwg.mxu0
      %v2280 = vsel %vm2098, %v2080, 0
      %v2283 = vsel %vm2098, %v2081, 0
      %v2286 = vsel %vm2098, %v2092, 0
      %v2289 = vsel %vm2098, %v2093, 0
      %2291 = vmatprep.subr.bf16.mxu0 0
      %2292 = vmatpush1.bf16.xpose.msra.mxu0 0
      %2293 = vmatprep.subr.bf16.mxu0 0
      %2294 = vmatpush1.bf16.xpose.msra.mxu0 0
      %2295 = vmatprep.subr.bf16.mxu0 0
      %2296 = vmatpush1.bf16.xpose.msra.mxu0 0
      %2297 = vmatprep.subr.bf16.mxu0 0
      %2298 = vmatpush1.bf16.xpose.msra.mxu0 0
      %2299 = vmatprep.subr.bf16.mxu0 0
      %2300 = vmatpush1.bf16.xpose.msra.mxu0 0
      %2301 = vmatprep.subr.bf16.mxu0 0
      %2302 = vmatpush1.bf16.xpose.msra.mxu0 0
      %2303 = vmatprep.subr.bf16.mxu0 0
      %2304 = vmatpush1.bf16.xpose.msra.mxu0 %v2289
      %2305 = vmatprep.subr.bf16.mxu0 0
      %2306 = vmatpush1.bf16.xpose.msra.mxu0 %v2286
      %2307 = vmatprep.subr.bf16.mxu0 0
      %2308 = vmatpush2.bf16.xpose.msra.mxu0 0
      %2309 = vmatprep.subr.bf16.mxu0 0
      %2310 = vmatpush2.bf16.xpose.msra.mxu0 0
      %2311 = vmatprep.subr.bf16.mxu0 0
      %2312 = vmatpush2.bf16.xpose.msra.mxu0 0
      %2313 = vmatprep.subr.bf16.mxu0 0
      %2314 = vmatpush2.bf16.xpose.msra.mxu0 0
      %2315 = vmatprep.subr.bf16.mxu0 0
      %2316 = vmatpush2.bf16.xpose.msra.mxu0 0
      %2317 = vmatprep.subr.bf16.mxu0 0
      %2318 = vmatpush2.bf16.xpose.msra.mxu0 0
      %2319 = vmatprep.subr.bf16.mxu0 0
      %2320 = vmatpush2.bf16.xpose.msra.mxu0 0
      %2321 = vmatprep.subr.bf16.mxu0 0
      %2322 = vmatpush2.bf16.xpose.msra.mxu0 0
      %2323 = vmatprep.mubr.bf16.mxu0 0
      %2324 = vmatmul.mubr.bf16.gmra.mxu0 %v2280
      %v2325 = vpop.f32.mrf.mxu0
      %v2326 = vadd.f32 0.0, %v2325
      %v2327 = vpop.f32.mrf.mxu0
      %v2328 = vpop.f32.mrf.mxu0
      %v2329 = vadd.f32 0.0, %v2328
      %v2330 = vpop.f32.mrf.mxu0
      %2331 = vmatprep.mubr.bf16.mxu0 0
      %2332 = vmatmul.mubr.bf16.gmra.mxu0 %v2283
      %v2333 = vpop.f32.mrf.mxu0
      %v2334 = vadd.f32 0.0, %v2333
      %v2335 = vpop.f32.mrf.mxu0
      %v2336 = vpop.f32.mrf.mxu0
      %v2337 = vpop.f32.mrf.mxu0
      %2338 = vdwg.mxu0
      %v2340 = vsel %vm2098, %v2082, 0
      %v2343 = vsel %vm2098, %v2083, 0
      %v2346 = vsel %vm2098, %v2094, 0
      %v2349 = vsel %vm2098, %v2095, 0
      %2351 = vmatprep.subr.bf16.mxu0 0
      %2352 = vmatpush1.bf16.xpose.msra.mxu0 0
      %2353 = vmatprep.subr.bf16.mxu0 0
      %2354 = vmatpush1.bf16.xpose.msra.mxu0 0
      %2355 = vmatprep.subr.bf16.mxu0 0
      %2356 = vmatpush1.bf16.xpose.msra.mxu0 0
      %2357 = vmatprep.subr.bf16.mxu0 0
      %2358 = vmatpush1.bf16.xpose.msra.mxu0 0
      %2359 = vmatprep.subr.bf16.mxu0 0
      %2360 = vmatpush1.bf16.xpose.msra.mxu0 0
      %2361 = vmatprep.subr.bf16.mxu0 0
      %2362 = vmatpush1.bf16.xpose.msra.mxu0 0
      %2363 = vmatprep.subr.bf16.mxu0 0
      %2364 = vmatpush1.bf16.xpose.msra.mxu0 %v2349
      %2365 = vmatprep.subr.bf16.mxu0 0
      %2366 = vmatpush1.bf16.xpose.msra.mxu0 %v2346
      %2367 = vmatprep.subr.bf16.mxu0 0
      %2368 = vmatpush2.bf16.xpose.msra.mxu0 0
      %2369 = vmatprep.subr.bf16.mxu0 0
      %2370 = vmatpush2.bf16.xpose.msra.mxu0 0
      %2371 = vmatprep.subr.bf16.mxu0 0
      %2372 = vmatpush2.bf16.xpose.msra.mxu0 0
      %2373 = vmatprep.subr.bf16.mxu0 0
      %2374 = vmatpush2.bf16.xpose.msra.mxu0 0
      %2375 = vmatprep.subr.bf16.mxu0 0
      %2376 = vmatpush2.bf16.xpose.msra.mxu0 0
      %2377 = vmatprep.subr.bf16.mxu0 0
      %2378 = vmatpush2.bf16.xpose.msra.mxu0 0
      %2379 = vmatprep.subr.bf16.mxu0 0
      %2380 = vmatpush2.bf16.xpose.msra.mxu0 0
      %2381 = vmatprep.subr.bf16.mxu0 0
      %2382 = vmatpush2.bf16.xpose.msra.mxu0 0
      %2383 = vmatprep.mubr.bf16.mxu0 0
      %2384 = vmatmul.mubr.bf16.gmra.mxu0 %v2340
      %v2385 = vpop.f32.mrf.mxu0
      %v2386 = vadd.f32 0.0, %v2385
      %v2387 = vpop.f32.mrf.mxu0
      %v2388 = vpop.f32.mrf.mxu0
      %v2389 = vadd.f32 0.0, %v2388
      %v2390 = vpop.f32.mrf.mxu0
      %2391 = vmatprep.mubr.bf16.mxu0 0
      %2392 = vmatmul.mubr.bf16.gmra.mxu0 %v2343
      %v2393 = vpop.f32.mrf.mxu0
      %v2394 = vadd.f32 0.0, %v2393
      %v2395 = vpop.f32.mrf.mxu0
      %v2396 = vpop.f32.mrf.mxu0
      %v2397 = vpop.f32.mrf.mxu0
      %2398 = vdwg.mxu0
      %v2400 = vsel %vm2098, %v2084, 0
      %v2403 = vsel %vm2098, %v2085, 0
      %v2406 = vsel %vm2098, %v2096, 0
      %v2409 = vsel %vm2098, %v2097, 0
      %2411 = vmatprep.subr.bf16.mxu0 0
      %2412 = vmatpush1.bf16.xpose.msra.mxu0 0
      %2413 = vmatprep.subr.bf16.mxu0 0
      %2414 = vmatpush1.bf16.xpose.msra.mxu0 0
      %2415 = vmatprep.subr.bf16.mxu0 0
      %2416 = vmatpush1.bf16.xpose.msra.mxu0 0
      %2417 = vmatprep.subr.bf16.mxu0 0
      %2418 = vmatpush1.bf16.xpose.msra.mxu0 0
      %2419 = vmatprep.subr.bf16.mxu0 0
      %2420 = vmatpush1.bf16.xpose.msra.mxu0 0
      %2421 = vmatprep.subr.bf16.mxu0 0
      %2422 = vmatpush1.bf16.xpose.msra.mxu0 0
      %2423 = vmatprep.subr.bf16.mxu0 0
      %2424 = vmatpush1.bf16.xpose.msra.mxu0 %v2409
      %2425 = vmatprep.subr.bf16.mxu0 0
      %2426 = vmatpush1.bf16.xpose.msra.mxu0 %v2406
      %2427 = vmatprep.subr.bf16.mxu0 0
      %2428 = vmatpush2.bf16.xpose.msra.mxu0 0
      %2429 = vmatprep.subr.bf16.mxu0 0
      %2430 = vmatpush2.bf16.xpose.msra.mxu0 0
      %2431 = vmatprep.subr.bf16.mxu0 0
      %2432 = vmatpush2.bf16.xpose.msra.mxu0 0
      %2433 = vmatprep.subr.bf16.mxu0 0
      %2434 = vmatpush2.bf16.xpose.msra.mxu0 0
      %2435 = vmatprep.subr.bf16.mxu0 0
      %2436 = vmatpush2.bf16.xpose.msra.mxu0 0
      %2437 = vmatprep.subr.bf16.mxu0 0
      %2438 = vmatpush2.bf16.xpose.msra.mxu0 0
      %2439 = vmatprep.subr.bf16.mxu0 0
      %2440 = vmatpush2.bf16.xpose.msra.mxu0 0
      %2441 = vmatprep.subr.bf16.mxu0 0
      %2442 = vmatpush2.bf16.xpose.msra.mxu0 0
      %2443 = vmatprep.mubr.bf16.mxu0 0
      %2444 = vmatmul.mubr.bf16.gmra.mxu0 %v2400
      %v2445 = vpop.f32.mrf.mxu0
      %v2446 = vadd.f32 0.0, %v2445
      %v2447 = vpop.f32.mrf.mxu0
      %v2448 = vpop.f32.mrf.mxu0
      %v2449 = vadd.f32 0.0, %v2448
      %v2450 = vpop.f32.mrf.mxu0
      %2451 = vmatprep.mubr.bf16.mxu0 0
      %2452 = vmatmul.mubr.bf16.gmra.mxu0 %v2403
      %v2453 = vpop.f32.mrf.mxu0
      %v2454 = vadd.f32 0.0, %v2453
      %v2455 = vpop.f32.mrf.mxu0
      %v2456 = vpop.f32.mrf.mxu0
      %v2457 = vpop.f32.mrf.mxu0
      %2458 = vdwg.mxu0
      %v2459 = vmul.f32 %v2146, 0.35355338
      %v2460 = vmul.f32 %v2149, 0.35355338
      %v2461 = vmul.f32 %v2154, 0.35355338
      %v2462 = vmul.f32 %v2206, 0.35355338
      %v2463 = vmul.f32 %v2209, 0.35355338
      %v2464 = vmul.f32 %v2214, 0.35355338
      %v2465 = vmul.f32 %v2266, 0.35355338
      %v2466 = vmul.f32 %v2269, 0.35355338
      %v2467 = vmul.f32 %v2274, 0.35355338
      %v2468 = vmul.f32 %v2326, 0.35355338
      %v2469 = vmul.f32 %v2329, 0.35355338
      %v2470 = vmul.f32 %v2334, 0.35355338
      %v2471 = vmul.f32 %v2386, 0.35355338
      %v2472 = vmul.f32 %v2389, 0.35355338
      %v2473 = vmul.f32 %v2394, 0.35355338
      %v2474 = vmul.f32 %v2446, 0.35355338
      %v2475 = vmul.f32 %v2449, 0.35355338
      %v2476 = vmul.f32 %v2454, 0.35355338
      %vm2477 = vcmask 138240
      %v2478 = vsel %vm2477, %v2459, -inf
      %2479 = vmax.xlane.f32.xlu0 %v2478
      %v2480 = vpop.xlane.xlu0 %2479
      %v2481 = vsel %vm2477, %v2460, -inf
      %2482 = vmax.xlane.f32.xlu0 %v2481
      %v2483 = vpop.xlane.xlu0 %2482
      %vm2484 = vcmask 131072
      %v2485 = vsel %vm2484, %v2461, -inf
      %2486 = vmax.xlane.f32.xlu0 %v2485
      %v2487 = vpop.xlane.xlu0 %2486
      %v2488 = vsel %vm2477, %v2462, -inf
      %2489 = vmax.xlane.f32.xlu0 %v2488
      %v2490 = vpop.xlane.xlu0 %2489
      %v2491 = vsel %vm2477, %v2463, -inf
      %2492 = vmax.xlane.f32.xlu0 %v2491
      %v2493 = vpop.xlane.xlu0 %2492
      %v2494 = vsel %vm2484, %v2464, -inf
      %2495 = vmax.xlane.f32.xlu0 %v2494
      %v2496 = vpop.xlane.xlu0 %2495
      %v2497 = vsel %vm2477, %v2465, -inf
      %2498 = vmax.xlane.f32.xlu0 %v2497
      %v2499 = vpop.xlane.xlu0 %2498
      %v2500 = vsel %vm2477, %v2466, -inf
      %2501 = vmax.xlane.f32.xlu0 %v2500
      %v2502 = vpop.xlane.xlu0 %2501
      %v2503 = vsel %vm2484, %v2467, -inf
      %2504 = vmax.xlane.f32.xlu0 %v2503
      %v2505 = vpop.xlane.xlu0 %2504
      %v2506 = vsel %vm2477, %v2468, -inf
      %2507 = vmax.xlane.f32.xlu0 %v2506
      %v2508 = vpop.xlane.xlu0 %2507
      %v2509 = vsel %vm2477, %v2469, -inf
      %2510 = vmax.xlane.f32.xlu0 %v2509
      %v2511 = vpop.xlane.xlu0 %2510
      %v2512 = vsel %vm2484, %v2470, -inf
      %2513 = vmax.xlane.f32.xlu0 %v2512
      %v2514 = vpop.xlane.xlu0 %2513
      %v2515 = vsel %vm2477, %v2471, -inf
      %2516 = vmax.xlane.f32.xlu0 %v2515
      %v2517 = vpop.xlane.xlu0 %2516
      %v2518 = vsel %vm2477, %v2472, -inf
      %2519 = vmax.xlane.f32.xlu0 %v2518
      %v2520 = vpop.xlane.xlu0 %2519
      %v2521 = vsel %vm2484, %v2473, -inf
      %2522 = vmax.xlane.f32.xlu0 %v2521
      %v2523 = vpop.xlane.xlu0 %2522
      %v2524 = vsel %vm2477, %v2474, -inf
      %2525 = vmax.xlane.f32.xlu0 %v2524
      %v2526 = vpop.xlane.xlu0 %2525
      %v2527 = vsel %vm2477, %v2475, -inf
      %2528 = vmax.xlane.f32.xlu0 %v2527
      %v2529 = vpop.xlane.xlu0 %2528
      %v2530 = vsel %vm2484, %v2476, -inf
      %2531 = vmax.xlane.f32.xlu0 %v2530
      %v2532 = vpop.xlane.xlu0 %2531
      %v2533 = vsub.f32 %v2459, %v2480
      %v2534 = vsub.f32 %v2460, %v2483
      %v2535 = vsub.f32 %v2461, %v2487
      %v2536 = vsub.f32 %v2462, %v2490
      %v2537 = vsub.f32 %v2463, %v2493
      %v2538 = vsub.f32 %v2464, %v2496
      %v2539 = vsub.f32 %v2465, %v2499
      %v2540 = vsub.f32 %v2466, %v2502
      %v2541 = vsub.f32 %v2467, %v2505
      %v2542 = vsub.f32 %v2468, %v2508
      %v2543 = vsub.f32 %v2469, %v2511
      %v2544 = vsub.f32 %v2470, %v2514
      %v2545 = vsub.f32 %v2471, %v2517
      %v2546 = vsub.f32 %v2472, %v2520
      %v2547 = vsub.f32 %v2473, %v2523
      %v2548 = vsub.f32 %v2474, %v2526
      %v2549 = vsub.f32 %v2475, %v2529
      %v2550 = vsub.f32 %v2476, %v2532
      %v2551 = vmul.f32 %v2533, 1.442695
      %v2552 = vpow.pop %v2551
      %v2553 = vmul.f32 %v2534, 1.442695
      %v2554 = vpow.pop %v2553
      %v2555 = vmul.f32 %v2535, 1.442695
      %v2556 = vpow.pop %v2555
      %v2557 = vmul.f32 %v2536, 1.442695
      %v2558 = vpow.pop %v2557
      %v2559 = vmul.f32 %v2537, 1.442695
      %v2560 = vpow.pop %v2559
      %v2561 = vmul.f32 %v2538, 1.442695
      %v2562 = vpow.pop %v2561
      %v2563 = vmul.f32 %v2539, 1.442695
      %v2564 = vpow.pop %v2563
      %v2565 = vmul.f32 %v2540, 1.442695
      %v2566 = vpow.pop %v2565
      %v2567 = vmul.f32 %v2541, 1.442695
      %v2568 = vpow.pop %v2567
      %v2569 = vmul.f32 %v2542, 1.442695
      %v2570 = vpow.pop %v2569
      %v2571 = vmul.f32 %v2543, 1.442695
      %v2572 = vpow.pop %v2571
      %v2573 = vmul.f32 %v2544, 1.442695
      %v2574 = vpow.pop %v2573
      %v2575 = vmul.f32 %v2545, 1.442695
      %v2576 = vpow.pop %v2575
      %v2577 = vmul.f32 %v2546, 1.442695
      %v2578 = vpow.pop %v2577
      %v2579 = vmul.f32 %v2547, 1.442695
      %v2580 = vpow.pop %v2579
      %v2581 = vmul.f32 %v2548, 1.442695
      %v2582 = vpow.pop %v2581
      %v2583 = vmul.f32 %v2549, 1.442695
      %v2584 = vpow.pop %v2583
      %v2585 = vmul.f32 %v2550, 1.442695
      %v2586 = vpow.pop %v2585
      %v2587 = vsel %vm2477, %v2552, 0.0
      %2588 = vadd.xlane.f32.xlu0 %v2587
      %v2589 = vpop.xlane.xlu0 %2588
      %v2590 = vsel %vm2477, %v2554, 0.0
      %2591 = vadd.xlane.f32.xlu0 %v2590
      %v2592 = vpop.xlane.xlu0 %2591
      %v2593 = vsel %vm2484, %v2556, 0.0
      %2594 = vadd.xlane.f32.xlu0 %v2593
      %v2595 = vpop.xlane.xlu0 %2594
      %v2596 = vsel %vm2477, %v2558, 0.0
      %2597 = vadd.xlane.f32.xlu0 %v2596
      %v2598 = vpop.xlane.xlu0 %2597
      %v2599 = vsel %vm2477, %v2560, 0.0
      %2600 = vadd.xlane.f32.xlu0 %v2599
      %v2601 = vpop.xlane.xlu0 %2600
      %v2602 = vsel %vm2484, %v2562, 0.0
      %2603 = vadd.xlane.f32.xlu0 %v2602
      %v2604 = vpop.xlane.xlu0 %2603
      %v2605 = vsel %vm2477, %v2564, 0.0
      %2606 = vadd.xlane.f32.xlu0 %v2605
      %v2607 = vpop.xlane.xlu0 %2606
      %v2608 = vsel %vm2477, %v2566, 0.0
      %2609 = vadd.xlane.f32.xlu0 %v2608
      %v2610 = vpop.xlane.xlu0 %2609
      %v2611 = vsel %vm2484, %v2568, 0.0
      %2612 = vadd.xlane.f32.xlu0 %v2611
      %v2613 = vpop.xlane.xlu0 %2612
      %v2614 = vsel %vm2477, %v2570, 0.0
      %2615 = vadd.xlane.f32.xlu0 %v2614
      %v2616 = vpop.xlane.xlu0 %2615
      %v2617 = vsel %vm2477, %v2572, 0.0
      %2618 = vadd.xlane.f32.xlu0 %v2617
      %v2619 = vpop.xlane.xlu0 %2618
      %v2620 = vsel %vm2484, %v2574, 0.0
      %2621 = vadd.xlane.f32.xlu0 %v2620
      %v2622 = vpop.xlane.xlu0 %2621
      %v2623 = vsel %vm2477, %v2576, 0.0
      %2624 = vadd.xlane.f32.xlu0 %v2623
      %v2625 = vpop.xlane.xlu0 %2624
      %v2626 = vsel %vm2477, %v2578, 0.0
      %2627 = vadd.xlane.f32.xlu0 %v2626
      %v2628 = vpop.xlane.xlu0 %2627
      %v2629 = vsel %vm2484, %v2580, 0.0
      %2630 = vadd.xlane.f32.xlu0 %v2629
      %v2631 = vpop.xlane.xlu0 %2630
      %v2632 = vsel %vm2477, %v2582, 0.0
      %2633 = vadd.xlane.f32.xlu0 %v2632
      %v2634 = vpop.xlane.xlu0 %2633
      %v2635 = vsel %vm2477, %v2584, 0.0
      %2636 = vadd.xlane.f32.xlu0 %v2635
      %v2637 = vpop.xlane.xlu0 %2636
      %v2638 = vsel %vm2484, %v2586, 0.0
      %2639 = vadd.xlane.f32.xlu0 %v2638
      %v2640 = vpop.xlane.xlu0 %2639
      %v2641 = vrcp.pop %v2589
      %v2642 = vrcp.pop %v2592
      %v2643 = vrcp.pop %v2595
      %v2644 = vrcp.pop %v2598
      %v2645 = vrcp.pop %v2601
      %v2646 = vrcp.pop %v2604
      %v2647 = vrcp.pop %v2607
      %v2648 = vrcp.pop %v2610
      %v2649 = vrcp.pop %v2613
      %v2650 = vrcp.pop %v2616
      %v2651 = vrcp.pop %v2619
      %v2652 = vrcp.pop %v2622
      %v2653 = vrcp.pop %v2625
      %v2654 = vrcp.pop %v2628
      %v2655 = vrcp.pop %v2631
      %v2656 = vrcp.pop %v2634
      %v2657 = vrcp.pop %v2637
      %v2658 = vrcp.pop %v2640
      %v2659 = vmul.f32 %v2552, %v2641
      %v2660 = vmul.f32 %v2554, %v2642
      %v2661 = vmul.f32 %v2556, %v2643
      %v2662 = vmul.f32 %v2558, %v2644
      %v2663 = vmul.f32 %v2560, %v2645
      %v2664 = vmul.f32 %v2562, %v2646
      %v2665 = vmul.f32 %v2564, %v2647
      %v2666 = vmul.f32 %v2566, %v2648
      %v2667 = vmul.f32 %v2568, %v2649
      %v2668 = vmul.f32 %v2570, %v2650
      %v2669 = vmul.f32 %v2572, %v2651
      %v2670 = vmul.f32 %v2574, %v2652
      %v2671 = vmul.f32 %v2576, %v2653
      %v2672 = vmul.f32 %v2578, %v2654
      %v2673 = vmul.f32 %v2580, %v2655
      %v2674 = vmul.f32 %v2582, %v2656
      %v2675 = vmul.f32 %v2584, %v2657
      %v2676 = vmul.f32 %v2586, %v2658
      %v2677 = vpack.c.bf16 %v2660, %v2659
      %v2678 = vpack.c.bf16 %v2661, %v2661
      %v2679 = vpack.c.bf16 %v2663, %v2662
      %v2680 = vpack.c.bf16 %v2664, %v2664
      %v2681 = vpack.c.bf16 %v2666, %v2665
      %v2682 = vpack.c.bf16 %v2667, %v2667
      %v2683 = vpack.c.bf16 %v2669, %v2668
      %v2684 = vpack.c.bf16 %v2670, %v2670
      %v2685 = vpack.c.bf16 %v2672, %v2671
      %v2686 = vpack.c.bf16 %v2673, %v2673
      %v2687 = vpack.c.bf16 %v2675, %v2674
      %v2688 = vpack.c.bf16 %v2676, %v2676
      %v2689 = vpack.c.bf16 %v1734, %v1731
      %v2690 = vpack.c.bf16 %v1739, %v1739
      %v2691 = vpack.c.bf16 %v1800, %v1797
      %v2692 = vpack.c.bf16 %v1805, %v1805
      %v2693 = vpack.c.bf16 %v1866, %v1863
      %v2694 = vpack.c.bf16 %v1871, %v1871
      %v2695 = vpack.c.bf16 %v1932, %v1929
      %v2696 = vpack.c.bf16 %v1937, %v1937
      %v2697 = vpack.c.bf16 %v1998, %v1995
      %v2698 = vpack.c.bf16 %v2003, %v2003
      %v2699 = vpack.c.bf16 %v2064, %v2061
      %v2700 = vpack.c.bf16 %v2069, %v2069
      %v2702 = vsel %vm2477, %v2677, 0
      %v2705 = vsel %vm2477, %v2678, 0
      %vm2707 = vcmask 1040384
      %v2708 = vsel 0, 4294967295, 65535
      %v2709 = vsel %vm2707, %v2708, 0
      %v2711 = vand.u32 %v2690, %v2709
      %2713 = vmatprep.subr.bf16.mxu0 0
      %2714 = vmatpush1.bf16.msra.mxu0 0
      %2715 = vmatprep.subr.bf16.mxu0 0
      %2716 = vmatpush1.bf16.msra.mxu0 0
      %2717 = vmatprep.subr.bf16.mxu0 0
      %2718 = vmatpush1.bf16.msra.mxu0 0
      %2719 = vmatprep.subr.bf16.mxu0 0
      %2720 = vmatpush1.bf16.msra.mxu0 0
      %2721 = vmatprep.subr.bf16.mxu0 0
      %2722 = vmatpush1.bf16.msra.mxu0 0
      %2723 = vmatprep.subr.bf16.mxu0 0
      %2724 = vmatpush1.bf16.msra.mxu0 0
      %2725 = vmatprep.subr.bf16.mxu0 0
      %2726 = vmatpush1.bf16.msra.mxu0 %v2711
      %2727 = vmatprep.subr.bf16.mxu0 0
      %2728 = vmatpush1.bf16.msra.mxu0 %v2689
      %2729 = vmatprep.subr.bf16.mxu0 0
      %2730 = vmatpush2.bf16.msra.mxu0 0
      %2731 = vmatprep.subr.bf16.mxu0 0
      %2732 = vmatpush2.bf16.msra.mxu0 0
      %2733 = vmatprep.subr.bf16.mxu0 0
      %2734 = vmatpush2.bf16.msra.mxu0 0
      %2735 = vmatprep.subr.bf16.mxu0 0
      %2736 = vmatpush2.bf16.msra.mxu0 0
      %2737 = vmatprep.subr.bf16.mxu0 0
      %2738 = vmatpush2.bf16.msra.mxu0 0
      %2739 = vmatprep.subr.bf16.mxu0 0
      %2740 = vmatpush2.bf16.msra.mxu0 0
      %2741 = vmatprep.subr.bf16.mxu0 0
      %2742 = vmatpush2.bf16.msra.mxu0 0
      %2743 = vmatprep.subr.bf16.mxu0 0
      %2744 = vmatpush2.bf16.msra.mxu0 0
      %2745 = vmatprep.mubr.bf16.mxu0 0
      %2746 = vmatmul.mubr.bf16.gmra.mxu0 %v2702
      %v2747 = vpop.f32.mrf.mxu0
      %v2748 = vadd.f32 0.0, %v2747
      %v2749 = vpop.f32.mrf.mxu0
      %v2750 = vpop.f32.mrf.mxu0
      %v2751 = vadd.f32 0.0, %v2750
      %v2752 = vpop.f32.mrf.mxu0
      %2753 = vmatprep.mubr.bf16.mxu0 0
      %2754 = vmatmul.mubr.bf16.gmra.mxu0 %v2705
      %v2755 = vpop.f32.mrf.mxu0
      %v2756 = vadd.f32 0.0, %v2755
      %v2757 = vpop.f32.mrf.mxu0
      %v2758 = vpop.f32.mrf.mxu0
      %v2759 = vpop.f32.mrf.mxu0
      %2760 = vdwg.mxu0
      %v2762 = vsel %vm2477, %v2679, 0
      %v2765 = vsel %vm2477, %v2680, 0
      %v2768 = vand.u32 %v2692, %v2709
      %2770 = vmatprep.subr.bf16.mxu0 0
      %2771 = vmatpush1.bf16.msra.mxu0 0
      %2772 = vmatprep.subr.bf16.mxu0 0
      %2773 = vmatpush1.bf16.msra.mxu0 0
      %2774 = vmatprep.subr.bf16.mxu0 0
      %2775 = vmatpush1.bf16.msra.mxu0 0
      %2776 = vmatprep.subr.bf16.mxu0 0
      %2777 = vmatpush1.bf16.msra.mxu0 0
      %2778 = vmatprep.subr.bf16.mxu0 0
      %2779 = vmatpush1.bf16.msra.mxu0 0
      %2780 = vmatprep.subr.bf16.mxu0 0
      %2781 = vmatpush1.bf16.msra.mxu0 0
      %2782 = vmatprep.subr.bf16.mxu0 0
      %2783 = vmatpush1.bf16.msra.mxu0 %v2768
      %2784 = vmatprep.subr.bf16.mxu0 0
      %2785 = vmatpush1.bf16.msra.mxu0 %v2691
      %2786 = vmatprep.subr.bf16.mxu0 0
      %2787 = vmatpush2.bf16.msra.mxu0 0
      %2788 = vmatprep.subr.bf16.mxu0 0
      %2789 = vmatpush2.bf16.msra.mxu0 0
      %2790 = vmatprep.subr.bf16.mxu0 0
      %2791 = vmatpush2.bf16.msra.mxu0 0
      %2792 = vmatprep.subr.bf16.mxu0 0
      %2793 = vmatpush2.bf16.msra.mxu0 0
      %2794 = vmatprep.subr.bf16.mxu0 0
      %2795 = vmatpush2.bf16.msra.mxu0 0
      %2796 = vmatprep.subr.bf16.mxu0 0
      %2797 = vmatpush2.bf16.msra.mxu0 0
      %2798 = vmatprep.subr.bf16.mxu0 0
      %2799 = vmatpush2.bf16.msra.mxu0 0
      %2800 = vmatprep.subr.bf16.mxu0 0
      %2801 = vmatpush2.bf16.msra.mxu0 0
      %2802 = vmatprep.mubr.bf16.mxu0 0
      %2803 = vmatmul.mubr.bf16.gmra.mxu0 %v2762
      %v2804 = vpop.f32.mrf.mxu0
      %v2805 = vadd.f32 0.0, %v2804
      %v2806 = vpop.f32.mrf.mxu0
      %v2807 = vpop.f32.mrf.mxu0
      %v2808 = vadd.f32 0.0, %v2807
      %v2809 = vpop.f32.mrf.mxu0
      %2810 = vmatprep.mubr.bf16.mxu0 0
      %2811 = vmatmul.mubr.bf16.gmra.mxu0 %v2765
      %v2812 = vpop.f32.mrf.mxu0
      %v2813 = vadd.f32 0.0, %v2812
      %v2814 = vpop.f32.mrf.mxu0
      %v2815 = vpop.f32.mrf.mxu0
      %v2816 = vpop.f32.mrf.mxu0
      %2817 = vdwg.mxu0
      %v2819 = vsel %vm2477, %v2681, 0
      %v2822 = vsel %vm2477, %v2682, 0
      %v2825 = vand.u32 %v2694, %v2709
      %2827 = vmatprep.subr.bf16.mxu0 0
      %2828 = vmatpush1.bf16.msra.mxu0 0
      %2829 = vmatprep.subr.bf16.mxu0 0
      %2830 = vmatpush1.bf16.msra.mxu0 0
      %2831 = vmatprep.subr.bf16.mxu0 0
      %2832 = vmatpush1.bf16.msra.mxu0 0
      %2833 = vmatprep.subr.bf16.mxu0 0
      %2834 = vmatpush1.bf16.msra.mxu0 0
      %2835 = vmatprep.subr.bf16.mxu0 0
      %2836 = vmatpush1.bf16.msra.mxu0 0
      %2837 = vmatprep.subr.bf16.mxu0 0
      %2838 = vmatpush1.bf16.msra.mxu0 0
      %2839 = vmatprep.subr.bf16.mxu0 0
      %2840 = vmatpush1.bf16.msra.mxu0 %v2825
      %2841 = vmatprep.subr.bf16.mxu0 0
      %2842 = vmatpush1.bf16.msra.mxu0 %v2693
      %2843 = vmatprep.subr.bf16.mxu0 0
      %2844 = vmatpush2.bf16.msra.mxu0 0
      %2845 = vmatprep.subr.bf16.mxu0 0
      %2846 = vmatpush2.bf16.msra.mxu0 0
      %2847 = vmatprep.subr.bf16.mxu0 0
      %2848 = vmatpush2.bf16.msra.mxu0 0
      %2849 = vmatprep.subr.bf16.mxu0 0
      %2850 = vmatpush2.bf16.msra.mxu0 0
      %2851 = vmatprep.subr.bf16.mxu0 0
      %2852 = vmatpush2.bf16.msra.mxu0 0
      %2853 = vmatprep.subr.bf16.mxu0 0
      %2854 = vmatpush2.bf16.msra.mxu0 0
      %2855 = vmatprep.subr.bf16.mxu0 0
      %2856 = vmatpush2.bf16.msra.mxu0 0
      %2857 = vmatprep.subr.bf16.mxu0 0
      %2858 = vmatpush2.bf16.msra.mxu0 0
      %2859 = vmatprep.mubr.bf16.mxu0 0
      %2860 = vmatmul.mubr.bf16.gmra.mxu0 %v2819
      %v2861 = vpop.f32.mrf.mxu0
      %v2862 = vadd.f32 0.0, %v2861
      %v2863 = vpop.f32.mrf.mxu0
      %v2864 = vpop.f32.mrf.mxu0
      %v2865 = vadd.f32 0.0, %v2864
      %v2866 = vpop.f32.mrf.mxu0
      %2867 = vmatprep.mubr.bf16.mxu0 0
      %2868 = vmatmul.mubr.bf16.gmra.mxu0 %v2822
      %v2869 = vpop.f32.mrf.mxu0
      %v2870 = vadd.f32 0.0, %v2869
      %v2871 = vpop.f32.mrf.mxu0
      %v2872 = vpop.f32.mrf.mxu0
      %v2873 = vpop.f32.mrf.mxu0
      %2874 = vdwg.mxu0
      %v2876 = vsel %vm2477, %v2683, 0
      %v2879 = vsel %vm2477, %v2684, 0
      %v2882 = vand.u32 %v2696, %v2709
      %2884 = vmatprep.subr.bf16.mxu0 0
      %2885 = vmatpush1.bf16.msra.mxu0 0
      %2886 = vmatprep.subr.bf16.mxu0 0
      %2887 = vmatpush1.bf16.msra.mxu0 0
      %2888 = vmatprep.subr.bf16.mxu0 0
      %2889 = vmatpush1.bf16.msra.mxu0 0
      %2890 = vmatprep.subr.bf16.mxu0 0
      %2891 = vmatpush1.bf16.msra.mxu0 0
      %2892 = vmatprep.subr.bf16.mxu0 0
      %2893 = vmatpush1.bf16.msra.mxu0 0
      %2894 = vmatprep.subr.bf16.mxu0 0
      %2895 = vmatpush1.bf16.msra.mxu0 0
      %2896 = vmatprep.subr.bf16.mxu0 0
      %2897 = vmatpush1.bf16.msra.mxu0 %v2882
      %2898 = vmatprep.subr.bf16.mxu0 0
      %2899 = vmatpush1.bf16.msra.mxu0 %v2695
      %2900 = vmatprep.subr.bf16.mxu0 0
      %2901 = vmatpush2.bf16.msra.mxu0 0
      %2902 = vmatprep.subr.bf16.mxu0 0
      %2903 = vmatpush2.bf16.msra.mxu0 0
      %2904 = vmatprep.subr.bf16.mxu0 0
      %2905 = vmatpush2.bf16.msra.mxu0 0
      %2906 = vmatprep.subr.bf16.mxu0 0
      %2907 = vmatpush2.bf16.msra.mxu0 0
      %2908 = vmatprep.subr.bf16.mxu0 0
      %2909 = vmatpush2.bf16.msra.mxu0 0
      %2910 = vmatprep.subr.bf16.mxu0 0
      %2911 = vmatpush2.bf16.msra.mxu0 0
      %2912 = vmatprep.subr.bf16.mxu0 0
      %2913 = vmatpush2.bf16.msra.mxu0 0
      %2914 = vmatprep.subr.bf16.mxu0 0
      %2915 = vmatpush2.bf16.msra.mxu0 0
      %2916 = vmatprep.mubr.bf16.mxu0 0
      %2917 = vmatmul.mubr.bf16.gmra.mxu0 %v2876
      %v2918 = vpop.f32.mrf.mxu0
      %v2919 = vadd.f32 0.0, %v2918
      %v2920 = vpop.f32.mrf.mxu0
      %v2921 = vpop.f32.mrf.mxu0
      %v2922 = vadd.f32 0.0, %v2921
      %v2923 = vpop.f32.mrf.mxu0
      %2924 = vmatprep.mubr.bf16.mxu0 0
      %2925 = vmatmul.mubr.bf16.gmra.mxu0 %v2879
      %v2926 = vpop.f32.mrf.mxu0
      %v2927 = vadd.f32 0.0, %v2926
      %v2928 = vpop.f32.mrf.mxu0
      %v2929 = vpop.f32.mrf.mxu0
      %v2930 = vpop.f32.mrf.mxu0
      %2931 = vdwg.mxu0
      %v2933 = vsel %vm2477, %v2685, 0
      %v2936 = vsel %vm2477, %v2686, 0
      %v2939 = vand.u32 %v2698, %v2709
      %2941 = vmatprep.subr.bf16.mxu0 0
      %2942 = vmatpush1.bf16.msra.mxu0 0
      %2943 = vmatprep.subr.bf16.mxu0 0
      %2944 = vmatpush1.bf16.msra.mxu0 0
      %2945 = vmatprep.subr.bf16.mxu0 0
      %2946 = vmatpush1.bf16.msra.mxu0 0
      %2947 = vmatprep.subr.bf16.mxu0 0
      %2948 = vmatpush1.bf16.msra.mxu0 0
      %2949 = vmatprep.subr.bf16.mxu0 0
      %2950 = vmatpush1.bf16.msra.mxu0 0
      %2951 = vmatprep.subr.bf16.mxu0 0
      %2952 = vmatpush1.bf16.msra.mxu0 0
      %2953 = vmatprep.subr.bf16.mxu0 0
      %2954 = vmatpush1.bf16.msra.mxu0 %v2939
      %2955 = vmatprep.subr.bf16.mxu0 0
      %2956 = vmatpush1.bf16.msra.mxu0 %v2697
      %2957 = vmatprep.subr.bf16.mxu0 0
      %2958 = vmatpush2.bf16.msra.mxu0 0
      %2959 = vmatprep.subr.bf16.mxu0 0
      %2960 = vmatpush2.bf16.msra.mxu0 0
      %2961 = vmatprep.subr.bf16.mxu0 0
      %2962 = vmatpush2.bf16.msra.mxu0 0
      %2963 = vmatprep.subr.bf16.mxu0 0
      %2964 = vmatpush2.bf16.msra.mxu0 0
      %2965 = vmatprep.subr.bf16.mxu0 0
      %2966 = vmatpush2.bf16.msra.mxu0 0
      %2967 = vmatprep.subr.bf16.mxu0 0
      %2968 = vmatpush2.bf16.msra.mxu0 0
      %2969 = vmatprep.subr.bf16.mxu0 0
      %2970 = vmatpush2.bf16.msra.mxu0 0
      %2971 = vmatprep.subr.bf16.mxu0 0
      %2972 = vmatpush2.bf16.msra.mxu0 0
      %2973 = vmatprep.mubr.bf16.mxu0 0
      %2974 = vmatmul.mubr.bf16.gmra.mxu0 %v2933
      %v2975 = vpop.f32.mrf.mxu0
      %v2976 = vadd.f32 0.0, %v2975
      %v2977 = vpop.f32.mrf.mxu0
      %v2978 = vpop.f32.mrf.mxu0
      %v2979 = vadd.f32 0.0, %v2978
      %v2980 = vpop.f32.mrf.mxu0
      %2981 = vmatprep.mubr.bf16.mxu0 0
      %2982 = vmatmul.mubr.bf16.gmra.mxu0 %v2936
      %v2983 = vpop.f32.mrf.mxu0
      %v2984 = vadd.f32 0.0, %v2983
      %v2985 = vpop.f32.mrf.mxu0
      %v2986 = vpop.f32.mrf.mxu0
      %v2987 = vpop.f32.mrf.mxu0
      %2988 = vdwg.mxu0
      %v2990 = vsel %vm2477, %v2687, 0
      %v2993 = vsel %vm2477, %v2688, 0
      %v2996 = vand.u32 %v2700, %v2709
      %2998 = vmatprep.subr.bf16.mxu0 0
      %2999 = vmatpush1.bf16.msra.mxu0 0
      %3000 = vmatprep.subr.bf16.mxu0 0
      %3001 = vmatpush1.bf16.msra.mxu0 0
      %3002 = vmatprep.subr.bf16.mxu0 0
      %3003 = vmatpush1.bf16.msra.mxu0 0
      %3004 = vmatprep.subr.bf16.mxu0 0
      %3005 = vmatpush1.bf16.msra.mxu0 0
      %3006 = vmatprep.subr.bf16.mxu0 0
      %3007 = vmatpush1.bf16.msra.mxu0 0
      %3008 = vmatprep.subr.bf16.mxu0 0
      %3009 = vmatpush1.bf16.msra.mxu0 0
      %3010 = vmatprep.subr.bf16.mxu0 0
      %3011 = vmatpush1.bf16.msra.mxu0 %v2996
      %3012 = vmatprep.subr.bf16.mxu0 0
      %3013 = vmatpush1.bf16.msra.mxu0 %v2699
      %3014 = vmatprep.subr.bf16.mxu0 0
      %3015 = vmatpush2.bf16.msra.mxu0 0
      %3016 = vmatprep.subr.bf16.mxu0 0
      %3017 = vmatpush2.bf16.msra.mxu0 0
      %3018 = vmatprep.subr.bf16.mxu0 0
      %3019 = vmatpush2.bf16.msra.mxu0 0
      %3020 = vmatprep.subr.bf16.mxu0 0
      %3021 = vmatpush2.bf16.msra.mxu0 0
      %3022 = vmatprep.subr.bf16.mxu0 0
      %3023 = vmatpush2.bf16.msra.mxu0 0
      %3024 = vmatprep.subr.bf16.mxu0 0
      %3025 = vmatpush2.bf16.msra.mxu0 0
      %3026 = vmatprep.subr.bf16.mxu0 0
      %3027 = vmatpush2.bf16.msra.mxu0 0
      %3028 = vmatprep.subr.bf16.mxu0 0
      %3029 = vmatpush2.bf16.msra.mxu0 0
      %3030 = vmatprep.mubr.bf16.mxu0 0
      %3031 = vmatmul.mubr.bf16.gmra.mxu0 %v2990
      %v3032 = vpop.f32.mrf.mxu0
      %v3033 = vadd.f32 0.0, %v3032
      %v3034 = vpop.f32.mrf.mxu0
      %v3035 = vpop.f32.mrf.mxu0
      %v3036 = vadd.f32 0.0, %v3035
      %v3037 = vpop.f32.mrf.mxu0
      %3038 = vmatprep.mubr.bf16.mxu0 0
      %3039 = vmatmul.mubr.bf16.gmra.mxu0 %v2993
      %v3040 = vpop.f32.mrf.mxu0
      %v3041 = vadd.f32 0.0, %v3040
      %v3042 = vpop.f32.mrf.mxu0
      %v3043 = vpop.f32.mrf.mxu0
      %v3044 = vpop.f32.mrf.mxu0
      %3045 = vdwg.mxu0
      %v3046 = vpack.c.bf16 %v2751, %v2748
      %v3047 = vpack.c.bf16 %v2756, %v2756
      %v3048 = vpack.c.bf16 %v2808, %v2805
      %v3049 = vpack.c.bf16 %v2813, %v2813
      %v3050 = vpack.c.bf16 %v2865, %v2862
      %v3051 = vpack.c.bf16 %v2870, %v2870
      %v3052 = vpack.c.bf16 %v2922, %v2919
      %v3053 = vpack.c.bf16 %v2927, %v2927
      %v3054 = vpack.c.bf16 %v2979, %v2976
      %v3055 = vpack.c.bf16 %v2984, %v2984
      %v3056 = vpack.c.bf16 %v3036, %v3033
      %v3057 = vpack.c.bf16 %v3041, %v3041
      %v3058 = vld [vmem:[%s9] sm:$0xf]
      %v3059 = vld [vmem:[%s9 + $0x4] sm:$0xf]
      %v3060 = vld [vmem:[%s9 + $0x8] sm:$0xf]
      %v3061 = vld [vmem:[%s9 + $0xc] sm:$0xf]
      %v3062 = vld [vmem:[%s9 + $0x10] sm:$0xf]
      %v3063 = vld [vmem:[%s9 + $0x14] sm:$0xf]
      %v3065 = vsel %vm2098, %v3046, 0
      %v3068 = vsel %vm2098, %v3047, 0
      %v3071 = vsel %vm650, %v3058, 0
      %3073 = vmatprep.subr.bf16.mxu0 0
      %3074 = vmatpush1.bf16.msra.mxu0 0
      %3075 = vmatprep.subr.bf16.mxu0 0
      %3076 = vmatpush1.bf16.msra.mxu0 0
      %3077 = vmatprep.subr.bf16.mxu0 0
      %3078 = vmatpush1.bf16.msra.mxu0 0
      %3079 = vmatprep.subr.bf16.mxu0 0
      %3080 = vmatpush1.bf16.msra.mxu0 0
      %3081 = vmatprep.subr.bf16.mxu0 0
      %3082 = vmatpush1.bf16.msra.mxu0 0
      %3083 = vmatprep.subr.bf16.mxu0 0
      %3084 = vmatpush1.bf16.msra.mxu0 0
      %3085 = vmatprep.subr.bf16.mxu0 0
      %3086 = vmatpush1.bf16.msra.mxu0 0
      %3087 = vmatprep.subr.bf16.mxu0 0
      %3088 = vmatpush1.bf16.msra.mxu0 %v3071
      %3089 = vmatprep.subr.bf16.mxu0 0
      %3090 = vmatpush2.bf16.msra.mxu0 0
      %3091 = vmatprep.subr.bf16.mxu0 0
      %3092 = vmatpush2.bf16.msra.mxu0 0
      %3093 = vmatprep.subr.bf16.mxu0 0
      %3094 = vmatpush2.bf16.msra.mxu0 0
      %3095 = vmatprep.subr.bf16.mxu0 0
      %3096 = vmatpush2.bf16.msra.mxu0 0
      %3097 = vmatprep.subr.bf16.mxu0 0
      %3098 = vmatpush2.bf16.msra.mxu0 0
      %3099 = vmatprep.subr.bf16.mxu0 0
      %3100 = vmatpush2.bf16.msra.mxu0 0
      %3101 = vmatprep.subr.bf16.mxu0 0
      %3102 = vmatpush2.bf16.msra.mxu0 0
      %3103 = vmatprep.subr.bf16.mxu0 0
      %3104 = vmatpush2.bf16.msra.mxu0 0
      %3105 = vmatprep.mubr.bf16.mxu0 0
      %3106 = vmatmul.mubr.bf16.gmra.mxu0 %v3065
      %v3107 = vpop.f32.mrf.mxu0
      %v3108 = vadd.f32 0.0, %v3107
      %v3109 = vpop.f32.mrf.mxu0
      %v3110 = vpop.f32.mrf.mxu0
      %v3111 = vadd.f32 0.0, %v3110
      %v3112 = vpop.f32.mrf.mxu0
      %3113 = vmatprep.mubr.bf16.mxu0 0
      %3114 = vmatmul.mubr.bf16.gmra.mxu0 %v3068
      %v3115 = vpop.f32.mrf.mxu0
      %v3116 = vadd.f32 0.0, %v3115
      %v3117 = vpop.f32.mrf.mxu0
      %v3118 = vpop.f32.mrf.mxu0
      %v3119 = vpop.f32.mrf.mxu0
      %3120 = vdwg.mxu0
      %v3122 = vsel %vm2098, %v3048, 0
      %v3125 = vsel %vm2098, %v3049, 0
      %v3128 = vsel %vm650, %v3059, 0
      %3130 = vmatprep.subr.bf16.mxu0 0
      %3131 = vmatpush1.bf16.msra.mxu0 0
      %3132 = vmatprep.subr.bf16.mxu0 0
      %3133 = vmatpush1.bf16.msra.mxu0 0
      %3134 = vmatprep.subr.bf16.mxu0 0
      %3135 = vmatpush1.bf16.msra.mxu0 0
      %3136 = vmatprep.subr.bf16.mxu0 0
      %3137 = vmatpush1.bf16.msra.mxu0 0
      %3138 = vmatprep.subr.bf16.mxu0 0
      %3139 = vmatpush1.bf16.msra.mxu0 0
      %3140 = vmatprep.subr.bf16.mxu0 0
      %3141 = vmatpush1.bf16.msra.mxu0 0
      %3142 = vmatprep.subr.bf16.mxu0 0
      %3143 = vmatpush1.bf16.msra.mxu0 0
      %3144 = vmatprep.subr.bf16.mxu0 0
      %3145 = vmatpush1.bf16.msra.mxu0 %v3128
      %3146 = vmatprep.subr.bf16.mxu0 0
      %3147 = vmatpush2.bf16.msra.mxu0 0
      %3148 = vmatprep.subr.bf16.mxu0 0
      %3149 = vmatpush2.bf16.msra.mxu0 0
      %3150 = vmatprep.subr.bf16.mxu0 0
      %3151 = vmatpush2.bf16.msra.mxu0 0
      %3152 = vmatprep.subr.bf16.mxu0 0
      %3153 = vmatpush2.bf16.msra.mxu0 0
      %3154 = vmatprep.subr.bf16.mxu0 0
      %3155 = vmatpush2.bf16.msra.mxu0 0
      %3156 = vmatprep.subr.bf16.mxu0 0
      %3157 = vmatpush2.bf16.msra.mxu0 0
      %3158 = vmatprep.subr.bf16.mxu0 0
      %3159 = vmatpush2.bf16.msra.mxu0 0
      %3160 = vmatprep.subr.bf16.mxu0 0
      %3161 = vmatpush2.bf16.msra.mxu0 0
      %3162 = vmatprep.mubr.bf16.mxu0 0
      %3163 = vmatmul.mubr.bf16.gmra.mxu0 %v3122
      %v3164 = vpop.f32.mrf.mxu0
      %v3165 = vadd.f32 0.0, %v3164
      %v3166 = vpop.f32.mrf.mxu0
      %v3167 = vpop.f32.mrf.mxu0
      %v3168 = vadd.f32 0.0, %v3167
      %v3169 = vpop.f32.mrf.mxu0
      %3170 = vmatprep.mubr.bf16.mxu0 0
      %3171 = vmatmul.mubr.bf16.gmra.mxu0 %v3125
      %v3172 = vpop.f32.mrf.mxu0
      %v3173 = vadd.f32 0.0, %v3172
      %v3174 = vpop.f32.mrf.mxu0
      %v3175 = vpop.f32.mrf.mxu0
      %v3176 = vpop.f32.mrf.mxu0
      %3177 = vdwg.mxu0
      %v3179 = vsel %vm2098, %v3050, 0
      %v3182 = vsel %vm2098, %v3051, 0
      %v3185 = vsel %vm650, %v3060, 0
      %3187 = vmatprep.subr.bf16.mxu0 0
      %3188 = vmatpush1.bf16.msra.mxu0 0
      %3189 = vmatprep.subr.bf16.mxu0 0
      %3190 = vmatpush1.bf16.msra.mxu0 0
      %3191 = vmatprep.subr.bf16.mxu0 0
      %3192 = vmatpush1.bf16.msra.mxu0 0
      %3193 = vmatprep.subr.bf16.mxu0 0
      %3194 = vmatpush1.bf16.msra.mxu0 0
      %3195 = vmatprep.subr.bf16.mxu0 0
      %3196 = vmatpush1.bf16.msra.mxu0 0
      %3197 = vmatprep.subr.bf16.mxu0 0
      %3198 = vmatpush1.bf16.msra.mxu0 0
      %3199 = vmatprep.subr.bf16.mxu0 0
      %3200 = vmatpush1.bf16.msra.mxu0 0
      %3201 = vmatprep.subr.bf16.mxu0 0
      %3202 = vmatpush1.bf16.msra.mxu0 %v3185
      %3203 = vmatprep.subr.bf16.mxu0 0
      %3204 = vmatpush2.bf16.msra.mxu0 0
      %3205 = vmatprep.subr.bf16.mxu0 0
      %3206 = vmatpush2.bf16.msra.mxu0 0
      %3207 = vmatprep.subr.bf16.mxu0 0
      %3208 = vmatpush2.bf16.msra.mxu0 0
      %3209 = vmatprep.subr.bf16.mxu0 0
      %3210 = vmatpush2.bf16.msra.mxu0 0
      %3211 = vmatprep.subr.bf16.mxu0 0
      %3212 = vmatpush2.bf16.msra.mxu0 0
      %3213 = vmatprep.subr.bf16.mxu0 0
      %3214 = vmatpush2.bf16.msra.mxu0 0
      %3215 = vmatprep.subr.bf16.mxu0 0
      %3216 = vmatpush2.bf16.msra.mxu0 0
      %3217 = vmatprep.subr.bf16.mxu0 0
      %3218 = vmatpush2.bf16.msra.mxu0 0
      %3219 = vmatprep.mubr.bf16.mxu0 0
      %3220 = vmatmul.mubr.bf16.gmra.mxu0 %v3179
      %v3221 = vpop.f32.mrf.mxu0
      %v3222 = vadd.f32 0.0, %v3221
      %v3223 = vpop.f32.mrf.mxu0
      %v3224 = vpop.f32.mrf.mxu0
      %v3225 = vadd.f32 0.0, %v3224
      %v3226 = vpop.f32.mrf.mxu0
      %3227 = vmatprep.mubr.bf16.mxu0 0
      %3228 = vmatmul.mubr.bf16.gmra.mxu0 %v3182
      %v3229 = vpop.f32.mrf.mxu0
      %v3230 = vadd.f32 0.0, %v3229
      %v3231 = vpop.f32.mrf.mxu0
      %v3232 = vpop.f32.mrf.mxu0
      %v3233 = vpop.f32.mrf.mxu0
      %3234 = vdwg.mxu0
      %v3236 = vsel %vm2098, %v3052, 0
      %v3239 = vsel %vm2098, %v3053, 0
      %v3242 = vsel %vm650, %v3061, 0
      %3244 = vmatprep.subr.bf16.mxu0 0
      %3245 = vmatpush1.bf16.msra.mxu0 0
      %3246 = vmatprep.subr.bf16.mxu0 0
      %3247 = vmatpush1.bf16.msra.mxu0 0
      %3248 = vmatprep.subr.bf16.mxu0 0
      %3249 = vmatpush1.bf16.msra.mxu0 0
      %3250 = vmatprep.subr.bf16.mxu0 0
      %3251 = vmatpush1.bf16.msra.mxu0 0
      %3252 = vmatprep.subr.bf16.mxu0 0
      %3253 = vmatpush1.bf16.msra.mxu0 0
      %3254 = vmatprep.subr.bf16.mxu0 0
      %3255 = vmatpush1.bf16.msra.mxu0 0
      %3256 = vmatprep.subr.bf16.mxu0 0
      %3257 = vmatpush1.bf16.msra.mxu0 0
      %3258 = vmatprep.subr.bf16.mxu0 0
      %3259 = vmatpush1.bf16.msra.mxu0 %v3242
      %3260 = vmatprep.subr.bf16.mxu0 0
      %3261 = vmatpush2.bf16.msra.mxu0 0
      %3262 = vmatprep.subr.bf16.mxu0 0
      %3263 = vmatpush2.bf16.msra.mxu0 0
      %3264 = vmatprep.subr.bf16.mxu0 0
      %3265 = vmatpush2.bf16.msra.mxu0 0
      %3266 = vmatprep.subr.bf16.mxu0 0
      %3267 = vmatpush2.bf16.msra.mxu0 0
      %3268 = vmatprep.subr.bf16.mxu0 0
      %3269 = vmatpush2.bf16.msra.mxu0 0
      %3270 = vmatprep.subr.bf16.mxu0 0
      %3271 = vmatpush2.bf16.msra.mxu0 0
      %3272 = vmatprep.subr.bf16.mxu0 0
      %3273 = vmatpush2.bf16.msra.mxu0 0
      %3274 = vmatprep.subr.bf16.mxu0 0
      %3275 = vmatpush2.bf16.msra.mxu0 0
      %3276 = vmatprep.mubr.bf16.mxu0 0
      %3277 = vmatmul.mubr.bf16.gmra.mxu0 %v3236
      %v3278 = vpop.f32.mrf.mxu0
      %v3279 = vadd.f32 0.0, %v3278
      %v3280 = vpop.f32.mrf.mxu0
      %v3281 = vpop.f32.mrf.mxu0
      %v3282 = vadd.f32 0.0, %v3281
      %v3283 = vpop.f32.mrf.mxu0
      %3284 = vmatprep.mubr.bf16.mxu0 0
      %3285 = vmatmul.mubr.bf16.gmra.mxu0 %v3239
      %v3286 = vpop.f32.mrf.mxu0
      %v3287 = vadd.f32 0.0, %v3286
      %v3288 = vpop.f32.mrf.mxu0
      %v3289 = vpop.f32.mrf.mxu0
      %v3290 = vpop.f32.mrf.mxu0
      %3291 = vdwg.mxu0
      %v3293 = vsel %vm2098, %v3054, 0
      %v3296 = vsel %vm2098, %v3055, 0
      %v3299 = vsel %vm650, %v3062, 0
      %3301 = vmatprep.subr.bf16.mxu0 0
      %3302 = vmatpush1.bf16.msra.mxu0 0
      %3303 = vmatprep.subr.bf16.mxu0 0
      %3304 = vmatpush1.bf16.msra.mxu0 0
      %3305 = vmatprep.subr.bf16.mxu0 0
      %3306 = vmatpush1.bf16.msra.mxu0 0
      %3307 = vmatprep.subr.bf16.mxu0 0
      %3308 = vmatpush1.bf16.msra.mxu0 0
      %3309 = vmatprep.subr.bf16.mxu0 0
      %3310 = vmatpush1.bf16.msra.mxu0 0
      %3311 = vmatprep.subr.bf16.mxu0 0
      %3312 = vmatpush1.bf16.msra.mxu0 0
      %3313 = vmatprep.subr.bf16.mxu0 0
      %3314 = vmatpush1.bf16.msra.mxu0 0
      %3315 = vmatprep.subr.bf16.mxu0 0
      %3316 = vmatpush1.bf16.msra.mxu0 %v3299
      %3317 = vmatprep.subr.bf16.mxu0 0
      %3318 = vmatpush2.bf16.msra.mxu0 0
      %3319 = vmatprep.subr.bf16.mxu0 0
      %3320 = vmatpush2.bf16.msra.mxu0 0
      %3321 = vmatprep.subr.bf16.mxu0 0
      %3322 = vmatpush2.bf16.msra.mxu0 0
      %3323 = vmatprep.subr.bf16.mxu0 0
      %3324 = vmatpush2.bf16.msra.mxu0 0
      %3325 = vmatprep.subr.bf16.mxu0 0
      %3326 = vmatpush2.bf16.msra.mxu0 0
      %3327 = vmatprep.subr.bf16.mxu0 0
      %3328 = vmatpush2.bf16.msra.mxu0 0
      %3329 = vmatprep.subr.bf16.mxu0 0
      %3330 = vmatpush2.bf16.msra.mxu0 0
      %3331 = vmatprep.subr.bf16.mxu0 0
      %3332 = vmatpush2.bf16.msra.mxu0 0
      %3333 = vmatprep.mubr.bf16.mxu0 0
      %3334 = vmatmul.mubr.bf16.gmra.mxu0 %v3293
      %v3335 = vpop.f32.mrf.mxu0
      %v3336 = vadd.f32 0.0, %v3335
      %v3337 = vpop.f32.mrf.mxu0
      %v3338 = vpop.f32.mrf.mxu0
      %v3339 = vadd.f32 0.0, %v3338
      %v3340 = vpop.f32.mrf.mxu0
      %3341 = vmatprep.mubr.bf16.mxu0 0
      %3342 = vmatmul.mubr.bf16.gmra.mxu0 %v3296
      %v3343 = vpop.f32.mrf.mxu0
      %v3344 = vadd.f32 0.0, %v3343
      %v3345 = vpop.f32.mrf.mxu0
      %v3346 = vpop.f32.mrf.mxu0
      %v3347 = vpop.f32.mrf.mxu0
      %3348 = vdwg.mxu0
      %v3350 = vsel %vm2098, %v3056, 0
      %v3353 = vsel %vm2098, %v3057, 0
      %v3356 = vsel %vm650, %v3063, 0
      %3358 = vmatprep.subr.bf16.mxu0 0
      %3359 = vmatpush1.bf16.msra.mxu0 0
      %3360 = vmatprep.subr.bf16.mxu0 0
      %3361 = vmatpush1.bf16.msra.mxu0 0
      %3362 = vmatprep.subr.bf16.mxu0 0
      %3363 = vmatpush1.bf16.msra.mxu0 0
      %3364 = vmatprep.subr.bf16.mxu0 0
      %3365 = vmatpush1.bf16.msra.mxu0 0
      %3366 = vmatprep.subr.bf16.mxu0 0
      %3367 = vmatpush1.bf16.msra.mxu0 0
      %3368 = vmatprep.subr.bf16.mxu0 0
      %3369 = vmatpush1.bf16.msra.mxu0 0
      %3370 = vmatprep.subr.bf16.mxu0 0
      %3371 = vmatpush1.bf16.msra.mxu0 0
      %3372 = vmatprep.subr.bf16.mxu0 0
      %3373 = vmatpush1.bf16.msra.mxu0 %v3356
      %3374 = vmatprep.subr.bf16.mxu0 0
      %3375 = vmatpush2.bf16.msra.mxu0 0
      %3376 = vmatprep.subr.bf16.mxu0 0
      %3377 = vmatpush2.bf16.msra.mxu0 0
      %3378 = vmatprep.subr.bf16.mxu0 0
      %3379 = vmatpush2.bf16.msra.mxu0 0
      %3380 = vmatprep.subr.bf16.mxu0 0
      %3381 = vmatpush2.bf16.msra.mxu0 0
      %3382 = vmatprep.subr.bf16.mxu0 0
      %3383 = vmatpush2.bf16.msra.mxu0 0
      %3384 = vmatprep.subr.bf16.mxu0 0
      %3385 = vmatpush2.bf16.msra.mxu0 0
      %3386 = vmatprep.subr.bf16.mxu0 0
      %3387 = vmatpush2.bf16.msra.mxu0 0
      %3388 = vmatprep.subr.bf16.mxu0 0
      %3389 = vmatpush2.bf16.msra.mxu0 0
      %3390 = vmatprep.mubr.bf16.mxu0 0
      %3391 = vmatmul.mubr.bf16.gmra.mxu0 %v3350
      %v3392 = vpop.f32.mrf.mxu0
      %v3393 = vadd.f32 0.0, %v3392
      %v3394 = vpop.f32.mrf.mxu0
      %v3395 = vpop.f32.mrf.mxu0
      %v3396 = vadd.f32 0.0, %v3395
      %v3397 = vpop.f32.mrf.mxu0
      %3398 = vmatprep.mubr.bf16.mxu0 0
      %3399 = vmatmul.mubr.bf16.gmra.mxu0 %v3353
      %v3400 = vpop.f32.mrf.mxu0
      %v3401 = vadd.f32 0.0, %v3400
      %v3402 = vpop.f32.mrf.mxu0
      %v3403 = vpop.f32.mrf.mxu0
      %v3404 = vpop.f32.mrf.mxu0
      %3405 = vdwg.mxu0
      %v3406 = vsel %vm704, %v3108, 0.0
      %v3407 = vsel %vm704, %v3165, 0.0
      %v3408 = vadd.f32 %v3406, %v3407
      %v3409 = vsel %vm704, %v3222, 0.0
      %v3410 = vadd.f32 %v3408, %v3409
      %v3411 = vsel %vm704, %v3279, 0.0
      %v3412 = vadd.f32 %v3410, %v3411
      %v3413 = vsel %vm704, %v3336, 0.0
      %v3414 = vadd.f32 %v3412, %v3413
      %v3415 = vsel %vm704, %v3393, 0.0
      %v3416 = vadd.f32 %v3414, %v3415
      %v3417 = vsel %vm704, %v3111, 0.0
      %v3418 = vsel %vm704, %v3168, 0.0
      %v3419 = vadd.f32 %v3417, %v3418
      %v3420 = vsel %vm704, %v3225, 0.0
      %v3421 = vadd.f32 %v3419, %v3420
      %v3422 = vsel %vm704, %v3282, 0.0
      %v3423 = vadd.f32 %v3421, %v3422
      %v3424 = vsel %vm704, %v3339, 0.0
      %v3425 = vadd.f32 %v3423, %v3424
      %v3426 = vsel %vm704, %v3396, 0.0
      %v3427 = vadd.f32 %v3425, %v3426
      %v3428 = vsel %vm698, %v3116, 0.0
      %v3429 = vsel %vm698, %v3173, 0.0
      %v3430 = vadd.f32 %v3428, %v3429
      %v3431 = vsel %vm698, %v3230, 0.0
      %v3432 = vadd.f32 %v3430, %v3431
      %v3433 = vsel %vm698, %v3287, 0.0
      %v3434 = vadd.f32 %v3432, %v3433
      %v3435 = vsel %vm698, %v3344, 0.0
      %v3436 = vadd.f32 %v3434, %v3435
      %v3437 = vsel %vm698, %v3401, 0.0
      %v3438 = vadd.f32 %v3436, %v3437
      %v3439 = vadd.f32 %v707, %v3416
      %v3440 = vadd.f32 %v708, %v3427
      %v3441 = vadd.f32 %v709, %v3438
      %v3442 = vld [vmem:[%s10] sm:$0x1]
      %v3444 = vlaneseq
      %v3445 = vshrl.u32 %v3444, 7
      %v3446 = vsub.s32 0, %v3445
      %v3447 = vrot.slane %v3442, %v3446
      %v3449 = vadd.f32 %v3439, %v3447
      %v3450 = vadd.f32 %v3440, %v3447
      %v3451 = vadd.f32 %v3441, %v3447
      %v3452 = vld [vmem:[%s11] sm:$0x1]
      %v3453 = vld [vmem:[%s12] sm:$0x1]
      %v3454 = vsel %vm704, %v3449, 0.0
      %3455 = vadd.xlane.f32.xlu0 %v3454
      %v3456 = vpop.xlane.xlu0 %3455
      %v3457 = vsel %vm704, %v3450, 0.0
      %3458 = vadd.xlane.f32.xlu0 %v3457
      %v3459 = vpop.xlane.xlu0 %3458
      %v3460 = vsel %vm698, %v3451, 0.0
      %3461 = vadd.xlane.f32.xlu0 %v3460
      %v3462 = vpop.xlane.xlu0 %3461
      %v3463 = vmul.f32 %v3456, %v721
      %v3464 = vmul.f32 %v3459, %v721
      %v3465 = vmul.f32 %v3462, %v721
      %v3466 = vsub.f32 %v3449, %v3463
      %v3467 = vsub.f32 %v3450, %v3464
      %v3468 = vsub.f32 %v3451, %v3465
      %v3469 = vmul.f32 %v3466, %v3466
      %v3470 = vmul.f32 %v3467, %v3467
      %v3471 = vmul.f32 %v3468, %v3468
      %v3472 = vsel %vm704, %v3469, 0.0
      %3473 = vadd.xlane.f32.xlu0 %v3472
      %v3474 = vpop.xlane.xlu0 %3473
      %v3475 = vsel %vm704, %v3470, 0.0
      %3476 = vadd.xlane.f32.xlu0 %v3475
      %v3477 = vpop.xlane.xlu0 %3476
      %v3478 = vsel %vm698, %v3471, 0.0
      %3479 = vadd.xlane.f32.xlu0 %v3478
      %v3480 = vpop.xlane.xlu0 %3479
      %v3481 = vmul.f32 %v3474, %v721
      %v3482 = vmul.f32 %v3477, %v721
      %v3483 = vmul.f32 %v3480, %v721
      %v3484 = vadd.f32 %v3481, 1e-05
      %v3485 = vadd.f32 %v3482, 1e-05
      %v3486 = vadd.f32 %v3483, 1e-05
      %v3487 = vrsqrt.pop %v3484
      %v3488 = vrsqrt.pop %v3485
      %v3489 = vrsqrt.pop %v3486
      %v3490 = vmul.f32 %v3466, %v3487
      %v3491 = vmul.f32 %v3467, %v3488
      %v3492 = vmul.f32 %v3468, %v3489
      %v3494 = vlaneseq
      %v3495 = vshrl.u32 %v3494, 7
      %v3496 = vsub.s32 0, %v3495
      %v3497 = vrot.slane %v3452, %v3496
      %v3499 = vmul.f32 %v3490, %v3497
      %v3500 = vmul.f32 %v3491, %v3497
      %v3501 = vmul.f32 %v3492, %v3497
      %v3503 = vlaneseq
      %v3504 = vshrl.u32 %v3503, 7
      %v3505 = vsub.s32 0, %v3504
      %v3506 = vrot.slane %v3453, %v3505
      %v3508 = vadd.f32 %v3499, %v3506
      %v3509 = vadd.f32 %v3500, %v3506
      %v3510 = vadd.f32 %v3501, %v3506
      %v3511 = vpack.c.bf16 %v3509, %v3508
      %v3512 = vpack.c.bf16 %v3510, %v3510
      %v3513 = vld [vmem:[%s13] sm:$0xff]
      %v3514 = vld [vmem:[%s13 + $0x8] sm:$0xff]
      %v3515 = vld [vmem:[%s13 + $0x10] sm:$0xff]
      %v3516 = vld [vmem:[%s13 + $0x18] sm:$0xff]
      %v3517 = vld [vmem:[%s13 + $0x20] sm:$0xff]
      %v3518 = vld [vmem:[%s13 + $0x28] sm:$0xff]
      %v3519 = vld [vmem:[%s14] sm:$0x3]
      %v3521 = vlaneseq
      %v3522 = vshrl.u32 %v3521, 7
      %v3523 = vsub.s32 0, %v3522
      %v3524 = vrot.slane %v3519, %v3523
      %v3525 = vlaneseq
      %v3526 = vshrl.u32 %v3525, 7
      %v3527 = vsub.s32 1, %v3526
      %v3528 = vrot.slane %v3519, %v3527
      %v3537 = vunpack.c.l.b16 %v3513
      %v3538 = vunpack.c.h.b16 %v3513
      %v3539 = vunpack.c.l.b16 %v3514
      %v3540 = vunpack.c.h.b16 %v3514
      %v3541 = vunpack.c.l.b16 %v3515
      %v3542 = vunpack.c.h.b16 %v3515
      %v3543 = vunpack.c.l.b16 %v3516
      %v3544 = vunpack.c.h.b16 %v3516
      %v3545 = vunpack.c.l.b16 %v3517
      %v3546 = vunpack.c.h.b16 %v3517
      %v3547 = vunpack.c.l.b16 %v3518
      %v3548 = vunpack.c.h.b16 %v3518
      %v3549 = vpack.c.b16 %v3539, %v3537
      %v3550 = vpack.c.b16 %v3540, %v3538
      %v3551 = vpack.c.b16 %v3543, %v3541
      %v3552 = vpack.c.b16 %v3544, %v3542
      %v3553 = vpack.c.b16 %v3547, %v3545
      %v3554 = vpack.c.b16 %v3548, %v3546
      %v3562 = vsel %vm704, %v3511, 0
      %v3565 = vsel %vm704, %v3512, 0
      %3567 = vmatprep.subr.bf16.mxu0 0
      %3568 = vmatpush1.bf16.msra.mxu0 0
      %3569 = vmatprep.subr.bf16.mxu0 0
      %3570 = vmatpush1.bf16.msra.mxu0 0
      %3571 = vmatprep.subr.bf16.mxu0 0
      %3572 = vmatpush1.bf16.msra.mxu0 0
      %3573 = vmatprep.subr.bf16.mxu0 0
      %3574 = vmatpush1.bf16.msra.mxu0 0
      %3575 = vmatprep.subr.bf16.mxu0 0
      %3576 = vmatpush1.bf16.msra.mxu0 0
      %3577 = vmatprep.subr.bf16.mxu0 %v3554
      %3578 = vmatpush1.bf16.msra.mxu0 %v3553
      %3579 = vmatprep.subr.bf16.mxu0 %v3552
      %3580 = vmatpush1.bf16.msra.mxu0 %v3551
      %3581 = vmatprep.subr.bf16.mxu0 %v3550
      %3582 = vmatpush1.bf16.msra.mxu0 %v3549
      %3583 = vmatprep.subr.bf16.mxu0 0
      %3584 = vmatpush2.bf16.msra.mxu0 0
      %3585 = vmatprep.subr.bf16.mxu0 0
      %3586 = vmatpush2.bf16.msra.mxu0 0
      %3587 = vmatprep.subr.bf16.mxu0 0
      %3588 = vmatpush2.bf16.msra.mxu0 0
      %3589 = vmatprep.subr.bf16.mxu0 0
      %3590 = vmatpush2.bf16.msra.mxu0 0
      %3591 = vmatprep.subr.bf16.mxu0 0
      %3592 = vmatpush2.bf16.msra.mxu0 0
      %3593 = vmatprep.subr.bf16.mxu0 0
      %3594 = vmatpush2.bf16.msra.mxu0 0
      %3595 = vmatprep.subr.bf16.mxu0 0
      %3596 = vmatpush2.bf16.msra.mxu0 0
      %3597 = vmatprep.subr.bf16.mxu0 0
      %3598 = vmatpush2.bf16.msra.mxu0 0
      %3599 = vmatprep.mubr.bf16.mxu0 0
      %3600 = vmatmul.mubr.bf16.gmra.mxu0 %v3562
      %v3601 = vpop.f32.mrf.mxu0
      %v3602 = vadd.f32 %v3524, %v3601
      %v3603 = vpop.f32.mrf.mxu0
      %v3604 = vadd.f32 %v3528, %v3603
      %v3605 = vpop.f32.mrf.mxu0
      %v3606 = vadd.f32 %v3524, %v3605
      %v3607 = vpop.f32.mrf.mxu0
      %v3608 = vadd.f32 %v3528, %v3607
      %3609 = vmatprep.mubr.bf16.mxu0 0
      %3610 = vmatmul.mubr.bf16.gmra.mxu0 %v3565
      %v3611 = vpop.f32.mrf.mxu0
      %v3612 = vadd.f32 %v3524, %v3611
      %v3613 = vpop.f32.mrf.mxu0
      %v3614 = vadd.f32 %v3528, %v3613
      %v3615 = vpop.f32.mrf.mxu0
      %v3616 = vpop.f32.mrf.mxu0
      %3617 = vdwg.mxu0
      %v3618 = vmul.f32 %v3602, 0.5
      %v3619 = vmul.f32 %v3604, 0.5
      %v3620 = vmul.f32 %v3606, 0.5
      %v3621 = vmul.f32 %v3608, 0.5
      %v3622 = vmul.f32 %v3612, 0.5
      %v3623 = vmul.f32 %v3614, 0.5
      %v3624 = vmul.f32 %v3602, 0.70710677
      %v3625 = vmul.f32 %v3604, 0.70710677
      %v3626 = vmul.f32 %v3606, 0.70710677
      %v3627 = vmul.f32 %v3608, 0.70710677
      %v3628 = vmul.f32 %v3612, 0.70710677
      %v3629 = vmul.f32 %v3614, 0.70710677
      %vm3630 = vcmp.ge.f32.partialorder %v3624, 0.0
      %vm3631 = vcmp.ge.f32.partialorder %v3625, 0.0
      %vm3632 = vcmp.ge.f32.partialorder %v3626, 0.0
      %vm3633 = vcmp.ge.f32.partialorder %v3627, 0.0
      %vm3634 = vcmp.ge.f32.partialorder %v3628, 0.0
      %vm3635 = vcmp.ge.f32.partialorder %v3629, 0.0
      %v3636 = vsel %vm3630, 1.0, -1.0
      %v3637 = vsel %vm3631, 1.0, -1.0
      %v3638 = vsel %vm3632, 1.0, -1.0
      %v3639 = vsel %vm3633, 1.0, -1.0
      %v3640 = vsel %vm3634, 1.0, -1.0
      %v3641 = vsel %vm3635, 1.0, -1.0
      %v3642 = vand.u32 2147483647, %v3624
      %v3643 = vand.u32 2147483647, %v3625
      %v3644 = vand.u32 2147483647, %v3626
      %v3645 = vand.u32 2147483647, %v3627
      %v3646 = vand.u32 2147483647, %v3628
      %v3647 = vand.u32 2147483647, %v3629
      %v3648 = vmul.f32 %v3642, 0.3275911
      %v3649 = vmul.f32 %v3643, 0.3275911
      %v3650 = vmul.f32 %v3644, 0.3275911
      %v3651 = vmul.f32 %v3645, 0.3275911
      %v3652 = vmul.f32 %v3646, 0.3275911
      %v3653 = vmul.f32 %v3647, 0.3275911
      %v3654 = vadd.f32 %v3648, 1.0
      %v3655 = vadd.f32 %v3649, 1.0
      %v3656 = vadd.f32 %v3650, 1.0
      %v3657 = vadd.f32 %v3651, 1.0
      %v3658 = vadd.f32 %v3652, 1.0
      %v3659 = vadd.f32 %v3653, 1.0
      %v3660 = vrcp.pop %v3654
      %v3661 = vmul.f32 1.0, %v3660
      %v3662 = vrcp.pop %v3655
      %v3663 = vmul.f32 1.0, %v3662
      %v3664 = vrcp.pop %v3656
      %v3665 = vmul.f32 1.0, %v3664
      %v3666 = vrcp.pop %v3657
      %v3667 = vmul.f32 1.0, %v3666
      %v3668 = vrcp.pop %v3658
      %v3669 = vmul.f32 1.0, %v3668
      %v3670 = vrcp.pop %v3659
      %v3671 = vmul.f32 1.0, %v3670
      %v3672 = vmul.f32 %v3661, 1.0614054
      %v3673 = vmul.f32 %v3663, 1.0614054
      %v3674 = vmul.f32 %v3665, 1.0614054
      %v3675 = vmul.f32 %v3667, 1.0614054
      %v3676 = vmul.f32 %v3669, 1.0614054
      %v3677 = vmul.f32 %v3671, 1.0614054
      %v3678 = vadd.f32 %v3672, -1.4531521
      %v3679 = vadd.f32 %v3673, -1.4531521
      %v3680 = vadd.f32 %v3674, -1.4531521
      %v3681 = vadd.f32 %v3675, -1.4531521
      %v3682 = vadd.f32 %v3676, -1.4531521
      %v3683 = vadd.f32 %v3677, -1.4531521
      %v3684 = vmul.f32 %v3678, %v3661
      %v3685 = vmul.f32 %v3679, %v3663
      %v3686 = vmul.f32 %v3680, %v3665
      %v3687 = vmul.f32 %v3681, %v3667
      %v3688 = vmul.f32 %v3682, %v3669
      %v3689 = vmul.f32 %v3683, %v3671
      %v3690 = vadd.f32 %v3684, 1.4214138
      %v3691 = vadd.f32 %v3685, 1.4214138
      %v3692 = vadd.f32 %v3686, 1.4214138
      %v3693 = vadd.f32 %v3687, 1.4214138
      %v3694 = vadd.f32 %v3688, 1.4214138
      %v3695 = vadd.f32 %v3689, 1.4214138
      %v3696 = vmul.f32 %v3690, %v3661
      %v3697 = vmul.f32 %v3691, %v3663
      %v3698 = vmul.f32 %v3692, %v3665
      %v3699 = vmul.f32 %v3693, %v3667
      %v3700 = vmul.f32 %v3694, %v3669
      %v3701 = vmul.f32 %v3695, %v3671
      %v3702 = vadd.f32 %v3696, -0.28449672
      %v3703 = vadd.f32 %v3697, -0.28449672
      %v3704 = vadd.f32 %v3698, -0.28449672
      %v3705 = vadd.f32 %v3699, -0.28449672
      %v3706 = vadd.f32 %v3700, -0.28449672
      %v3707 = vadd.f32 %v3701, -0.28449672
      %v3708 = vmul.f32 %v3702, %v3661
      %v3709 = vmul.f32 %v3703, %v3663
      %v3710 = vmul.f32 %v3704, %v3665
      %v3711 = vmul.f32 %v3705, %v3667
      %v3712 = vmul.f32 %v3706, %v3669
      %v3713 = vmul.f32 %v3707, %v3671
      %v3714 = vadd.f32 %v3708, 0.2548296
      %v3715 = vadd.f32 %v3709, 0.2548296
      %v3716 = vadd.f32 %v3710, 0.2548296
      %v3717 = vadd.f32 %v3711, 0.2548296
      %v3718 = vadd.f32 %v3712, 0.2548296
      %v3719 = vadd.f32 %v3713, 0.2548296
      %v3720 = vmul.f32 %v3714, %v3661
      %v3721 = vmul.f32 %v3715, %v3663
      %v3722 = vmul.f32 %v3716, %v3665
      %v3723 = vmul.f32 %v3717, %v3667
      %v3724 = vmul.f32 %v3718, %v3669
      %v3725 = vmul.f32 %v3719, %v3671
      %v3726 = vsub.f32 0.0, %v3642
      %v3727 = vsub.f32 0.0, %v3643
      %v3728 = vsub.f32 0.0, %v3644
      %v3729 = vsub.f32 0.0, %v3645
      %v3730 = vsub.f32 0.0, %v3646
      %v3731 = vsub.f32 0.0, %v3647
      %v3732 = vmul.f32 %v3726, %v3642
      %v3733 = vmul.f32 %v3727, %v3643
      %v3734 = vmul.f32 %v3728, %v3644
      %v3735 = vmul.f32 %v3729, %v3645
      %v3736 = vmul.f32 %v3730, %v3646
      %v3737 = vmul.f32 %v3731, %v3647
      %v3738 = vmul.f32 %v3732, 1.442695
      %v3739 = vpow.pop %v3738
      %v3740 = vmul.f32 %v3733, 1.442695
      %v3741 = vpow.pop %v3740
      %v3742 = vmul.f32 %v3734, 1.442695
      %v3743 = vpow.pop %v3742
      %v3744 = vmul.f32 %v3735, 1.442695
      %v3745 = vpow.pop %v3744
      %v3746 = vmul.f32 %v3736, 1.442695
      %v3747 = vpow.pop %v3746
      %v3748 = vmul.f32 %v3737, 1.442695
      %v3749 = vpow.pop %v3748
      %v3750 = vmul.f32 %v3720, %v3739
      %v3751 = vmul.f32 %v3721, %v3741
      %v3752 = vmul.f32 %v3722, %v3743
      %v3753 = vmul.f32 %v3723, %v3745
      %v3754 = vmul.f32 %v3724, %v3747
      %v3755 = vmul.f32 %v3725, %v3749
      %v3756 = vsub.f32 1.0, %v3750
      %v3757 = vsub.f32 1.0, %v3751
      %v3758 = vsub.f32 1.0, %v3752
      %v3759 = vsub.f32 1.0, %v3753
      %v3760 = vsub.f32 1.0, %v3754
      %v3761 = vsub.f32 1.0, %v3755
      %v3762 = vmul.f32 %v3636, %v3756
      %v3763 = vmul.f32 %v3637, %v3757
      %v3764 = vmul.f32 %v3638, %v3758
      %v3765 = vmul.f32 %v3639, %v3759
      %v3766 = vmul.f32 %v3640, %v3760
      %v3767 = vmul.f32 %v3641, %v3761
      %v3768 = vadd.f32 %v3762, 1.0
      %v3769 = vadd.f32 %v3763, 1.0
      %v3770 = vadd.f32 %v3764, 1.0
      %v3771 = vadd.f32 %v3765, 1.0
      %v3772 = vadd.f32 %v3766, 1.0
      %v3773 = vadd.f32 %v3767, 1.0
      %v3774 = vmul.f32 %v3618, %v3768
      %v3775 = vmul.f32 %v3619, %v3769
      %v3776 = vmul.f32 %v3620, %v3770
      %v3777 = vmul.f32 %v3621, %v3771
      %v3778 = vmul.f32 %v3622, %v3772
      %v3779 = vmul.f32 %v3623, %v3773
      %v3780 = vpack.c.bf16 %v3776, %v3774
      %v3781 = vpack.c.bf16 %v3777, %v3775
      %v3782 = vpack.c.bf16 %v3778, %v3778
      %v3783 = vpack.c.bf16 %v3779, %v3779
      %v3784 = vld [vmem:[%s15] sm:$0xf]
      %v3785 = vld [vmem:[%s15 + $0x4] sm:$0xf]
      %v3786 = vld [vmem:[%s15 + $0x8] sm:$0xf]
      %v3787 = vld [vmem:[%s15 + $0xc] sm:$0xf]
      %v3788 = vld [vmem:[%s15 + $0x10] sm:$0xf]
      %v3789 = vld [vmem:[%s15 + $0x14] sm:$0xf]
      %v3790 = vld [vmem:[%s15 + $0x18] sm:$0xf]
      %v3791 = vld [vmem:[%s15 + $0x1c] sm:$0xf]
      %v3792 = vld [vmem:[%s15 + $0x20] sm:$0xf]
      %v3793 = vld [vmem:[%s15 + $0x24] sm:$0xf]
      %v3794 = vld [vmem:[%s15 + $0x28] sm:$0xf]
      %v3795 = vld [vmem:[%s15 + $0x2c] sm:$0xf]
      %v3796 = vld [vmem:[%s15 + $0x30] sm:$0xf]
      %v3797 = vld [vmem:[%s15 + $0x34] sm:$0xf]
      %v3798 = vld [vmem:[%s15 + $0x38] sm:$0xf]
      %v3799 = vld [vmem:[%s15 + $0x3c] sm:$0xf]
      %v3800 = vld [vmem:[%s15 + $0x40] sm:$0xf]
      %v3801 = vld [vmem:[%s15 + $0x44] sm:$0xf]
      %v3802 = vld [vmem:[%s15 + $0x48] sm:$0xf]
      %v3803 = vld [vmem:[%s15 + $0x4c] sm:$0xf]
      %v3804 = vld [vmem:[%s15 + $0x50] sm:$0xf]
      %v3805 = vld [vmem:[%s15 + $0x54] sm:$0xf]
      %v3806 = vld [vmem:[%s15 + $0x58] sm:$0xf]
      %v3807 = vld [vmem:[%s15 + $0x5c] sm:$0xf]
      %v3808 = vld [vmem:[%s16] sm:$0x1]
      %v3810 = vlaneseq
      %v3811 = vshrl.u32 %v3810, 7
      %v3812 = vsub.s32 0, %v3811
      %v3813 = vrot.slane %v3808, %v3812
      %v3839 = vunpack.c.l.b16 %v3784
      %v3840 = vunpack.c.l.b16 %v3785
      %v3841 = vunpack.c.l.b16 %v3786
      %v3842 = vunpack.c.l.b16 %v3787
      %v3843 = vunpack.c.l.b16 %v3788
      %v3844 = vunpack.c.l.b16 %v3789
      %v3845 = vunpack.c.l.b16 %v3790
      %v3846 = vunpack.c.l.b16 %v3791
      %v3847 = vunpack.c.l.b16 %v3792
      %v3848 = vunpack.c.l.b16 %v3793
      %v3849 = vunpack.c.l.b16 %v3794
      %v3850 = vunpack.c.l.b16 %v3795
      %v3851 = vunpack.c.l.b16 %v3796
      %v3852 = vunpack.c.l.b16 %v3797
      %v3853 = vunpack.c.l.b16 %v3798
      %v3854 = vunpack.c.l.b16 %v3799
      %v3855 = vunpack.c.l.b16 %v3800
      %v3856 = vunpack.c.l.b16 %v3801
      %v3857 = vunpack.c.l.b16 %v3802
      %v3858 = vunpack.c.l.b16 %v3803
      %v3859 = vunpack.c.l.b16 %v3804
      %v3860 = vunpack.c.l.b16 %v3805
      %v3861 = vunpack.c.l.b16 %v3806
      %v3862 = vunpack.c.l.b16 %v3807
      %v3863 = vpack.c.b16 %v3840, %v3839
      %v3864 = vpack.c.b16 %v3842, %v3841
      %v3865 = vpack.c.b16 %v3844, %v3843
      %v3866 = vpack.c.b16 %v3846, %v3845
      %v3867 = vpack.c.b16 %v3848, %v3847
      %v3868 = vpack.c.b16 %v3850, %v3849
      %v3869 = vpack.c.b16 %v3852, %v3851
      %v3870 = vpack.c.b16 %v3854, %v3853
      %v3871 = vpack.c.b16 %v3856, %v3855
      %v3872 = vpack.c.b16 %v3858, %v3857
      %v3873 = vpack.c.b16 %v3860, %v3859
      %v3874 = vpack.c.b16 %v3862, %v3861
      %vm3887 = vcmask 523264
      %v3889 = vsel %vm3887, %v3781, 0
      %v3892 = vsel %vm3887, %v3783, 0
      %3894 = vmatprep.subr.bf16.mxu0 0
      %3895 = vmatpush1.bf16.msra.mxu0 %v3870
      %3896 = vmatprep.subr.bf16.mxu0 0
      %3897 = vmatpush1.bf16.msra.mxu0 %v3869
      %3898 = vmatprep.subr.bf16.mxu0 0
      %3899 = vmatpush1.bf16.msra.mxu0 %v3868
      %3900 = vmatprep.subr.bf16.mxu0 0
      %3901 = vmatpush1.bf16.msra.mxu0 %v3867
      %3902 = vmatprep.subr.bf16.mxu0 0
      %3903 = vmatpush1.bf16.msra.mxu0 %v3866
      %3904 = vmatprep.subr.bf16.mxu0 0
      %3905 = vmatpush1.bf16.msra.mxu0 %v3865
      %3906 = vmatprep.subr.bf16.mxu0 0
      %3907 = vmatpush1.bf16.msra.mxu0 %v3864
      %3908 = vmatprep.subr.bf16.mxu0 0
      %3909 = vmatpush1.bf16.msra.mxu0 %v3863
      %3910 = vmatprep.subr.bf16.mxu0 0
      %3911 = vmatpush2.bf16.msra.mxu0 0
      %3912 = vmatprep.subr.bf16.mxu0 0
      %3913 = vmatpush2.bf16.msra.mxu0 0
      %3914 = vmatprep.subr.bf16.mxu0 0
      %3915 = vmatpush2.bf16.msra.mxu0 0
      %3916 = vmatprep.subr.bf16.mxu0 0
      %3917 = vmatpush2.bf16.msra.mxu0 0
      %3918 = vmatprep.subr.bf16.mxu0 0
      %3919 = vmatpush2.bf16.msra.mxu0 %v3874
      %3920 = vmatprep.subr.bf16.mxu0 0
      %3921 = vmatpush2.bf16.msra.mxu0 %v3873
      %3922 = vmatprep.subr.bf16.mxu0 0
      %3923 = vmatpush2.bf16.msra.mxu0 %v3872
      %3924 = vmatprep.subr.bf16.mxu0 0
      %3925 = vmatpush2.bf16.msra.mxu0 %v3871
      %3926 = vmatprep.mubr.bf16.mxu0 %v3889
      %3927 = vmatmul.mubr.bf16.gmra.mxu0 %v3780
      %v3928 = vpop.f32.mrf.mxu0
      %v3929 = vadd.f32 %v3813, %v3928
      %v3930 = vpop.f32.mrf.mxu0
      %v3931 = vpop.f32.mrf.mxu0
      %v3932 = vadd.f32 %v3813, %v3931
      %v3933 = vpop.f32.mrf.mxu0
      %3934 = vmatprep.mubr.bf16.mxu0 %v3892
      %3935 = vmatmul.mubr.bf16.gmra.mxu0 %v3782
      %v3936 = vpop.f32.mrf.mxu0
      %v3937 = vadd.f32 %v3813, %v3936
      %v3938 = vpop.f32.mrf.mxu0
      %v3939 = vpop.f32.mrf.mxu0
      %v3940 = vpop.f32.mrf.mxu0
      %3941 = vdwg.mxu0
      %v3942 = vadd.f32 %v3449, %v3929
      %v3943 = vadd.f32 %v3450, %v3932
      %v3944 = vadd.f32 %v3451, %v3937
      %s3945 = scalar_lea.vmem %s6, 1
      %v3946 = vld [vmem:[%s3945] sm:$0x1]
      %s3947 = scalar_lea.vmem %s7, 1
      %v3948 = vld [vmem:[%s3947] sm:$0x1]
      %v3949 = vsel %vm704, %v3942, 0.0
      %3950 = vadd.xlane.f32.xlu0 %v3949
      %v3951 = vpop.xlane.xlu0 %3950
      %v3952 = vsel %vm704, %v3943, 0.0
      %3953 = vadd.xlane.f32.xlu0 %v3952
      %v3954 = vpop.xlane.xlu0 %3953
      %v3955 = vsel %vm698, %v3944, 0.0
      %3956 = vadd.xlane.f32.xlu0 %v3955
      %v3957 = vpop.xlane.xlu0 %3956
      %v3958 = vmul.f32 %v3951, %v721
      %v3959 = vmul.f32 %v3954, %v721
      %v3960 = vmul.f32 %v3957, %v721
      %v3961 = vsub.f32 %v3942, %v3958
      %v3962 = vsub.f32 %v3943, %v3959
      %v3963 = vsub.f32 %v3944, %v3960
      %v3964 = vmul.f32 %v3961, %v3961
      %v3965 = vmul.f32 %v3962, %v3962
      %v3966 = vmul.f32 %v3963, %v3963
      %v3967 = vsel %vm704, %v3964, 0.0
      %3968 = vadd.xlane.f32.xlu0 %v3967
      %v3969 = vpop.xlane.xlu0 %3968
      %v3970 = vsel %vm704, %v3965, 0.0
      %3971 = vadd.xlane.f32.xlu0 %v3970
      %v3972 = vpop.xlane.xlu0 %3971
      %v3973 = vsel %vm698, %v3966, 0.0
      %3974 = vadd.xlane.f32.xlu0 %v3973
      %v3975 = vpop.xlane.xlu0 %3974
      %v3976 = vmul.f32 %v3969, %v721
      %v3977 = vmul.f32 %v3972, %v721
      %v3978 = vmul.f32 %v3975, %v721
      %v3979 = vadd.f32 %v3976, 1e-05
      %v3980 = vadd.f32 %v3977, 1e-05
      %v3981 = vadd.f32 %v3978, 1e-05
      %v3982 = vrsqrt.pop %v3979
      %v3983 = vrsqrt.pop %v3980
      %v3984 = vrsqrt.pop %v3981
      %v3985 = vmul.f32 %v3961, %v3982
      %v3986 = vmul.f32 %v3962, %v3983
      %v3987 = vmul.f32 %v3963, %v3984
      %v3989 = vlaneseq
      %v3990 = vshrl.u32 %v3989, 7
      %v3991 = vsub.s32 0, %v3990
      %v3992 = vrot.slane %v3946, %v3991
      %v3994 = vmul.f32 %v3985, %v3992
      %v3995 = vmul.f32 %v3986, %v3992
      %v3996 = vmul.f32 %v3987, %v3992
      %v3998 = vlaneseq
      %v3999 = vshrl.u32 %v3998, 7
      %v4000 = vsub.s32 0, %v3999
      %v4001 = vrot.slane %v3948, %v4000
      %v4003 = vadd.f32 %v3994, %v4001
      %v4004 = vadd.f32 %v3995, %v4001
      %v4005 = vadd.f32 %v3996, %v4001
      %v4006 = vpack.c.bf16 %v4004, %v4003
      %v4007 = vpack.c.bf16 %v4005, %v4005
      %s4008 = scalar_lea.vmem %s8, 432
      %v4009 = vld [vmem:[%s4008] sm:$0xf]
      %v4010 = vld [vmem:[%s4008 + $0x4] sm:$0xf]
      %v4011 = vld [vmem:[%s4008 + $0x8] sm:$0xf]
      %v4012 = vld [vmem:[%s4008 + $0xc] sm:$0xf]
      %v4013 = vld [vmem:[%s4008 + $0x10] sm:$0xf]
      %v4014 = vld [vmem:[%s4008 + $0x14] sm:$0xf]
      %v4015 = vld [vmem:[%s4008 + $0x18] sm:$0xf]
      %v4016 = vld [vmem:[%s4008 + $0x1c] sm:$0xf]
      %v4017 = vld [vmem:[%s4008 + $0x20] sm:$0xf]
      %v4018 = vld [vmem:[%s4008 + $0x24] sm:$0xf]
      %v4019 = vld [vmem:[%s4008 + $0x28] sm:$0xf]
      %v4020 = vld [vmem:[%s4008 + $0x2c] sm:$0xf]
      %v4021 = vld [vmem:[%s4008 + $0x30] sm:$0xf]
      %v4022 = vld [vmem:[%s4008 + $0x34] sm:$0xf]
      %v4023 = vld [vmem:[%s4008 + $0x38] sm:$0xf]
      %v4024 = vld [vmem:[%s4008 + $0x3c] sm:$0xf]
      %v4025 = vld [vmem:[%s4008 + $0x40] sm:$0xf]
      %v4026 = vld [vmem:[%s4008 + $0x44] sm:$0xf]
      %v4027 = vld [vmem:[%s4008 + $0x48] sm:$0xf]
      %v4028 = vld [vmem:[%s4008 + $0x4c] sm:$0xf]
      %v4029 = vld [vmem:[%s4008 + $0x50] sm:$0xf]
      %v4030 = vld [vmem:[%s4008 + $0x54] sm:$0xf]
      %v4031 = vld [vmem:[%s4008 + $0x58] sm:$0xf]
      %v4032 = vld [vmem:[%s4008 + $0x5c] sm:$0xf]
      %v4033 = vld [vmem:[%s4008 + $0x60] sm:$0xf]
      %v4034 = vld [vmem:[%s4008 + $0x64] sm:$0xf]
      %v4035 = vld [vmem:[%s4008 + $0x68] sm:$0xf]
      %v4036 = vld [vmem:[%s4008 + $0x6c] sm:$0xf]
      %v4037 = vld [vmem:[%s4008 + $0x70] sm:$0xf]
      %v4038 = vld [vmem:[%s4008 + $0x74] sm:$0xf]
      %v4039 = vld [vmem:[%s4008 + $0x78] sm:$0xf]
      %v4040 = vld [vmem:[%s4008 + $0x7c] sm:$0xf]
      %v4041 = vld [vmem:[%s4008 + $0x80] sm:$0xf]
      %v4042 = vld [vmem:[%s4008 + $0x84] sm:$0xf]
      %v4043 = vld [vmem:[%s4008 + $0x88] sm:$0xf]
      %v4044 = vld [vmem:[%s4008 + $0x8c] sm:$0xf]
      %v4045 = vld [vmem:[%s4008 + $0x90] sm:$0xf]
      %v4046 = vld [vmem:[%s4008 + $0x94] sm:$0xf]
      %v4047 = vld [vmem:[%s4008 + $0x98] sm:$0xf]
      %v4048 = vld [vmem:[%s4008 + $0x9c] sm:$0xf]
      %v4049 = vld [vmem:[%s4008 + $0xa0] sm:$0xf]
      %v4050 = vld [vmem:[%s4008 + $0xa4] sm:$0xf]
      %v4051 = vld [vmem:[%s4008 + $0xa8] sm:$0xf]
      %v4052 = vld [vmem:[%s4008 + $0xac] sm:$0xf]
      %v4053 = vld [vmem:[%s4008 + $0xb0] sm:$0xf]
      %v4054 = vld [vmem:[%s4008 + $0xb4] sm:$0xf]
      %v4055 = vld [vmem:[%s4008 + $0xb8] sm:$0xf]
      %v4056 = vld [vmem:[%s4008 + $0xbc] sm:$0xf]
      %v4057 = vld [vmem:[%s4008 + $0xc0] sm:$0xf]
      %v4058 = vld [vmem:[%s4008 + $0xc4] sm:$0xf]
      %v4059 = vld [vmem:[%s4008 + $0xc8] sm:$0xf]
      %v4060 = vld [vmem:[%s4008 + $0xcc] sm:$0xf]
      %v4061 = vld [vmem:[%s4008 + $0xd0] sm:$0xf]
      %v4062 = vld [vmem:[%s4008 + $0xd4] sm:$0xf]
      %v4063 = vld [vmem:[%s4008 + $0xd8] sm:$0xf]
      %v4064 = vld [vmem:[%s4008 + $0xdc] sm:$0xf]
      %v4065 = vld [vmem:[%s4008 + $0xe0] sm:$0xf]
      %v4066 = vld [vmem:[%s4008 + $0xe4] sm:$0xf]
      %v4067 = vld [vmem:[%s4008 + $0xe8] sm:$0xf]
      %v4068 = vld [vmem:[%s4008 + $0xec] sm:$0xf]
      %v4069 = vld [vmem:[%s4008 + $0xf0] sm:$0xf]
      %v4070 = vld [vmem:[%s4008 + $0xf4] sm:$0xf]
      %v4071 = vld [vmem:[%s4008 + $0xf8] sm:$0xf]
      %v4072 = vld [vmem:[%s4008 + $0xfc] sm:$0xf]
      %v4073 = vld [vmem:[%s4008 + $0x100] sm:$0xf]
      %v4074 = vld [vmem:[%s4008 + $0x104] sm:$0xf]
      %v4075 = vld [vmem:[%s4008 + $0x108] sm:$0xf]
      %v4076 = vld [vmem:[%s4008 + $0x10c] sm:$0xf]
      %v4077 = vld [vmem:[%s4008 + $0x110] sm:$0xf]
      %v4078 = vld [vmem:[%s4008 + $0x114] sm:$0xf]
      %v4079 = vld [vmem:[%s4008 + $0x118] sm:$0xf]
      %v4080 = vld [vmem:[%s4008 + $0x11c] sm:$0xf]
      %v4081 = vld [vmem:[%s4008 + $0x120] sm:$0xf]
      %v4082 = vld [vmem:[%s4008 + $0x124] sm:$0xf]
      %v4083 = vld [vmem:[%s4008 + $0x128] sm:$0xf]
      %v4084 = vld [vmem:[%s4008 + $0x12c] sm:$0xf]
      %v4085 = vld [vmem:[%s4008 + $0x130] sm:$0xf]
      %v4086 = vld [vmem:[%s4008 + $0x134] sm:$0xf]
      %v4087 = vld [vmem:[%s4008 + $0x138] sm:$0xf]
      %v4088 = vld [vmem:[%s4008 + $0x13c] sm:$0xf]
      %v4089 = vld [vmem:[%s4008 + $0x140] sm:$0xf]
      %v4090 = vld [vmem:[%s4008 + $0x144] sm:$0xf]
      %v4091 = vld [vmem:[%s4008 + $0x148] sm:$0xf]
      %v4092 = vld [vmem:[%s4008 + $0x14c] sm:$0xf]
      %v4093 = vld [vmem:[%s4008 + $0x150] sm:$0xf]
      %v4094 = vld [vmem:[%s4008 + $0x154] sm:$0xf]
      %v4095 = vld [vmem:[%s4008 + $0x158] sm:$0xf]
      %v4096 = vld [vmem:[%s4008 + $0x15c] sm:$0xf]
      %v4097 = vld [vmem:[%s4008 + $0x160] sm:$0xf]
      %v4098 = vld [vmem:[%s4008 + $0x164] sm:$0xf]
      %v4099 = vld [vmem:[%s4008 + $0x168] sm:$0xf]
      %v4100 = vld [vmem:[%s4008 + $0x16c] sm:$0xf]
      %v4101 = vld [vmem:[%s4008 + $0x170] sm:$0xf]
      %v4102 = vld [vmem:[%s4008 + $0x174] sm:$0xf]
      %v4103 = vld [vmem:[%s4008 + $0x178] sm:$0xf]
      %v4104 = vld [vmem:[%s4008 + $0x17c] sm:$0xf]
      %v4105 = vld [vmem:[%s4008 + $0x180] sm:$0xf]
      %v4106 = vld [vmem:[%s4008 + $0x184] sm:$0xf]
      %v4107 = vld [vmem:[%s4008 + $0x188] sm:$0xf]
      %v4108 = vld [vmem:[%s4008 + $0x18c] sm:$0xf]
      %v4109 = vld [vmem:[%s4008 + $0x190] sm:$0xf]
      %v4110 = vld [vmem:[%s4008 + $0x194] sm:$0xf]
      %v4111 = vld [vmem:[%s4008 + $0x198] sm:$0xf]
      %v4112 = vld [vmem:[%s4008 + $0x19c] sm:$0xf]
      %v4113 = vld [vmem:[%s4008 + $0x1a0] sm:$0xf]
      %v4114 = vld [vmem:[%s4008 + $0x1a4] sm:$0xf]
      %v4115 = vld [vmem:[%s4008 + $0x1a8] sm:$0xf]
      %v4116 = vld [vmem:[%s4008 + $0x1ac] sm:$0xf]
      %v4123 = vunpack.c.l.b16 %v4009
      %v4124 = vunpack.c.l.b16 %v4010
      %v4125 = vunpack.c.l.b16 %v4011
      %v4126 = vunpack.c.l.b16 %v4012
      %v4127 = vunpack.c.l.b16 %v4013
      %v4128 = vunpack.c.l.b16 %v4014
      %v4129 = vpack.c.b16 %v4124, %v4123
      %v4130 = vpack.c.b16 %v4126, %v4125
      %v4131 = vpack.c.b16 %v4128, %v4127
      %v4136 = vsel %vm704, %v4006, 0
      %v4139 = vsel %vm704, %v4007, 0
      %4141 = vmatprep.subr.bf16.mxu0 0
      %4142 = vmatpush1.bf16.msra.mxu0 0
      %4143 = vmatprep.subr.bf16.mxu0 0
      %4144 = vmatpush1.bf16.msra.mxu0 0
      %4145 = vmatprep.subr.bf16.mxu0 0
      %4146 = vmatpush1.bf16.msra.mxu0 0
      %4147 = vmatprep.subr.bf16.mxu0 0
      %4148 = vmatpush1.bf16.msra.mxu0 0
      %4149 = vmatprep.subr.bf16.mxu0 0
      %4150 = vmatpush1.bf16.msra.mxu0 0
      %4151 = vmatprep.subr.bf16.mxu0 0
      %4152 = vmatpush1.bf16.msra.mxu0 %v4131
      %4153 = vmatprep.subr.bf16.mxu0 0
      %4154 = vmatpush1.bf16.msra.mxu0 %v4130
      %4155 = vmatprep.subr.bf16.mxu0 0
      %4156 = vmatpush1.bf16.msra.mxu0 %v4129
      %4157 = vmatprep.subr.bf16.mxu0 0
      %4158 = vmatpush2.bf16.msra.mxu0 0
      %4159 = vmatprep.subr.bf16.mxu0 0
      %4160 = vmatpush2.bf16.msra.mxu0 0
      %4161 = vmatprep.subr.bf16.mxu0 0
      %4162 = vmatpush2.bf16.msra.mxu0 0
      %4163 = vmatprep.subr.bf16.mxu0 0
      %4164 = vmatpush2.bf16.msra.mxu0 0
      %4165 = vmatprep.subr.bf16.mxu0 0
      %4166 = vmatpush2.bf16.msra.mxu0 0
      %4167 = vmatprep.subr.bf16.mxu0 0
      %4168 = vmatpush2.bf16.msra.mxu0 0
      %4169 = vmatprep.subr.bf16.mxu0 0
      %4170 = vmatpush2.bf16.msra.mxu0 0
      %4171 = vmatprep.subr.bf16.mxu0 0
      %4172 = vmatpush2.bf16.msra.mxu0 0
      %4173 = vmatprep.mubr.bf16.mxu0 0
      %4174 = vmatmul.mubr.bf16.gmra.mxu0 %v4136
      %v4175 = vpop.f32.mrf.mxu0
      %v4176 = vadd.f32 0.0, %v4175
      %v4177 = vpop.f32.mrf.mxu0
      %v4178 = vpop.f32.mrf.mxu0
      %v4179 = vadd.f32 0.0, %v4178
      %v4180 = vpop.f32.mrf.mxu0
      %4181 = vmatprep.mubr.bf16.mxu0 0
      %4182 = vmatmul.mubr.bf16.gmra.mxu0 %v4139
      %v4183 = vpop.f32.mrf.mxu0
      %v4184 = vadd.f32 0.0, %v4183
      %v4185 = vpop.f32.mrf.mxu0
      %v4186 = vpop.f32.mrf.mxu0
      %v4187 = vpop.f32.mrf.mxu0
      %4188 = vdwg.mxu0
      %v4195 = vunpack.c.l.b16 %v4015
      %v4196 = vunpack.c.l.b16 %v4016
      %v4197 = vunpack.c.l.b16 %v4017
      %v4198 = vunpack.c.l.b16 %v4018
      %v4199 = vunpack.c.l.b16 %v4019
      %v4200 = vunpack.c.l.b16 %v4020
      %v4201 = vpack.c.b16 %v4196, %v4195
      %v4202 = vpack.c.b16 %v4198, %v4197
      %v4203 = vpack.c.b16 %v4200, %v4199
      %4207 = vmatprep.subr.bf16.mxu0 0
      %4208 = vmatpush1.bf16.msra.mxu0 0
      %4209 = vmatprep.subr.bf16.mxu0 0
      %4210 = vmatpush1.bf16.msra.mxu0 0
      %4211 = vmatprep.subr.bf16.mxu0 0
      %4212 = vmatpush1.bf16.msra.mxu0 0
      %4213 = vmatprep.subr.bf16.mxu0 0
      %4214 = vmatpush1.bf16.msra.mxu0 0
      %4215 = vmatprep.subr.bf16.mxu0 0
      %4216 = vmatpush1.bf16.msra.mxu0 0
      %4217 = vmatprep.subr.bf16.mxu0 0
      %4218 = vmatpush1.bf16.msra.mxu0 %v4203
      %4219 = vmatprep.subr.bf16.mxu0 0
      %4220 = vmatpush1.bf16.msra.mxu0 %v4202
      %4221 = vmatprep.subr.bf16.mxu0 0
      %4222 = vmatpush1.bf16.msra.mxu0 %v4201
      %4223 = vmatprep.subr.bf16.mxu0 0
      %4224 = vmatpush2.bf16.msra.mxu0 0
      %4225 = vmatprep.subr.bf16.mxu0 0
      %4226 = vmatpush2.bf16.msra.mxu0 0
      %4227 = vmatprep.subr.bf16.mxu0 0
      %4228 = vmatpush2.bf16.msra.mxu0 0
      %4229 = vmatprep.subr.bf16.mxu0 0
      %4230 = vmatpush2.bf16.msra.mxu0 0
      %4231 = vmatprep.subr.bf16.mxu0 0
      %4232 = vmatpush2.bf16.msra.mxu0 0
      %4233 = vmatprep.subr.bf16.mxu0 0
      %4234 = vmatpush2.bf16.msra.mxu0 0
      %4235 = vmatprep.subr.bf16.mxu0 0
      %4236 = vmatpush2.bf16.msra.mxu0 0
      %4237 = vmatprep.subr.bf16.mxu0 0
      %4238 = vmatpush2.bf16.msra.mxu0 0
      %4239 = vmatprep.mubr.bf16.mxu0 0
      %4240 = vmatmul.mubr.bf16.gmra.mxu0 %v4136
      %v4241 = vpop.f32.mrf.mxu0
      %v4242 = vadd.f32 0.0, %v4241
      %v4243 = vpop.f32.mrf.mxu0
      %v4244 = vpop.f32.mrf.mxu0
      %v4245 = vadd.f32 0.0, %v4244
      %v4246 = vpop.f32.mrf.mxu0
      %4247 = vmatprep.mubr.bf16.mxu0 0
      %4248 = vmatmul.mubr.bf16.gmra.mxu0 %v4139
      %v4249 = vpop.f32.mrf.mxu0
      %v4250 = vadd.f32 0.0, %v4249
      %v4251 = vpop.f32.mrf.mxu0
      %v4252 = vpop.f32.mrf.mxu0
      %v4253 = vpop.f32.mrf.mxu0
      %4254 = vdwg.mxu0
      %v4261 = vunpack.c.l.b16 %v4021
      %v4262 = vunpack.c.l.b16 %v4022
      %v4263 = vunpack.c.l.b16 %v4023
      %v4264 = vunpack.c.l.b16 %v4024
      %v4265 = vunpack.c.l.b16 %v4025
      %v4266 = vunpack.c.l.b16 %v4026
      %v4267 = vpack.c.b16 %v4262, %v4261
      %v4268 = vpack.c.b16 %v4264, %v4263
      %v4269 = vpack.c.b16 %v4266, %v4265
      %4273 = vmatprep.subr.bf16.mxu0 0
      %4274 = vmatpush1.bf16.msra.mxu0 0
      %4275 = vmatprep.subr.bf16.mxu0 0
      %4276 = vmatpush1.bf16.msra.mxu0 0
      %4277 = vmatprep.subr.bf16.mxu0 0
      %4278 = vmatpush1.bf16.msra.mxu0 0
      %4279 = vmatprep.subr.bf16.mxu0 0
      %4280 = vmatpush1.bf16.msra.mxu0 0
      %4281 = vmatprep.subr.bf16.mxu0 0
      %4282 = vmatpush1.bf16.msra.mxu0 0
      %4283 = vmatprep.subr.bf16.mxu0 0
      %4284 = vmatpush1.bf16.msra.mxu0 %v4269
      %4285 = vmatprep.subr.bf16.mxu0 0
      %4286 = vmatpush1.bf16.msra.mxu0 %v4268
      %4287 = vmatprep.subr.bf16.mxu0 0
      %4288 = vmatpush1.bf16.msra.mxu0 %v4267
      %4289 = vmatprep.subr.bf16.mxu0 0
      %4290 = vmatpush2.bf16.msra.mxu0 0
      %4291 = vmatprep.subr.bf16.mxu0 0
      %4292 = vmatpush2.bf16.msra.mxu0 0
      %4293 = vmatprep.subr.bf16.mxu0 0
      %4294 = vmatpush2.bf16.msra.mxu0 0
      %4295 = vmatprep.subr.bf16.mxu0 0
      %4296 = vmatpush2.bf16.msra.mxu0 0
      %4297 = vmatprep.subr.bf16.mxu0 0
      %4298 = vmatpush2.bf16.msra.mxu0 0
      %4299 = vmatprep.subr.bf16.mxu0 0
      %4300 = vmatpush2.bf16.msra.mxu0 0
      %4301 = vmatprep.subr.bf16.mxu0 0
      %4302 = vmatpush2.bf16.msra.mxu0 0
      %4303 = vmatprep.subr.bf16.mxu0 0
      %4304 = vmatpush2.bf16.msra.mxu0 0
      %4305 = vmatprep.mubr.bf16.mxu0 0
      %4306 = vmatmul.mubr.bf16.gmra.mxu0 %v4136
      %v4307 = vpop.f32.mrf.mxu0
      %v4308 = vadd.f32 0.0, %v4307
      %v4309 = vpop.f32.mrf.mxu0
      %v4310 = vpop.f32.mrf.mxu0
      %v4311 = vadd.f32 0.0, %v4310
      %v4312 = vpop.f32.mrf.mxu0
      %4313 = vmatprep.mubr.bf16.mxu0 0
      %4314 = vmatmul.mubr.bf16.gmra.mxu0 %v4139
      %v4315 = vpop.f32.mrf.mxu0
      %v4316 = vadd.f32 0.0, %v4315
      %v4317 = vpop.f32.mrf.mxu0
      %v4318 = vpop.f32.mrf.mxu0
      %v4319 = vpop.f32.mrf.mxu0
      %4320 = vdwg.mxu0
      %v4327 = vunpack.c.l.b16 %v4027
      %v4328 = vunpack.c.l.b16 %v4028
      %v4329 = vunpack.c.l.b16 %v4029
      %v4330 = vunpack.c.l.b16 %v4030
      %v4331 = vunpack.c.l.b16 %v4031
      %v4332 = vunpack.c.l.b16 %v4032
      %v4333 = vpack.c.b16 %v4328, %v4327
      %v4334 = vpack.c.b16 %v4330, %v4329
      %v4335 = vpack.c.b16 %v4332, %v4331
      %4339 = vmatprep.subr.bf16.mxu0 0
      %4340 = vmatpush1.bf16.msra.mxu0 0
      %4341 = vmatprep.subr.bf16.mxu0 0
      %4342 = vmatpush1.bf16.msra.mxu0 0
      %4343 = vmatprep.subr.bf16.mxu0 0
      %4344 = vmatpush1.bf16.msra.mxu0 0
      %4345 = vmatprep.subr.bf16.mxu0 0
      %4346 = vmatpush1.bf16.msra.mxu0 0
      %4347 = vmatprep.subr.bf16.mxu0 0
      %4348 = vmatpush1.bf16.msra.mxu0 0
      %4349 = vmatprep.subr.bf16.mxu0 0
      %4350 = vmatpush1.bf16.msra.mxu0 %v4335
      %4351 = vmatprep.subr.bf16.mxu0 0
      %4352 = vmatpush1.bf16.msra.mxu0 %v4334
      %4353 = vmatprep.subr.bf16.mxu0 0
      %4354 = vmatpush1.bf16.msra.mxu0 %v4333
      %4355 = vmatprep.subr.bf16.mxu0 0
      %4356 = vmatpush2.bf16.msra.mxu0 0
      %4357 = vmatprep.subr.bf16.mxu0 0
      %4358 = vmatpush2.bf16.msra.mxu0 0
      %4359 = vmatprep.subr.bf16.mxu0 0
      %4360 = vmatpush2.bf16.msra.mxu0 0
      %4361 = vmatprep.subr.bf16.mxu0 0
      %4362 = vmatpush2.bf16.msra.mxu0 0
      %4363 = vmatprep.subr.bf16.mxu0 0
      %4364 = vmatpush2.bf16.msra.mxu0 0
      %4365 = vmatprep.subr.bf16.mxu0 0
      %4366 = vmatpush2.bf16.msra.mxu0 0
      %4367 = vmatprep.subr.bf16.mxu0 0
      %4368 = vmatpush2.bf16.msra.mxu0 0
      %4369 = vmatprep.subr.bf16.mxu0 0
      %4370 = vmatpush2.bf16.msra.mxu0 0
      %4371 = vmatprep.mubr.bf16.mxu0 0
      %4372 = vmatmul.mubr.bf16.gmra.mxu0 %v4136
      %v4373 = vpop.f32.mrf.mxu0
      %v4374 = vadd.f32 0.0, %v4373
      %v4375 = vpop.f32.mrf.mxu0
      %v4376 = vpop.f32.mrf.mxu0
      %v4377 = vadd.f32 0.0, %v4376
      %v4378 = vpop.f32.mrf.mxu0
      %4379 = vmatprep.mubr.bf16.mxu0 0
      %4380 = vmatmul.mubr.bf16.gmra.mxu0 %v4139
      %v4381 = vpop.f32.mrf.mxu0
      %v4382 = vadd.f32 0.0, %v4381
      %v4383 = vpop.f32.mrf.mxu0
      %v4384 = vpop.f32.mrf.mxu0
      %v4385 = vpop.f32.mrf.mxu0
      %4386 = vdwg.mxu0
      %v4393 = vunpack.c.l.b16 %v4033
      %v4394 = vunpack.c.l.b16 %v4034
      %v4395 = vunpack.c.l.b16 %v4035
      %v4396 = vunpack.c.l.b16 %v4036
      %v4397 = vunpack.c.l.b16 %v4037
      %v4398 = vunpack.c.l.b16 %v4038
      %v4399 = vpack.c.b16 %v4394, %v4393
      %v4400 = vpack.c.b16 %v4396, %v4395
      %v4401 = vpack.c.b16 %v4398, %v4397
      %4405 = vmatprep.subr.bf16.mxu0 0
      %4406 = vmatpush1.bf16.msra.mxu0 0
      %4407 = vmatprep.subr.bf16.mxu0 0
      %4408 = vmatpush1.bf16.msra.mxu0 0
      %4409 = vmatprep.subr.bf16.mxu0 0
      %4410 = vmatpush1.bf16.msra.mxu0 0
      %4411 = vmatprep.subr.bf16.mxu0 0
      %4412 = vmatpush1.bf16.msra.mxu0 0
      %4413 = vmatprep.subr.bf16.mxu0 0
      %4414 = vmatpush1.bf16.msra.mxu0 0
      %4415 = vmatprep.subr.bf16.mxu0 0
      %4416 = vmatpush1.bf16.msra.mxu0 %v4401
      %4417 = vmatprep.subr.bf16.mxu0 0
      %4418 = vmatpush1.bf16.msra.mxu0 %v4400
      %4419 = vmatprep.subr.bf16.mxu0 0
      %4420 = vmatpush1.bf16.msra.mxu0 %v4399
      %4421 = vmatprep.subr.bf16.mxu0 0
      %4422 = vmatpush2.bf16.msra.mxu0 0
      %4423 = vmatprep.subr.bf16.mxu0 0
      %4424 = vmatpush2.bf16.msra.mxu0 0
      %4425 = vmatprep.subr.bf16.mxu0 0
      %4426 = vmatpush2.bf16.msra.mxu0 0
      %4427 = vmatprep.subr.bf16.mxu0 0
      %4428 = vmatpush2.bf16.msra.mxu0 0
      %4429 = vmatprep.subr.bf16.mxu0 0
      %4430 = vmatpush2.bf16.msra.mxu0 0
      %4431 = vmatprep.subr.bf16.mxu0 0
      %4432 = vmatpush2.bf16.msra.mxu0 0
      %4433 = vmatprep.subr.bf16.mxu0 0
      %4434 = vmatpush2.bf16.msra.mxu0 0
      %4435 = vmatprep.subr.bf16.mxu0 0
      %4436 = vmatpush2.bf16.msra.mxu0 0
      %4437 = vmatprep.mubr.bf16.mxu0 0
      %4438 = vmatmul.mubr.bf16.gmra.mxu0 %v4136
      %v4439 = vpop.f32.mrf.mxu0
      %v4440 = vadd.f32 0.0, %v4439
      %v4441 = vpop.f32.mrf.mxu0
      %v4442 = vpop.f32.mrf.mxu0
      %v4443 = vadd.f32 0.0, %v4442
      %v4444 = vpop.f32.mrf.mxu0
      %4445 = vmatprep.mubr.bf16.mxu0 0
      %4446 = vmatmul.mubr.bf16.gmra.mxu0 %v4139
      %v4447 = vpop.f32.mrf.mxu0
      %v4448 = vadd.f32 0.0, %v4447
      %v4449 = vpop.f32.mrf.mxu0
      %v4450 = vpop.f32.mrf.mxu0
      %v4451 = vpop.f32.mrf.mxu0
      %4452 = vdwg.mxu0
      %v4459 = vunpack.c.l.b16 %v4039
      %v4460 = vunpack.c.l.b16 %v4040
      %v4461 = vunpack.c.l.b16 %v4041
      %v4462 = vunpack.c.l.b16 %v4042
      %v4463 = vunpack.c.l.b16 %v4043
      %v4464 = vunpack.c.l.b16 %v4044
      %v4465 = vpack.c.b16 %v4460, %v4459
      %v4466 = vpack.c.b16 %v4462, %v4461
      %v4467 = vpack.c.b16 %v4464, %v4463
      %4471 = vmatprep.subr.bf16.mxu0 0
      %4472 = vmatpush1.bf16.msra.mxu0 0
      %4473 = vmatprep.subr.bf16.mxu0 0
      %4474 = vmatpush1.bf16.msra.mxu0 0
      %4475 = vmatprep.subr.bf16.mxu0 0
      %4476 = vmatpush1.bf16.msra.mxu0 0
      %4477 = vmatprep.subr.bf16.mxu0 0
      %4478 = vmatpush1.bf16.msra.mxu0 0
      %4479 = vmatprep.subr.bf16.mxu0 0
      %4480 = vmatpush1.bf16.msra.mxu0 0
      %4481 = vmatprep.subr.bf16.mxu0 0
      %4482 = vmatpush1.bf16.msra.mxu0 %v4467
      %4483 = vmatprep.subr.bf16.mxu0 0
      %4484 = vmatpush1.bf16.msra.mxu0 %v4466
      %4485 = vmatprep.subr.bf16.mxu0 0
      %4486 = vmatpush1.bf16.msra.mxu0 %v4465
      %4487 = vmatprep.subr.bf16.mxu0 0
      %4488 = vmatpush2.bf16.msra.mxu0 0
      %4489 = vmatprep.subr.bf16.mxu0 0
      %4490 = vmatpush2.bf16.msra.mxu0 0
      %4491 = vmatprep.subr.bf16.mxu0 0
      %4492 = vmatpush2.bf16.msra.mxu0 0
      %4493 = vmatprep.subr.bf16.mxu0 0
      %4494 = vmatpush2.bf16.msra.mxu0 0
      %4495 = vmatprep.subr.bf16.mxu0 0
      %4496 = vmatpush2.bf16.msra.mxu0 0
      %4497 = vmatprep.subr.bf16.mxu0 0
      %4498 = vmatpush2.bf16.msra.mxu0 0
      %4499 = vmatprep.subr.bf16.mxu0 0
      %4500 = vmatpush2.bf16.msra.mxu0 0
      %4501 = vmatprep.subr.bf16.mxu0 0
      %4502 = vmatpush2.bf16.msra.mxu0 0
      %4503 = vmatprep.mubr.bf16.mxu0 0
      %4504 = vmatmul.mubr.bf16.gmra.mxu0 %v4136
      %v4505 = vpop.f32.mrf.mxu0
      %v4506 = vadd.f32 0.0, %v4505
      %v4507 = vpop.f32.mrf.mxu0
      %v4508 = vpop.f32.mrf.mxu0
      %v4509 = vadd.f32 0.0, %v4508
      %v4510 = vpop.f32.mrf.mxu0
      %4511 = vmatprep.mubr.bf16.mxu0 0
      %4512 = vmatmul.mubr.bf16.gmra.mxu0 %v4139
      %v4513 = vpop.f32.mrf.mxu0
      %v4514 = vadd.f32 0.0, %v4513
      %v4515 = vpop.f32.mrf.mxu0
      %v4516 = vpop.f32.mrf.mxu0
      %v4517 = vpop.f32.mrf.mxu0
      %4518 = vdwg.mxu0
      %v4525 = vunpack.c.l.b16 %v4045
      %v4526 = vunpack.c.l.b16 %v4046
      %v4527 = vunpack.c.l.b16 %v4047
      %v4528 = vunpack.c.l.b16 %v4048
      %v4529 = vunpack.c.l.b16 %v4049
      %v4530 = vunpack.c.l.b16 %v4050
      %v4531 = vpack.c.b16 %v4526, %v4525
      %v4532 = vpack.c.b16 %v4528, %v4527
      %v4533 = vpack.c.b16 %v4530, %v4529
      %4537 = vmatprep.subr.bf16.mxu0 0
      %4538 = vmatpush1.bf16.msra.mxu0 0
      %4539 = vmatprep.subr.bf16.mxu0 0
      %4540 = vmatpush1.bf16.msra.mxu0 0
      %4541 = vmatprep.subr.bf16.mxu0 0
      %4542 = vmatpush1.bf16.msra.mxu0 0
      %4543 = vmatprep.subr.bf16.mxu0 0
      %4544 = vmatpush1.bf16.msra.mxu0 0
      %4545 = vmatprep.subr.bf16.mxu0 0
      %4546 = vmatpush1.bf16.msra.mxu0 0
      %4547 = vmatprep.subr.bf16.mxu0 0
      %4548 = vmatpush1.bf16.msra.mxu0 %v4533
      %4549 = vmatprep.subr.bf16.mxu0 0
      %4550 = vmatpush1.bf16.msra.mxu0 %v4532
      %4551 = vmatprep.subr.bf16.mxu0 0
      %4552 = vmatpush1.bf16.msra.mxu0 %v4531
      %4553 = vmatprep.subr.bf16.mxu0 0
      %4554 = vmatpush2.bf16.msra.mxu0 0
      %4555 = vmatprep.subr.bf16.mxu0 0
      %4556 = vmatpush2.bf16.msra.mxu0 0
      %4557 = vmatprep.subr.bf16.mxu0 0
      %4558 = vmatpush2.bf16.msra.mxu0 0
      %4559 = vmatprep.subr.bf16.mxu0 0
      %4560 = vmatpush2.bf16.msra.mxu0 0
      %4561 = vmatprep.subr.bf16.mxu0 0
      %4562 = vmatpush2.bf16.msra.mxu0 0
      %4563 = vmatprep.subr.bf16.mxu0 0
      %4564 = vmatpush2.bf16.msra.mxu0 0
      %4565 = vmatprep.subr.bf16.mxu0 0
      %4566 = vmatpush2.bf16.msra.mxu0 0
      %4567 = vmatprep.subr.bf16.mxu0 0
      %4568 = vmatpush2.bf16.msra.mxu0 0
      %4569 = vmatprep.mubr.bf16.mxu0 0
      %4570 = vmatmul.mubr.bf16.gmra.mxu0 %v4136
      %v4571 = vpop.f32.mrf.mxu0
      %v4572 = vadd.f32 0.0, %v4571
      %v4573 = vpop.f32.mrf.mxu0
      %v4574 = vpop.f32.mrf.mxu0
      %v4575 = vadd.f32 0.0, %v4574
      %v4576 = vpop.f32.mrf.mxu0
      %4577 = vmatprep.mubr.bf16.mxu0 0
      %4578 = vmatmul.mubr.bf16.gmra.mxu0 %v4139
      %v4579 = vpop.f32.mrf.mxu0
      %v4580 = vadd.f32 0.0, %v4579
      %v4581 = vpop.f32.mrf.mxu0
      %v4582 = vpop.f32.mrf.mxu0
      %v4583 = vpop.f32.mrf.mxu0
      %4584 = vdwg.mxu0
      %v4591 = vunpack.c.l.b16 %v4051
      %v4592 = vunpack.c.l.b16 %v4052
      %v4593 = vunpack.c.l.b16 %v4053
      %v4594 = vunpack.c.l.b16 %v4054
      %v4595 = vunpack.c.l.b16 %v4055
      %v4596 = vunpack.c.l.b16 %v4056
      %v4597 = vpack.c.b16 %v4592, %v4591
      %v4598 = vpack.c.b16 %v4594, %v4593
      %v4599 = vpack.c.b16 %v4596, %v4595
      %4603 = vmatprep.subr.bf16.mxu0 0
      %4604 = vmatpush1.bf16.msra.mxu0 0
      %4605 = vmatprep.subr.bf16.mxu0 0
      %4606 = vmatpush1.bf16.msra.mxu0 0
      %4607 = vmatprep.subr.bf16.mxu0 0
      %4608 = vmatpush1.bf16.msra.mxu0 0
      %4609 = vmatprep.subr.bf16.mxu0 0
      %4610 = vmatpush1.bf16.msra.mxu0 0
      %4611 = vmatprep.subr.bf16.mxu0 0
      %4612 = vmatpush1.bf16.msra.mxu0 0
      %4613 = vmatprep.subr.bf16.mxu0 0
      %4614 = vmatpush1.bf16.msra.mxu0 %v4599
      %4615 = vmatprep.subr.bf16.mxu0 0
      %4616 = vmatpush1.bf16.msra.mxu0 %v4598
      %4617 = vmatprep.subr.bf16.mxu0 0
      %4618 = vmatpush1.bf16.msra.mxu0 %v4597
      %4619 = vmatprep.subr.bf16.mxu0 0
      %4620 = vmatpush2.bf16.msra.mxu0 0
      %4621 = vmatprep.subr.bf16.mxu0 0
      %4622 = vmatpush2.bf16.msra.mxu0 0
      %4623 = vmatprep.subr.bf16.mxu0 0
      %4624 = vmatpush2.bf16.msra.mxu0 0
      %4625 = vmatprep.subr.bf16.mxu0 0
      %4626 = vmatpush2.bf16.msra.mxu0 0
      %4627 = vmatprep.subr.bf16.mxu0 0
      %4628 = vmatpush2.bf16.msra.mxu0 0
      %4629 = vmatprep.subr.bf16.mxu0 0
      %4630 = vmatpush2.bf16.msra.mxu0 0
      %4631 = vmatprep.subr.bf16.mxu0 0
      %4632 = vmatpush2.bf16.msra.mxu0 0
      %4633 = vmatprep.subr.bf16.mxu0 0
      %4634 = vmatpush2.bf16.msra.mxu0 0
      %4635 = vmatprep.mubr.bf16.mxu0 0
      %4636 = vmatmul.mubr.bf16.gmra.mxu0 %v4136
      %v4637 = vpop.f32.mrf.mxu0
      %v4638 = vadd.f32 0.0, %v4637
      %v4639 = vpop.f32.mrf.mxu0
      %v4640 = vpop.f32.mrf.mxu0
      %v4641 = vadd.f32 0.0, %v4640
      %v4642 = vpop.f32.mrf.mxu0
      %4643 = vmatprep.mubr.bf16.mxu0 0
      %4644 = vmatmul.mubr.bf16.gmra.mxu0 %v4139
      %v4645 = vpop.f32.mrf.mxu0
      %v4646 = vadd.f32 0.0, %v4645
      %v4647 = vpop.f32.mrf.mxu0
      %v4648 = vpop.f32.mrf.mxu0
      %v4649 = vpop.f32.mrf.mxu0
      %4650 = vdwg.mxu0
      %v4657 = vunpack.c.l.b16 %v4057
      %v4658 = vunpack.c.l.b16 %v4058
      %v4659 = vunpack.c.l.b16 %v4059
      %v4660 = vunpack.c.l.b16 %v4060
      %v4661 = vunpack.c.l.b16 %v4061
      %v4662 = vunpack.c.l.b16 %v4062
      %v4663 = vpack.c.b16 %v4658, %v4657
      %v4664 = vpack.c.b16 %v4660, %v4659
      %v4665 = vpack.c.b16 %v4662, %v4661
      %4669 = vmatprep.subr.bf16.mxu0 0
      %4670 = vmatpush1.bf16.msra.mxu0 0
      %4671 = vmatprep.subr.bf16.mxu0 0
      %4672 = vmatpush1.bf16.msra.mxu0 0
      %4673 = vmatprep.subr.bf16.mxu0 0
      %4674 = vmatpush1.bf16.msra.mxu0 0
      %4675 = vmatprep.subr.bf16.mxu0 0
      %4676 = vmatpush1.bf16.msra.mxu0 0
      %4677 = vmatprep.subr.bf16.mxu0 0
      %4678 = vmatpush1.bf16.msra.mxu0 0
      %4679 = vmatprep.subr.bf16.mxu0 0
      %4680 = vmatpush1.bf16.msra.mxu0 %v4665
      %4681 = vmatprep.subr.bf16.mxu0 0
      %4682 = vmatpush1.bf16.msra.mxu0 %v4664
      %4683 = vmatprep.subr.bf16.mxu0 0
      %4684 = vmatpush1.bf16.msra.mxu0 %v4663
      %4685 = vmatprep.subr.bf16.mxu0 0
      %4686 = vmatpush2.bf16.msra.mxu0 0
      %4687 = vmatprep.subr.bf16.mxu0 0
      %4688 = vmatpush2.bf16.msra.mxu0 0
      %4689 = vmatprep.subr.bf16.mxu0 0
      %4690 = vmatpush2.bf16.msra.mxu0 0
      %4691 = vmatprep.subr.bf16.mxu0 0
      %4692 = vmatpush2.bf16.msra.mxu0 0
      %4693 = vmatprep.subr.bf16.mxu0 0
      %4694 = vmatpush2.bf16.msra.mxu0 0
      %4695 = vmatprep.subr.bf16.mxu0 0
      %4696 = vmatpush2.bf16.msra.mxu0 0
      %4697 = vmatprep.subr.bf16.mxu0 0
      %4698 = vmatpush2.bf16.msra.mxu0 0
      %4699 = vmatprep.subr.bf16.mxu0 0
      %4700 = vmatpush2.bf16.msra.mxu0 0
      %4701 = vmatprep.mubr.bf16.mxu0 0
      %4702 = vmatmul.mubr.bf16.gmra.mxu0 %v4136
      %v4703 = vpop.f32.mrf.mxu0
      %v4704 = vadd.f32 0.0, %v4703
      %v4705 = vpop.f32.mrf.mxu0
      %v4706 = vpop.f32.mrf.mxu0
      %v4707 = vadd.f32 0.0, %v4706
      %v4708 = vpop.f32.mrf.mxu0
      %4709 = vmatprep.mubr.bf16.mxu0 0
      %4710 = vmatmul.mubr.bf16.gmra.mxu0 %v4139
      %v4711 = vpop.f32.mrf.mxu0
      %v4712 = vadd.f32 0.0, %v4711
      %v4713 = vpop.f32.mrf.mxu0
      %v4714 = vpop.f32.mrf.mxu0
      %v4715 = vpop.f32.mrf.mxu0
      %4716 = vdwg.mxu0
      %v4723 = vunpack.c.l.b16 %v4063
      %v4724 = vunpack.c.l.b16 %v4064
      %v4725 = vunpack.c.l.b16 %v4065
      %v4726 = vunpack.c.l.b16 %v4066
      %v4727 = vunpack.c.l.b16 %v4067
      %v4728 = vunpack.c.l.b16 %v4068
      %v4729 = vpack.c.b16 %v4724, %v4723
      %v4730 = vpack.c.b16 %v4726, %v4725
      %v4731 = vpack.c.b16 %v4728, %v4727
      %4735 = vmatprep.subr.bf16.mxu0 0
      %4736 = vmatpush1.bf16.msra.mxu0 0
      %4737 = vmatprep.subr.bf16.mxu0 0
      %4738 = vmatpush1.bf16.msra.mxu0 0
      %4739 = vmatprep.subr.bf16.mxu0 0
      %4740 = vmatpush1.bf16.msra.mxu0 0
      %4741 = vmatprep.subr.bf16.mxu0 0
      %4742 = vmatpush1.bf16.msra.mxu0 0
      %4743 = vmatprep.subr.bf16.mxu0 0
      %4744 = vmatpush1.bf16.msra.mxu0 0
      %4745 = vmatprep.subr.bf16.mxu0 0
      %4746 = vmatpush1.bf16.msra.mxu0 %v4731
      %4747 = vmatprep.subr.bf16.mxu0 0
      %4748 = vmatpush1.bf16.msra.mxu0 %v4730
      %4749 = vmatprep.subr.bf16.mxu0 0
      %4750 = vmatpush1.bf16.msra.mxu0 %v4729
      %4751 = vmatprep.subr.bf16.mxu0 0
      %4752 = vmatpush2.bf16.msra.mxu0 0
      %4753 = vmatprep.subr.bf16.mxu0 0
      %4754 = vmatpush2.bf16.msra.mxu0 0
      %4755 = vmatprep.subr.bf16.mxu0 0
      %4756 = vmatpush2.bf16.msra.mxu0 0
      %4757 = vmatprep.subr.bf16.mxu0 0
      %4758 = vmatpush2.bf16.msra.mxu0 0
      %4759 = vmatprep.subr.bf16.mxu0 0
      %4760 = vmatpush2.bf16.msra.mxu0 0
      %4761 = vmatprep.subr.bf16.mxu0 0
      %4762 = vmatpush2.bf16.msra.mxu0 0
      %4763 = vmatprep.subr.bf16.mxu0 0
      %4764 = vmatpush2.bf16.msra.mxu0 0
      %4765 = vmatprep.subr.bf16.mxu0 0
      %4766 = vmatpush2.bf16.msra.mxu0 0
      %4767 = vmatprep.mubr.bf16.mxu0 0
      %4768 = vmatmul.mubr.bf16.gmra.mxu0 %v4136
      %v4769 = vpop.f32.mrf.mxu0
      %v4770 = vadd.f32 0.0, %v4769
      %v4771 = vpop.f32.mrf.mxu0
      %v4772 = vpop.f32.mrf.mxu0
      %v4773 = vadd.f32 0.0, %v4772
      %v4774 = vpop.f32.mrf.mxu0
      %4775 = vmatprep.mubr.bf16.mxu0 0
      %4776 = vmatmul.mubr.bf16.gmra.mxu0 %v4139
      %v4777 = vpop.f32.mrf.mxu0
      %v4778 = vadd.f32 0.0, %v4777
      %v4779 = vpop.f32.mrf.mxu0
      %v4780 = vpop.f32.mrf.mxu0
      %v4781 = vpop.f32.mrf.mxu0
      %4782 = vdwg.mxu0
      %v4789 = vunpack.c.l.b16 %v4069
      %v4790 = vunpack.c.l.b16 %v4070
      %v4791 = vunpack.c.l.b16 %v4071
      %v4792 = vunpack.c.l.b16 %v4072
      %v4793 = vunpack.c.l.b16 %v4073
      %v4794 = vunpack.c.l.b16 %v4074
      %v4795 = vpack.c.b16 %v4790, %v4789
      %v4796 = vpack.c.b16 %v4792, %v4791
      %v4797 = vpack.c.b16 %v4794, %v4793
      %4801 = vmatprep.subr.bf16.mxu0 0
      %4802 = vmatpush1.bf16.msra.mxu0 0
      %4803 = vmatprep.subr.bf16.mxu0 0
      %4804 = vmatpush1.bf16.msra.mxu0 0
      %4805 = vmatprep.subr.bf16.mxu0 0
      %4806 = vmatpush1.bf16.msra.mxu0 0
      %4807 = vmatprep.subr.bf16.mxu0 0
      %4808 = vmatpush1.bf16.msra.mxu0 0
      %4809 = vmatprep.subr.bf16.mxu0 0
      %4810 = vmatpush1.bf16.msra.mxu0 0
      %4811 = vmatprep.subr.bf16.mxu0 0
      %4812 = vmatpush1.bf16.msra.mxu0 %v4797
      %4813 = vmatprep.subr.bf16.mxu0 0
      %4814 = vmatpush1.bf16.msra.mxu0 %v4796
      %4815 = vmatprep.subr.bf16.mxu0 0
      %4816 = vmatpush1.bf16.msra.mxu0 %v4795
      %4817 = vmatprep.subr.bf16.mxu0 0
      %4818 = vmatpush2.bf16.msra.mxu0 0
      %4819 = vmatprep.subr.bf16.mxu0 0
      %4820 = vmatpush2.bf16.msra.mxu0 0
      %4821 = vmatprep.subr.bf16.mxu0 0
      %4822 = vmatpush2.bf16.msra.mxu0 0
      %4823 = vmatprep.subr.bf16.mxu0 0
      %4824 = vmatpush2.bf16.msra.mxu0 0
      %4825 = vmatprep.subr.bf16.mxu0 0
      %4826 = vmatpush2.bf16.msra.mxu0 0
      %4827 = vmatprep.subr.bf16.mxu0 0
      %4828 = vmatpush2.bf16.msra.mxu0 0
      %4829 = vmatprep.subr.bf16.mxu0 0
      %4830 = vmatpush2.bf16.msra.mxu0 0
      %4831 = vmatprep.subr.bf16.mxu0 0
      %4832 = vmatpush2.bf16.msra.mxu0 0
      %4833 = vmatprep.mubr.bf16.mxu0 0
      %4834 = vmatmul.mubr.bf16.gmra.mxu0 %v4136
      %v4835 = vpop.f32.mrf.mxu0
      %v4836 = vadd.f32 0.0, %v4835
      %v4837 = vpop.f32.mrf.mxu0
      %v4838 = vpop.f32.mrf.mxu0
      %v4839 = vadd.f32 0.0, %v4838
      %v4840 = vpop.f32.mrf.mxu0
      %4841 = vmatprep.mubr.bf16.mxu0 0
      %4842 = vmatmul.mubr.bf16.gmra.mxu0 %v4139
      %v4843 = vpop.f32.mrf.mxu0
      %v4844 = vadd.f32 0.0, %v4843
      %v4845 = vpop.f32.mrf.mxu0
      %v4846 = vpop.f32.mrf.mxu0
      %v4847 = vpop.f32.mrf.mxu0
      %4848 = vdwg.mxu0
      %v4855 = vunpack.c.l.b16 %v4075
      %v4856 = vunpack.c.l.b16 %v4076
      %v4857 = vunpack.c.l.b16 %v4077
      %v4858 = vunpack.c.l.b16 %v4078
      %v4859 = vunpack.c.l.b16 %v4079
      %v4860 = vunpack.c.l.b16 %v4080
      %v4861 = vpack.c.b16 %v4856, %v4855
      %v4862 = vpack.c.b16 %v4858, %v4857
      %v4863 = vpack.c.b16 %v4860, %v4859
      %4867 = vmatprep.subr.bf16.mxu0 0
      %4868 = vmatpush1.bf16.msra.mxu0 0
      %4869 = vmatprep.subr.bf16.mxu0 0
      %4870 = vmatpush1.bf16.msra.mxu0 0
      %4871 = vmatprep.subr.bf16.mxu0 0
      %4872 = vmatpush1.bf16.msra.mxu0 0
      %4873 = vmatprep.subr.bf16.mxu0 0
      %4874 = vmatpush1.bf16.msra.mxu0 0
      %4875 = vmatprep.subr.bf16.mxu0 0
      %4876 = vmatpush1.bf16.msra.mxu0 0
      %4877 = vmatprep.subr.bf16.mxu0 0
      %4878 = vmatpush1.bf16.msra.mxu0 %v4863
      %4879 = vmatprep.subr.bf16.mxu0 0
      %4880 = vmatpush1.bf16.msra.mxu0 %v4862
      %4881 = vmatprep.subr.bf16.mxu0 0
      %4882 = vmatpush1.bf16.msra.mxu0 %v4861
      %4883 = vmatprep.subr.bf16.mxu0 0
      %4884 = vmatpush2.bf16.msra.mxu0 0
      %4885 = vmatprep.subr.bf16.mxu0 0
      %4886 = vmatpush2.bf16.msra.mxu0 0
      %4887 = vmatprep.subr.bf16.mxu0 0
      %4888 = vmatpush2.bf16.msra.mxu0 0
      %4889 = vmatprep.subr.bf16.mxu0 0
      %4890 = vmatpush2.bf16.msra.mxu0 0
      %4891 = vmatprep.subr.bf16.mxu0 0
      %4892 = vmatpush2.bf16.msra.mxu0 0
      %4893 = vmatprep.subr.bf16.mxu0 0
      %4894 = vmatpush2.bf16.msra.mxu0 0
      %4895 = vmatprep.subr.bf16.mxu0 0
      %4896 = vmatpush2.bf16.msra.mxu0 0
      %4897 = vmatprep.subr.bf16.mxu0 0
      %4898 = vmatpush2.bf16.msra.mxu0 0
      %4899 = vmatprep.mubr.bf16.mxu0 0
      %4900 = vmatmul.mubr.bf16.gmra.mxu0 %v4136
      %v4901 = vpop.f32.mrf.mxu0
      %v4902 = vadd.f32 0.0, %v4901
      %v4903 = vpop.f32.mrf.mxu0
      %v4904 = vpop.f32.mrf.mxu0
      %v4905 = vadd.f32 0.0, %v4904
      %v4906 = vpop.f32.mrf.mxu0
      %4907 = vmatprep.mubr.bf16.mxu0 0
      %4908 = vmatmul.mubr.bf16.gmra.mxu0 %v4139
      %v4909 = vpop.f32.mrf.mxu0
      %v4910 = vadd.f32 0.0, %v4909
      %v4911 = vpop.f32.mrf.mxu0
      %v4912 = vpop.f32.mrf.mxu0
      %v4913 = vpop.f32.mrf.mxu0
      %4914 = vdwg.mxu0
      %v4921 = vunpack.c.l.b16 %v4081
      %v4922 = vunpack.c.l.b16 %v4082
      %v4923 = vunpack.c.l.b16 %v4083
      %v4924 = vunpack.c.l.b16 %v4084
      %v4925 = vunpack.c.l.b16 %v4085
      %v4926 = vunpack.c.l.b16 %v4086
      %v4927 = vpack.c.b16 %v4922, %v4921
      %v4928 = vpack.c.b16 %v4924, %v4923
      %v4929 = vpack.c.b16 %v4926, %v4925
      %4933 = vmatprep.subr.bf16.mxu0 0
      %4934 = vmatpush1.bf16.msra.mxu0 0
      %4935 = vmatprep.subr.bf16.mxu0 0
      %4936 = vmatpush1.bf16.msra.mxu0 0
      %4937 = vmatprep.subr.bf16.mxu0 0
      %4938 = vmatpush1.bf16.msra.mxu0 0
      %4939 = vmatprep.subr.bf16.mxu0 0
      %4940 = vmatpush1.bf16.msra.mxu0 0
      %4941 = vmatprep.subr.bf16.mxu0 0
      %4942 = vmatpush1.bf16.msra.mxu0 0
      %4943 = vmatprep.subr.bf16.mxu0 0
      %4944 = vmatpush1.bf16.msra.mxu0 %v4929
      %4945 = vmatprep.subr.bf16.mxu0 0
      %4946 = vmatpush1.bf16.msra.mxu0 %v4928
      %4947 = vmatprep.subr.bf16.mxu0 0
      %4948 = vmatpush1.bf16.msra.mxu0 %v4927
      %4949 = vmatprep.subr.bf16.mxu0 0
      %4950 = vmatpush2.bf16.msra.mxu0 0
      %4951 = vmatprep.subr.bf16.mxu0 0
      %4952 = vmatpush2.bf16.msra.mxu0 0
      %4953 = vmatprep.subr.bf16.mxu0 0
      %4954 = vmatpush2.bf16.msra.mxu0 0
      %4955 = vmatprep.subr.bf16.mxu0 0
      %4956 = vmatpush2.bf16.msra.mxu0 0
      %4957 = vmatprep.subr.bf16.mxu0 0
      %4958 = vmatpush2.bf16.msra.mxu0 0
      %4959 = vmatprep.subr.bf16.mxu0 0
      %4960 = vmatpush2.bf16.msra.mxu0 0
      %4961 = vmatprep.subr.bf16.mxu0 0
      %4962 = vmatpush2.bf16.msra.mxu0 0
      %4963 = vmatprep.subr.bf16.mxu0 0
      %4964 = vmatpush2.bf16.msra.mxu0 0
      %4965 = vmatprep.mubr.bf16.mxu0 0
      %4966 = vmatmul.mubr.bf16.gmra.mxu0 %v4136
      %v4967 = vpop.f32.mrf.mxu0
      %v4968 = vadd.f32 0.0, %v4967
      %v4969 = vpop.f32.mrf.mxu0
      %v4970 = vpop.f32.mrf.mxu0
      %v4971 = vadd.f32 0.0, %v4970
      %v4972 = vpop.f32.mrf.mxu0
      %4973 = vmatprep.mubr.bf16.mxu0 0
      %4974 = vmatmul.mubr.bf16.gmra.mxu0 %v4139
      %v4975 = vpop.f32.mrf.mxu0
      %v4976 = vadd.f32 0.0, %v4975
      %v4977 = vpop.f32.mrf.mxu0
      %v4978 = vpop.f32.mrf.mxu0
      %v4979 = vpop.f32.mrf.mxu0
      %4980 = vdwg.mxu0
      %v4987 = vunpack.c.l.b16 %v4087
      %v4988 = vunpack.c.l.b16 %v4088
      %v4989 = vunpack.c.l.b16 %v4089
      %v4990 = vunpack.c.l.b16 %v4090
      %v4991 = vunpack.c.l.b16 %v4091
      %v4992 = vunpack.c.l.b16 %v4092
      %v4993 = vpack.c.b16 %v4988, %v4987
      %v4994 = vpack.c.b16 %v4990, %v4989
      %v4995 = vpack.c.b16 %v4992, %v4991
      %4999 = vmatprep.subr.bf16.mxu0 0
      %5000 = vmatpush1.bf16.msra.mxu0 0
      %5001 = vmatprep.subr.bf16.mxu0 0
      %5002 = vmatpush1.bf16.msra.mxu0 0
      %5003 = vmatprep.subr.bf16.mxu0 0
      %5004 = vmatpush1.bf16.msra.mxu0 0
      %5005 = vmatprep.subr.bf16.mxu0 0
      %5006 = vmatpush1.bf16.msra.mxu0 0
      %5007 = vmatprep.subr.bf16.mxu0 0
      %5008 = vmatpush1.bf16.msra.mxu0 0
      %5009 = vmatprep.subr.bf16.mxu0 0
      %5010 = vmatpush1.bf16.msra.mxu0 %v4995
      %5011 = vmatprep.subr.bf16.mxu0 0
      %5012 = vmatpush1.bf16.msra.mxu0 %v4994
      %5013 = vmatprep.subr.bf16.mxu0 0
      %5014 = vmatpush1.bf16.msra.mxu0 %v4993
      %5015 = vmatprep.subr.bf16.mxu0 0
      %5016 = vmatpush2.bf16.msra.mxu0 0
      %5017 = vmatprep.subr.bf16.mxu0 0
      %5018 = vmatpush2.bf16.msra.mxu0 0
      %5019 = vmatprep.subr.bf16.mxu0 0
      %5020 = vmatpush2.bf16.msra.mxu0 0
      %5021 = vmatprep.subr.bf16.mxu0 0
      %5022 = vmatpush2.bf16.msra.mxu0 0
      %5023 = vmatprep.subr.bf16.mxu0 0
      %5024 = vmatpush2.bf16.msra.mxu0 0
      %5025 = vmatprep.subr.bf16.mxu0 0
      %5026 = vmatpush2.bf16.msra.mxu0 0
      %5027 = vmatprep.subr.bf16.mxu0 0
      %5028 = vmatpush2.bf16.msra.mxu0 0
      %5029 = vmatprep.subr.bf16.mxu0 0
      %5030 = vmatpush2.bf16.msra.mxu0 0
      %5031 = vmatprep.mubr.bf16.mxu0 0
      %5032 = vmatmul.mubr.bf16.gmra.mxu0 %v4136
      %v5033 = vpop.f32.mrf.mxu0
      %v5034 = vadd.f32 0.0, %v5033
      %v5035 = vpop.f32.mrf.mxu0
      %v5036 = vpop.f32.mrf.mxu0
      %v5037 = vadd.f32 0.0, %v5036
      %v5038 = vpop.f32.mrf.mxu0
      %5039 = vmatprep.mubr.bf16.mxu0 0
      %5040 = vmatmul.mubr.bf16.gmra.mxu0 %v4139
      %v5041 = vpop.f32.mrf.mxu0
      %v5042 = vadd.f32 0.0, %v5041
      %v5043 = vpop.f32.mrf.mxu0
      %v5044 = vpop.f32.mrf.mxu0
      %v5045 = vpop.f32.mrf.mxu0
      %5046 = vdwg.mxu0
      %v5053 = vunpack.c.l.b16 %v4093
      %v5054 = vunpack.c.l.b16 %v4094
      %v5055 = vunpack.c.l.b16 %v4095
      %v5056 = vunpack.c.l.b16 %v4096
      %v5057 = vunpack.c.l.b16 %v4097
      %v5058 = vunpack.c.l.b16 %v4098
      %v5059 = vpack.c.b16 %v5054, %v5053
      %v5060 = vpack.c.b16 %v5056, %v5055
      %v5061 = vpack.c.b16 %v5058, %v5057
      %5065 = vmatprep.subr.bf16.mxu0 0
      %5066 = vmatpush1.bf16.msra.mxu0 0
      %5067 = vmatprep.subr.bf16.mxu0 0
      %5068 = vmatpush1.bf16.msra.mxu0 0
      %5069 = vmatprep.subr.bf16.mxu0 0
      %5070 = vmatpush1.bf16.msra.mxu0 0
      %5071 = vmatprep.subr.bf16.mxu0 0
      %5072 = vmatpush1.bf16.msra.mxu0 0
      %5073 = vmatprep.subr.bf16.mxu0 0
      %5074 = vmatpush1.bf16.msra.mxu0 0
      %5075 = vmatprep.subr.bf16.mxu0 0
      %5076 = vmatpush1.bf16.msra.mxu0 %v5061
      %5077 = vmatprep.subr.bf16.mxu0 0
      %5078 = vmatpush1.bf16.msra.mxu0 %v5060
      %5079 = vmatprep.subr.bf16.mxu0 0
      %5080 = vmatpush1.bf16.msra.mxu0 %v5059
      %5081 = vmatprep.subr.bf16.mxu0 0
      %5082 = vmatpush2.bf16.msra.mxu0 0
      %5083 = vmatprep.subr.bf16.mxu0 0
      %5084 = vmatpush2.bf16.msra.mxu0 0
      %5085 = vmatprep.subr.bf16.mxu0 0
      %5086 = vmatpush2.bf16.msra.mxu0 0
      %5087 = vmatprep.subr.bf16.mxu0 0
      %5088 = vmatpush2.bf16.msra.mxu0 0
      %5089 = vmatprep.subr.bf16.mxu0 0
      %5090 = vmatpush2.bf16.msra.mxu0 0
      %5091 = vmatprep.subr.bf16.mxu0 0
      %5092 = vmatpush2.bf16.msra.mxu0 0
      %5093 = vmatprep.subr.bf16.mxu0 0
      %5094 = vmatpush2.bf16.msra.mxu0 0
      %5095 = vmatprep.subr.bf16.mxu0 0
      %5096 = vmatpush2.bf16.msra.mxu0 0
      %5097 = vmatprep.mubr.bf16.mxu0 0
      %5098 = vmatmul.mubr.bf16.gmra.mxu0 %v4136
      %v5099 = vpop.f32.mrf.mxu0
      %v5100 = vadd.f32 0.0, %v5099
      %v5101 = vpop.f32.mrf.mxu0
      %v5102 = vpop.f32.mrf.mxu0
      %v5103 = vadd.f32 0.0, %v5102
      %v5104 = vpop.f32.mrf.mxu0
      %5105 = vmatprep.mubr.bf16.mxu0 0
      %5106 = vmatmul.mubr.bf16.gmra.mxu0 %v4139
      %v5107 = vpop.f32.mrf.mxu0
      %v5108 = vadd.f32 0.0, %v5107
      %v5109 = vpop.f32.mrf.mxu0
      %v5110 = vpop.f32.mrf.mxu0
      %v5111 = vpop.f32.mrf.mxu0
      %5112 = vdwg.mxu0
      %v5119 = vunpack.c.l.b16 %v4099
      %v5120 = vunpack.c.l.b16 %v4100
      %v5121 = vunpack.c.l.b16 %v4101
      %v5122 = vunpack.c.l.b16 %v4102
      %v5123 = vunpack.c.l.b16 %v4103
      %v5124 = vunpack.c.l.b16 %v4104
      %v5125 = vpack.c.b16 %v5120, %v5119
      %v5126 = vpack.c.b16 %v5122, %v5121
      %v5127 = vpack.c.b16 %v5124, %v5123
      %5131 = vmatprep.subr.bf16.mxu0 0
      %5132 = vmatpush1.bf16.msra.mxu0 0
      %5133 = vmatprep.subr.bf16.mxu0 0
      %5134 = vmatpush1.bf16.msra.mxu0 0
      %5135 = vmatprep.subr.bf16.mxu0 0
      %5136 = vmatpush1.bf16.msra.mxu0 0
      %5137 = vmatprep.subr.bf16.mxu0 0
      %5138 = vmatpush1.bf16.msra.mxu0 0
      %5139 = vmatprep.subr.bf16.mxu0 0
      %5140 = vmatpush1.bf16.msra.mxu0 0
      %5141 = vmatprep.subr.bf16.mxu0 0
      %5142 = vmatpush1.bf16.msra.mxu0 %v5127
      %5143 = vmatprep.subr.bf16.mxu0 0
      %5144 = vmatpush1.bf16.msra.mxu0 %v5126
      %5145 = vmatprep.subr.bf16.mxu0 0
      %5146 = vmatpush1.bf16.msra.mxu0 %v5125
      %5147 = vmatprep.subr.bf16.mxu0 0
      %5148 = vmatpush2.bf16.msra.mxu0 0
      %5149 = vmatprep.subr.bf16.mxu0 0
      %5150 = vmatpush2.bf16.msra.mxu0 0
      %5151 = vmatprep.subr.bf16.mxu0 0
      %5152 = vmatpush2.bf16.msra.mxu0 0
      %5153 = vmatprep.subr.bf16.mxu0 0
      %5154 = vmatpush2.bf16.msra.mxu0 0
      %5155 = vmatprep.subr.bf16.mxu0 0
      %5156 = vmatpush2.bf16.msra.mxu0 0
      %5157 = vmatprep.subr.bf16.mxu0 0
      %5158 = vmatpush2.bf16.msra.mxu0 0
      %5159 = vmatprep.subr.bf16.mxu0 0
      %5160 = vmatpush2.bf16.msra.mxu0 0
      %5161 = vmatprep.subr.bf16.mxu0 0
      %5162 = vmatpush2.bf16.msra.mxu0 0
      %5163 = vmatprep.mubr.bf16.mxu0 0
      %5164 = vmatmul.mubr.bf16.gmra.mxu0 %v4136
      %v5165 = vpop.f32.mrf.mxu0
      %v5166 = vadd.f32 0.0, %v5165
      %v5167 = vpop.f32.mrf.mxu0
      %v5168 = vpop.f32.mrf.mxu0
      %v5169 = vadd.f32 0.0, %v5168
      %v5170 = vpop.f32.mrf.mxu0
      %5171 = vmatprep.mubr.bf16.mxu0 0
      %5172 = vmatmul.mubr.bf16.gmra.mxu0 %v4139
      %v5173 = vpop.f32.mrf.mxu0
      %v5174 = vadd.f32 0.0, %v5173
      %v5175 = vpop.f32.mrf.mxu0
      %v5176 = vpop.f32.mrf.mxu0
      %v5177 = vpop.f32.mrf.mxu0
      %5178 = vdwg.mxu0
      %v5185 = vunpack.c.l.b16 %v4105
      %v5186 = vunpack.c.l.b16 %v4106
      %v5187 = vunpack.c.l.b16 %v4107
      %v5188 = vunpack.c.l.b16 %v4108
      %v5189 = vunpack.c.l.b16 %v4109
      %v5190 = vunpack.c.l.b16 %v4110
      %v5191 = vpack.c.b16 %v5186, %v5185
      %v5192 = vpack.c.b16 %v5188, %v5187
      %v5193 = vpack.c.b16 %v5190, %v5189
      %5197 = vmatprep.subr.bf16.mxu0 0
      %5198 = vmatpush1.bf16.msra.mxu0 0
      %5199 = vmatprep.subr.bf16.mxu0 0
      %5200 = vmatpush1.bf16.msra.mxu0 0
      %5201 = vmatprep.subr.bf16.mxu0 0
      %5202 = vmatpush1.bf16.msra.mxu0 0
      %5203 = vmatprep.subr.bf16.mxu0 0
      %5204 = vmatpush1.bf16.msra.mxu0 0
      %5205 = vmatprep.subr.bf16.mxu0 0
      %5206 = vmatpush1.bf16.msra.mxu0 0
      %5207 = vmatprep.subr.bf16.mxu0 0
      %5208 = vmatpush1.bf16.msra.mxu0 %v5193
      %5209 = vmatprep.subr.bf16.mxu0 0
      %5210 = vmatpush1.bf16.msra.mxu0 %v5192
      %5211 = vmatprep.subr.bf16.mxu0 0
      %5212 = vmatpush1.bf16.msra.mxu0 %v5191
      %5213 = vmatprep.subr.bf16.mxu0 0
      %5214 = vmatpush2.bf16.msra.mxu0 0
      %5215 = vmatprep.subr.bf16.mxu0 0
      %5216 = vmatpush2.bf16.msra.mxu0 0
      %5217 = vmatprep.subr.bf16.mxu0 0
      %5218 = vmatpush2.bf16.msra.mxu0 0
      %5219 = vmatprep.subr.bf16.mxu0 0
      %5220 = vmatpush2.bf16.msra.mxu0 0
      %5221 = vmatprep.subr.bf16.mxu0 0
      %5222 = vmatpush2.bf16.msra.mxu0 0
      %5223 = vmatprep.subr.bf16.mxu0 0
      %5224 = vmatpush2.bf16.msra.mxu0 0
      %5225 = vmatprep.subr.bf16.mxu0 0
      %5226 = vmatpush2.bf16.msra.mxu0 0
      %5227 = vmatprep.subr.bf16.mxu0 0
      %5228 = vmatpush2.bf16.msra.mxu0 0
      %5229 = vmatprep.mubr.bf16.mxu0 0
      %5230 = vmatmul.mubr.bf16.gmra.mxu0 %v4136
      %v5231 = vpop.f32.mrf.mxu0
      %v5232 = vadd.f32 0.0, %v5231
      %v5233 = vpop.f32.mrf.mxu0
      %v5234 = vpop.f32.mrf.mxu0
      %v5235 = vadd.f32 0.0, %v5234
      %v5236 = vpop.f32.mrf.mxu0
      %5237 = vmatprep.mubr.bf16.mxu0 0
      %5238 = vmatmul.mubr.bf16.gmra.mxu0 %v4139
      %v5239 = vpop.f32.mrf.mxu0
      %v5240 = vadd.f32 0.0, %v5239
      %v5241 = vpop.f32.mrf.mxu0
      %v5242 = vpop.f32.mrf.mxu0
      %v5243 = vpop.f32.mrf.mxu0
      %5244 = vdwg.mxu0
      %v5251 = vunpack.c.l.b16 %v4111
      %v5252 = vunpack.c.l.b16 %v4112
      %v5253 = vunpack.c.l.b16 %v4113
      %v5254 = vunpack.c.l.b16 %v4114
      %v5255 = vunpack.c.l.b16 %v4115
      %v5256 = vunpack.c.l.b16 %v4116
      %v5257 = vpack.c.b16 %v5252, %v5251
      %v5258 = vpack.c.b16 %v5254, %v5253
      %v5259 = vpack.c.b16 %v5256, %v5255
      %5263 = vmatprep.subr.bf16.mxu0 0
      %5264 = vmatpush1.bf16.msra.mxu0 0
      %5265 = vmatprep.subr.bf16.mxu0 0
      %5266 = vmatpush1.bf16.msra.mxu0 0
      %5267 = vmatprep.subr.bf16.mxu0 0
      %5268 = vmatpush1.bf16.msra.mxu0 0
      %5269 = vmatprep.subr.bf16.mxu0 0
      %5270 = vmatpush1.bf16.msra.mxu0 0
      %5271 = vmatprep.subr.bf16.mxu0 0
      %5272 = vmatpush1.bf16.msra.mxu0 0
      %5273 = vmatprep.subr.bf16.mxu0 0
      %5274 = vmatpush1.bf16.msra.mxu0 %v5259
      %5275 = vmatprep.subr.bf16.mxu0 0
      %5276 = vmatpush1.bf16.msra.mxu0 %v5258
      %5277 = vmatprep.subr.bf16.mxu0 0
      %5278 = vmatpush1.bf16.msra.mxu0 %v5257
      %5279 = vmatprep.subr.bf16.mxu0 0
      %5280 = vmatpush2.bf16.msra.mxu0 0
      %5281 = vmatprep.subr.bf16.mxu0 0
      %5282 = vmatpush2.bf16.msra.mxu0 0
      %5283 = vmatprep.subr.bf16.mxu0 0
      %5284 = vmatpush2.bf16.msra.mxu0 0
      %5285 = vmatprep.subr.bf16.mxu0 0
      %5286 = vmatpush2.bf16.msra.mxu0 0
      %5287 = vmatprep.subr.bf16.mxu0 0
      %5288 = vmatpush2.bf16.msra.mxu0 0
      %5289 = vmatprep.subr.bf16.mxu0 0
      %5290 = vmatpush2.bf16.msra.mxu0 0
      %5291 = vmatprep.subr.bf16.mxu0 0
      %5292 = vmatpush2.bf16.msra.mxu0 0
      %5293 = vmatprep.subr.bf16.mxu0 0
      %5294 = vmatpush2.bf16.msra.mxu0 0
      %5295 = vmatprep.mubr.bf16.mxu0 0
      %5296 = vmatmul.mubr.bf16.gmra.mxu0 %v4136
      %v5297 = vpop.f32.mrf.mxu0
      %v5298 = vadd.f32 0.0, %v5297
      %v5299 = vpop.f32.mrf.mxu0
      %v5300 = vpop.f32.mrf.mxu0
      %v5301 = vadd.f32 0.0, %v5300
      %v5302 = vpop.f32.mrf.mxu0
      %5303 = vmatprep.mubr.bf16.mxu0 0
      %5304 = vmatmul.mubr.bf16.gmra.mxu0 %v4139
      %v5305 = vpop.f32.mrf.mxu0
      %v5306 = vadd.f32 0.0, %v5305
      %v5307 = vpop.f32.mrf.mxu0
      %v5308 = vpop.f32.mrf.mxu0
      %v5309 = vpop.f32.mrf.mxu0
      %5310 = vdwg.mxu0
      %v5311 = vpack.c.bf16 %v4179, %v4176
      %v5312 = vpack.c.bf16 %v4184, %v4184
      %v5313 = vpack.c.bf16 %v4245, %v4242
      %v5314 = vpack.c.bf16 %v4250, %v4250
      %v5315 = vpack.c.bf16 %v4311, %v4308
      %v5316 = vpack.c.bf16 %v4316, %v4316
      %v5317 = vpack.c.bf16 %v4377, %v4374
      %v5318 = vpack.c.bf16 %v4382, %v4382
      %v5319 = vpack.c.bf16 %v4443, %v4440
      %v5320 = vpack.c.bf16 %v4448, %v4448
      %v5321 = vpack.c.bf16 %v4509, %v4506
      %v5322 = vpack.c.bf16 %v4514, %v4514
      %v5323 = vpack.c.bf16 %v4575, %v4572
      %v5324 = vpack.c.bf16 %v4580, %v4580
      %v5325 = vpack.c.bf16 %v4641, %v4638
      %v5326 = vpack.c.bf16 %v4646, %v4646
      %v5327 = vpack.c.bf16 %v4707, %v4704
      %v5328 = vpack.c.bf16 %v4712, %v4712
      %v5329 = vpack.c.bf16 %v4773, %v4770
      %v5330 = vpack.c.bf16 %v4778, %v4778
      %v5331 = vpack.c.bf16 %v4839, %v4836
      %v5332 = vpack.c.bf16 %v4844, %v4844
      %v5333 = vpack.c.bf16 %v4905, %v4902
      %v5334 = vpack.c.bf16 %v4910, %v4910
      %v5336 = vsel %vm2098, %v5311, 0
      %v5339 = vsel %vm2098, %v5312, 0
      %v5342 = vsel %vm2098, %v5323, 0
      %v5345 = vsel %vm2098, %v5324, 0
      %5347 = vmatprep.subr.bf16.mxu0 0
      %5348 = vmatpush1.bf16.xpose.msra.mxu0 0
      %5349 = vmatprep.subr.bf16.mxu0 0
      %5350 = vmatpush1.bf16.xpose.msra.mxu0 0
      %5351 = vmatprep.subr.bf16.mxu0 0
      %5352 = vmatpush1.bf16.xpose.msra.mxu0 0
      %5353 = vmatprep.subr.bf16.mxu0 0
      %5354 = vmatpush1.bf16.xpose.msra.mxu0 0
      %5355 = vmatprep.subr.bf16.mxu0 0
      %5356 = vmatpush1.bf16.xpose.msra.mxu0 0
      %5357 = vmatprep.subr.bf16.mxu0 0
      %5358 = vmatpush1.bf16.xpose.msra.mxu0 0
      %5359 = vmatprep.subr.bf16.mxu0 0
      %5360 = vmatpush1.bf16.xpose.msra.mxu0 %v5345
      %5361 = vmatprep.subr.bf16.mxu0 0
      %5362 = vmatpush1.bf16.xpose.msra.mxu0 %v5342
      %5363 = vmatprep.subr.bf16.mxu0 0
      %5364 = vmatpush2.bf16.xpose.msra.mxu0 0
      %5365 = vmatprep.subr.bf16.mxu0 0
      %5366 = vmatpush2.bf16.xpose.msra.mxu0 0
      %5367 = vmatprep.subr.bf16.mxu0 0
      %5368 = vmatpush2.bf16.xpose.msra.mxu0 0
      %5369 = vmatprep.subr.bf16.mxu0 0
      %5370 = vmatpush2.bf16.xpose.msra.mxu0 0
      %5371 = vmatprep.subr.bf16.mxu0 0
      %5372 = vmatpush2.bf16.xpose.msra.mxu0 0
      %5373 = vmatprep.subr.bf16.mxu0 0
      %5374 = vmatpush2.bf16.xpose.msra.mxu0 0
      %5375 = vmatprep.subr.bf16.mxu0 0
      %5376 = vmatpush2.bf16.xpose.msra.mxu0 0
      %5377 = vmatprep.subr.bf16.mxu0 0
      %5378 = vmatpush2.bf16.xpose.msra.mxu0 0
      %5379 = vmatprep.mubr.bf16.mxu0 0
      %5380 = vmatmul.mubr.bf16.gmra.mxu0 %v5336
      %v5381 = vpop.f32.mrf.mxu0
      %v5382 = vadd.f32 0.0, %v5381
      %v5383 = vpop.f32.mrf.mxu0
      %v5384 = vpop.f32.mrf.mxu0
      %v5385 = vadd.f32 0.0, %v5384
      %v5386 = vpop.f32.mrf.mxu0
      %5387 = vmatprep.mubr.bf16.mxu0 0
      %5388 = vmatmul.mubr.bf16.gmra.mxu0 %v5339
      %v5389 = vpop.f32.mrf.mxu0
      %v5390 = vadd.f32 0.0, %v5389
      %v5391 = vpop.f32.mrf.mxu0
      %v5392 = vpop.f32.mrf.mxu0
      %v5393 = vpop.f32.mrf.mxu0
      %5394 = vdwg.mxu0
      %v5396 = vsel %vm2098, %v5313, 0
      %v5399 = vsel %vm2098, %v5314, 0
      %v5402 = vsel %vm2098, %v5325, 0
      %v5405 = vsel %vm2098, %v5326, 0
      %5407 = vmatprep.subr.bf16.mxu0 0
      %5408 = vmatpush1.bf16.xpose.msra.mxu0 0
      %5409 = vmatprep.subr.bf16.mxu0 0
      %5410 = vmatpush1.bf16.xpose.msra.mxu0 0
      %5411 = vmatprep.subr.bf16.mxu0 0
      %5412 = vmatpush1.bf16.xpose.msra.mxu0 0
      %5413 = vmatprep.subr.bf16.mxu0 0
      %5414 = vmatpush1.bf16.xpose.msra.mxu0 0
      %5415 = vmatprep.subr.bf16.mxu0 0
      %5416 = vmatpush1.bf16.xpose.msra.mxu0 0
      %5417 = vmatprep.subr.bf16.mxu0 0
      %5418 = vmatpush1.bf16.xpose.msra.mxu0 0
      %5419 = vmatprep.subr.bf16.mxu0 0
      %5420 = vmatpush1.bf16.xpose.msra.mxu0 %v5405
      %5421 = vmatprep.subr.bf16.mxu0 0
      %5422 = vmatpush1.bf16.xpose.msra.mxu0 %v5402
      %5423 = vmatprep.subr.bf16.mxu0 0
      %5424 = vmatpush2.bf16.xpose.msra.mxu0 0
      %5425 = vmatprep.subr.bf16.mxu0 0
      %5426 = vmatpush2.bf16.xpose.msra.mxu0 0
      %5427 = vmatprep.subr.bf16.mxu0 0
      %5428 = vmatpush2.bf16.xpose.msra.mxu0 0
      %5429 = vmatprep.subr.bf16.mxu0 0
      %5430 = vmatpush2.bf16.xpose.msra.mxu0 0
      %5431 = vmatprep.subr.bf16.mxu0 0
      %5432 = vmatpush2.bf16.xpose.msra.mxu0 0
      %5433 = vmatprep.subr.bf16.mxu0 0
      %5434 = vmatpush2.bf16.xpose.msra.mxu0 0
      %5435 = vmatprep.subr.bf16.mxu0 0
      %5436 = vmatpush2.bf16.xpose.msra.mxu0 0
      %5437 = vmatprep.subr.bf16.mxu0 0
      %5438 = vmatpush2.bf16.xpose.msra.mxu0 0
      %5439 = vmatprep.mubr.bf16.mxu0 0
      %5440 = vmatmul.mubr.bf16.gmra.mxu0 %v5396
      %v5441 = vpop.f32.mrf.mxu0
      %v5442 = vadd.f32 0.0, %v5441
      %v5443 = vpop.f32.mrf.mxu0
      %v5444 = vpop.f32.mrf.mxu0
      %v5445 = vadd.f32 0.0, %v5444
      %v5446 = vpop.f32.mrf.mxu0
      %5447 = vmatprep.mubr.bf16.mxu0 0
      %5448 = vmatmul.mubr.bf16.gmra.mxu0 %v5399
      %v5449 = vpop.f32.mrf.mxu0
      %v5450 = vadd.f32 0.0, %v5449
      %v5451 = vpop.f32.mrf.mxu0
      %v5452 = vpop.f32.mrf.mxu0
      %v5453 = vpop.f32.mrf.mxu0
      %5454 = vdwg.mxu0
      %v5456 = vsel %vm2098, %v5315, 0
      %v5459 = vsel %vm2098, %v5316, 0
      %v5462 = vsel %vm2098, %v5327, 0
      %v5465 = vsel %vm2098, %v5328, 0
      %5467 = vmatprep.subr.bf16.mxu0 0
      %5468 = vmatpush1.bf16.xpose.msra.mxu0 0
      %5469 = vmatprep.subr.bf16.mxu0 0
      %5470 = vmatpush1.bf16.xpose.msra.mxu0 0
      %5471 = vmatprep.subr.bf16.mxu0 0
      %5472 = vmatpush1.bf16.xpose.msra.mxu0 0
      %5473 = vmatprep.subr.bf16.mxu0 0
      %5474 = vmatpush1.bf16.xpose.msra.mxu0 0
      %5475 = vmatprep.subr.bf16.mxu0 0
      %5476 = vmatpush1.bf16.xpose.msra.mxu0 0
      %5477 = vmatprep.subr.bf16.mxu0 0
      %5478 = vmatpush1.bf16.xpose.msra.mxu0 0
      %5479 = vmatprep.subr.bf16.mxu0 0
      %5480 = vmatpush1.bf16.xpose.msra.mxu0 %v5465
      %5481 = vmatprep.subr.bf16.mxu0 0
      %5482 = vmatpush1.bf16.xpose.msra.mxu0 %v5462
      %5483 = vmatprep.subr.bf16.mxu0 0
      %5484 = vmatpush2.bf16.xpose.msra.mxu0 0
      %5485 = vmatprep.subr.bf16.mxu0 0
      %5486 = vmatpush2.bf16.xpose.msra.mxu0 0
      %5487 = vmatprep.subr.bf16.mxu0 0
      %5488 = vmatpush2.bf16.xpose.msra.mxu0 0
      %5489 = vmatprep.subr.bf16.mxu0 0
      %5490 = vmatpush2.bf16.xpose.msra.mxu0 0
      %5491 = vmatprep.subr.bf16.mxu0 0
      %5492 = vmatpush2.bf16.xpose.msra.mxu0 0
      %5493 = vmatprep.subr.bf16.mxu0 0
      %5494 = vmatpush2.bf16.xpose.msra.mxu0 0
      %5495 = vmatprep.subr.bf16.mxu0 0
      %5496 = vmatpush2.bf16.xpose.msra.mxu0 0
      %5497 = vmatprep.subr.bf16.mxu0 0
      %5498 = vmatpush2.bf16.xpose.msra.mxu0 0
      %5499 = vmatprep.mubr.bf16.mxu0 0
      %5500 = vmatmul.mubr.bf16.gmra.mxu0 %v5456
      %v5501 = vpop.f32.mrf.mxu0
      %v5502 = vadd.f32 0.0, %v5501
      %v5503 = vpop.f32.mrf.mxu0
      %v5504 = vpop.f32.mrf.mxu0
      %v5505 = vadd.f32 0.0, %v5504
      %v5506 = vpop.f32.mrf.mxu0
      %5507 = vmatprep.mubr.bf16.mxu0 0
      %5508 = vmatmul.mubr.bf16.gmra.mxu0 %v5459
      %v5509 = vpop.f32.mrf.mxu0
      %v5510 = vadd.f32 0.0, %v5509
      %v5511 = vpop.f32.mrf.mxu0
      %v5512 = vpop.f32.mrf.mxu0
      %v5513 = vpop.f32.mrf.mxu0
      %5514 = vdwg.mxu0
      %v5516 = vsel %vm2098, %v5317, 0
      %v5519 = vsel %vm2098, %v5318, 0
      %v5522 = vsel %vm2098, %v5329, 0
      %v5525 = vsel %vm2098, %v5330, 0
      %5527 = vmatprep.subr.bf16.mxu0 0
      %5528 = vmatpush1.bf16.xpose.msra.mxu0 0
      %5529 = vmatprep.subr.bf16.mxu0 0
      %5530 = vmatpush1.bf16.xpose.msra.mxu0 0
      %5531 = vmatprep.subr.bf16.mxu0 0
      %5532 = vmatpush1.bf16.xpose.msra.mxu0 0
      %5533 = vmatprep.subr.bf16.mxu0 0
      %5534 = vmatpush1.bf16.xpose.msra.mxu0 0
      %5535 = vmatprep.subr.bf16.mxu0 0
      %5536 = vmatpush1.bf16.xpose.msra.mxu0 0
      %5537 = vmatprep.subr.bf16.mxu0 0
      %5538 = vmatpush1.bf16.xpose.msra.mxu0 0
      %5539 = vmatprep.subr.bf16.mxu0 0
      %5540 = vmatpush1.bf16.xpose.msra.mxu0 %v5525
      %5541 = vmatprep.subr.bf16.mxu0 0
      %5542 = vmatpush1.bf16.xpose.msra.mxu0 %v5522
      %5543 = vmatprep.subr.bf16.mxu0 0
      %5544 = vmatpush2.bf16.xpose.msra.mxu0 0
      %5545 = vmatprep.subr.bf16.mxu0 0
      %5546 = vmatpush2.bf16.xpose.msra.mxu0 0
      %5547 = vmatprep.subr.bf16.mxu0 0
      %5548 = vmatpush2.bf16.xpose.msra.mxu0 0
      %5549 = vmatprep.subr.bf16.mxu0 0
      %5550 = vmatpush2.bf16.xpose.msra.mxu0 0
      %5551 = vmatprep.subr.bf16.mxu0 0
      %5552 = vmatpush2.bf16.xpose.msra.mxu0 0
      %5553 = vmatprep.subr.bf16.mxu0 0
      %5554 = vmatpush2.bf16.xpose.msra.mxu0 0
      %5555 = vmatprep.subr.bf16.mxu0 0
      %5556 = vmatpush2.bf16.xpose.msra.mxu0 0
      %5557 = vmatprep.subr.bf16.mxu0 0
      %5558 = vmatpush2.bf16.xpose.msra.mxu0 0
      %5559 = vmatprep.mubr.bf16.mxu0 0
      %5560 = vmatmul.mubr.bf16.gmra.mxu0 %v5516
      %v5561 = vpop.f32.mrf.mxu0
      %v5562 = vadd.f32 0.0, %v5561
      %v5563 = vpop.f32.mrf.mxu0
      %v5564 = vpop.f32.mrf.mxu0
      %v5565 = vadd.f32 0.0, %v5564
      %v5566 = vpop.f32.mrf.mxu0
      %5567 = vmatprep.mubr.bf16.mxu0 0
      %5568 = vmatmul.mubr.bf16.gmra.mxu0 %v5519
      %v5569 = vpop.f32.mrf.mxu0
      %v5570 = vadd.f32 0.0, %v5569
      %v5571 = vpop.f32.mrf.mxu0
      %v5572 = vpop.f32.mrf.mxu0
      %v5573 = vpop.f32.mrf.mxu0
      %5574 = vdwg.mxu0
      %v5576 = vsel %vm2098, %v5319, 0
      %v5579 = vsel %vm2098, %v5320, 0
      %v5582 = vsel %vm2098, %v5331, 0
      %v5585 = vsel %vm2098, %v5332, 0
      %5587 = vmatprep.subr.bf16.mxu0 0
      %5588 = vmatpush1.bf16.xpose.msra.mxu0 0
      %5589 = vmatprep.subr.bf16.mxu0 0
      %5590 = vmatpush1.bf16.xpose.msra.mxu0 0
      %5591 = vmatprep.subr.bf16.mxu0 0
      %5592 = vmatpush1.bf16.xpose.msra.mxu0 0
      %5593 = vmatprep.subr.bf16.mxu0 0
      %5594 = vmatpush1.bf16.xpose.msra.mxu0 0
      %5595 = vmatprep.subr.bf16.mxu0 0
      %5596 = vmatpush1.bf16.xpose.msra.mxu0 0
      %5597 = vmatprep.subr.bf16.mxu0 0
      %5598 = vmatpush1.bf16.xpose.msra.mxu0 0
      %5599 = vmatprep.subr.bf16.mxu0 0
      %5600 = vmatpush1.bf16.xpose.msra.mxu0 %v5585
      %5601 = vmatprep.subr.bf16.mxu0 0
      %5602 = vmatpush1.bf16.xpose.msra.mxu0 %v5582
      %5603 = vmatprep.subr.bf16.mxu0 0
      %5604 = vmatpush2.bf16.xpose.msra.mxu0 0
      %5605 = vmatprep.subr.bf16.mxu0 0
      %5606 = vmatpush2.bf16.xpose.msra.mxu0 0
      %5607 = vmatprep.subr.bf16.mxu0 0
      %5608 = vmatpush2.bf16.xpose.msra.mxu0 0
      %5609 = vmatprep.subr.bf16.mxu0 0
      %5610 = vmatpush2.bf16.xpose.msra.mxu0 0
      %5611 = vmatprep.subr.bf16.mxu0 0
      %5612 = vmatpush2.bf16.xpose.msra.mxu0 0
      %5613 = vmatprep.subr.bf16.mxu0 0
      %5614 = vmatpush2.bf16.xpose.msra.mxu0 0
      %5615 = vmatprep.subr.bf16.mxu0 0
      %5616 = vmatpush2.bf16.xpose.msra.mxu0 0
      %5617 = vmatprep.subr.bf16.mxu0 0
      %5618 = vmatpush2.bf16.xpose.msra.mxu0 0
      %5619 = vmatprep.mubr.bf16.mxu0 0
      %5620 = vmatmul.mubr.bf16.gmra.mxu0 %v5576
      %v5621 = vpop.f32.mrf.mxu0
      %v5622 = vadd.f32 0.0, %v5621
      %v5623 = vpop.f32.mrf.mxu0
      %v5624 = vpop.f32.mrf.mxu0
      %v5625 = vadd.f32 0.0, %v5624
      %v5626 = vpop.f32.mrf.mxu0
      %5627 = vmatprep.mubr.bf16.mxu0 0
      %5628 = vmatmul.mubr.bf16.gmra.mxu0 %v5579
      %v5629 = vpop.f32.mrf.mxu0
      %v5630 = vadd.f32 0.0, %v5629
      %v5631 = vpop.f32.mrf.mxu0
      %v5632 = vpop.f32.mrf.mxu0
      %v5633 = vpop.f32.mrf.mxu0
      %5634 = vdwg.mxu0
      %v5636 = vsel %vm2098, %v5321, 0
      %v5639 = vsel %vm2098, %v5322, 0
      %v5642 = vsel %vm2098, %v5333, 0
      %v5645 = vsel %vm2098, %v5334, 0
      %5647 = vmatprep.subr.bf16.mxu0 0
      %5648 = vmatpush1.bf16.xpose.msra.mxu0 0
      %5649 = vmatprep.subr.bf16.mxu0 0
      %5650 = vmatpush1.bf16.xpose.msra.mxu0 0
      %5651 = vmatprep.subr.bf16.mxu0 0
      %5652 = vmatpush1.bf16.xpose.msra.mxu0 0
      %5653 = vmatprep.subr.bf16.mxu0 0
      %5654 = vmatpush1.bf16.xpose.msra.mxu0 0
      %5655 = vmatprep.subr.bf16.mxu0 0
      %5656 = vmatpush1.bf16.xpose.msra.mxu0 0
      %5657 = vmatprep.subr.bf16.mxu0 0
      %5658 = vmatpush1.bf16.xpose.msra.mxu0 0
      %5659 = vmatprep.subr.bf16.mxu0 0
      %5660 = vmatpush1.bf16.xpose.msra.mxu0 %v5645
      %5661 = vmatprep.subr.bf16.mxu0 0
      %5662 = vmatpush1.bf16.xpose.msra.mxu0 %v5642
      %5663 = vmatprep.subr.bf16.mxu0 0
      %5664 = vmatpush2.bf16.xpose.msra.mxu0 0
      %5665 = vmatprep.subr.bf16.mxu0 0
      %5666 = vmatpush2.bf16.xpose.msra.mxu0 0
      %5667 = vmatprep.subr.bf16.mxu0 0
      %5668 = vmatpush2.bf16.xpose.msra.mxu0 0
      %5669 = vmatprep.subr.bf16.mxu0 0
      %5670 = vmatpush2.bf16.xpose.msra.mxu0 0
      %5671 = vmatprep.subr.bf16.mxu0 0
      %5672 = vmatpush2.bf16.xpose.msra.mxu0 0
      %5673 = vmatprep.subr.bf16.mxu0 0
      %5674 = vmatpush2.bf16.xpose.msra.mxu0 0
      %5675 = vmatprep.subr.bf16.mxu0 0
      %5676 = vmatpush2.bf16.xpose.msra.mxu0 0
      %5677 = vmatprep.subr.bf16.mxu0 0
      %5678 = vmatpush2.bf16.xpose.msra.mxu0 0
      %5679 = vmatprep.mubr.bf16.mxu0 0
      %5680 = vmatmul.mubr.bf16.gmra.mxu0 %v5636
      %v5681 = vpop.f32.mrf.mxu0
      %v5682 = vadd.f32 0.0, %v5681
      %v5683 = vpop.f32.mrf.mxu0
      %v5684 = vpop.f32.mrf.mxu0
      %v5685 = vadd.f32 0.0, %v5684
      %v5686 = vpop.f32.mrf.mxu0
      %5687 = vmatprep.mubr.bf16.mxu0 0
      %5688 = vmatmul.mubr.bf16.gmra.mxu0 %v5639
      %v5689 = vpop.f32.mrf.mxu0
      %v5690 = vadd.f32 0.0, %v5689
      %v5691 = vpop.f32.mrf.mxu0
      %v5692 = vpop.f32.mrf.mxu0
      %v5693 = vpop.f32.mrf.mxu0
      %5694 = vdwg.mxu0
      %v5695 = vmul.f32 %v5382, 0.35355338
      %v5696 = vmul.f32 %v5385, 0.35355338
      %v5697 = vmul.f32 %v5390, 0.35355338
      %v5698 = vmul.f32 %v5442, 0.35355338
      %v5699 = vmul.f32 %v5445, 0.35355338
      %v5700 = vmul.f32 %v5450, 0.35355338
      %v5701 = vmul.f32 %v5502, 0.35355338
      %v5702 = vmul.f32 %v5505, 0.35355338
      %v5703 = vmul.f32 %v5510, 0.35355338
      %v5704 = vmul.f32 %v5562, 0.35355338
      %v5705 = vmul.f32 %v5565, 0.35355338
      %v5706 = vmul.f32 %v5570, 0.35355338
      %v5707 = vmul.f32 %v5622, 0.35355338
      %v5708 = vmul.f32 %v5625, 0.35355338
      %v5709 = vmul.f32 %v5630, 0.35355338
      %v5710 = vmul.f32 %v5682, 0.35355338
      %v5711 = vmul.f32 %v5685, 0.35355338
      %v5712 = vmul.f32 %v5690, 0.35355338
      %v5713 = vsel %vm2477, %v5695, -inf
      %5714 = vmax.xlane.f32.xlu0 %v5713
      %v5715 = vpop.xlane.xlu0 %5714
      %v5716 = vsel %vm2477, %v5696, -inf
      %5717 = vmax.xlane.f32.xlu0 %v5716
      %v5718 = vpop.xlane.xlu0 %5717
      %v5719 = vsel %vm2484, %v5697, -inf
      %5720 = vmax.xlane.f32.xlu0 %v5719
      %v5721 = vpop.xlane.xlu0 %5720
      %v5722 = vsel %vm2477, %v5698, -inf
      %5723 = vmax.xlane.f32.xlu0 %v5722
      %v5724 = vpop.xlane.xlu0 %5723
      %v5725 = vsel %vm2477, %v5699, -inf
      %5726 = vmax.xlane.f32.xlu0 %v5725
      %v5727 = vpop.xlane.xlu0 %5726
      %v5728 = vsel %vm2484, %v5700, -inf
      %5729 = vmax.xlane.f32.xlu0 %v5728
      %v5730 = vpop.xlane.xlu0 %5729
      %v5731 = vsel %vm2477, %v5701, -inf
      %5732 = vmax.xlane.f32.xlu0 %v5731
      %v5733 = vpop.xlane.xlu0 %5732
      %v5734 = vsel %vm2477, %v5702, -inf
      %5735 = vmax.xlane.f32.xlu0 %v5734
      %v5736 = vpop.xlane.xlu0 %5735
      %v5737 = vsel %vm2484, %v5703, -inf
      %5738 = vmax.xlane.f32.xlu0 %v5737
      %v5739 = vpop.xlane.xlu0 %5738
      %v5740 = vsel %vm2477, %v5704, -inf
      %5741 = vmax.xlane.f32.xlu0 %v5740
      %v5742 = vpop.xlane.xlu0 %5741
      %v5743 = vsel %vm2477, %v5705, -inf
      %5744 = vmax.xlane.f32.xlu0 %v5743
      %v5745 = vpop.xlane.xlu0 %5744
      %v5746 = vsel %vm2484, %v5706, -inf
      %5747 = vmax.xlane.f32.xlu0 %v5746
      %v5748 = vpop.xlane.xlu0 %5747
      %v5749 = vsel %vm2477, %v5707, -inf
      %5750 = vmax.xlane.f32.xlu0 %v5749
      %v5751 = vpop.xlane.xlu0 %5750
      %v5752 = vsel %vm2477, %v5708, -inf
      %5753 = vmax.xlane.f32.xlu0 %v5752
      %v5754 = vpop.xlane.xlu0 %5753
      %v5755 = vsel %vm2484, %v5709, -inf
      %5756 = vmax.xlane.f32.xlu0 %v5755
      %v5757 = vpop.xlane.xlu0 %5756
      %v5758 = vsel %vm2477, %v5710, -inf
      %5759 = vmax.xlane.f32.xlu0 %v5758
      %v5760 = vpop.xlane.xlu0 %5759
      %v5761 = vsel %vm2477, %v5711, -inf
      %5762 = vmax.xlane.f32.xlu0 %v5761
      %v5763 = vpop.xlane.xlu0 %5762
      %v5764 = vsel %vm2484, %v5712, -inf
      %5765 = vmax.xlane.f32.xlu0 %v5764
      %v5766 = vpop.xlane.xlu0 %5765
      %v5767 = vsub.f32 %v5695, %v5715
      %v5768 = vsub.f32 %v5696, %v5718
      %v5769 = vsub.f32 %v5697, %v5721
      %v5770 = vsub.f32 %v5698, %v5724
      %v5771 = vsub.f32 %v5699, %v5727
      %v5772 = vsub.f32 %v5700, %v5730
      %v5773 = vsub.f32 %v5701, %v5733
      %v5774 = vsub.f32 %v5702, %v5736
      %v5775 = vsub.f32 %v5703, %v5739
      %v5776 = vsub.f32 %v5704, %v5742
      %v5777 = vsub.f32 %v5705, %v5745
      %v5778 = vsub.f32 %v5706, %v5748
      %v5779 = vsub.f32 %v5707, %v5751
      %v5780 = vsub.f32 %v5708, %v5754
      %v5781 = vsub.f32 %v5709, %v5757
      %v5782 = vsub.f32 %v5710, %v5760
      %v5783 = vsub.f32 %v5711, %v5763
      %v5784 = vsub.f32 %v5712, %v5766
      %v5785 = vmul.f32 %v5767, 1.442695
      %v5786 = vpow.pop %v5785
      %v5787 = vmul.f32 %v5768, 1.442695
      %v5788 = vpow.pop %v5787
      %v5789 = vmul.f32 %v5769, 1.442695
      %v5790 = vpow.pop %v5789
      %v5791 = vmul.f32 %v5770, 1.442695
      %v5792 = vpow.pop %v5791
      %v5793 = vmul.f32 %v5771, 1.442695
      %v5794 = vpow.pop %v5793
      %v5795 = vmul.f32 %v5772, 1.442695
      %v5796 = vpow.pop %v5795
      %v5797 = vmul.f32 %v5773, 1.442695
      %v5798 = vpow.pop %v5797
      %v5799 = vmul.f32 %v5774, 1.442695
      %v5800 = vpow.pop %v5799
      %v5801 = vmul.f32 %v5775, 1.442695
      %v5802 = vpow.pop %v5801
      %v5803 = vmul.f32 %v5776, 1.442695
      %v5804 = vpow.pop %v5803
      %v5805 = vmul.f32 %v5777, 1.442695
      %v5806 = vpow.pop %v5805
      %v5807 = vmul.f32 %v5778, 1.442695
      %v5808 = vpow.pop %v5807
      %v5809 = vmul.f32 %v5779, 1.442695
      %v5810 = vpow.pop %v5809
      %v5811 = vmul.f32 %v5780, 1.442695
      %v5812 = vpow.pop %v5811
      %v5813 = vmul.f32 %v5781, 1.442695
      %v5814 = vpow.pop %v5813
      %v5815 = vmul.f32 %v5782, 1.442695
      %v5816 = vpow.pop %v5815
      %v5817 = vmul.f32 %v5783, 1.442695
      %v5818 = vpow.pop %v5817
      %v5819 = vmul.f32 %v5784, 1.442695
      %v5820 = vpow.pop %v5819
      %v5821 = vsel %vm2477, %v5786, 0.0
      %5822 = vadd.xlane.f32.xlu0 %v5821
      %v5823 = vpop.xlane.xlu0 %5822
      %v5824 = vsel %vm2477, %v5788, 0.0
      %5825 = vadd.xlane.f32.xlu0 %v5824
      %v5826 = vpop.xlane.xlu0 %5825
      %v5827 = vsel %vm2484, %v5790, 0.0
      %5828 = vadd.xlane.f32.xlu0 %v5827
      %v5829 = vpop.xlane.xlu0 %5828
      %v5830 = vsel %vm2477, %v5792, 0.0
      %5831 = vadd.xlane.f32.xlu0 %v5830
      %v5832 = vpop.xlane.xlu0 %5831
      %v5833 = vsel %vm2477, %v5794, 0.0
      %5834 = vadd.xlane.f32.xlu0 %v5833
      %v5835 = vpop.xlane.xlu0 %5834
      %v5836 = vsel %vm2484, %v5796, 0.0
      %5837 = vadd.xlane.f32.xlu0 %v5836
      %v5838 = vpop.xlane.xlu0 %5837
      %v5839 = vsel %vm2477, %v5798, 0.0
      %5840 = vadd.xlane.f32.xlu0 %v5839
      %v5841 = vpop.xlane.xlu0 %5840
      %v5842 = vsel %vm2477, %v5800, 0.0
      %5843 = vadd.xlane.f32.xlu0 %v5842
      %v5844 = vpop.xlane.xlu0 %5843
      %v5845 = vsel %vm2484, %v5802, 0.0
      %5846 = vadd.xlane.f32.xlu0 %v5845
      %v5847 = vpop.xlane.xlu0 %5846
      %v5848 = vsel %vm2477, %v5804, 0.0
      %5849 = vadd.xlane.f32.xlu0 %v5848
      %v5850 = vpop.xlane.xlu0 %5849
      %v5851 = vsel %vm2477, %v5806, 0.0
      %5852 = vadd.xlane.f32.xlu0 %v5851
      %v5853 = vpop.xlane.xlu0 %5852
      %v5854 = vsel %vm2484, %v5808, 0.0
      %5855 = vadd.xlane.f32.xlu0 %v5854
      %v5856 = vpop.xlane.xlu0 %5855
      %v5857 = vsel %vm2477, %v5810, 0.0
      %5858 = vadd.xlane.f32.xlu0 %v5857
      %v5859 = vpop.xlane.xlu0 %5858
      %v5860 = vsel %vm2477, %v5812, 0.0
      %5861 = vadd.xlane.f32.xlu0 %v5860
      %v5862 = vpop.xlane.xlu0 %5861
      %v5863 = vsel %vm2484, %v5814, 0.0
      %5864 = vadd.xlane.f32.xlu0 %v5863
      %v5865 = vpop.xlane.xlu0 %5864
      %v5866 = vsel %vm2477, %v5816, 0.0
      %5867 = vadd.xlane.f32.xlu0 %v5866
      %v5868 = vpop.xlane.xlu0 %5867
      %v5869 = vsel %vm2477, %v5818, 0.0
      %5870 = vadd.xlane.f32.xlu0 %v5869
      %v5871 = vpop.xlane.xlu0 %5870
      %v5872 = vsel %vm2484, %v5820, 0.0
      %5873 = vadd.xlane.f32.xlu0 %v5872
      %v5874 = vpop.xlane.xlu0 %5873
      %v5875 = vrcp.pop %v5823
      %v5876 = vrcp.pop %v5826
      %v5877 = vrcp.pop %v5829
      %v5878 = vrcp.pop %v5832
      %v5879 = vrcp.pop %v5835
      %v5880 = vrcp.pop %v5838
      %v5881 = vrcp.pop %v5841
      %v5882 = vrcp.pop %v5844
      %v5883 = vrcp.pop %v5847
      %v5884 = vrcp.pop %v5850
      %v5885 = vrcp.pop %v5853
      %v5886 = vrcp.pop %v5856
      %v5887 = vrcp.pop %v5859
      %v5888 = vrcp.pop %v5862
      %v5889 = vrcp.pop %v5865
      %v5890 = vrcp.pop %v5868
      %v5891 = vrcp.pop %v5871
      %v5892 = vrcp.pop %v5874
      %v5893 = vmul.f32 %v5786, %v5875
      %v5894 = vmul.f32 %v5788, %v5876
      %v5895 = vmul.f32 %v5790, %v5877
      %v5896 = vmul.f32 %v5792, %v5878
      %v5897 = vmul.f32 %v5794, %v5879
      %v5898 = vmul.f32 %v5796, %v5880
      %v5899 = vmul.f32 %v5798, %v5881
      %v5900 = vmul.f32 %v5800, %v5882
      %v5901 = vmul.f32 %v5802, %v5883
      %v5902 = vmul.f32 %v5804, %v5884
      %v5903 = vmul.f32 %v5806, %v5885
      %v5904 = vmul.f32 %v5808, %v5886
      %v5905 = vmul.f32 %v5810, %v5887
      %v5906 = vmul.f32 %v5812, %v5888
      %v5907 = vmul.f32 %v5814, %v5889
      %v5908 = vmul.f32 %v5816, %v5890
      %v5909 = vmul.f32 %v5818, %v5891
      %v5910 = vmul.f32 %v5820, %v5892
      %v5911 = vpack.c.bf16 %v5894, %v5893
      %v5912 = vpack.c.bf16 %v5895, %v5895
      %v5913 = vpack.c.bf16 %v5897, %v5896
      %v5914 = vpack.c.bf16 %v5898, %v5898
      %v5915 = vpack.c.bf16 %v5900, %v5899
      %v5916 = vpack.c.bf16 %v5901, %v5901
      %v5917 = vpack.c.bf16 %v5903, %v5902
      %v5918 = vpack.c.bf16 %v5904, %v5904
      %v5919 = vpack.c.bf16 %v5906, %v5905
      %v5920 = vpack.c.bf16 %v5907, %v5907
      %v5921 = vpack.c.bf16 %v5909, %v5908
      %v5922 = vpack.c.bf16 %v5910, %v5910
      %v5923 = vpack.c.bf16 %v4971, %v4968
      %v5924 = vpack.c.bf16 %v4976, %v4976
      %v5925 = vpack.c.bf16 %v5037, %v5034
      %v5926 = vpack.c.bf16 %v5042, %v5042
      %v5927 = vpack.c.bf16 %v5103, %v5100
      %v5928 = vpack.c.bf16 %v5108, %v5108
      %v5929 = vpack.c.bf16 %v5169, %v5166
      %v5930 = vpack.c.bf16 %v5174, %v5174
      %v5931 = vpack.c.bf16 %v5235, %v5232
      %v5932 = vpack.c.bf16 %v5240, %v5240
      %v5933 = vpack.c.bf16 %v5301, %v5298
      %v5934 = vpack.c.bf16 %v5306, %v5306
      %v5936 = vsel %vm2477, %v5911, 0
      %v5939 = vsel %vm2477, %v5912, 0
      %v5942 = vand.u32 %v5924, %v2709
      %5944 = vmatprep.subr.bf16.mxu0 0
      %5945 = vmatpush1.bf16.msra.mxu0 0
      %5946 = vmatprep.subr.bf16.mxu0 0
      %5947 = vmatpush1.bf16.msra.mxu0 0
      %5948 = vmatprep.subr.bf16.mxu0 0
      %5949 = vmatpush1.bf16.msra.mxu0 0
      %5950 = vmatprep.subr.bf16.mxu0 0
      %5951 = vmatpush1.bf16.msra.mxu0 0
      %5952 = vmatprep.subr.bf16.mxu0 0
      %5953 = vmatpush1.bf16.msra.mxu0 0
      %5954 = vmatprep.subr.bf16.mxu0 0
      %5955 = vmatpush1.bf16.msra.mxu0 0
      %5956 = vmatprep.subr.bf16.mxu0 0
      %5957 = vmatpush1.bf16.msra.mxu0 %v5942
      %5958 = vmatprep.subr.bf16.mxu0 0
      %5959 = vmatpush1.bf16.msra.mxu0 %v5923
      %5960 = vmatprep.subr.bf16.mxu0 0
      %5961 = vmatpush2.bf16.msra.mxu0 0
      %5962 = vmatprep.subr.bf16.mxu0 0
      %5963 = vmatpush2.bf16.msra.mxu0 0
      %5964 = vmatprep.subr.bf16.mxu0 0
      %5965 = vmatpush2.bf16.msra.mxu0 0
      %5966 = vmatprep.subr.bf16.mxu0 0
      %5967 = vmatpush2.bf16.msra.mxu0 0
      %5968 = vmatprep.subr.bf16.mxu0 0
      %5969 = vmatpush2.bf16.msra.mxu0 0
      %5970 = vmatprep.subr.bf16.mxu0 0
      %5971 = vmatpush2.bf16.msra.mxu0 0
      %5972 = vmatprep.subr.bf16.mxu0 0
      %5973 = vmatpush2.bf16.msra.mxu0 0
      %5974 = vmatprep.subr.bf16.mxu0 0
      %5975 = vmatpush2.bf16.msra.mxu0 0
      %5976 = vmatprep.mubr.bf16.mxu0 0
      %5977 = vmatmul.mubr.bf16.gmra.mxu0 %v5936
      %v5978 = vpop.f32.mrf.mxu0
      %v5979 = vadd.f32 0.0, %v5978
      %v5980 = vpop.f32.mrf.mxu0
      %v5981 = vpop.f32.mrf.mxu0
      %v5982 = vadd.f32 0.0, %v5981
      %v5983 = vpop.f32.mrf.mxu0
      %5984 = vmatprep.mubr.bf16.mxu0 0
      %5985 = vmatmul.mubr.bf16.gmra.mxu0 %v5939
      %v5986 = vpop.f32.mrf.mxu0
      %v5987 = vadd.f32 0.0, %v5986
      %v5988 = vpop.f32.mrf.mxu0
      %v5989 = vpop.f32.mrf.mxu0
      %v5990 = vpop.f32.mrf.mxu0
      %5991 = vdwg.mxu0
      %v5993 = vsel %vm2477, %v5913, 0
      %v5996 = vsel %vm2477, %v5914, 0
      %v5999 = vand.u32 %v5926, %v2709
      %6001 = vmatprep.subr.bf16.mxu0 0
      %6002 = vmatpush1.bf16.msra.mxu0 0
      %6003 = vmatprep.subr.bf16.mxu0 0
      %6004 = vmatpush1.bf16.msra.mxu0 0
      %6005 = vmatprep.subr.bf16.mxu0 0
      %6006 = vmatpush1.bf16.msra.mxu0 0
      %6007 = vmatprep.subr.bf16.mxu0 0
      %6008 = vmatpush1.bf16.msra.mxu0 0
      %6009 = vmatprep.subr.bf16.mxu0 0
      %6010 = vmatpush1.bf16.msra.mxu0 0
      %6011 = vmatprep.subr.bf16.mxu0 0
      %6012 = vmatpush1.bf16.msra.mxu0 0
      %6013 = vmatprep.subr.bf16.mxu0 0
      %6014 = vmatpush1.bf16.msra.mxu0 %v5999
      %6015 = vmatprep.subr.bf16.mxu0 0
      %6016 = vmatpush1.bf16.msra.mxu0 %v5925
      %6017 = vmatprep.subr.bf16.mxu0 0
      %6018 = vmatpush2.bf16.msra.mxu0 0
      %6019 = vmatprep.subr.bf16.mxu0 0
      %6020 = vmatpush2.bf16.msra.mxu0 0
      %6021 = vmatprep.subr.bf16.mxu0 0
      %6022 = vmatpush2.bf16.msra.mxu0 0
      %6023 = vmatprep.subr.bf16.mxu0 0
      %6024 = vmatpush2.bf16.msra.mxu0 0
      %6025 = vmatprep.subr.bf16.mxu0 0
      %6026 = vmatpush2.bf16.msra.mxu0 0
      %6027 = vmatprep.subr.bf16.mxu0 0
      %6028 = vmatpush2.bf16.msra.mxu0 0
      %6029 = vmatprep.subr.bf16.mxu0 0
      %6030 = vmatpush2.bf16.msra.mxu0 0
      %6031 = vmatprep.subr.bf16.mxu0 0
      %6032 = vmatpush2.bf16.msra.mxu0 0
      %6033 = vmatprep.mubr.bf16.mxu0 0
      %6034 = vmatmul.mubr.bf16.gmra.mxu0 %v5993
      %v6035 = vpop.f32.mrf.mxu0
      %v6036 = vadd.f32 0.0, %v6035
      %v6037 = vpop.f32.mrf.mxu0
      %v6038 = vpop.f32.mrf.mxu0
      %v6039 = vadd.f32 0.0, %v6038
      %v6040 = vpop.f32.mrf.mxu0
      %6041 = vmatprep.mubr.bf16.mxu0 0
      %6042 = vmatmul.mubr.bf16.gmra.mxu0 %v5996
      %v6043 = vpop.f32.mrf.mxu0
      %v6044 = vadd.f32 0.0, %v6043
      %v6045 = vpop.f32.mrf.mxu0
      %v6046 = vpop.f32.mrf.mxu0
      %v6047 = vpop.f32.mrf.mxu0
      %6048 = vdwg.mxu0
      %v6050 = vsel %vm2477, %v5915, 0
      %v6053 = vsel %vm2477, %v5916, 0
      %v6056 = vand.u32 %v5928, %v2709
      %6058 = vmatprep.subr.bf16.mxu0 0
      %6059 = vmatpush1.bf16.msra.mxu0 0
      %6060 = vmatprep.subr.bf16.mxu0 0
      %6061 = vmatpush1.bf16.msra.mxu0 0
      %6062 = vmatprep.subr.bf16.mxu0 0
      %6063 = vmatpush1.bf16.msra.mxu0 0
      %6064 = vmatprep.subr.bf16.mxu0 0
      %6065 = vmatpush1.bf16.msra.mxu0 0
      %6066 = vmatprep.subr.bf16.mxu0 0
      %6067 = vmatpush1.bf16.msra.mxu0 0
      %6068 = vmatprep.subr.bf16.mxu0 0
      %6069 = vmatpush1.bf16.msra.mxu0 0
      %6070 = vmatprep.subr.bf16.mxu0 0
      %6071 = vmatpush1.bf16.msra.mxu0 %v6056
      %6072 = vmatprep.subr.bf16.mxu0 0
      %6073 = vmatpush1.bf16.msra.mxu0 %v5927
      %6074 = vmatprep.subr.bf16.mxu0 0
      %6075 = vmatpush2.bf16.msra.mxu0 0
      %6076 = vmatprep.subr.bf16.mxu0 0
      %6077 = vmatpush2.bf16.msra.mxu0 0
      %6078 = vmatprep.subr.bf16.mxu0 0
      %6079 = vmatpush2.bf16.msra.mxu0 0
      %6080 = vmatprep.subr.bf16.mxu0 0
      %6081 = vmatpush2.bf16.msra.mxu0 0
      %6082 = vmatprep.subr.bf16.mxu0 0
      %6083 = vmatpush2.bf16.msra.mxu0 0
      %6084 = vmatprep.subr.bf16.mxu0 0
      %6085 = vmatpush2.bf16.msra.mxu0 0
      %6086 = vmatprep.subr.bf16.mxu0 0
      %6087 = vmatpush2.bf16.msra.mxu0 0
      %6088 = vmatprep.subr.bf16.mxu0 0
      %6089 = vmatpush2.bf16.msra.mxu0 0
      %6090 = vmatprep.mubr.bf16.mxu0 0
      %6091 = vmatmul.mubr.bf16.gmra.mxu0 %v6050
      %v6092 = vpop.f32.mrf.mxu0
      %v6093 = vadd.f32 0.0, %v6092
      %v6094 = vpop.f32.mrf.mxu0
      %v6095 = vpop.f32.mrf.mxu0
      %v6096 = vadd.f32 0.0, %v6095
      %v6097 = vpop.f32.mrf.mxu0
      %6098 = vmatprep.mubr.bf16.mxu0 0
      %6099 = vmatmul.mubr.bf16.gmra.mxu0 %v6053
      %v6100 = vpop.f32.mrf.mxu0
      %v6101 = vadd.f32 0.0, %v6100
      %v6102 = vpop.f32.mrf.mxu0
      %v6103 = vpop.f32.mrf.mxu0
      %v6104 = vpop.f32.mrf.mxu0
      %6105 = vdwg.mxu0
      %v6107 = vsel %vm2477, %v5917, 0
      %v6110 = vsel %vm2477, %v5918, 0
      %v6113 = vand.u32 %v5930, %v2709
      %6115 = vmatprep.subr.bf16.mxu0 0
      %6116 = vmatpush1.bf16.msra.mxu0 0
      %6117 = vmatprep.subr.bf16.mxu0 0
      %6118 = vmatpush1.bf16.msra.mxu0 0
      %6119 = vmatprep.subr.bf16.mxu0 0
      %6120 = vmatpush1.bf16.msra.mxu0 0
      %6121 = vmatprep.subr.bf16.mxu0 0
      %6122 = vmatpush1.bf16.msra.mxu0 0
      %6123 = vmatprep.subr.bf16.mxu0 0
      %6124 = vmatpush1.bf16.msra.mxu0 0
      %6125 = vmatprep.subr.bf16.mxu0 0
      %6126 = vmatpush1.bf16.msra.mxu0 0
      %6127 = vmatprep.subr.bf16.mxu0 0
      %6128 = vmatpush1.bf16.msra.mxu0 %v6113
      %6129 = vmatprep.subr.bf16.mxu0 0
      %6130 = vmatpush1.bf16.msra.mxu0 %v5929
      %6131 = vmatprep.subr.bf16.mxu0 0
      %6132 = vmatpush2.bf16.msra.mxu0 0
      %6133 = vmatprep.subr.bf16.mxu0 0
      %6134 = vmatpush2.bf16.msra.mxu0 0
      %6135 = vmatprep.subr.bf16.mxu0 0
      %6136 = vmatpush2.bf16.msra.mxu0 0
      %6137 = vmatprep.subr.bf16.mxu0 0
      %6138 = vmatpush2.bf16.msra.mxu0 0
      %6139 = vmatprep.subr.bf16.mxu0 0
      %6140 = vmatpush2.bf16.msra.mxu0 0
      %6141 = vmatprep.subr.bf16.mxu0 0
      %6142 = vmatpush2.bf16.msra.mxu0 0
      %6143 = vmatprep.subr.bf16.mxu0 0
      %6144 = vmatpush2.bf16.msra.mxu0 0
      %6145 = vmatprep.subr.bf16.mxu0 0
      %6146 = vmatpush2.bf16.msra.mxu0 0
      %6147 = vmatprep.mubr.bf16.mxu0 0
      %6148 = vmatmul.mubr.bf16.gmra.mxu0 %v6107
      %v6149 = vpop.f32.mrf.mxu0
      %v6150 = vadd.f32 0.0, %v6149
      %v6151 = vpop.f32.mrf.mxu0
      %v6152 = vpop.f32.mrf.mxu0
      %v6153 = vadd.f32 0.0, %v6152
      %v6154 = vpop.f32.mrf.mxu0
      %6155 = vmatprep.mubr.bf16.mxu0 0
      %6156 = vmatmul.mubr.bf16.gmra.mxu0 %v6110
      %v6157 = vpop.f32.mrf.mxu0
      %v6158 = vadd.f32 0.0, %v6157
      %v6159 = vpop.f32.mrf.mxu0
      %v6160 = vpop.f32.mrf.mxu0
      %v6161 = vpop.f32.mrf.mxu0
      %6162 = vdwg.mxu0
      %v6164 = vsel %vm2477, %v5919, 0
      %v6167 = vsel %vm2477, %v5920, 0
      %v6170 = vand.u32 %v5932, %v2709
      %6172 = vmatprep.subr.bf16.mxu0 0
      %6173 = vmatpush1.bf16.msra.mxu0 0
      %6174 = vmatprep.subr.bf16.mxu0 0
      %6175 = vmatpush1.bf16.msra.mxu0 0
      %6176 = vmatprep.subr.bf16.mxu0 0
      %6177 = vmatpush1.bf16.msra.mxu0 0
      %6178 = vmatprep.subr.bf16.mxu0 0
      %6179 = vmatpush1.bf16.msra.mxu0 0
      %6180 = vmatprep.subr.bf16.mxu0 0
      %6181 = vmatpush1.bf16.msra.mxu0 0
      %6182 = vmatprep.subr.bf16.mxu0 0
      %6183 = vmatpush1.bf16.msra.mxu0 0
      %6184 = vmatprep.subr.bf16.mxu0 0
      %6185 = vmatpush1.bf16.msra.mxu0 %v6170
      %6186 = vmatprep.subr.bf16.mxu0 0
      %6187 = vmatpush1.bf16.msra.mxu0 %v5931
      %6188 = vmatprep.subr.bf16.mxu0 0
      %6189 = vmatpush2.bf16.msra.mxu0 0
      %6190 = vmatprep.subr.bf16.mxu0 0
      %6191 = vmatpush2.bf16.msra.mxu0 0
      %6192 = vmatprep.subr.bf16.mxu0 0
      %6193 = vmatpush2.bf16.msra.mxu0 0
      %6194 = vmatprep.subr.bf16.mxu0 0
      %6195 = vmatpush2.bf16.msra.mxu0 0
      %6196 = vmatprep.subr.bf16.mxu0 0
      %6197 = vmatpush2.bf16.msra.mxu0 0
      %6198 = vmatprep.subr.bf16.mxu0 0
      %6199 = vmatpush2.bf16.msra.mxu0 0
      %6200 = vmatprep.subr.bf16.mxu0 0
      %6201 = vmatpush2.bf16.msra.mxu0 0
      %6202 = vmatprep.subr.bf16.mxu0 0
      %6203 = vmatpush2.bf16.msra.mxu0 0
      %6204 = vmatprep.mubr.bf16.mxu0 0
      %6205 = vmatmul.mubr.bf16.gmra.mxu0 %v6164
      %v6206 = vpop.f32.mrf.mxu0
      %v6207 = vadd.f32 0.0, %v6206
      %v6208 = vpop.f32.mrf.mxu0
      %v6209 = vpop.f32.mrf.mxu0
      %v6210 = vadd.f32 0.0, %v6209
      %v6211 = vpop.f32.mrf.mxu0
      %6212 = vmatprep.mubr.bf16.mxu0 0
      %6213 = vmatmul.mubr.bf16.gmra.mxu0 %v6167
      %v6214 = vpop.f32.mrf.mxu0
      %v6215 = vadd.f32 0.0, %v6214
      %v6216 = vpop.f32.mrf.mxu0
      %v6217 = vpop.f32.mrf.mxu0
      %v6218 = vpop.f32.mrf.mxu0
      %6219 = vdwg.mxu0
      %v6221 = vsel %vm2477, %v5921, 0
      %v6224 = vsel %vm2477, %v5922, 0
      %v6227 = vand.u32 %v5934, %v2709
      %6229 = vmatprep.subr.bf16.mxu0 0
      %6230 = vmatpush1.bf16.msra.mxu0 0
      %6231 = vmatprep.subr.bf16.mxu0 0
      %6232 = vmatpush1.bf16.msra.mxu0 0
      %6233 = vmatprep.subr.bf16.mxu0 0
      %6234 = vmatpush1.bf16.msra.mxu0 0
      %6235 = vmatprep.subr.bf16.mxu0 0
      %6236 = vmatpush1.bf16.msra.mxu0 0
      %6237 = vmatprep.subr.bf16.mxu0 0
      %6238 = vmatpush1.bf16.msra.mxu0 0
      %6239 = vmatprep.subr.bf16.mxu0 0
      %6240 = vmatpush1.bf16.msra.mxu0 0
      %6241 = vmatprep.subr.bf16.mxu0 0
      %6242 = vmatpush1.bf16.msra.mxu0 %v6227
      %6243 = vmatprep.subr.bf16.mxu0 0
      %6244 = vmatpush1.bf16.msra.mxu0 %v5933
      %6245 = vmatprep.subr.bf16.mxu0 0
      %6246 = vmatpush2.bf16.msra.mxu0 0
      %6247 = vmatprep.subr.bf16.mxu0 0
      %6248 = vmatpush2.bf16.msra.mxu0 0
      %6249 = vmatprep.subr.bf16.mxu0 0
      %6250 = vmatpush2.bf16.msra.mxu0 0
      %6251 = vmatprep.subr.bf16.mxu0 0
      %6252 = vmatpush2.bf16.msra.mxu0 0
      %6253 = vmatprep.subr.bf16.mxu0 0
      %6254 = vmatpush2.bf16.msra.mxu0 0
      %6255 = vmatprep.subr.bf16.mxu0 0
      %6256 = vmatpush2.bf16.msra.mxu0 0
      %6257 = vmatprep.subr.bf16.mxu0 0
      %6258 = vmatpush2.bf16.msra.mxu0 0
      %6259 = vmatprep.subr.bf16.mxu0 0
      %6260 = vmatpush2.bf16.msra.mxu0 0
      %6261 = vmatprep.mubr.bf16.mxu0 0
      %6262 = vmatmul.mubr.bf16.gmra.mxu0 %v6221
      %v6263 = vpop.f32.mrf.mxu0
      %v6264 = vadd.f32 0.0, %v6263
      %v6265 = vpop.f32.mrf.mxu0
      %v6266 = vpop.f32.mrf.mxu0
      %v6267 = vadd.f32 0.0, %v6266
      %v6268 = vpop.f32.mrf.mxu0
      %6269 = vmatprep.mubr.bf16.mxu0 0
      %6270 = vmatmul.mubr.bf16.gmra.mxu0 %v6224
      %v6271 = vpop.f32.mrf.mxu0
      %v6272 = vadd.f32 0.0, %v6271
      %v6273 = vpop.f32.mrf.mxu0
      %v6274 = vpop.f32.mrf.mxu0
      %v6275 = vpop.f32.mrf.mxu0
      %6276 = vdwg.mxu0
      %v6277 = vpack.c.bf16 %v5982, %v5979
      %v6278 = vpack.c.bf16 %v5987, %v5987
      %v6279 = vpack.c.bf16 %v6039, %v6036
      %v6280 = vpack.c.bf16 %v6044, %v6044
      %v6281 = vpack.c.bf16 %v6096, %v6093
      %v6282 = vpack.c.bf16 %v6101, %v6101
      %v6283 = vpack.c.bf16 %v6153, %v6150
      %v6284 = vpack.c.bf16 %v6158, %v6158
      %v6285 = vpack.c.bf16 %v6210, %v6207
      %v6286 = vpack.c.bf16 %v6215, %v6215
      %v6287 = vpack.c.bf16 %v6267, %v6264
      %v6288 = vpack.c.bf16 %v6272, %v6272
      %s6289 = scalar_lea.vmem %s9, 24
      %v6290 = vld [vmem:[%s6289] sm:$0xf]
      %v6291 = vld [vmem:[%s6289 + $0x4] sm:$0xf]
      %v6292 = vld [vmem:[%s6289 + $0x8] sm:$0xf]
      %v6293 = vld [vmem:[%s6289 + $0xc] sm:$0xf]
      %v6294 = vld [vmem:[%s6289 + $0x10] sm:$0xf]
      %v6295 = vld [vmem:[%s6289 + $0x14] sm:$0xf]
      %v6297 = vsel %vm2098, %v6277, 0
      %v6300 = vsel %vm2098, %v6278, 0
      %v6303 = vsel %vm650, %v6290, 0
      %6305 = vmatprep.subr.bf16.mxu0 0
      %6306 = vmatpush1.bf16.msra.mxu0 0
      %6307 = vmatprep.subr.bf16.mxu0 0
      %6308 = vmatpush1.bf16.msra.mxu0 0
      %6309 = vmatprep.subr.bf16.mxu0 0
      %6310 = vmatpush1.bf16.msra.mxu0 0
      %6311 = vmatprep.subr.bf16.mxu0 0
      %6312 = vmatpush1.bf16.msra.mxu0 0
      %6313 = vmatprep.subr.bf16.mxu0 0
      %6314 = vmatpush1.bf16.msra.mxu0 0
      %6315 = vmatprep.subr.bf16.mxu0 0
      %6316 = vmatpush1.bf16.msra.mxu0 0
      %6317 = vmatprep.subr.bf16.mxu0 0
      %6318 = vmatpush1.bf16.msra.mxu0 0
      %6319 = vmatprep.subr.bf16.mxu0 0
      %6320 = vmatpush1.bf16.msra.mxu0 %v6303
      %6321 = vmatprep.subr.bf16.mxu0 0
      %6322 = vmatpush2.bf16.msra.mxu0 0
      %6323 = vmatprep.subr.bf16.mxu0 0
      %6324 = vmatpush2.bf16.msra.mxu0 0
      %6325 = vmatprep.subr.bf16.mxu0 0
      %6326 = vmatpush2.bf16.msra.mxu0 0
      %6327 = vmatprep.subr.bf16.mxu0 0
      %6328 = vmatpush2.bf16.msra.mxu0 0
      %6329 = vmatprep.subr.bf16.mxu0 0
      %6330 = vmatpush2.bf16.msra.mxu0 0
      %6331 = vmatprep.subr.bf16.mxu0 0
      %6332 = vmatpush2.bf16.msra.mxu0 0
      %6333 = vmatprep.subr.bf16.mxu0 0
      %6334 = vmatpush2.bf16.msra.mxu0 0
      %6335 = vmatprep.subr.bf16.mxu0 0
      %6336 = vmatpush2.bf16.msra.mxu0 0
      %6337 = vmatprep.mubr.bf16.mxu0 0
      %6338 = vmatmul.mubr.bf16.gmra.mxu0 %v6297
      %v6339 = vpop.f32.mrf.mxu0
      %v6340 = vadd.f32 0.0, %v6339
      %v6341 = vpop.f32.mrf.mxu0
      %v6342 = vpop.f32.mrf.mxu0
      %v6343 = vadd.f32 0.0, %v6342
      %v6344 = vpop.f32.mrf.mxu0
      %6345 = vmatprep.mubr.bf16.mxu0 0
      %6346 = vmatmul.mubr.bf16.gmra.mxu0 %v6300
      %v6347 = vpop.f32.mrf.mxu0
      %v6348 = vadd.f32 0.0, %v6347
      %v6349 = vpop.f32.mrf.mxu0
      %v6350 = vpop.f32.mrf.mxu0
      %v6351 = vpop.f32.mrf.mxu0
      %6352 = vdwg.mxu0
      %v6354 = vsel %vm2098, %v6279, 0
      %v6357 = vsel %vm2098, %v6280, 0
      %v6360 = vsel %vm650, %v6291, 0
      %6362 = vmatprep.subr.bf16.mxu0 0
      %6363 = vmatpush1.bf16.msra.mxu0 0
      %6364 = vmatprep.subr.bf16.mxu0 0
      %6365 = vmatpush1.bf16.msra.mxu0 0
      %6366 = vmatprep.subr.bf16.mxu0 0
      %6367 = vmatpush1.bf16.msra.mxu0 0
      %6368 = vmatprep.subr.bf16.mxu0 0
      %6369 = vmatpush1.bf16.msra.mxu0 0
      %6370 = vmatprep.subr.bf16.mxu0 0
      %6371 = vmatpush1.bf16.msra.mxu0 0
      %6372 = vmatprep.subr.bf16.mxu0 0
      %6373 = vmatpush1.bf16.msra.mxu0 0
      %6374 = vmatprep.subr.bf16.mxu0 0
      %6375 = vmatpush1.bf16.msra.mxu0 0
      %6376 = vmatprep.subr.bf16.mxu0 0
      %6377 = vmatpush1.bf16.msra.mxu0 %v6360
      %6378 = vmatprep.subr.bf16.mxu0 0
      %6379 = vmatpush2.bf16.msra.mxu0 0
      %6380 = vmatprep.subr.bf16.mxu0 0
      %6381 = vmatpush2.bf16.msra.mxu0 0
      %6382 = vmatprep.subr.bf16.mxu0 0
      %6383 = vmatpush2.bf16.msra.mxu0 0
      %6384 = vmatprep.subr.bf16.mxu0 0
      %6385 = vmatpush2.bf16.msra.mxu0 0
      %6386 = vmatprep.subr.bf16.mxu0 0
      %6387 = vmatpush2.bf16.msra.mxu0 0
      %6388 = vmatprep.subr.bf16.mxu0 0
      %6389 = vmatpush2.bf16.msra.mxu0 0
      %6390 = vmatprep.subr.bf16.mxu0 0
      %6391 = vmatpush2.bf16.msra.mxu0 0
      %6392 = vmatprep.subr.bf16.mxu0 0
      %6393 = vmatpush2.bf16.msra.mxu0 0
      %6394 = vmatprep.mubr.bf16.mxu0 0
      %6395 = vmatmul.mubr.bf16.gmra.mxu0 %v6354
      %v6396 = vpop.f32.mrf.mxu0
      %v6397 = vadd.f32 0.0, %v6396
      %v6398 = vpop.f32.mrf.mxu0
      %v6399 = vpop.f32.mrf.mxu0
      %v6400 = vadd.f32 0.0, %v6399
      %v6401 = vpop.f32.mrf.mxu0
      %6402 = vmatprep.mubr.bf16.mxu0 0
      %6403 = vmatmul.mubr.bf16.gmra.mxu0 %v6357
      %v6404 = vpop.f32.mrf.mxu0
      %v6405 = vadd.f32 0.0, %v6404
      %v6406 = vpop.f32.mrf.mxu0
      %v6407 = vpop.f32.mrf.mxu0
      %v6408 = vpop.f32.mrf.mxu0
      %6409 = vdwg.mxu0
      %v6411 = vsel %vm2098, %v6281, 0
      %v6414 = vsel %vm2098, %v6282, 0
      %v6417 = vsel %vm650, %v6292, 0
      %6419 = vmatprep.subr.bf16.mxu0 0
      %6420 = vmatpush1.bf16.msra.mxu0 0
      %6421 = vmatprep.subr.bf16.mxu0 0
      %6422 = vmatpush1.bf16.msra.mxu0 0
      %6423 = vmatprep.subr.bf16.mxu0 0
      %6424 = vmatpush1.bf16.msra.mxu0 0
      %6425 = vmatprep.subr.bf16.mxu0 0
      %6426 = vmatpush1.bf16.msra.mxu0 0
      %6427 = vmatprep.subr.bf16.mxu0 0
      %6428 = vmatpush1.bf16.msra.mxu0 0
      %6429 = vmatprep.subr.bf16.mxu0 0
      %6430 = vmatpush1.bf16.msra.mxu0 0
      %6431 = vmatprep.subr.bf16.mxu0 0
      %6432 = vmatpush1.bf16.msra.mxu0 0
      %6433 = vmatprep.subr.bf16.mxu0 0
      %6434 = vmatpush1.bf16.msra.mxu0 %v6417
      %6435 = vmatprep.subr.bf16.mxu0 0
      %6436 = vmatpush2.bf16.msra.mxu0 0
      %6437 = vmatprep.subr.bf16.mxu0 0
      %6438 = vmatpush2.bf16.msra.mxu0 0
      %6439 = vmatprep.subr.bf16.mxu0 0
      %6440 = vmatpush2.bf16.msra.mxu0 0
      %6441 = vmatprep.subr.bf16.mxu0 0
      %6442 = vmatpush2.bf16.msra.mxu0 0
      %6443 = vmatprep.subr.bf16.mxu0 0
      %6444 = vmatpush2.bf16.msra.mxu0 0
      %6445 = vmatprep.subr.bf16.mxu0 0
      %6446 = vmatpush2.bf16.msra.mxu0 0
      %6447 = vmatprep.subr.bf16.mxu0 0
      %6448 = vmatpush2.bf16.msra.mxu0 0
      %6449 = vmatprep.subr.bf16.mxu0 0
      %6450 = vmatpush2.bf16.msra.mxu0 0
      %6451 = vmatprep.mubr.bf16.mxu0 0
      %6452 = vmatmul.mubr.bf16.gmra.mxu0 %v6411
      %v6453 = vpop.f32.mrf.mxu0
      %v6454 = vadd.f32 0.0, %v6453
      %v6455 = vpop.f32.mrf.mxu0
      %v6456 = vpop.f32.mrf.mxu0
      %v6457 = vadd.f32 0.0, %v6456
      %v6458 = vpop.f32.mrf.mxu0
      %6459 = vmatprep.mubr.bf16.mxu0 0
      %6460 = vmatmul.mubr.bf16.gmra.mxu0 %v6414
      %v6461 = vpop.f32.mrf.mxu0
      %v6462 = vadd.f32 0.0, %v6461
      %v6463 = vpop.f32.mrf.mxu0
      %v6464 = vpop.f32.mrf.mxu0
      %v6465 = vpop.f32.mrf.mxu0
      %6466 = vdwg.mxu0
      %v6468 = vsel %vm2098, %v6283, 0
      %v6471 = vsel %vm2098, %v6284, 0
      %v6474 = vsel %vm650, %v6293, 0
      %6476 = vmatprep.subr.bf16.mxu0 0
      %6477 = vmatpush1.bf16.msra.mxu0 0
      %6478 = vmatprep.subr.bf16.mxu0 0
      %6479 = vmatpush1.bf16.msra.mxu0 0
      %6480 = vmatprep.subr.bf16.mxu0 0
      %6481 = vmatpush1.bf16.msra.mxu0 0
      %6482 = vmatprep.subr.bf16.mxu0 0
      %6483 = vmatpush1.bf16.msra.mxu0 0
      %6484 = vmatprep.subr.bf16.mxu0 0
      %6485 = vmatpush1.bf16.msra.mxu0 0
      %6486 = vmatprep.subr.bf16.mxu0 0
      %6487 = vmatpush1.bf16.msra.mxu0 0
      %6488 = vmatprep.subr.bf16.mxu0 0
      %6489 = vmatpush1.bf16.msra.mxu0 0
      %6490 = vmatprep.subr.bf16.mxu0 0
      %6491 = vmatpush1.bf16.msra.mxu0 %v6474
      %6492 = vmatprep.subr.bf16.mxu0 0
      %6493 = vmatpush2.bf16.msra.mxu0 0
      %6494 = vmatprep.subr.bf16.mxu0 0
      %6495 = vmatpush2.bf16.msra.mxu0 0
      %6496 = vmatprep.subr.bf16.mxu0 0
      %6497 = vmatpush2.bf16.msra.mxu0 0
      %6498 = vmatprep.subr.bf16.mxu0 0
      %6499 = vmatpush2.bf16.msra.mxu0 0
      %6500 = vmatprep.subr.bf16.mxu0 0
      %6501 = vmatpush2.bf16.msra.mxu0 0
      %6502 = vmatprep.subr.bf16.mxu0 0
      %6503 = vmatpush2.bf16.msra.mxu0 0
      %6504 = vmatprep.subr.bf16.mxu0 0
      %6505 = vmatpush2.bf16.msra.mxu0 0
      %6506 = vmatprep.subr.bf16.mxu0 0
      %6507 = vmatpush2.bf16.msra.mxu0 0
      %6508 = vmatprep.mubr.bf16.mxu0 0
      %6509 = vmatmul.mubr.bf16.gmra.mxu0 %v6468
      %v6510 = vpop.f32.mrf.mxu0
      %v6511 = vadd.f32 0.0, %v6510
      %v6512 = vpop.f32.mrf.mxu0
      %v6513 = vpop.f32.mrf.mxu0
      %v6514 = vadd.f32 0.0, %v6513
      %v6515 = vpop.f32.mrf.mxu0
      %6516 = vmatprep.mubr.bf16.mxu0 0
      %6517 = vmatmul.mubr.bf16.gmra.mxu0 %v6471
      %v6518 = vpop.f32.mrf.mxu0
      %v6519 = vadd.f32 0.0, %v6518
      %v6520 = vpop.f32.mrf.mxu0
      %v6521 = vpop.f32.mrf.mxu0
      %v6522 = vpop.f32.mrf.mxu0
      %6523 = vdwg.mxu0
      %v6525 = vsel %vm2098, %v6285, 0
      %v6528 = vsel %vm2098, %v6286, 0
      %v6531 = vsel %vm650, %v6294, 0
      %6533 = vmatprep.subr.bf16.mxu0 0
      %6534 = vmatpush1.bf16.msra.mxu0 0
      %6535 = vmatprep.subr.bf16.mxu0 0
      %6536 = vmatpush1.bf16.msra.mxu0 0
      %6537 = vmatprep.subr.bf16.mxu0 0
      %6538 = vmatpush1.bf16.msra.mxu0 0
      %6539 = vmatprep.subr.bf16.mxu0 0
      %6540 = vmatpush1.bf16.msra.mxu0 0
      %6541 = vmatprep.subr.bf16.mxu0 0
      %6542 = vmatpush1.bf16.msra.mxu0 0
      %6543 = vmatprep.subr.bf16.mxu0 0
      %6544 = vmatpush1.bf16.msra.mxu0 0
      %6545 = vmatprep.subr.bf16.mxu0 0
      %6546 = vmatpush1.bf16.msra.mxu0 0
      %6547 = vmatprep.subr.bf16.mxu0 0
      %6548 = vmatpush1.bf16.msra.mxu0 %v6531
      %6549 = vmatprep.subr.bf16.mxu0 0
      %6550 = vmatpush2.bf16.msra.mxu0 0
      %6551 = vmatprep.subr.bf16.mxu0 0
      %6552 = vmatpush2.bf16.msra.mxu0 0
      %6553 = vmatprep.subr.bf16.mxu0 0
      %6554 = vmatpush2.bf16.msra.mxu0 0
      %6555 = vmatprep.subr.bf16.mxu0 0
      %6556 = vmatpush2.bf16.msra.mxu0 0
      %6557 = vmatprep.subr.bf16.mxu0 0
      %6558 = vmatpush2.bf16.msra.mxu0 0
      %6559 = vmatprep.subr.bf16.mxu0 0
      %6560 = vmatpush2.bf16.msra.mxu0 0
      %6561 = vmatprep.subr.bf16.mxu0 0
      %6562 = vmatpush2.bf16.msra.mxu0 0
      %6563 = vmatprep.subr.bf16.mxu0 0
      %6564 = vmatpush2.bf16.msra.mxu0 0
      %6565 = vmatprep.mubr.bf16.mxu0 0
      %6566 = vmatmul.mubr.bf16.gmra.mxu0 %v6525
      %v6567 = vpop.f32.mrf.mxu0
      %v6568 = vadd.f32 0.0, %v6567
      %v6569 = vpop.f32.mrf.mxu0
      %v6570 = vpop.f32.mrf.mxu0
      %v6571 = vadd.f32 0.0, %v6570
      %v6572 = vpop.f32.mrf.mxu0
      %6573 = vmatprep.mubr.bf16.mxu0 0
      %6574 = vmatmul.mubr.bf16.gmra.mxu0 %v6528
      %v6575 = vpop.f32.mrf.mxu0
      %v6576 = vadd.f32 0.0, %v6575
      %v6577 = vpop.f32.mrf.mxu0
      %v6578 = vpop.f32.mrf.mxu0
      %v6579 = vpop.f32.mrf.mxu0
      %6580 = vdwg.mxu0
      %v6582 = vsel %vm2098, %v6287, 0
      %v6585 = vsel %vm2098, %v6288, 0
      %v6588 = vsel %vm650, %v6295, 0
      %6590 = vmatprep.subr.bf16.mxu0 0
      %6591 = vmatpush1.bf16.msra.mxu0 0
      %6592 = vmatprep.subr.bf16.mxu0 0
      %6593 = vmatpush1.bf16.msra.mxu0 0
      %6594 = vmatprep.subr.bf16.mxu0 0
      %6595 = vmatpush1.bf16.msra.mxu0 0
      %6596 = vmatprep.subr.bf16.mxu0 0
      %6597 = vmatpush1.bf16.msra.mxu0 0
      %6598 = vmatprep.subr.bf16.mxu0 0
      %6599 = vmatpush1.bf16.msra.mxu0 0
      %6600 = vmatprep.subr.bf16.mxu0 0
      %6601 = vmatpush1.bf16.msra.mxu0 0
      %6602 = vmatprep.subr.bf16.mxu0 0
      %6603 = vmatpush1.bf16.msra.mxu0 0
      %6604 = vmatprep.subr.bf16.mxu0 0
      %6605 = vmatpush1.bf16.msra.mxu0 %v6588
      %6606 = vmatprep.subr.bf16.mxu0 0
      %6607 = vmatpush2.bf16.msra.mxu0 0
      %6608 = vmatprep.subr.bf16.mxu0 0
      %6609 = vmatpush2.bf16.msra.mxu0 0
      %6610 = vmatprep.subr.bf16.mxu0 0
      %6611 = vmatpush2.bf16.msra.mxu0 0
      %6612 = vmatprep.subr.bf16.mxu0 0
      %6613 = vmatpush2.bf16.msra.mxu0 0
      %6614 = vmatprep.subr.bf16.mxu0 0
      %6615 = vmatpush2.bf16.msra.mxu0 0
      %6616 = vmatprep.subr.bf16.mxu0 0
      %6617 = vmatpush2.bf16.msra.mxu0 0
      %6618 = vmatprep.subr.bf16.mxu0 0
      %6619 = vmatpush2.bf16.msra.mxu0 0
      %6620 = vmatprep.subr.bf16.mxu0 0
      %6621 = vmatpush2.bf16.msra.mxu0 0
      %6622 = vmatprep.mubr.bf16.mxu0 0
      %6623 = vmatmul.mubr.bf16.gmra.mxu0 %v6582
      %v6624 = vpop.f32.mrf.mxu0
      %v6625 = vadd.f32 0.0, %v6624
      %v6626 = vpop.f32.mrf.mxu0
      %v6627 = vpop.f32.mrf.mxu0
      %v6628 = vadd.f32 0.0, %v6627
      %v6629 = vpop.f32.mrf.mxu0
      %6630 = vmatprep.mubr.bf16.mxu0 0
      %6631 = vmatmul.mubr.bf16.gmra.mxu0 %v6585
      %v6632 = vpop.f32.mrf.mxu0
      %v6633 = vadd.f32 0.0, %v6632
      %v6634 = vpop.f32.mrf.mxu0
      %v6635 = vpop.f32.mrf.mxu0
      %v6636 = vpop.f32.mrf.mxu0
      %6637 = vdwg.mxu0
      %v6638 = vsel %vm704, %v6340, 0.0
      %v6639 = vsel %vm704, %v6397, 0.0
      %v6640 = vadd.f32 %v6638, %v6639
      %v6641 = vsel %vm704, %v6454, 0.0
      %v6642 = vadd.f32 %v6640, %v6641
      %v6643 = vsel %vm704, %v6511, 0.0
      %v6644 = vadd.f32 %v6642, %v6643
      %v6645 = vsel %vm704, %v6568, 0.0
      %v6646 = vadd.f32 %v6644, %v6645
      %v6647 = vsel %vm704, %v6625, 0.0
      %v6648 = vadd.f32 %v6646, %v6647
      %v6649 = vsel %vm704, %v6343, 0.0
      %v6650 = vsel %vm704, %v6400, 0.0
      %v6651 = vadd.f32 %v6649, %v6650
      %v6652 = vsel %vm704, %v6457, 0.0
      %v6653 = vadd.f32 %v6651, %v6652
      %v6654 = vsel %vm704, %v6514, 0.0
      %v6655 = vadd.f32 %v6653, %v6654
      %v6656 = vsel %vm704, %v6571, 0.0
      %v6657 = vadd.f32 %v6655, %v6656
      %v6658 = vsel %vm704, %v6628, 0.0
      %v6659 = vadd.f32 %v6657, %v6658
      %v6660 = vsel %vm698, %v6348, 0.0
      %v6661 = vsel %vm698, %v6405, 0.0
      %v6662 = vadd.f32 %v6660, %v6661
      %v6663 = vsel %vm698, %v6462, 0.0
      %v6664 = vadd.f32 %v6662, %v6663
      %v6665 = vsel %vm698, %v6519, 0.0
      %v6666 = vadd.f32 %v6664, %v6665
      %v6667 = vsel %vm698, %v6576, 0.0
      %v6668 = vadd.f32 %v6666, %v6667
      %v6669 = vsel %vm698, %v6633, 0.0
      %v6670 = vadd.f32 %v6668, %v6669
      %v6671 = vadd.f32 %v3942, %v6648
      %v6672 = vadd.f32 %v3943, %v6659
      %v6673 = vadd.f32 %v3944, %v6670
      %s6674 = scalar_lea.vmem %s10, 1
      %v6675 = vld [vmem:[%s6674] sm:$0x1]
      %v6677 = vlaneseq
      %v6678 = vshrl.u32 %v6677, 7
      %v6679 = vsub.s32 0, %v6678
      %v6680 = vrot.slane %v6675, %v6679
      %v6682 = vadd.f32 %v6671, %v6680
      %v6683 = vadd.f32 %v6672, %v6680
      %v6684 = vadd.f32 %v6673, %v6680
      %s6685 = scalar_lea.vmem %s11, 1
      %v6686 = vld [vmem:[%s6685] sm:$0x1]
      %s6687 = scalar_lea.vmem %s12, 1
      %v6688 = vld [vmem:[%s6687] sm:$0x1]
      %v6689 = vsel %vm704, %v6682, 0.0
      %6690 = vadd.xlane.f32.xlu0 %v6689
      %v6691 = vpop.xlane.xlu0 %6690
      %v6692 = vsel %vm704, %v6683, 0.0
      %6693 = vadd.xlane.f32.xlu0 %v6692
      %v6694 = vpop.xlane.xlu0 %6693
      %v6695 = vsel %vm698, %v6684, 0.0
      %6696 = vadd.xlane.f32.xlu0 %v6695
      %v6697 = vpop.xlane.xlu0 %6696
      %v6698 = vmul.f32 %v6691, %v721
      %v6699 = vmul.f32 %v6694, %v721
      %v6700 = vmul.f32 %v6697, %v721
      %v6701 = vsub.f32 %v6682, %v6698
      %v6702 = vsub.f32 %v6683, %v6699
      %v6703 = vsub.f32 %v6684, %v6700
      %v6704 = vmul.f32 %v6701, %v6701
      %v6705 = vmul.f32 %v6702, %v6702
      %v6706 = vmul.f32 %v6703, %v6703
      %v6707 = vsel %vm704, %v6704, 0.0
      %6708 = vadd.xlane.f32.xlu0 %v6707
      %v6709 = vpop.xlane.xlu0 %6708
      %v6710 = vsel %vm704, %v6705, 0.0
      %6711 = vadd.xlane.f32.xlu0 %v6710
      %v6712 = vpop.xlane.xlu0 %6711
      %v6713 = vsel %vm698, %v6706, 0.0
      %6714 = vadd.xlane.f32.xlu0 %v6713
      %v6715 = vpop.xlane.xlu0 %6714
      %v6716 = vmul.f32 %v6709, %v721
      %v6717 = vmul.f32 %v6712, %v721
      %v6718 = vmul.f32 %v6715, %v721
      %v6719 = vadd.f32 %v6716, 1e-05
      %v6720 = vadd.f32 %v6717, 1e-05
      %v6721 = vadd.f32 %v6718, 1e-05
      %v6722 = vrsqrt.pop %v6719
      %v6723 = vrsqrt.pop %v6720
      %v6724 = vrsqrt.pop %v6721
      %v6725 = vmul.f32 %v6701, %v6722
      %v6726 = vmul.f32 %v6702, %v6723
      %v6727 = vmul.f32 %v6703, %v6724
      %v6729 = vlaneseq
      %v6730 = vshrl.u32 %v6729, 7
      %v6731 = vsub.s32 0, %v6730
      %v6732 = vrot.slane %v6686, %v6731
      %v6734 = vmul.f32 %v6725, %v6732
      %v6735 = vmul.f32 %v6726, %v6732
      %v6736 = vmul.f32 %v6727, %v6732
      %v6738 = vlaneseq
      %v6739 = vshrl.u32 %v6738, 7
      %v6740 = vsub.s32 0, %v6739
      %v6741 = vrot.slane %v6688, %v6740
      %v6743 = vadd.f32 %v6734, %v6741
      %v6744 = vadd.f32 %v6735, %v6741
      %v6745 = vadd.f32 %v6736, %v6741
      %v6746 = vpack.c.bf16 %v6744, %v6743
      %v6747 = vpack.c.bf16 %v6745, %v6745
      %s6748 = scalar_lea.vmem %s13, 48
      %v6749 = vld [vmem:[%s6748] sm:$0xff]
      %v6750 = vld [vmem:[%s6748 + $0x8] sm:$0xff]
      %v6751 = vld [vmem:[%s6748 + $0x10] sm:$0xff]
      %v6752 = vld [vmem:[%s6748 + $0x18] sm:$0xff]
      %v6753 = vld [vmem:[%s6748 + $0x20] sm:$0xff]
      %v6754 = vld [vmem:[%s6748 + $0x28] sm:$0xff]
      %s6755 = scalar_lea.vmem %s14, 2
      %v6756 = vld [vmem:[%s6755] sm:$0x3]
      %v6758 = vlaneseq
      %v6759 = vshrl.u32 %v6758, 7
      %v6760 = vsub.s32 0, %v6759
      %v6761 = vrot.slane %v6756, %v6760
      %v6762 = vlaneseq
      %v6763 = vshrl.u32 %v6762, 7
      %v6764 = vsub.s32 1, %v6763
      %v6765 = vrot.slane %v6756, %v6764
      %v6774 = vunpack.c.l.b16 %v6749
      %v6775 = vunpack.c.h.b16 %v6749
      %v6776 = vunpack.c.l.b16 %v6750
      %v6777 = vunpack.c.h.b16 %v6750
      %v6778 = vunpack.c.l.b16 %v6751
      %v6779 = vunpack.c.h.b16 %v6751
      %v6780 = vunpack.c.l.b16 %v6752
      %v6781 = vunpack.c.h.b16 %v6752
      %v6782 = vunpack.c.l.b16 %v6753
      %v6783 = vunpack.c.h.b16 %v6753
      %v6784 = vunpack.c.l.b16 %v6754
      %v6785 = vunpack.c.h.b16 %v6754
      %v6786 = vpack.c.b16 %v6776, %v6774
      %v6787 = vpack.c.b16 %v6777, %v6775
      %v6788 = vpack.c.b16 %v6780, %v6778
      %v6789 = vpack.c.b16 %v6781, %v6779
      %v6790 = vpack.c.b16 %v6784, %v6782
      %v6791 = vpack.c.b16 %v6785, %v6783
      %v6799 = vsel %vm704, %v6746, 0
      %v6802 = vsel %vm704, %v6747, 0
      %6804 = vmatprep.subr.bf16.mxu0 0
      %6805 = vmatpush1.bf16.msra.mxu0 0
      %6806 = vmatprep.subr.bf16.mxu0 0
      %6807 = vmatpush1.bf16.msra.mxu0 0
      %6808 = vmatprep.subr.bf16.mxu0 0
      %6809 = vmatpush1.bf16.msra.mxu0 0
      %6810 = vmatprep.subr.bf16.mxu0 0
      %6811 = vmatpush1.bf16.msra.mxu0 0
      %6812 = vmatprep.subr.bf16.mxu0 0
      %6813 = vmatpush1.bf16.msra.mxu0 0
      %6814 = vmatprep.subr.bf16.mxu0 %v6791
      %6815 = vmatpush1.bf16.msra.mxu0 %v6790
      %6816 = vmatprep.subr.bf16.mxu0 %v6789
      %6817 = vmatpush1.bf16.msra.mxu0 %v6788
      %6818 = vmatprep.subr.bf16.mxu0 %v6787
      %6819 = vmatpush1.bf16.msra.mxu0 %v6786
      %6820 = vmatprep.subr.bf16.mxu0 0
      %6821 = vmatpush2.bf16.msra.mxu0 0
      %6822 = vmatprep.subr.bf16.mxu0 0
      %6823 = vmatpush2.bf16.msra.mxu0 0
      %6824 = vmatprep.subr.bf16.mxu0 0
      %6825 = vmatpush2.bf16.msra.mxu0 0
      %6826 = vmatprep.subr.bf16.mxu0 0
      %6827 = vmatpush2.bf16.msra.mxu0 0
      %6828 = vmatprep.subr.bf16.mxu0 0
      %6829 = vmatpush2.bf16.msra.mxu0 0
      %6830 = vmatprep.subr.bf16.mxu0 0
      %6831 = vmatpush2.bf16.msra.mxu0 0
      %6832 = vmatprep.subr.bf16.mxu0 0
      %6833 = vmatpush2.bf16.msra.mxu0 0
      %6834 = vmatprep.subr.bf16.mxu0 0
      %6835 = vmatpush2.bf16.msra.mxu0 0
      %6836 = vmatprep.mubr.bf16.mxu0 0
      %6837 = vmatmul.mubr.bf16.gmra.mxu0 %v6799
      %v6838 = vpop.f32.mrf.mxu0
      %v6839 = vadd.f32 %v6761, %v6838
      %v6840 = vpop.f32.mrf.mxu0
      %v6841 = vadd.f32 %v6765, %v6840
      %v6842 = vpop.f32.mrf.mxu0
      %v6843 = vadd.f32 %v6761, %v6842
      %v6844 = vpop.f32.mrf.mxu0
      %v6845 = vadd.f32 %v6765, %v6844
      %6846 = vmatprep.mubr.bf16.mxu0 0
      %6847 = vmatmul.mubr.bf16.gmra.mxu0 %v6802
      %v6848 = vpop.f32.mrf.mxu0
      %v6849 = vadd.f32 %v6761, %v6848
      %v6850 = vpop.f32.mrf.mxu0
      %v6851 = vadd.f32 %v6765, %v6850
      %v6852 = vpop.f32.mrf.mxu0
      %v6853 = vpop.f32.mrf.mxu0
      %6854 = vdwg.mxu0
      %v6855 = vmul.f32 %v6839, 0.5
      %v6856 = vmul.f32 %v6841, 0.5
      %v6857 = vmul.f32 %v6843, 0.5
      %v6858 = vmul.f32 %v6845, 0.5
      %v6859 = vmul.f32 %v6849, 0.5
      %v6860 = vmul.f32 %v6851, 0.5
      %v6861 = vmul.f32 %v6839, 0.70710677
      %v6862 = vmul.f32 %v6841, 0.70710677
      %v6863 = vmul.f32 %v6843, 0.70710677
      %v6864 = vmul.f32 %v6845, 0.70710677
      %v6865 = vmul.f32 %v6849, 0.70710677
      %v6866 = vmul.f32 %v6851, 0.70710677
      %vm6867 = vcmp.ge.f32.partialorder %v6861, 0.0
      %vm6868 = vcmp.ge.f32.partialorder %v6862, 0.0
      %vm6869 = vcmp.ge.f32.partialorder %v6863, 0.0
      %vm6870 = vcmp.ge.f32.partialorder %v6864, 0.0
      %vm6871 = vcmp.ge.f32.partialorder %v6865, 0.0
      %vm6872 = vcmp.ge.f32.partialorder %v6866, 0.0
      %v6873 = vsel %vm6867, 1.0, -1.0
      %v6874 = vsel %vm6868, 1.0, -1.0
      %v6875 = vsel %vm6869, 1.0, -1.0
      %v6876 = vsel %vm6870, 1.0, -1.0
      %v6877 = vsel %vm6871, 1.0, -1.0
      %v6878 = vsel %vm6872, 1.0, -1.0
      %v6879 = vand.u32 2147483647, %v6861
      %v6880 = vand.u32 2147483647, %v6862
      %v6881 = vand.u32 2147483647, %v6863
      %v6882 = vand.u32 2147483647, %v6864
      %v6883 = vand.u32 2147483647, %v6865
      %v6884 = vand.u32 2147483647, %v6866
      %v6885 = vmul.f32 %v6879, 0.3275911
      %v6886 = vmul.f32 %v6880, 0.3275911
      %v6887 = vmul.f32 %v6881, 0.3275911
      %v6888 = vmul.f32 %v6882, 0.3275911
      %v6889 = vmul.f32 %v6883, 0.3275911
      %v6890 = vmul.f32 %v6884, 0.3275911
      %v6891 = vadd.f32 %v6885, 1.0
      %v6892 = vadd.f32 %v6886, 1.0
      %v6893 = vadd.f32 %v6887, 1.0
      %v6894 = vadd.f32 %v6888, 1.0
      %v6895 = vadd.f32 %v6889, 1.0
      %v6896 = vadd.f32 %v6890, 1.0
      %v6897 = vrcp.pop %v6891
      %v6898 = vmul.f32 1.0, %v6897
      %v6899 = vrcp.pop %v6892
      %v6900 = vmul.f32 1.0, %v6899
      %v6901 = vrcp.pop %v6893
      %v6902 = vmul.f32 1.0, %v6901
      %v6903 = vrcp.pop %v6894
      %v6904 = vmul.f32 1.0, %v6903
      %v6905 = vrcp.pop %v6895
      %v6906 = vmul.f32 1.0, %v6905
      %v6907 = vrcp.pop %v6896
      %v6908 = vmul.f32 1.0, %v6907
      %v6909 = vmul.f32 %v6898, 1.0614054
      %v6910 = vmul.f32 %v6900, 1.0614054
      %v6911 = vmul.f32 %v6902, 1.0614054
      %v6912 = vmul.f32 %v6904, 1.0614054
      %v6913 = vmul.f32 %v6906, 1.0614054
      %v6914 = vmul.f32 %v6908, 1.0614054
      %v6915 = vadd.f32 %v6909, -1.4531521
      %v6916 = vadd.f32 %v6910, -1.4531521
      %v6917 = vadd.f32 %v6911, -1.4531521
      %v6918 = vadd.f32 %v6912, -1.4531521
      %v6919 = vadd.f32 %v6913, -1.4531521
      %v6920 = vadd.f32 %v6914, -1.4531521
      %v6921 = vmul.f32 %v6915, %v6898
      %v6922 = vmul.f32 %v6916, %v6900
      %v6923 = vmul.f32 %v6917, %v6902
      %v6924 = vmul.f32 %v6918, %v6904
      %v6925 = vmul.f32 %v6919, %v6906
      %v6926 = vmul.f32 %v6920, %v6908
      %v6927 = vadd.f32 %v6921, 1.4214138
      %v6928 = vadd.f32 %v6922, 1.4214138
      %v6929 = vadd.f32 %v6923, 1.4214138
      %v6930 = vadd.f32 %v6924, 1.4214138
      %v6931 = vadd.f32 %v6925, 1.4214138
      %v6932 = vadd.f32 %v6926, 1.4214138
      %v6933 = vmul.f32 %v6927, %v6898
      %v6934 = vmul.f32 %v6928, %v6900
      %v6935 = vmul.f32 %v6929, %v6902
      %v6936 = vmul.f32 %v6930, %v6904
      %v6937 = vmul.f32 %v6931, %v6906
      %v6938 = vmul.f32 %v6932, %v6908
      %v6939 = vadd.f32 %v6933, -0.28449672
      %v6940 = vadd.f32 %v6934, -0.28449672
      %v6941 = vadd.f32 %v6935, -0.28449672
      %v6942 = vadd.f32 %v6936, -0.28449672
      %v6943 = vadd.f32 %v6937, -0.28449672
      %v6944 = vadd.f32 %v6938, -0.28449672
      %v6945 = vmul.f32 %v6939, %v6898
      %v6946 = vmul.f32 %v6940, %v6900
      %v6947 = vmul.f32 %v6941, %v6902
      %v6948 = vmul.f32 %v6942, %v6904
      %v6949 = vmul.f32 %v6943, %v6906
      %v6950 = vmul.f32 %v6944, %v6908
      %v6951 = vadd.f32 %v6945, 0.2548296
      %v6952 = vadd.f32 %v6946, 0.2548296
      %v6953 = vadd.f32 %v6947, 0.2548296
      %v6954 = vadd.f32 %v6948, 0.2548296
      %v6955 = vadd.f32 %v6949, 0.2548296
      %v6956 = vadd.f32 %v6950, 0.2548296
      %v6957 = vmul.f32 %v6951, %v6898
      %v6958 = vmul.f32 %v6952, %v6900
      %v6959 = vmul.f32 %v6953, %v6902
      %v6960 = vmul.f32 %v6954, %v6904
      %v6961 = vmul.f32 %v6955, %v6906
      %v6962 = vmul.f32 %v6956, %v6908
      %v6963 = vsub.f32 0.0, %v6879
      %v6964 = vsub.f32 0.0, %v6880
      %v6965 = vsub.f32 0.0, %v6881
      %v6966 = vsub.f32 0.0, %v6882
      %v6967 = vsub.f32 0.0, %v6883
      %v6968 = vsub.f32 0.0, %v6884
      %v6969 = vmul.f32 %v6963, %v6879
      %v6970 = vmul.f32 %v6964, %v6880
      %v6971 = vmul.f32 %v6965, %v6881
      %v6972 = vmul.f32 %v6966, %v6882
      %v6973 = vmul.f32 %v6967, %v6883
      %v6974 = vmul.f32 %v6968, %v6884
      %v6975 = vmul.f32 %v6969, 1.442695
      %v6976 = vpow.pop %v6975
      %v6977 = vmul.f32 %v6970, 1.442695
      %v6978 = vpow.pop %v6977
      %v6979 = vmul.f32 %v6971, 1.442695
      %v6980 = vpow.pop %v6979
      %v6981 = vmul.f32 %v6972, 1.442695
      %v6982 = vpow.pop %v6981
      %v6983 = vmul.f32 %v6973, 1.442695
      %v6984 = vpow.pop %v6983
      %v6985 = vmul.f32 %v6974, 1.442695
      %v6986 = vpow.pop %v6985
      %v6987 = vmul.f32 %v6957, %v6976
      %v6988 = vmul.f32 %v6958, %v6978
      %v6989 = vmul.f32 %v6959, %v6980
      %v6990 = vmul.f32 %v6960, %v6982
      %v6991 = vmul.f32 %v6961, %v6984
      %v6992 = vmul.f32 %v6962, %v6986
      %v6993 = vsub.f32 1.0, %v6987
      %v6994 = vsub.f32 1.0, %v6988
      %v6995 = vsub.f32 1.0, %v6989
      %v6996 = vsub.f32 1.0, %v6990
      %v6997 = vsub.f32 1.0, %v6991
      %v6998 = vsub.f32 1.0, %v6992
      %v6999 = vmul.f32 %v6873, %v6993
      %v7000 = vmul.f32 %v6874, %v6994
      %v7001 = vmul.f32 %v6875, %v6995
      %v7002 = vmul.f32 %v6876, %v6996
      %v7003 = vmul.f32 %v6877, %v6997
      %v7004 = vmul.f32 %v6878, %v6998
      %v7005 = vadd.f32 %v6999, 1.0
      %v7006 = vadd.f32 %v7000, 1.0
      %v7007 = vadd.f32 %v7001, 1.0
      %v7008 = vadd.f32 %v7002, 1.0
      %v7009 = vadd.f32 %v7003, 1.0
      %v7010 = vadd.f32 %v7004, 1.0
      %v7011 = vmul.f32 %v6855, %v7005
      %v7012 = vmul.f32 %v6856, %v7006
      %v7013 = vmul.f32 %v6857, %v7007
      %v7014 = vmul.f32 %v6858, %v7008
      %v7015 = vmul.f32 %v6859, %v7009
      %v7016 = vmul.f32 %v6860, %v7010
      %v7017 = vpack.c.bf16 %v7013, %v7011
      %v7018 = vpack.c.bf16 %v7014, %v7012
      %v7019 = vpack.c.bf16 %v7015, %v7015
      %v7020 = vpack.c.bf16 %v7016, %v7016
      %s7021 = scalar_lea.vmem %s15, 96
      %v7022 = vld [vmem:[%s7021] sm:$0xf]
      %v7023 = vld [vmem:[%s7021 + $0x4] sm:$0xf]
      %v7024 = vld [vmem:[%s7021 + $0x8] sm:$0xf]
      %v7025 = vld [vmem:[%s7021 + $0xc] sm:$0xf]
      %v7026 = vld [vmem:[%s7021 + $0x10] sm:$0xf]
      %v7027 = vld [vmem:[%s7021 + $0x14] sm:$0xf]
      %v7028 = vld [vmem:[%s7021 + $0x18] sm:$0xf]
      %v7029 = vld [vmem:[%s7021 + $0x1c] sm:$0xf]
      %v7030 = vld [vmem:[%s7021 + $0x20] sm:$0xf]
      %v7031 = vld [vmem:[%s7021 + $0x24] sm:$0xf]
      %v7032 = vld [vmem:[%s7021 + $0x28] sm:$0xf]
      %v7033 = vld [vmem:[%s7021 + $0x2c] sm:$0xf]
      %v7034 = vld [vmem:[%s7021 + $0x30] sm:$0xf]
      %v7035 = vld [vmem:[%s7021 + $0x34] sm:$0xf]
      %v7036 = vld [vmem:[%s7021 + $0x38] sm:$0xf]
      %v7037 = vld [vmem:[%s7021 + $0x3c] sm:$0xf]
      %v7038 = vld [vmem:[%s7021 + $0x40] sm:$0xf]
      %v7039 = vld [vmem:[%s7021 + $0x44] sm:$0xf]
      %v7040 = vld [vmem:[%s7021 + $0x48] sm:$0xf]
      %v7041 = vld [vmem:[%s7021 + $0x4c] sm:$0xf]
      %v7042 = vld [vmem:[%s7021 + $0x50] sm:$0xf]
      %v7043 = vld [vmem:[%s7021 + $0x54] sm:$0xf]
      %v7044 = vld [vmem:[%s7021 + $0x58] sm:$0xf]
      %v7045 = vld [vmem:[%s7021 + $0x5c] sm:$0xf]
      %s7046 = scalar_lea.vmem %s16, 1
      %v7047 = vld [vmem:[%s7046] sm:$0x1]
      %v7049 = vlaneseq
      %v7050 = vshrl.u32 %v7049, 7
      %v7051 = vsub.s32 0, %v7050
      %v7052 = vrot.slane %v7047, %v7051
      %v7078 = vunpack.c.l.b16 %v7022
      %v7079 = vunpack.c.l.b16 %v7023
      %v7080 = vunpack.c.l.b16 %v7024
      %v7081 = vunpack.c.l.b16 %v7025
      %v7082 = vunpack.c.l.b16 %v7026
      %v7083 = vunpack.c.l.b16 %v7027
      %v7084 = vunpack.c.l.b16 %v7028
      %v7085 = vunpack.c.l.b16 %v7029
      %v7086 = vunpack.c.l.b16 %v7030
      %v7087 = vunpack.c.l.b16 %v7031
      %v7088 = vunpack.c.l.b16 %v7032
      %v7089 = vunpack.c.l.b16 %v7033
      %v7090 = vunpack.c.l.b16 %v7034
      %v7091 = vunpack.c.l.b16 %v7035
      %v7092 = vunpack.c.l.b16 %v7036
      %v7093 = vunpack.c.l.b16 %v7037
      %v7094 = vunpack.c.l.b16 %v7038
      %v7095 = vunpack.c.l.b16 %v7039
      %v7096 = vunpack.c.l.b16 %v7040
      %v7097 = vunpack.c.l.b16 %v7041
      %v7098 = vunpack.c.l.b16 %v7042
      %v7099 = vunpack.c.l.b16 %v7043
      %v7100 = vunpack.c.l.b16 %v7044
      %v7101 = vunpack.c.l.b16 %v7045
      %v7102 = vpack.c.b16 %v7079, %v7078
      %v7103 = vpack.c.b16 %v7081, %v7080
      %v7104 = vpack.c.b16 %v7083, %v7082
      %v7105 = vpack.c.b16 %v7085, %v7084
      %v7106 = vpack.c.b16 %v7087, %v7086
      %v7107 = vpack.c.b16 %v7089, %v7088
      %v7108 = vpack.c.b16 %v7091, %v7090
      %v7109 = vpack.c.b16 %v7093, %v7092
      %v7110 = vpack.c.b16 %v7095, %v7094
      %v7111 = vpack.c.b16 %v7097, %v7096
      %v7112 = vpack.c.b16 %v7099, %v7098
      %v7113 = vpack.c.b16 %v7101, %v7100
      %v7127 = vsel %vm3887, %v7018, 0
      %v7130 = vsel %vm3887, %v7020, 0
      %7132 = vmatprep.subr.bf16.mxu0 0
      %7133 = vmatpush1.bf16.msra.mxu0 %v7109
      %7134 = vmatprep.subr.bf16.mxu0 0
      %7135 = vmatpush1.bf16.msra.mxu0 %v7108
      %7136 = vmatprep.subr.bf16.mxu0 0
      %7137 = vmatpush1.bf16.msra.mxu0 %v7107
      %7138 = vmatprep.subr.bf16.mxu0 0
      %7139 = vmatpush1.bf16.msra.mxu0 %v7106
      %7140 = vmatprep.subr.bf16.mxu0 0
      %7141 = vmatpush1.bf16.msra.mxu0 %v7105
      %7142 = vmatprep.subr.bf16.mxu0 0
      %7143 = vmatpush1.bf16.msra.mxu0 %v7104
      %7144 = vmatprep.subr.bf16.mxu0 0
      %7145 = vmatpush1.bf16.msra.mxu0 %v7103
      %7146 = vmatprep.subr.bf16.mxu0 0
      %7147 = vmatpush1.bf16.msra.mxu0 %v7102
      %7148 = vmatprep.subr.bf16.mxu0 0
      %7149 = vmatpush2.bf16.msra.mxu0 0
      %7150 = vmatprep.subr.bf16.mxu0 0
      %7151 = vmatpush2.bf16.msra.mxu0 0
      %7152 = vmatprep.subr.bf16.mxu0 0
      %7153 = vmatpush2.bf16.msra.mxu0 0
      %7154 = vmatprep.subr.bf16.mxu0 0
      %7155 = vmatpush2.bf16.msra.mxu0 0
      %7156 = vmatprep.subr.bf16.mxu0 0
      %7157 = vmatpush2.bf16.msra.mxu0 %v7113
      %7158 = vmatprep.subr.bf16.mxu0 0
      %7159 = vmatpush2.bf16.msra.mxu0 %v7112
      %7160 = vmatprep.subr.bf16.mxu0 0
      %7161 = vmatpush2.bf16.msra.mxu0 %v7111
      %7162 = vmatprep.subr.bf16.mxu0 0
      %7163 = vmatpush2.bf16.msra.mxu0 %v7110
      %7164 = vmatprep.mubr.bf16.mxu0 %v7127
      %7165 = vmatmul.mubr.bf16.gmra.mxu0 %v7017
      %v7166 = vpop.f32.mrf.mxu0
      %v7167 = vadd.f32 %v7052, %v7166
      %v7168 = vpop.f32.mrf.mxu0
      %v7169 = vpop.f32.mrf.mxu0
      %v7170 = vadd.f32 %v7052, %v7169
      %v7171 = vpop.f32.mrf.mxu0
      %7172 = vmatprep.mubr.bf16.mxu0 %v7130
      %7173 = vmatmul.mubr.bf16.gmra.mxu0 %v7019
      %v7174 = vpop.f32.mrf.mxu0
      %v7175 = vadd.f32 %v7052, %v7174
      %v7176 = vpop.f32.mrf.mxu0
      %v7177 = vpop.f32.mrf.mxu0
      %v7178 = vpop.f32.mrf.mxu0
      %7179 = vdwg.mxu0
      %v7180 = vadd.f32 %v6682, %v7167
      %v7181 = vadd.f32 %v6683, %v7170
      %v7182 = vadd.f32 %v6684, %v7175
      %v7183 = vld [vmem:[%s17] sm:$0x1]
      %v7184 = vld [vmem:[%s18] sm:$0x1]
      %v7185 = vsel %vm704, %v7180, 0.0
      %7186 = vadd.xlane.f32.xlu0 %v7185
      %v7187 = vpop.xlane.xlu0 %7186
      %v7188 = vsel %vm704, %v7181, 0.0
      %7189 = vadd.xlane.f32.xlu0 %v7188
      %v7190 = vpop.xlane.xlu0 %7189
      %v7191 = vsel %vm698, %v7182, 0.0
      %7192 = vadd.xlane.f32.xlu0 %v7191
      %v7193 = vpop.xlane.xlu0 %7192
      %v7194 = vmul.f32 %v7187, %v721
      %v7195 = vmul.f32 %v7190, %v721
      %v7196 = vmul.f32 %v7193, %v721
      %v7197 = vsub.f32 %v7180, %v7194
      %v7198 = vsub.f32 %v7181, %v7195
      %v7199 = vsub.f32 %v7182, %v7196
      %v7200 = vmul.f32 %v7197, %v7197
      %v7201 = vmul.f32 %v7198, %v7198
      %v7202 = vmul.f32 %v7199, %v7199
      %v7203 = vsel %vm704, %v7200, 0.0
      %7204 = vadd.xlane.f32.xlu0 %v7203
      %v7205 = vpop.xlane.xlu0 %7204
      %v7206 = vsel %vm704, %v7201, 0.0
      %7207 = vadd.xlane.f32.xlu0 %v7206
      %v7208 = vpop.xlane.xlu0 %7207
      %v7209 = vsel %vm698, %v7202, 0.0
      %7210 = vadd.xlane.f32.xlu0 %v7209
      %v7211 = vpop.xlane.xlu0 %7210
      %v7212 = vmul.f32 %v7205, %v721
      %v7213 = vmul.f32 %v7208, %v721
      %v7214 = vmul.f32 %v7211, %v721
      %v7215 = vadd.f32 %v7212, 1e-05
      %v7216 = vadd.f32 %v7213, 1e-05
      %v7217 = vadd.f32 %v7214, 1e-05
      %v7218 = vrsqrt.pop %v7215
      %v7219 = vrsqrt.pop %v7216
      %v7220 = vrsqrt.pop %v7217
      %v7221 = vmul.f32 %v7197, %v7218
      %v7222 = vmul.f32 %v7198, %v7219
      %v7223 = vmul.f32 %v7199, %v7220
      %v7225 = vlaneseq
      %v7226 = vshrl.u32 %v7225, 7
      %v7227 = vsub.s32 0, %v7226
      %v7228 = vrot.slane %v7183, %v7227
      %v7230 = vmul.f32 %v7221, %v7228
      %v7231 = vmul.f32 %v7222, %v7228
      %v7232 = vmul.f32 %v7223, %v7228
      %v7234 = vlaneseq
      %v7235 = vshrl.u32 %v7234, 7
      %v7236 = vsub.s32 0, %v7235
      %v7237 = vrot.slane %v7184, %v7236
      %v7239 = vadd.f32 %v7230, %v7237
      %v7240 = vadd.f32 %v7231, %v7237
      %v7241 = vadd.f32 %v7232, %v7237
      %7242 = vst.msk [vmem:[%s622] sm:$0xff] %vm704, %v7239
      %7243 = vst.msk [vmem:[%s622 + $0x8] sm:$0xff] %vm704, %v7240
      %7244 = vst.msk [vmem:[%s622 + $0x10] sm:$0x1] %vm698, %v7241
      %p7245 = scmp.lt.s32.totalorder %s30, 1
      %s7246 = scalar_select %p7245, %s30, 1
      %s7247 = smul.addr %s7246, 3
      %s7248 = smul.addr %s7247, 8
      %s7249 = scalar_lea.vmem %s19, %s7248
      // Predicated region
      $region97: #{tpu_custom_call.1} parent=95 // pred_check
        %p7250 = pneg %p457
      $region98: #{tpu_custom_call.1} parent=95 // pred_check_branch
        %7252 = sbr.rel (%p7250) target = $region100
      $region99: #{tpu_custom_call.1} parent=95 // pred_region
        _
      $region100: #{tpu_custom_call.1} parent=95 // pred_fallthru
        _
    $region96: #{tpu_custom_call.1} parent=5 // pred_fallthru
      _
    %p7253 = scmp.le.s32.totalorder 2, %s25
    // Predicated region
    $region101: #{tpu_custom_call.1} parent=5 // pred_check
      %p7254 = pneg %p7253
    $region102: #{tpu_custom_call.1} parent=5 // pred_check_branch
      %7256 = sbr.rel (%p7254) target = $region104
    $region103: #{tpu_custom_call.1} parent=5 // pred_region
      %s7257 = ssub.s32 %s25, 2
      // Predicated region
      $region105: #{tpu_custom_call.1} parent=103 // pred_check
        %p7258 = pneg %p463
      $region106: #{tpu_custom_call.1} parent=103 // pred_check_branch
        %7260 = sbr.rel (%p7258) target = $region108
      $region107: #{tpu_custom_call.1} parent=103 // pred_region
        %p7261 = scmp.lt.s32.totalorder %s31, 1
        %s7262 = scalar_select %p7261, %s31, 1
        %s7263 = smul.addr %s7262, 3
        %s7264 = smul.addr %s7263, 8
        %s7265 = scalar_lea.vmem %s19, %s7264
      $region108: #{tpu_custom_call.1} parent=103 // pred_fallthru
        _
    $region104: #{tpu_custom_call.1} parent=5 // pred_fallthru
      _
  $region6: #{tpu_custom_call.1} parent=0 // loop_footer
    %s29 = sadd.s32 1, %s25
  $region7: #{tpu_custom_call.1} parent=0 // loop_footer_branch
    %24 = sbr.rel target = $region3
  $region8: #{tpu_custom_call.1} parent=0 // loop_exit
    _

</llo_original>
